<compile_context>
chip_gen: v5e
topology: v5e:2x2
jax: 0.10.0
libtpu: 0.0.40
codegen_flags: <defaults>
</compile_context>

<pallas_src>
import jax
import jax.numpy as jnp
import numpy as np
from jax import lax
from jax.experimental import pallas as pl
from jax.experimental.pallas import tpu as pltpu


# ------------------------------ Pallas kernels ------------------------------ #

def _conv1_kernel(p_ref, w_ref, b_ref, o_ref):
    """One MXU GEMM: (bm, K) x (K, C) + bias, f32 accumulation."""
    acc = jnp.dot(p_ref[...], w_ref[...], preferred_element_type=jnp.float32)
    o_ref[...] = (acc + b_ref[...]).astype(o_ref.dtype)


def _head_kernel(y1_ref, w2_ref, b2_ref, w3_ref, b3_ref,
                 wl1_ref, bl1_ref, wl2_ref, bl2_ref, o_ref):
    """Fused conv2(dense) + conv3(dense) + linear1 + linear2 + sigmoid.

    All weights live in VMEM; intermediates never leave the chip.  MXU
    operands are bf16, accumulation / bias / sigmoid are f32.
    """
    f32 = jnp.float32
    bf16 = jnp.bfloat16
    y2 = jnp.dot(y1_ref[...], w2_ref[...], preferred_element_type=f32) + b2_ref[...]
    y3 = jnp.dot(y2.astype(bf16), w3_ref[...], preferred_element_type=f32) + b3_ref[...]
    h = jnp.dot(y3.astype(bf16), wl1_ref[...], preferred_element_type=f32) + bl1_ref[...]
    z = jnp.dot(h.astype(bf16), wl2_ref[...], preferred_element_type=f32) + bl2_ref[...]
    o_ref[...] = 1.0 / (1.0 + jnp.exp(-z))          # sigmoid, f32 on the EUP


# ------------------------------ Kernel wrappers ------------------------------ #

def conv1_matmul(patches, w_mat, bias2):
    """y1 = patches @ w_mat + bias.  patches (M, K) bf16, w_mat (K, C) bf16."""
    M, K = patches.shape
    _, C = w_mat.shape
    # Single block for the sizes used here (M = N*256 <= 1024); a 256-row grid
    # (parallel -> megacore shard) for larger batches.
    if M <= 1024 or M % 256 != 0:
        bm = M
    else:
        bm = 256
    grid = (M // bm,)
    flops = 2 * M * K * C
    bytes_accessed = 2 * (M * K + K * C + M * C) + 4 * C
    return pl.pallas_call(
        _conv1_kernel,
        out_shape=jax.ShapeDtypeStruct((M, C), jnp.bfloat16),
        grid=grid,
        in_specs=[
            pl.BlockSpec((bm, K), lambda i: (i, 0)),
            pl.BlockSpec((K, C), lambda i: (0, 0)),
            pl.BlockSpec((1, C), lambda i: (0, 0)),
        ],
        out_specs=pl.BlockSpec((bm, C), lambda i: (i, 0)),
        compiler_params=pltpu.CompilerParams(
            dimension_semantics=("parallel",)),
        cost_estimate=pl.CostEstimate(flops=flops, transcendentals=0,
                                      bytes_accessed=bytes_accessed),
    )(patches, w_mat, bias2)


def fused_head(y1_flat, prep):
    """conv2 + conv3 + linear1 + linear2 + sigmoid, fused in one launch."""
    n, d_in = y1_flat.shape
    out_dim = prep["wl2t"].shape[1]

    # Batch tiling: single block for small batches; 128-row blocks otherwise
    # (weights keep a constant block index, so they are not re-DMA'd).
    if n <= 128 or n % 128 != 0:
        bn = n
    else:
        bn = 128
    grid = (n // bn,)

    w2, b2 = prep["w2_dense"], prep["b2_dense"]
    w3, b3 = prep["w3_dense"], prep["b3"]
    wl1, bl1 = prep["wl1t"], prep["bl1"]
    wl2, bl2 = prep["wl2t"], prep["bl2"]
    args = (y1_flat, w2, b2, w3, b3, wl1, bl1, wl2, bl2)

    flops = 2 * n * (w2.shape[0] * w2.shape[1] + w3.shape[0] * w3.shape[1]
                     + wl1.shape[0] * wl1.shape[1] + wl2.shape[0] * wl2.shape[1])
    bytes_accessed = sum(int(a.size) * a.dtype.itemsize for a in args) + n * out_dim * 4

    def full_spec(a):
        return pl.BlockSpec(a.shape, lambda i: (0, 0))

    return pl.pallas_call(
        _head_kernel,
        out_shape=jax.ShapeDtypeStruct((n, out_dim), jnp.float32),
        grid=grid,
        in_specs=[
            pl.BlockSpec((bn, d_in), lambda i: (i, 0)),
            full_spec(w2), full_spec(b2),
            full_spec(w3), full_spec(b3),
            full_spec(wl1), full_spec(bl1),
            full_spec(wl2), full_spec(bl2),
        ],
        out_specs=pl.BlockSpec((bn, out_dim), lambda i: (i, 0)),
        compiler_params=pltpu.CompilerParams(
            dimension_semantics=("parallel",),
            vmem_limit_bytes=32 * 1024 * 1024),
        cost_estimate=pl.CostEstimate(flops=flops, transcendentals=n * out_dim,
                                      bytes_accessed=bytes_accessed),
    )(*args)


# ------------------------------ Param preparation ---------------------------- #

def _conv_out(i):          # k=7, stride=4, pad=3
    return (i + 2 * 3 - 7) // 4 + 1


def prepare_params(params, imgshape=(64, 64)):
    """One-time host-side re-layout of the PyTorch-style parameters."""
    wimg, himg = imgshape
    h1, w1s = _conv_out(himg), _conv_out(wimg)       # conv1 output spatial
    h2, w2s = _conv_out(h1), _conv_out(w1s)          # conv2 output spatial
    h3, w3s = _conv_out(h2), _conv_out(w2s)          # conv3 output spatial
    assert (h3, w3s) == (1, 1), "head folding assumes conv3 output is 1x1"

    w1 = np.asarray(params["w1"], np.float32)        # (16, 3, 7, 7)
    w2 = np.asarray(params["w2"], np.float32)        # (32, 16, 7, 7)
    w3 = np.asarray(params["w3"], np.float32)        # (64, 32, 7, 7)
    c1, c2, c3 = w1.shape[0], w2.shape[0], w3.shape[0]

    # conv1 GEMM weight: rows ordered (cin, kh, kw), matching
    # lax.conv_general_dilated_patches' output-feature ordering.
    w1_mat = w1.reshape(c1, -1).T                    # (147, 16)

    # conv2 folded to a dense per-image matrix.
    #   input  feature (h,  w,  ci) -> index (h*w1s + w)*c1 + ci
    #   output feature (ho, wo, co) -> index (ho*w2s + wo)*c2 + co
    in2, out2 = h1 * w1s * c1, h2 * w2s * c2
    w2_dense = np.zeros((in2, out2), np.float32)
    for ho in range(h2):
        for wo in range(w2s):
            c0 = (ho * w2s + wo) * c2
            for kh in range(7):
                h = 4 * ho + kh - 3
                if not 0 <= h < h1:
                    continue
                for kw in range(7):
                    w = 4 * wo + kw - 3
                    if not 0 <= w < w1s:
                        continue
                    r0 = (h * w1s + w) * c1
                    w2_dense[r0:r0 + c1, c0:c0 + c2] = w2[:, :, kh, kw].T
    b2_dense = np.tile(np.asarray(params["b2"], np.float32), h2 * w2s)

    # conv3 (1x1 output) folded to a dense matrix over (ho, wo, ci) features.
    w3_dense = np.zeros((out2, c3), np.float32)
    for hi in range(h2):
        for wi in range(w2s):
            kh, kw = hi + 3, wi + 3
            if kh >= 7 or kw >= 7:
                continue
            r0 = (hi * w2s + wi) * c2
            w3_dense[r0:r0 + c2, :] = w3[:, :, kh, kw].T

    # conv3 output is 1x1 so PyTorch's NCHW Flatten order == channel order;
    # no extra column permutation of wl1 is needed.
    bf = jnp.bfloat16
    f32 = jnp.float32
    return {
        "w1_mat": jnp.asarray(w1_mat, bf),
        "b1": jnp.asarray(params["b1"], f32).reshape(1, -1),
        "w2_dense": jnp.asarray(w2_dense, bf),
        "b2_dense": jnp.asarray(b2_dense, f32).reshape(1, -1),
        "w3_dense": jnp.asarray(w3_dense, bf),
        "b3": jnp.asarray(params["b3"], f32).reshape(1, -1),
        "wl1t": jnp.asarray(np.asarray(params["wl1"], np.float32).T, bf),
        "bl1": jnp.asarray(params["bl1"], f32).reshape(1, -1),
        "wl2t": jnp.asarray(np.asarray(params["wl2"], np.float32).T, bf),
        "bl2": jnp.asarray(params["bl2"], f32).reshape(1, -1),
    }


# ------------------------------ Model forward -------------------------------- #

def gmask_binary_list_forward(x_nchw, prep):
    """Equivalent of GMaskBinaryList.forward (== TinyGMask.forward)."""
    n, _, himg, wimg = x_nchw.shape
    h1, w1s = _conv_out(himg), _conv_out(wimg)
    k1 = prep["w1_mat"].shape[0]
    c1 = prep["w1_mat"].shape[1]

    # conv1 im2col: one fused XLA op.  Output (N, H1, W1, cin*7*7) with the
    # feature dim ordered (cin, kh, kw) -- matches w1_mat's row ordering.
    patches = lax.conv_general_dilated_patches(
        x_nchw, filter_shape=(7, 7), window_strides=(4, 4),
        padding=((3, 3), (3, 3)),
        dimension_numbers=("NCHW", "OIHW", "NHWC"))
    patches = patches.reshape(n * h1 * w1s, k1).astype(jnp.bfloat16)

    y1 = conv1_matmul(patches, prep["w1_mat"], prep["b1"])   # (N*H1*W1, 16)
    y1_flat = y1.reshape(n, h1 * w1s * c1)                   # (h, w, c) order; free reshape
    return fused_head(y1_flat, prep)                         # (N, patch_num**2) f32


# --------------------------- Pure-JAX reference ------------------------------ #

def reference_forward(x_nchw, params):
    def conv(x, w, b):
        y = lax.conv_general_dilated(
            x, w, window_strides=(4, 4), padding=((3, 3), (3, 3)),
            dimension_numbers=("NCHW", "OIHW", "NCHW"))
        return y + b.reshape(1, -1, 1, 1)

    x = conv(x_nchw, params["w1"], params["b1"])
    x = conv(x, params["w2"], params["b2"])
    x = conv(x, params["w3"], params["b3"])
    xf = x.reshape(x.shape[0], -1)
    h = xf @ params["wl1"].T + params["bl1"]
    o = h @ params["wl2"].T + params["bl2"]
    return jax.nn.sigmoid(o)


# ------------------------------- Param setup --------------------------------- #

def init_params(key, imgshape=(64, 64), patch_num=20):
    W, H = imgshape
    lin_in = int(64 * H / 64 * W / 64)
    lin_out = int(np.power(patch_num, 2))
    ks = jax.random.split(key, 10)

    def w(k, shape, scale=0.05):
        return (scale * jax.random.normal(k, shape)).astype(jnp.float32)

    return {
        "w1": w(ks[0], (16, 3, 7, 7)),   "b1": w(ks[1], (16,)),
        "w2": w(ks[2], (32, 16, 7, 7)),  "b2": w(ks[3], (32,)),
        "w3": w(ks[4], (64, 32, 7, 7)),  "b3": w(ks[5], (64,)),
        "wl1": w(ks[6], (1000, lin_in)), "bl1": w(ks[7], (1000,)),
        "wl2": w(ks[8], (lin_out, 1000)), "bl2": w(ks[9], (lin_out,)),
    }


# ---------------------------------- Main -------------------------------------- #

if __name__ == "__main__":
    key = jax.random.PRNGKey(0)
    k_x, k_p = jax.random.split(key)

    imgshape = (64, 64)                 # (W, H); keeps TinyGMask's 64/64 divisor exact
    batch = 2
    x = jax.random.normal(k_x, (batch, 3, imgshape[1], imgshape[0]),
                          dtype=jnp.float32)          # NCHW input, like PyTorch
    params = init_params(k_p, imgshape)
    prep = prepare_params(params, imgshape)

    fwd = jax.jit(gmask_binary_list_forward)
    out = jax.block_until_ready(fwd(x, prep))
    assert out.shape == (batch, 400), out.shape

    ref = jax.block_until_ready(reference_forward(x, params))
    np.testing.assert_allclose(np.asarray(out), np.asarray(ref),
                               rtol=1e-2, atol=1e-2)

    print("KERNEL_OK")
</pallas_src>

<mosaic_0001>
module attributes {stable_mosaic.version = 11 : i64} {
  func.func @_conv1_kernel(%arg0: i32, %arg1: memref<512x147xbf16, #tpu.memory_space<vmem>>, %arg2: memref<147x16xbf16, #tpu.memory_space<vmem>>, %arg3: memref<1x16xf32, #tpu.memory_space<vmem>>, %arg4: memref<512x16xbf16, #tpu.memory_space<vmem>>) attributes {dimension_semantics = [#tpu.dimension_semantics<parallel>], iteration_bounds = array<i64: 1>, scalar_prefetch = 0 : i64, scratch_operands = 0 : i64, tpu.core_type = #tpu.core_type<tc>, window_params = [{transform_indices = @transform_0, window_bounds = array<i64: 512, 147>}, {pipeline_mode = #tpu.pipeline_mode<synchronous>, transform_indices = @transform_1, window_bounds = array<i64: 147, 16>}, {pipeline_mode = #tpu.pipeline_mode<synchronous>, transform_indices = @transform_2, window_bounds = array<i64: 1, 16>}, {transform_indices = @transform_3, window_bounds = array<i64: 512, 16>}]} {
    %c0 = arith.constant 0 : index
    %c0_0 = arith.constant 0 : index
    %0 = vector.load %arg1[%c0, %c0_0] : memref<512x147xbf16, #tpu.memory_space<vmem>>, vector<512x147xbf16>
    %c0_1 = arith.constant 0 : index
    %c0_2 = arith.constant 0 : index
    %1 = vector.load %arg2[%c0_1, %c0_2] : memref<147x16xbf16, #tpu.memory_space<vmem>>, vector<147x16xbf16>
    %cst = arith.constant dense<0.000000e+00> : vector<512x16xf32>
    %2 = tpu.matmul %0, %1, %cst {dimension_numbers = #tpu.dot_dimension_numbers<[1], [0], [0], [1], [0, 0, 1, 1], [], []>} : vector<512x147xbf16>, vector<147x16xbf16>, vector<512x16xf32> -> vector<512x16xf32>
    %c0_3 = arith.constant 0 : index
    %c0_4 = arith.constant 0 : index
    %3 = vector.load %arg3[%c0_3, %c0_4] : memref<1x16xf32, #tpu.memory_space<vmem>>, vector<1x16xf32>
    %4 = vector.broadcast %3 : vector<1x16xf32> to vector<512x16xf32>
    %5 = arith.addf %2, %4 : vector<512x16xf32>
    %6 = arith.truncf %5 : vector<512x16xf32> to vector<512x16xbf16>
    %c0_5 = arith.constant 0 : index
    %c0_6 = arith.constant 0 : index
    %7 = vector.load %arg4[%c0_5, %c0_6] : memref<512x16xbf16, #tpu.memory_space<vmem>>, vector<512x16xbf16>
    tpu.vector_store %arg4[%c0_5, %c0_6], %6 {strides = array<i32>} : memref<512x16xbf16, #tpu.memory_space<vmem>>, vector<512x16xbf16>,
    return
  }
  func.func @transform_0(%arg0: i32) -> (i32, i32) {
    %c0_i32 = arith.constant 0 : i32
    %c0_i32_0 = arith.constant 0 : i32
    return %arg0, %c0_i32 : i32, i32
  }
  func.func @transform_1(%arg0: i32) -> (i32, i32) {
    %c0_i32 = arith.constant 0 : i32
    %c0_i32_0 = arith.constant 0 : i32
    %c0_i32_1 = arith.constant 0 : i32
    return %c0_i32, %c0_i32_0 : i32, i32
  }
  func.func @transform_2(%arg0: i32) -> (i32, i32) {
    %c0_i32 = arith.constant 0 : i32
    %c0_i32_0 = arith.constant 0 : i32
    %c0_i32_1 = arith.constant 0 : i32
    return %c0_i32, %c0_i32_0 : i32, i32
  }
  func.func @transform_3(%arg0: i32) -> (i32, i32) {
    %c0_i32 = arith.constant 0 : i32
    %c0_i32_0 = arith.constant 0 : i32
    return %arg0, %c0_i32 : i32, i32
  }
}

module attributes {stable_mosaic.version = 11 : i64} {
  func.func @_head_kernel(%arg0: i32, %arg1: memref<2x4096xbf16, #tpu.memory_space<vmem>>, %arg2: memref<4096x512xbf16, #tpu.memory_space<vmem>>, %arg3: memref<1x512xf32, #tpu.memory_space<vmem>>, %arg4: memref<512x64xbf16, #tpu.memory_space<vmem>>, %arg5: memref<1x64xf32, #tpu.memory_space<vmem>>, %arg6: memref<64x1000xbf16, #tpu.memory_space<vmem>>, %arg7: memref<1x1000xf32, #tpu.memory_space<vmem>>, %arg8: memref<1000x400xbf16, #tpu.memory_space<vmem>>, %arg9: memref<1x400xf32, #tpu.memory_space<vmem>>, %arg10: memref<2x400xf32, #tpu.memory_space<vmem>>) attributes {dimension_semantics = [#tpu.dimension_semantics<parallel>], iteration_bounds = array<i64: 1>, scalar_prefetch = 0 : i64, scratch_operands = 0 : i64, tpu.core_type = #tpu.core_type<tc>, window_params = [{transform_indices = @transform_0, window_bounds = array<i64: 2, 4096>}, {pipeline_mode = #tpu.pipeline_mode<synchronous>, transform_indices = @transform_1, window_bounds = array<i64: 4096, 512>}, {pipeline_mode = #tpu.pipeline_mode<synchronous>, transform_indices = @transform_2, window_bounds = array<i64: 1, 512>}, {pipeline_mode = #tpu.pipeline_mode<synchronous>, transform_indices = @transform_3, window_bounds = array<i64: 512, 64>}, {pipeline_mode = #tpu.pipeline_mode<synchronous>, transform_indices = @transform_4, window_bounds = array<i64: 1, 64>}, {pipeline_mode = #tpu.pipeline_mode<synchronous>, transform_indices = @transform_5, window_bounds = array<i64: 64, 1000>}, {pipeline_mode = #tpu.pipeline_mode<synchronous>, transform_indices = @transform_6, window_bounds = array<i64: 1, 1000>}, {pipeline_mode = #tpu.pipeline_mode<synchronous>, transform_indices = @transform_7, window_bounds = array<i64: 1000, 400>}, {pipeline_mode = #tpu.pipeline_mode<synchronous>, transform_indices = @transform_8, window_bounds = array<i64: 1, 400>}, {transform_indices = @transform_9, window_bounds = array<i64: 2, 400>}]} {
    %c0 = arith.constant 0 : index
    %c0_0 = arith.constant 0 : index
    %0 = vector.load %arg1[%c0, %c0_0] : memref<2x4096xbf16, #tpu.memory_space<vmem>>, vector<2x4096xbf16>
    %c0_1 = arith.constant 0 : index
    %c0_2 = arith.constant 0 : index
    %1 = vector.load %arg2[%c0_1, %c0_2] : memref<4096x512xbf16, #tpu.memory_space<vmem>>, vector<4096x512xbf16>
    %cst = arith.constant dense<0.000000e+00> : vector<2x512xf32>
    %2 = tpu.matmul %0, %1, %cst {dimension_numbers = #tpu.dot_dimension_numbers<[1], [0], [0], [1], [0, 0, 1, 1], [], []>} : vector<2x4096xbf16>, vector<4096x512xbf16>, vector<2x512xf32> -> vector<2x512xf32>
    %c0_3 = arith.constant 0 : index
    %c0_4 = arith.constant 0 : index
    %3 = vector.load %arg3[%c0_3, %c0_4] : memref<1x512xf32, #tpu.memory_space<vmem>>, vector<1x512xf32>
    %4 = vector.broadcast %3 : vector<1x512xf32> to vector<2x512xf32>
    %5 = arith.addf %2, %4 : vector<2x512xf32>
    %6 = arith.truncf %5 : vector<2x512xf32> to vector<2x512xbf16>
    %c0_5 = arith.constant 0 : index
    %c0_6 = arith.constant 0 : index
    %7 = vector.load %arg4[%c0_5, %c0_6] : memref<512x64xbf16, #tpu.memory_space<vmem>>, vector<512x64xbf16>
    %cst_7 = arith.constant dense<0.000000e+00> : vector<2x64xf32>
    %8 = tpu.matmul %6, %7, %cst_7 {dimension_numbers = #tpu.dot_dimension_numbers<[1], [0], [0], [1], [0, 0, 1, 1], [], []>} : vector<2x512xbf16>, vector<512x64xbf16>, vector<2x64xf32> -> vector<2x64xf32>
    %c0_8 = arith.constant 0 : index
    %c0_9 = arith.constant 0 : index
    %9 = vector.load %arg5[%c0_8, %c0_9] : memref<1x64xf32, #tpu.memory_space<vmem>>, vector<1x64xf32>
    %10 = vector.broadcast %9 : vector<1x64xf32> to vector<2x64xf32>
    %11 = arith.addf %8, %10 : vector<2x64xf32>
    %12 = arith.truncf %11 : vector<2x64xf32> to vector<2x64xbf16>
    %c0_10 = arith.constant 0 : index
    %c0_11 = arith.constant 0 : index
    %13 = vector.load %arg6[%c0_10, %c0_11] : memref<64x1000xbf16, #tpu.memory_space<vmem>>, vector<64x1000xbf16>
    %cst_12 = arith.constant dense<0.000000e+00> : vector<2x1000xf32>
    %14 = tpu.matmul %12, %13, %cst_12 {dimension_numbers = #tpu.dot_dimension_numbers<[1], [0], [0], [1], [0, 0, 1, 1], [], []>} : vector<2x64xbf16>, vector<64x1000xbf16>, vector<2x1000xf32> -> vector<2x1000xf32>
    %c0_13 = arith.constant 0 : index
    %c0_14 = arith.constant 0 : index
    %15 = vector.load %arg7[%c0_13, %c0_14] : memref<1x1000xf32, #tpu.memory_space<vmem>>, vector<1x1000xf32>
    %16 = vector.broadcast %15 : vector<1x1000xf32> to vector<2x1000xf32>
    %17 = arith.addf %14, %16 : vector<2x1000xf32>
    %18 = arith.truncf %17 : vector<2x1000xf32> to vector<2x1000xbf16>
    %c0_15 = arith.constant 0 : index
    %c0_16 = arith.constant 0 : index
    %19 = vector.load %arg8[%c0_15, %c0_16] : memref<1000x400xbf16, #tpu.memory_space<vmem>>, vector<1000x400xbf16>
    %cst_17 = arith.constant dense<0.000000e+00> : vector<2x400xf32>
    %20 = tpu.matmul %18, %19, %cst_17 {dimension_numbers = #tpu.dot_dimension_numbers<[1], [0], [0], [1], [0, 0, 1, 1], [], []>} : vector<2x1000xbf16>, vector<1000x400xbf16>, vector<2x400xf32> -> vector<2x400xf32>
    %c0_18 = arith.constant 0 : index
    %c0_19 = arith.constant 0 : index
    %21 = vector.load %arg9[%c0_18, %c0_19] : memref<1x400xf32, #tpu.memory_space<vmem>>, vector<1x400xf32>
    %22 = vector.broadcast %21 : vector<1x400xf32> to vector<2x400xf32>
    %23 = arith.addf %20, %22 : vector<2x400xf32>
    %cst_20 = arith.constant 0.000000e+00 : f32
    %24 = vector.broadcast %cst_20 : f32 to vector<2x400xf32>
    %25 = arith.subf %24, %23 : vector<2x400xf32>
    %26 = math.exp %25 : vector<2x400xf32>
    %cst_21 = arith.constant 1.000000e+00 : f32
    %27 = vector.broadcast %cst_21 : f32 to vector<2x400xf32>
    %28 = arith.addf %27, %26 : vector<2x400xf32>
    %cst_22 = arith.constant 1.000000e+00 : f32
    %29 = vector.broadcast %cst_22 : f32 to vector<2x400xf32>
    %30 = arith.divf %29, %28 : vector<2x400xf32>
    %c0_23 = arith.constant 0 : index
    %c0_24 = arith.constant 0 : index
    %31 = vector.load %arg10[%c0_23, %c0_24] : memref<2x400xf32, #tpu.memory_space<vmem>>, vector<2x400xf32>
    tpu.vector_store %arg10[%c0_23, %c0_24], %30 {strides = array<i32>} : memref<2x400xf32, #tpu.memory_space<vmem>>, vector<2x400xf32>,
    return
  }
  func.func @transform_0(%arg0: i32) -> (i32, i32) {
    %c0_i32 = arith.constant 0 : i32
    %c0_i32_0 = arith.constant 0 : i32
    return %arg0, %c0_i32 : i32, i32
  }
  func.func @transform_1(%arg0: i32) -> (i32, i32) {
    %c0_i32 = arith.constant 0 : i32
    %c0_i32_0 = arith.constant 0 : i32
    %c0_i32_1 = arith.constant 0 : i32
    return %c0_i32, %c0_i32_0 : i32, i32
  }
  func.func @transform_2(%arg0: i32) -> (i32, i32) {
    %c0_i32 = arith.constant 0 : i32
    %c0_i32_0 = arith.constant 0 : i32
    %c0_i32_1 = arith.constant 0 : i32
    return %c0_i32, %c0_i32_0 : i32, i32
  }
  func.func @transform_3(%arg0: i32) -> (i32, i32) {
    %c0_i32 = arith.constant 0 : i32
    %c0_i32_0 = arith.constant 0 : i32
    %c0_i32_1 = arith.constant 0 : i32
    return %c0_i32, %c0_i32_0 : i32, i32
  }
  func.func @transform_4(%arg0: i32) -> (i32, i32) {
    %c0_i32 = arith.constant 0 : i32
    %c0_i32_0 = arith.constant 0 : i32
    %c0_i32_1 = arith.constant 0 : i32
    return %c0_i32, %c0_i32_0 : i32, i32
  }
  func.func @transform_5(%arg0: i32) -> (i32, i32) {
    %c0_i32 = arith.constant 0 : i32
    %c0_i32_0 = arith.constant 0 : i32
    %c0_i32_1 = arith.constant 0 : i32
    return %c0_i32, %c0_i32_0 : i32, i32
  }
  func.func @transform_6(%arg0: i32) -> (i32, i32) {
    %c0_i32 = arith.constant 0 : i32
    %c0_i32_0 = arith.constant 0 : i32
    %c0_i32_1 = arith.constant 0 : i32
    return %c0_i32, %c0_i32_0 : i32, i32
  }
  func.func @transform_7(%arg0: i32) -> (i32, i32) {
    %c0_i32 = arith.constant 0 : i32
    %c0_i32_0 = arith.constant 0 : i32
    %c0_i32_1 = arith.constant 0 : i32
    return %c0_i32, %c0_i32_0 : i32, i32
  }
  func.func @transform_8(%arg0: i32) -> (i32, i32) {
    %c0_i32 = arith.constant 0 : i32
    %c0_i32_0 = arith.constant 0 : i32
    %c0_i32_1 = arith.constant 0 : i32
    return %c0_i32, %c0_i32_0 : i32, i32
  }
  func.func @transform_9(%arg0: i32) -> (i32, i32) {
    %c0_i32 = arith.constant 0 : i32
    %c0_i32_0 = arith.constant 0 : i32
    return %arg0, %c0_i32 : i32, i32
  }
}

</mosaic_0001>

<llo_original>
// kernel: gmask_binary_list_forward.2
$region0: #{gmask_binary_list_forward.2}
  #allocation0 [shape = 'u32[]', space=smem, size = 0x4, offset = 0x4, fixed_abs, tag = 'smem constant byte address 0x4 - core index']
  #allocation1 [shape = 'u32[72,128]{1,0:T(1,128)}', space=vmem, size = 0x9000, scoped, tag = 'internal scratch']
  %s0 = inlined_call_operand.vmem [shape: bf16[512,147], index: 0, kind: input, shape index: {}]
  %s1 = inlined_call_operand.vmem [shape: bf16[147,16], index: 1, kind: input, shape index: {}]
  %s2 = inlined_call_operand.vmem [shape: f32[1,16], index: 2, kind: input, shape index: {}]
  %s3 = inlined_call_operand.vmem [shape: bf16[512,16], index: 3, kind: output, shape index: {}]
  %s4 = sld [smem:[#allocation0]]
  $region22: #{gmask_binary_list_forward.2} parent=0
    _
  %s6 = ssub.s32 1, %s4
  %s7 = scalar_select 0, %s6, %s4
  // Predicated region
  $region2: #{gmask_binary_list_forward.2} parent=0 // pred_check
    _
  $region3: #{gmask_binary_list_forward.2} parent=0 // pred_check_branch
    %9 = sbr.rel (0) target = $region5
  $region4: #{gmask_binary_list_forward.2} parent=0 // pred_region
    _
  $region5: #{gmask_binary_list_forward.2} parent=0 // pred_fallthru
    _
  // Predicated region
  $region6: #{gmask_binary_list_forward.2} parent=0 // pred_check
    _
  $region7: #{gmask_binary_list_forward.2} parent=0 // pred_check_branch
    %11 = sbr.rel (0) target = $region9
  $region8: #{gmask_binary_list_forward.2} parent=0 // pred_region
    _
  $region9: #{gmask_binary_list_forward.2} parent=0 // pred_fallthru
    _
  // Predicated region
  $region10: #{gmask_binary_list_forward.2} parent=0 // pred_check
    _
  $region11: #{gmask_binary_list_forward.2} parent=0 // pred_check_branch
    %13 = sbr.rel (0) target = $region13
  $region12: #{gmask_binary_list_forward.2} parent=0 // pred_region
    _
  $region13: #{gmask_binary_list_forward.2} parent=0 // pred_fallthru
    _
  %v15 = vld [vmem:[%s0] sm:$0xff]
  %v16 = vld [vmem:[%s0 + $0x8] sm:$0xff]
  %v17 = vld [vmem:[%s0 + $0x10] sm:$0xff]
  %v18 = vld [vmem:[%s0 + $0x18] sm:$0xff]
  %v19 = vld [vmem:[%s0 + $0x20] sm:$0xff]
  %v20 = vld [vmem:[%s0 + $0x28] sm:$0xff]
  %v21 = vld [vmem:[%s0 + $0x30] sm:$0xff]
  %v22 = vld [vmem:[%s0 + $0x38] sm:$0xff]
  %v23 = vld [vmem:[%s0 + $0x40] sm:$0xff]
  %v24 = vld [vmem:[%s0 + $0x48] sm:$0xff]
  %v25 = vld [vmem:[%s0 + $0x50] sm:$0xff]
  %v26 = vld [vmem:[%s0 + $0x58] sm:$0xff]
  %v27 = vld [vmem:[%s0 + $0x60] sm:$0xff]
  %v28 = vld [vmem:[%s0 + $0x68] sm:$0xff]
  %v29 = vld [vmem:[%s0 + $0x70] sm:$0xff]
  %v30 = vld [vmem:[%s0 + $0x78] sm:$0xff]
  %v31 = vld [vmem:[%s0 + $0x80] sm:$0xff]
  %v32 = vld [vmem:[%s0 + $0x88] sm:$0xff]
  %v33 = vld [vmem:[%s0 + $0x90] sm:$0xff]
  %v34 = vld [vmem:[%s0 + $0x98] sm:$0xff]
  %v35 = vld [vmem:[%s0 + $0xa0] sm:$0xff]
  %v36 = vld [vmem:[%s0 + $0xa8] sm:$0xff]
  %v37 = vld [vmem:[%s0 + $0xb0] sm:$0xff]
  %v38 = vld [vmem:[%s0 + $0xb8] sm:$0xff]
  %v39 = vld [vmem:[%s0 + $0xc0] sm:$0xff]
  %v40 = vld [vmem:[%s0 + $0xc8] sm:$0xff]
  %v41 = vld [vmem:[%s0 + $0xd0] sm:$0xff]
  %v42 = vld [vmem:[%s0 + $0xd8] sm:$0xff]
  %v43 = vld [vmem:[%s0 + $0xe0] sm:$0xff]
  %v44 = vld [vmem:[%s0 + $0xe8] sm:$0xff]
  %v45 = vld [vmem:[%s0 + $0xf0] sm:$0xff]
  %v46 = vld [vmem:[%s0 + $0xf8] sm:$0xff]
  %v47 = vld [vmem:[%s0 + $0x100] sm:$0xff]
  %v48 = vld [vmem:[%s0 + $0x108] sm:$0xff]
  %v49 = vld [vmem:[%s0 + $0x110] sm:$0xff]
  %v50 = vld [vmem:[%s0 + $0x118] sm:$0xff]
  %v51 = vld [vmem:[%s0 + $0x120] sm:$0xff]
  %v52 = vld [vmem:[%s0 + $0x128] sm:$0xff]
  %v53 = vld [vmem:[%s0 + $0x130] sm:$0xff]
  %v54 = vld [vmem:[%s0 + $0x138] sm:$0xff]
  %v55 = vld [vmem:[%s0 + $0x140] sm:$0xff]
  %v56 = vld [vmem:[%s0 + $0x148] sm:$0xff]
  %v57 = vld [vmem:[%s0 + $0x150] sm:$0xff]
  %v58 = vld [vmem:[%s0 + $0x158] sm:$0xff]
  %v59 = vld [vmem:[%s0 + $0x160] sm:$0xff]
  %v60 = vld [vmem:[%s0 + $0x168] sm:$0xff]
  %v61 = vld [vmem:[%s0 + $0x170] sm:$0xff]
  %v62 = vld [vmem:[%s0 + $0x178] sm:$0xff]
  %v63 = vld [vmem:[%s0 + $0x180] sm:$0xff]
  %v64 = vld [vmem:[%s0 + $0x188] sm:$0xff]
  %v65 = vld [vmem:[%s0 + $0x190] sm:$0xff]
  %v66 = vld [vmem:[%s0 + $0x198] sm:$0xff]
  %v67 = vld [vmem:[%s0 + $0x1a0] sm:$0xff]
  %v68 = vld [vmem:[%s0 + $0x1a8] sm:$0xff]
  %v69 = vld [vmem:[%s0 + $0x1b0] sm:$0xff]
  %v70 = vld [vmem:[%s0 + $0x1b8] sm:$0xff]
  %v71 = vld [vmem:[%s0 + $0x1c0] sm:$0xff]
  %v72 = vld [vmem:[%s0 + $0x1c8] sm:$0xff]
  %v73 = vld [vmem:[%s0 + $0x1d0] sm:$0xff]
  %v74 = vld [vmem:[%s0 + $0x1d8] sm:$0xff]
  %v75 = vld [vmem:[%s0 + $0x1e0] sm:$0xff]
  %v76 = vld [vmem:[%s0 + $0x1e8] sm:$0xff]
  %v77 = vld [vmem:[%s0 + $0x1f0] sm:$0xff]
  %v78 = vld [vmem:[%s0 + $0x1f8] sm:$0xff]
  %v79 = vld [vmem:[%s1] sm:$0xf]
  %v80 = vld [vmem:[%s1 + $0x4] sm:$0xf]
  %v81 = vld [vmem:[%s1 + $0x8] sm:$0xf]
  %v82 = vld [vmem:[%s1 + $0xc] sm:$0xf]
  %v83 = vld [vmem:[%s1 + $0x10] sm:$0xf]
  %v84 = vld [vmem:[%s1 + $0x14] sm:$0xf]
  %v85 = vld [vmem:[%s1 + $0x18] sm:$0xf]
  %v86 = vld [vmem:[%s1 + $0x1c] sm:$0xf]
  %v87 = vld [vmem:[%s1 + $0x20] sm:$0xf]
  %v88 = vld [vmem:[%s1 + $0x24] sm:$0xf]
  %v89 = vld [vmem:[%s1 + $0x28] sm:$0xf]
  %v90 = vld [vmem:[%s1 + $0x2c] sm:$0xf]
  %v91 = vld [vmem:[%s1 + $0x30] sm:$0xf]
  %v92 = vld [vmem:[%s1 + $0x34] sm:$0xf]
  %v93 = vld [vmem:[%s1 + $0x38] sm:$0xf]
  %v94 = vld [vmem:[%s1 + $0x3c] sm:$0xf]
  %v95 = vld [vmem:[%s1 + $0x40] sm:$0xf]
  %v96 = vld [vmem:[%s1 + $0x44] sm:$0xf]
  %v97 = vld [vmem:[%s1 + $0x48] sm:$0x3]
  %v98 = vld [vmem:[%s2] sm:$0x1]
  %v100 = vperm.slane %v98, 0
  %v166 = vunpack.c.l.b16 %v15
  %v167 = vunpack.c.h.b16 %v15
  %v168 = vunpack.c.l.b16 %v16
  %v169 = vunpack.c.h.b16 %v16
  %v170 = vunpack.c.l.b16 %v17
  %v171 = vunpack.c.h.b16 %v17
  %v172 = vunpack.c.l.b16 %v18
  %v173 = vunpack.c.h.b16 %v18
  %v174 = vunpack.c.l.b16 %v19
  %v175 = vunpack.c.h.b16 %v19
  %v176 = vunpack.c.l.b16 %v20
  %v177 = vunpack.c.h.b16 %v20
  %v178 = vunpack.c.l.b16 %v21
  %v179 = vunpack.c.h.b16 %v21
  %v180 = vunpack.c.l.b16 %v22
  %v181 = vunpack.c.h.b16 %v22
  %v182 = vunpack.c.l.b16 %v23
  %v183 = vunpack.c.h.b16 %v23
  %v184 = vunpack.c.l.b16 %v24
  %v185 = vunpack.c.h.b16 %v24
  %v186 = vunpack.c.l.b16 %v25
  %v187 = vunpack.c.h.b16 %v25
  %v188 = vunpack.c.l.b16 %v26
  %v189 = vunpack.c.h.b16 %v26
  %v190 = vunpack.c.l.b16 %v27
  %v191 = vunpack.c.h.b16 %v27
  %v192 = vunpack.c.l.b16 %v28
  %v193 = vunpack.c.h.b16 %v28
  %v194 = vunpack.c.l.b16 %v29
  %v195 = vunpack.c.h.b16 %v29
  %v196 = vunpack.c.l.b16 %v30
  %v197 = vunpack.c.h.b16 %v30
  %v198 = vunpack.c.l.b16 %v31
  %v199 = vunpack.c.h.b16 %v31
  %v200 = vunpack.c.l.b16 %v32
  %v201 = vunpack.c.h.b16 %v32
  %v202 = vunpack.c.l.b16 %v33
  %v203 = vunpack.c.h.b16 %v33
  %v204 = vunpack.c.l.b16 %v34
  %v205 = vunpack.c.h.b16 %v34
  %v206 = vunpack.c.l.b16 %v35
  %v207 = vunpack.c.h.b16 %v35
  %v208 = vunpack.c.l.b16 %v36
  %v209 = vunpack.c.h.b16 %v36
  %v210 = vunpack.c.l.b16 %v37
  %v211 = vunpack.c.h.b16 %v37
  %v212 = vunpack.c.l.b16 %v38
  %v213 = vunpack.c.h.b16 %v38
  %v214 = vunpack.c.l.b16 %v39
  %v215 = vunpack.c.h.b16 %v39
  %v216 = vunpack.c.l.b16 %v40
  %v217 = vunpack.c.h.b16 %v40
  %v218 = vunpack.c.l.b16 %v41
  %v219 = vunpack.c.h.b16 %v41
  %v220 = vunpack.c.l.b16 %v42
  %v221 = vunpack.c.h.b16 %v42
  %v222 = vunpack.c.l.b16 %v43
  %v223 = vunpack.c.h.b16 %v43
  %v224 = vunpack.c.l.b16 %v44
  %v225 = vunpack.c.h.b16 %v44
  %v226 = vunpack.c.l.b16 %v45
  %v227 = vunpack.c.h.b16 %v45
  %v228 = vunpack.c.l.b16 %v46
  %v229 = vunpack.c.h.b16 %v46
  %v230 = vunpack.c.l.b16 %v47
  %v231 = vunpack.c.h.b16 %v47
  %v232 = vunpack.c.l.b16 %v48
  %v233 = vunpack.c.h.b16 %v48
  %v234 = vunpack.c.l.b16 %v49
  %v235 = vunpack.c.h.b16 %v49
  %v236 = vunpack.c.l.b16 %v50
  %v237 = vunpack.c.h.b16 %v50
  %v238 = vunpack.c.l.b16 %v51
  %v239 = vunpack.c.h.b16 %v51
  %v240 = vunpack.c.l.b16 %v52
  %v241 = vunpack.c.h.b16 %v52
  %v242 = vunpack.c.l.b16 %v53
  %v243 = vunpack.c.h.b16 %v53
  %v244 = vunpack.c.l.b16 %v54
  %v245 = vunpack.c.h.b16 %v54
  %v246 = vunpack.c.l.b16 %v55
  %v247 = vunpack.c.h.b16 %v55
  %v248 = vunpack.c.l.b16 %v56
  %v249 = vunpack.c.h.b16 %v56
  %v250 = vunpack.c.l.b16 %v57
  %v251 = vunpack.c.h.b16 %v57
  %v252 = vunpack.c.l.b16 %v58
  %v253 = vunpack.c.h.b16 %v58
  %v254 = vunpack.c.l.b16 %v59
  %v255 = vunpack.c.h.b16 %v59
  %v256 = vunpack.c.l.b16 %v60
  %v257 = vunpack.c.h.b16 %v60
  %v258 = vunpack.c.l.b16 %v61
  %v259 = vunpack.c.h.b16 %v61
  %v260 = vunpack.c.l.b16 %v62
  %v261 = vunpack.c.h.b16 %v62
  %v262 = vunpack.c.l.b16 %v63
  %v263 = vunpack.c.h.b16 %v63
  %v264 = vunpack.c.l.b16 %v64
  %v265 = vunpack.c.h.b16 %v64
  %v266 = vunpack.c.l.b16 %v65
  %v267 = vunpack.c.h.b16 %v65
  %v268 = vunpack.c.l.b16 %v66
  %v269 = vunpack.c.h.b16 %v66
  %v270 = vunpack.c.l.b16 %v67
  %v271 = vunpack.c.h.b16 %v67
  %v272 = vunpack.c.l.b16 %v68
  %v273 = vunpack.c.h.b16 %v68
  %v274 = vunpack.c.l.b16 %v69
  %v275 = vunpack.c.h.b16 %v69
  %v276 = vunpack.c.l.b16 %v70
  %v277 = vunpack.c.h.b16 %v70
  %v278 = vunpack.c.l.b16 %v71
  %v279 = vunpack.c.h.b16 %v71
  %v280 = vunpack.c.l.b16 %v72
  %v281 = vunpack.c.h.b16 %v72
  %v282 = vunpack.c.l.b16 %v73
  %v283 = vunpack.c.h.b16 %v73
  %v284 = vunpack.c.l.b16 %v74
  %v285 = vunpack.c.h.b16 %v74
  %v286 = vunpack.c.l.b16 %v75
  %v287 = vunpack.c.h.b16 %v75
  %v288 = vunpack.c.l.b16 %v76
  %v289 = vunpack.c.h.b16 %v76
  %v290 = vunpack.c.l.b16 %v77
  %v291 = vunpack.c.h.b16 %v77
  %v292 = vunpack.c.l.b16 %v78
  %v293 = vunpack.c.h.b16 %v78
  %v294 = vpack.c.b16 %v168, %v166
  %v295 = vpack.c.b16 %v169, %v167
  %v296 = vpack.c.b16 %v172, %v170
  %v297 = vpack.c.b16 %v173, %v171
  %v298 = vpack.c.b16 %v176, %v174
  %v299 = vpack.c.b16 %v177, %v175
  %v300 = vpack.c.b16 %v180, %v178
  %v301 = vpack.c.b16 %v181, %v179
  %v302 = vpack.c.b16 %v184, %v182
  %v303 = vpack.c.b16 %v185, %v183
  %v304 = vpack.c.b16 %v188, %v186
  %v305 = vpack.c.b16 %v189, %v187
  %v306 = vpack.c.b16 %v192, %v190
  %v307 = vpack.c.b16 %v193, %v191
  %v308 = vpack.c.b16 %v196, %v194
  %v309 = vpack.c.b16 %v197, %v195
  %v310 = vpack.c.b16 %v200, %v198
  %v311 = vpack.c.b16 %v201, %v199
  %v312 = vpack.c.b16 %v204, %v202
  %v313 = vpack.c.b16 %v205, %v203
  %v314 = vpack.c.b16 %v208, %v206
  %v315 = vpack.c.b16 %v209, %v207
  %v316 = vpack.c.b16 %v212, %v210
  %v317 = vpack.c.b16 %v213, %v211
  %v318 = vpack.c.b16 %v216, %v214
  %v319 = vpack.c.b16 %v217, %v215
  %v320 = vpack.c.b16 %v220, %v218
  %v321 = vpack.c.b16 %v221, %v219
  %v322 = vpack.c.b16 %v224, %v222
  %v323 = vpack.c.b16 %v225, %v223
  %v324 = vpack.c.b16 %v228, %v226
  %v325 = vpack.c.b16 %v229, %v227
  %v326 = vpack.c.b16 %v232, %v230
  %v327 = vpack.c.b16 %v233, %v231
  %v328 = vpack.c.b16 %v236, %v234
  %v329 = vpack.c.b16 %v237, %v235
  %v330 = vpack.c.b16 %v240, %v238
  %v331 = vpack.c.b16 %v241, %v239
  %v332 = vpack.c.b16 %v244, %v242
  %v333 = vpack.c.b16 %v245, %v243
  %v334 = vpack.c.b16 %v248, %v246
  %v335 = vpack.c.b16 %v249, %v247
  %v336 = vpack.c.b16 %v252, %v250
  %v337 = vpack.c.b16 %v253, %v251
  %v338 = vpack.c.b16 %v256, %v254
  %v339 = vpack.c.b16 %v257, %v255
  %v340 = vpack.c.b16 %v260, %v258
  %v341 = vpack.c.b16 %v261, %v259
  %v342 = vpack.c.b16 %v264, %v262
  %v343 = vpack.c.b16 %v265, %v263
  %v344 = vpack.c.b16 %v268, %v266
  %v345 = vpack.c.b16 %v269, %v267
  %v346 = vpack.c.b16 %v272, %v270
  %v347 = vpack.c.b16 %v273, %v271
  %v348 = vpack.c.b16 %v276, %v274
  %v349 = vpack.c.b16 %v277, %v275
  %v350 = vpack.c.b16 %v280, %v278
  %v351 = vpack.c.b16 %v281, %v279
  %v352 = vpack.c.b16 %v284, %v282
  %v353 = vpack.c.b16 %v285, %v283
  %v354 = vpack.c.b16 %v288, %v286
  %v355 = vpack.c.b16 %v289, %v287
  %v356 = vpack.c.b16 %v292, %v290
  %v357 = vpack.c.b16 %v293, %v291
  %v409 = vunpack.c.l.b16 %v79
  %v410 = vunpack.c.l.b16 %v80
  %v411 = vunpack.c.l.b16 %v81
  %v412 = vunpack.c.l.b16 %v82
  %v413 = vunpack.c.l.b16 %v83
  %v414 = vunpack.c.l.b16 %v84
  %v415 = vunpack.c.l.b16 %v85
  %v416 = vunpack.c.l.b16 %v86
  %v417 = vunpack.c.l.b16 %v87
  %v418 = vunpack.c.l.b16 %v88
  %v419 = vunpack.c.l.b16 %v89
  %v420 = vunpack.c.l.b16 %v90
  %v421 = vunpack.c.l.b16 %v91
  %v422 = vunpack.c.l.b16 %v92
  %v423 = vunpack.c.l.b16 %v93
  %v424 = vunpack.c.l.b16 %v94
  %v425 = vunpack.c.l.b16 %v95
  %v426 = vunpack.c.l.b16 %v96
  %v427 = vunpack.c.l.b16 %v97
  %v428 = vpack.c.b16 %v410, %v409
  %v429 = vpack.c.b16 %v412, %v411
  %v430 = vpack.c.b16 %v414, %v413
  %v431 = vpack.c.b16 %v416, %v415
  %v432 = vpack.c.b16 %v418, %v417
  %v433 = vpack.c.b16 %v420, %v419
  %v434 = vpack.c.b16 %v422, %v421
  %v435 = vpack.c.b16 %v424, %v423
  %v436 = vpack.c.b16 %v426, %v425
  %v437 = vpack.c.b16 %v427, %v427
  %vm447 = vcmask 154624
  %v449 = vsel %vm447, %v295, 0
  %v452 = vsel %vm447, %v297, 0
  %v455 = vsel %vm447, %v299, 0
  %v458 = vsel %vm447, %v301, 0
  %v461 = vsel %vm447, %v303, 0
  %v464 = vsel %vm447, %v305, 0
  %v467 = vsel %vm447, %v307, 0
  %v470 = vsel %vm447, %v309, 0
  %v473 = vsel %vm447, %v311, 0
  %v476 = vsel %vm447, %v313, 0
  %v479 = vsel %vm447, %v315, 0
  %v482 = vsel %vm447, %v317, 0
  %v485 = vsel %vm447, %v319, 0
  %v488 = vsel %vm447, %v321, 0
  %v491 = vsel %vm447, %v323, 0
  %v494 = vsel %vm447, %v325, 0
  %v497 = vsel %vm447, %v327, 0
  %v500 = vsel %vm447, %v329, 0
  %v503 = vsel %vm447, %v331, 0
  %v506 = vsel %vm447, %v333, 0
  %v509 = vsel %vm447, %v335, 0
  %v512 = vsel %vm447, %v337, 0
  %v515 = vsel %vm447, %v339, 0
  %v518 = vsel %vm447, %v341, 0
  %v521 = vsel %vm447, %v343, 0
  %v524 = vsel %vm447, %v345, 0
  %v527 = vsel %vm447, %v347, 0
  %v530 = vsel %vm447, %v349, 0
  %v533 = vsel %vm447, %v351, 0
  %v536 = vsel %vm447, %v353, 0
  %v539 = vsel %vm447, %v355, 0
  %v542 = vsel %vm447, %v357, 0
  %vm544 = vcmask 1040384
  %vm545 = vcmask 1041408
  %v546 = vsel %vm544, 4294967295, 65535
  %v547 = vsel %vm545, %v546, 0
  %v549 = vand.u32 %v437, %v547
  %551 = vmatpush.bf16.msra.mxu0 %v435
  %552 = vmatpush.bf16.msra.mxu0 %v434
  %553 = vmatpush.bf16.msra.mxu0 %v433
  %554 = vmatpush.bf16.msra.mxu0 %v432
  %555 = vmatpush.bf16.msra.mxu0 %v431
  %556 = vmatpush.bf16.msra.mxu0 %v430
  %557 = vmatpush.bf16.msra.mxu0 %v429
  %558 = vmatpush.bf16.msra.mxu0 %v428
  %559 = vmatmul.bf16.gmra.mxu0 %v294
  %v560 = vpop.f32.mrf.mxu0
  %v561 = vadd.f32 %v100, %v560
  %v562 = vpop.f32.mrf.mxu0
  %v563 = vadd.f32 %v100, %v562
  %564 = vmatmul.bf16.gmra.mxu0 %v296
  %v565 = vpop.f32.mrf.mxu0
  %v566 = vadd.f32 %v100, %v565
  %v567 = vpop.f32.mrf.mxu0
  %v568 = vadd.f32 %v100, %v567
  %569 = vmatmul.bf16.gmra.mxu0 %v298
  %v570 = vpop.f32.mrf.mxu0
  %v571 = vadd.f32 %v100, %v570
  %v572 = vpop.f32.mrf.mxu0
  %v573 = vadd.f32 %v100, %v572
  %574 = vmatmul.bf16.gmra.mxu0 %v300
  %v575 = vpop.f32.mrf.mxu0
  %v576 = vadd.f32 %v100, %v575
  %v577 = vpop.f32.mrf.mxu0
  %v578 = vadd.f32 %v100, %v577
  %579 = vmatmul.bf16.gmra.mxu0 %v302
  %v580 = vpop.f32.mrf.mxu0
  %v581 = vadd.f32 %v100, %v580
  %v582 = vpop.f32.mrf.mxu0
  %v583 = vadd.f32 %v100, %v582
  %584 = vmatmul.bf16.gmra.mxu0 %v304
  %v585 = vpop.f32.mrf.mxu0
  %v586 = vadd.f32 %v100, %v585
  %v587 = vpop.f32.mrf.mxu0
  %v588 = vadd.f32 %v100, %v587
  %589 = vmatmul.bf16.gmra.mxu0 %v306
  %v590 = vpop.f32.mrf.mxu0
  %v591 = vadd.f32 %v100, %v590
  %v592 = vpop.f32.mrf.mxu0
  %v593 = vadd.f32 %v100, %v592
  %594 = vmatmul.bf16.gmra.mxu0 %v308
  %v595 = vpop.f32.mrf.mxu0
  %v596 = vadd.f32 %v100, %v595
  %v597 = vpop.f32.mrf.mxu0
  %v598 = vadd.f32 %v100, %v597
  %599 = vmatmul.bf16.gmra.mxu0 %v310
  %v600 = vpop.f32.mrf.mxu0
  %v601 = vadd.f32 %v100, %v600
  %v602 = vpop.f32.mrf.mxu0
  %v603 = vadd.f32 %v100, %v602
  %604 = vmatmul.bf16.gmra.mxu0 %v312
  %v605 = vpop.f32.mrf.mxu0
  %v606 = vadd.f32 %v100, %v605
  %v607 = vpop.f32.mrf.mxu0
  %v608 = vadd.f32 %v100, %v607
  %609 = vmatmul.bf16.gmra.mxu0 %v314
  %v610 = vpop.f32.mrf.mxu0
  %v611 = vadd.f32 %v100, %v610
  %v612 = vpop.f32.mrf.mxu0
  %v613 = vadd.f32 %v100, %v612
  %614 = vmatmul.bf16.gmra.mxu0 %v316
  %v615 = vpop.f32.mrf.mxu0
  %v616 = vadd.f32 %v100, %v615
  %v617 = vpop.f32.mrf.mxu0
  %v618 = vadd.f32 %v100, %v617
  %619 = vmatmul.bf16.gmra.mxu0 %v318
  %v620 = vpop.f32.mrf.mxu0
  %v621 = vadd.f32 %v100, %v620
  %v622 = vpop.f32.mrf.mxu0
  %v623 = vadd.f32 %v100, %v622
  %624 = vmatmul.bf16.gmra.mxu0 %v320
  %v625 = vpop.f32.mrf.mxu0
  %v626 = vadd.f32 %v100, %v625
  %v627 = vpop.f32.mrf.mxu0
  %v628 = vadd.f32 %v100, %v627
  %629 = vmatmul.bf16.gmra.mxu0 %v322
  %v630 = vpop.f32.mrf.mxu0
  %v631 = vadd.f32 %v100, %v630
  %v632 = vpop.f32.mrf.mxu0
  %v633 = vadd.f32 %v100, %v632
  %634 = vmatmul.bf16.gmra.mxu0 %v324
  %v635 = vpop.f32.mrf.mxu0
  %v636 = vadd.f32 %v100, %v635
  %v637 = vpop.f32.mrf.mxu0
  %v638 = vadd.f32 %v100, %v637
  %639 = vmatmul.bf16.gmra.mxu0 %v326
  %v640 = vpop.f32.mrf.mxu0
  %v641 = vadd.f32 %v100, %v640
  %v642 = vpop.f32.mrf.mxu0
  %v643 = vadd.f32 %v100, %v642
  %644 = vmatmul.bf16.gmra.mxu0 %v328
  %v645 = vpop.f32.mrf.mxu0
  %v646 = vadd.f32 %v100, %v645
  %v647 = vpop.f32.mrf.mxu0
  %v648 = vadd.f32 %v100, %v647
  %649 = vmatmul.bf16.gmra.mxu0 %v330
  %v650 = vpop.f32.mrf.mxu0
  %v651 = vadd.f32 %v100, %v650
  %v652 = vpop.f32.mrf.mxu0
  %v653 = vadd.f32 %v100, %v652
  %654 = vmatmul.bf16.gmra.mxu0 %v332
  %v655 = vpop.f32.mrf.mxu0
  %v656 = vadd.f32 %v100, %v655
  %v657 = vpop.f32.mrf.mxu0
  %v658 = vadd.f32 %v100, %v657
  %659 = vmatmul.bf16.gmra.mxu0 %v334
  %v660 = vpop.f32.mrf.mxu0
  %v661 = vadd.f32 %v100, %v660
  %v662 = vpop.f32.mrf.mxu0
  %v663 = vadd.f32 %v100, %v662
  %664 = vmatmul.bf16.gmra.mxu0 %v336
  %v665 = vpop.f32.mrf.mxu0
  %v666 = vadd.f32 %v100, %v665
  %v667 = vpop.f32.mrf.mxu0
  %v668 = vadd.f32 %v100, %v667
  %669 = vmatmul.bf16.gmra.mxu0 %v338
  %v670 = vpop.f32.mrf.mxu0
  %v671 = vadd.f32 %v100, %v670
  %v672 = vpop.f32.mrf.mxu0
  %v673 = vadd.f32 %v100, %v672
  %674 = vmatmul.bf16.gmra.mxu0 %v340
  %v675 = vpop.f32.mrf.mxu0
  %v676 = vadd.f32 %v100, %v675
  %v677 = vpop.f32.mrf.mxu0
  %v678 = vadd.f32 %v100, %v677
  %679 = vmatmul.bf16.gmra.mxu0 %v342
  %v680 = vpop.f32.mrf.mxu0
  %v681 = vadd.f32 %v100, %v680
  %v682 = vpop.f32.mrf.mxu0
  %v683 = vadd.f32 %v100, %v682
  %684 = vmatmul.bf16.gmra.mxu0 %v344
  %v685 = vpop.f32.mrf.mxu0
  %v686 = vadd.f32 %v100, %v685
  %v687 = vpop.f32.mrf.mxu0
  %v688 = vadd.f32 %v100, %v687
  %689 = vmatmul.bf16.gmra.mxu0 %v346
  %v690 = vpop.f32.mrf.mxu0
  %v691 = vadd.f32 %v100, %v690
  %v692 = vpop.f32.mrf.mxu0
  %v693 = vadd.f32 %v100, %v692
  %694 = vmatmul.bf16.gmra.mxu0 %v348
  %v695 = vpop.f32.mrf.mxu0
  %v696 = vadd.f32 %v100, %v695
  %v697 = vpop.f32.mrf.mxu0
  %v698 = vadd.f32 %v100, %v697
  %699 = vmatmul.bf16.gmra.mxu0 %v350
  %v700 = vpop.f32.mrf.mxu0
  %v701 = vadd.f32 %v100, %v700
  %v702 = vpop.f32.mrf.mxu0
  %v703 = vadd.f32 %v100, %v702
  %704 = vmatmul.bf16.gmra.mxu0 %v352
  %v705 = vpop.f32.mrf.mxu0
  %v706 = vadd.f32 %v100, %v705
  %v707 = vpop.f32.mrf.mxu0
  %v708 = vadd.f32 %v100, %v707
  %709 = vmatmul.bf16.gmra.mxu0 %v354
  %v710 = vpop.f32.mrf.mxu0
  %v711 = vadd.f32 %v100, %v710
  %v712 = vpop.f32.mrf.mxu0
  %v713 = vadd.f32 %v100, %v712
  %714 = vmatmul.bf16.gmra.mxu0 %v356
  %v715 = vpop.f32.mrf.mxu0
  %v716 = vadd.f32 %v100, %v715
  %v717 = vpop.f32.mrf.mxu0
  %v718 = vadd.f32 %v100, %v717
  %719 = vdwg.mxu0
  %720 = vmatpush.bf16.msra.mxu0 0
  %721 = vmatpush.bf16.msra.mxu0 0
  %722 = vmatpush.bf16.msra.mxu0 0
  %723 = vmatpush.bf16.msra.mxu0 0
  %724 = vmatpush.bf16.msra.mxu0 0
  %725 = vmatpush.bf16.msra.mxu0 0
  %726 = vmatpush.bf16.msra.mxu0 %v549
  %727 = vmatpush.bf16.msra.mxu0 %v436
  %728 = vmatmul.bf16.gmra.mxu0 %v449
  %v729 = vpop.f32.mrf.mxu0
  %v730 = vadd.f32 %v561, %v729
  %v731 = vpop.f32.mrf.mxu0
  %v732 = vadd.f32 %v563, %v731
  %733 = vmatmul.bf16.gmra.mxu0 %v452
  %v734 = vpop.f32.mrf.mxu0
  %v735 = vadd.f32 %v566, %v734
  %v736 = vpop.f32.mrf.mxu0
  %v737 = vadd.f32 %v568, %v736
  %738 = vmatmul.bf16.gmra.mxu0 %v455
  %v739 = vpop.f32.mrf.mxu0
  %v740 = vadd.f32 %v571, %v739
  %v741 = vpop.f32.mrf.mxu0
  %v742 = vadd.f32 %v573, %v741
  %743 = vmatmul.bf16.gmra.mxu0 %v458
  %v744 = vpop.f32.mrf.mxu0
  %v745 = vadd.f32 %v576, %v744
  %v746 = vpop.f32.mrf.mxu0
  %v747 = vadd.f32 %v578, %v746
  %748 = vmatmul.bf16.gmra.mxu0 %v461
  %v749 = vpop.f32.mrf.mxu0
  %v750 = vadd.f32 %v581, %v749
  %v751 = vpop.f32.mrf.mxu0
  %v752 = vadd.f32 %v583, %v751
  %753 = vmatmul.bf16.gmra.mxu0 %v464
  %v754 = vpop.f32.mrf.mxu0
  %v755 = vadd.f32 %v586, %v754
  %v756 = vpop.f32.mrf.mxu0
  %v757 = vadd.f32 %v588, %v756
  %758 = vmatmul.bf16.gmra.mxu0 %v467
  %v759 = vpop.f32.mrf.mxu0
  %v760 = vadd.f32 %v591, %v759
  %v761 = vpop.f32.mrf.mxu0
  %v762 = vadd.f32 %v593, %v761
  %763 = vmatmul.bf16.gmra.mxu0 %v470
  %v764 = vpop.f32.mrf.mxu0
  %v765 = vadd.f32 %v596, %v764
  %v766 = vpop.f32.mrf.mxu0
  %v767 = vadd.f32 %v598, %v766
  %768 = vmatmul.bf16.gmra.mxu0 %v473
  %v769 = vpop.f32.mrf.mxu0
  %v770 = vadd.f32 %v601, %v769
  %v771 = vpop.f32.mrf.mxu0
  %v772 = vadd.f32 %v603, %v771
  %773 = vmatmul.bf16.gmra.mxu0 %v476
  %v774 = vpop.f32.mrf.mxu0
  %v775 = vadd.f32 %v606, %v774
  %v776 = vpop.f32.mrf.mxu0
  %v777 = vadd.f32 %v608, %v776
  %778 = vmatmul.bf16.gmra.mxu0 %v479
  %v779 = vpop.f32.mrf.mxu0
  %v780 = vadd.f32 %v611, %v779
  %v781 = vpop.f32.mrf.mxu0
  %v782 = vadd.f32 %v613, %v781
  %783 = vmatmul.bf16.gmra.mxu0 %v482
  %v784 = vpop.f32.mrf.mxu0
  %v785 = vadd.f32 %v616, %v784
  %v786 = vpop.f32.mrf.mxu0
  %v787 = vadd.f32 %v618, %v786
  %788 = vmatmul.bf16.gmra.mxu0 %v485
  %v789 = vpop.f32.mrf.mxu0
  %v790 = vadd.f32 %v621, %v789
  %v791 = vpop.f32.mrf.mxu0
  %v792 = vadd.f32 %v623, %v791
  %793 = vmatmul.bf16.gmra.mxu0 %v488
  %v794 = vpop.f32.mrf.mxu0
  %v795 = vadd.f32 %v626, %v794
  %v796 = vpop.f32.mrf.mxu0
  %v797 = vadd.f32 %v628, %v796
  %798 = vmatmul.bf16.gmra.mxu0 %v491
  %v799 = vpop.f32.mrf.mxu0
  %v800 = vadd.f32 %v631, %v799
  %v801 = vpop.f32.mrf.mxu0
  %v802 = vadd.f32 %v633, %v801
  %803 = vmatmul.bf16.gmra.mxu0 %v494
  %v804 = vpop.f32.mrf.mxu0
  %v805 = vadd.f32 %v636, %v804
  %v806 = vpop.f32.mrf.mxu0
  %v807 = vadd.f32 %v638, %v806
  %808 = vmatmul.bf16.gmra.mxu0 %v497
  %v809 = vpop.f32.mrf.mxu0
  %v810 = vadd.f32 %v641, %v809
  %v811 = vpop.f32.mrf.mxu0
  %v812 = vadd.f32 %v643, %v811
  %813 = vmatmul.bf16.gmra.mxu0 %v500
  %v814 = vpop.f32.mrf.mxu0
  %v815 = vadd.f32 %v646, %v814
  %v816 = vpop.f32.mrf.mxu0
  %v817 = vadd.f32 %v648, %v816
  %818 = vmatmul.bf16.gmra.mxu0 %v503
  %v819 = vpop.f32.mrf.mxu0
  %v820 = vadd.f32 %v651, %v819
  %v821 = vpop.f32.mrf.mxu0
  %v822 = vadd.f32 %v653, %v821
  %823 = vmatmul.bf16.gmra.mxu0 %v506
  %v824 = vpop.f32.mrf.mxu0
  %v825 = vadd.f32 %v656, %v824
  %v826 = vpop.f32.mrf.mxu0
  %v827 = vadd.f32 %v658, %v826
  %828 = vmatmul.bf16.gmra.mxu0 %v509
  %v829 = vpop.f32.mrf.mxu0
  %v830 = vadd.f32 %v661, %v829
  %v831 = vpop.f32.mrf.mxu0
  %v832 = vadd.f32 %v663, %v831
  %833 = vmatmul.bf16.gmra.mxu0 %v512
  %v834 = vpop.f32.mrf.mxu0
  %v835 = vadd.f32 %v666, %v834
  %v836 = vpop.f32.mrf.mxu0
  %v837 = vadd.f32 %v668, %v836
  %838 = vmatmul.bf16.gmra.mxu0 %v515
  %v839 = vpop.f32.mrf.mxu0
  %v840 = vadd.f32 %v671, %v839
  %v841 = vpop.f32.mrf.mxu0
  %v842 = vadd.f32 %v673, %v841
  %843 = vmatmul.bf16.gmra.mxu0 %v518
  %v844 = vpop.f32.mrf.mxu0
  %v845 = vadd.f32 %v676, %v844
  %v846 = vpop.f32.mrf.mxu0
  %v847 = vadd.f32 %v678, %v846
  %848 = vmatmul.bf16.gmra.mxu0 %v521
  %v849 = vpop.f32.mrf.mxu0
  %v850 = vadd.f32 %v681, %v849
  %v851 = vpop.f32.mrf.mxu0
  %v852 = vadd.f32 %v683, %v851
  %853 = vmatmul.bf16.gmra.mxu0 %v524
  %v854 = vpop.f32.mrf.mxu0
  %v855 = vadd.f32 %v686, %v854
  %v856 = vpop.f32.mrf.mxu0
  %v857 = vadd.f32 %v688, %v856
  %858 = vmatmul.bf16.gmra.mxu0 %v527
  %v859 = vpop.f32.mrf.mxu0
  %v860 = vadd.f32 %v691, %v859
  %v861 = vpop.f32.mrf.mxu0
  %v862 = vadd.f32 %v693, %v861
  %863 = vmatmul.bf16.gmra.mxu0 %v530
  %v864 = vpop.f32.mrf.mxu0
  %v865 = vadd.f32 %v696, %v864
  %v866 = vpop.f32.mrf.mxu0
  %v867 = vadd.f32 %v698, %v866
  %868 = vmatmul.bf16.gmra.mxu0 %v533
  %v869 = vpop.f32.mrf.mxu0
  %v870 = vadd.f32 %v701, %v869
  %v871 = vpop.f32.mrf.mxu0
  %v872 = vadd.f32 %v703, %v871
  %873 = vmatmul.bf16.gmra.mxu0 %v536
  %v874 = vpop.f32.mrf.mxu0
  %v875 = vadd.f32 %v706, %v874
  %v876 = vpop.f32.mrf.mxu0
  %v877 = vadd.f32 %v708, %v876
  %878 = vmatmul.bf16.gmra.mxu0 %v539
  %v879 = vpop.f32.mrf.mxu0
  %v880 = vadd.f32 %v711, %v879
  %v881 = vpop.f32.mrf.mxu0
  %v882 = vadd.f32 %v713, %v881
  %883 = vmatmul.bf16.gmra.mxu0 %v542
  %v884 = vpop.f32.mrf.mxu0
  %v885 = vadd.f32 %v716, %v884
  %v886 = vpop.f32.mrf.mxu0
  %v887 = vadd.f32 %v718, %v886
  %888 = vdwg.mxu0
  %v889 = vpack.c.bf16 %v730, %v730
  %v890 = vpack.c.bf16 %v732, %v732
  %v891 = vpack.c.bf16 %v735, %v735
  %v892 = vpack.c.bf16 %v737, %v737
  %v893 = vpack.c.bf16 %v740, %v740
  %v894 = vpack.c.bf16 %v742, %v742
  %v895 = vpack.c.bf16 %v745, %v745
  %v896 = vpack.c.bf16 %v747, %v747
  %v897 = vpack.c.bf16 %v750, %v750
  %v898 = vpack.c.bf16 %v752, %v752
  %v899 = vpack.c.bf16 %v755, %v755
  %v900 = vpack.c.bf16 %v757, %v757
  %v901 = vpack.c.bf16 %v760, %v760
  %v902 = vpack.c.bf16 %v762, %v762
  %v903 = vpack.c.bf16 %v765, %v765
  %v904 = vpack.c.bf16 %v767, %v767
  %v905 = vpack.c.bf16 %v770, %v770
  %v906 = vpack.c.bf16 %v772, %v772
  %v907 = vpack.c.bf16 %v775, %v775
  %v908 = vpack.c.bf16 %v777, %v777
  %v909 = vpack.c.bf16 %v780, %v780
  %v910 = vpack.c.bf16 %v782, %v782
  %v911 = vpack.c.bf16 %v785, %v785
  %v912 = vpack.c.bf16 %v787, %v787
  %v913 = vpack.c.bf16 %v790, %v790
  %v914 = vpack.c.bf16 %v792, %v792
  %v915 = vpack.c.bf16 %v795, %v795
  %v916 = vpack.c.bf16 %v797, %v797
  %v917 = vpack.c.bf16 %v800, %v800
  %v918 = vpack.c.bf16 %v802, %v802
  %v919 = vpack.c.bf16 %v805, %v805
  %v920 = vpack.c.bf16 %v807, %v807
  %v921 = vpack.c.bf16 %v810, %v810
  %v922 = vpack.c.bf16 %v812, %v812
  %v923 = vpack.c.bf16 %v815, %v815
  %v924 = vpack.c.bf16 %v817, %v817
  %v925 = vpack.c.bf16 %v820, %v820
  %v926 = vpack.c.bf16 %v822, %v822
  %v927 = vpack.c.bf16 %v825, %v825
  %v928 = vpack.c.bf16 %v827, %v827
  %v929 = vpack.c.bf16 %v830, %v830
  %v930 = vpack.c.bf16 %v832, %v832
  %v931 = vpack.c.bf16 %v835, %v835
  %v932 = vpack.c.bf16 %v837, %v837
  %v933 = vpack.c.bf16 %v840, %v840
  %v934 = vpack.c.bf16 %v842, %v842
  %v935 = vpack.c.bf16 %v845, %v845
  %v936 = vpack.c.bf16 %v847, %v847
  %v937 = vpack.c.bf16 %v850, %v850
  %v938 = vpack.c.bf16 %v852, %v852
  %v939 = vpack.c.bf16 %v855, %v855
  %v940 = vpack.c.bf16 %v857, %v857
  %v941 = vpack.c.bf16 %v860, %v860
  %v942 = vpack.c.bf16 %v862, %v862
  %v943 = vpack.c.bf16 %v865, %v865
  %v944 = vpack.c.bf16 %v867, %v867
  %v945 = vpack.c.bf16 %v870, %v870
  %v946 = vpack.c.bf16 %v872, %v872
  %v947 = vpack.c.bf16 %v875, %v875
  %v948 = vpack.c.bf16 %v877, %v877
  %v949 = vpack.c.bf16 %v880, %v880
  %v950 = vpack.c.bf16 %v882, %v882
  %v951 = vpack.c.bf16 %v885, %v885
  %v952 = vpack.c.bf16 %v887, %v887
  %vm953 = vcmask 125952
  %954 = vst.msk [vmem:[%s3] sm:$0xf] %vm953, %v889
  %955 = vst.msk [vmem:[%s3 + $0x4] sm:$0xf] %vm953, %v890
  %956 = vst.msk [vmem:[%s3 + $0x8] sm:$0xf] %vm953, %v891
  %957 = vst.msk [vmem:[%s3 + $0xc] sm:$0xf] %vm953, %v892
  %958 = vst.msk [vmem:[%s3 + $0x10] sm:$0xf] %vm953, %v893
  %959 = vst.msk [vmem:[%s3 + $0x14] sm:$0xf] %vm953, %v894
  %960 = vst.msk [vmem:[%s3 + $0x18] sm:$0xf] %vm953, %v895
  %961 = vst.msk [vmem:[%s3 + $0x1c] sm:$0xf] %vm953, %v896
  %962 = vst.msk [vmem:[%s3 + $0x20] sm:$0xf] %vm953, %v897
  %963 = vst.msk [vmem:[%s3 + $0x24] sm:$0xf] %vm953, %v898
  %964 = vst.msk [vmem:[%s3 + $0x28] sm:$0xf] %vm953, %v899
  %965 = vst.msk [vmem:[%s3 + $0x2c] sm:$0xf] %vm953, %v900
  %966 = vst.msk [vmem:[%s3 + $0x30] sm:$0xf] %vm953, %v901
  %967 = vst.msk [vmem:[%s3 + $0x34] sm:$0xf] %vm953, %v902
  %968 = vst.msk [vmem:[%s3 + $0x38] sm:$0xf] %vm953, %v903
  %969 = vst.msk [vmem:[%s3 + $0x3c] sm:$0xf] %vm953, %v904
  %970 = vst.msk [vmem:[%s3 + $0x40] sm:$0xf] %vm953, %v905
  %971 = vst.msk [vmem:[%s3 + $0x44] sm:$0xf] %vm953, %v906
  %972 = vst.msk [vmem:[%s3 + $0x48] sm:$0xf] %vm953, %v907
  %973 = vst.msk [vmem:[%s3 + $0x4c] sm:$0xf] %vm953, %v908
  %974 = vst.msk [vmem:[%s3 + $0x50] sm:$0xf] %vm953, %v909
  %975 = vst.msk [vmem:[%s3 + $0x54] sm:$0xf] %vm953, %v910
  %976 = vst.msk [vmem:[%s3 + $0x58] sm:$0xf] %vm953, %v911
  %977 = vst.msk [vmem:[%s3 + $0x5c] sm:$0xf] %vm953, %v912
  %978 = vst.msk [vmem:[%s3 + $0x60] sm:$0xf] %vm953, %v913
  %979 = vst.msk [vmem:[%s3 + $0x64] sm:$0xf] %vm953, %v914
  %980 = vst.msk [vmem:[%s3 + $0x68] sm:$0xf] %vm953, %v915
  %981 = vst.msk [vmem:[%s3 + $0x6c] sm:$0xf] %vm953, %v916
  %982 = vst.msk [vmem:[%s3 + $0x70] sm:$0xf] %vm953, %v917
  %983 = vst.msk [vmem:[%s3 + $0x74] sm:$0xf] %vm953, %v918
  %984 = vst.msk [vmem:[%s3 + $0x78] sm:$0xf] %vm953, %v919
  %985 = vst.msk [vmem:[%s3 + $0x7c] sm:$0xf] %vm953, %v920
  %986 = vst.msk [vmem:[%s3 + $0x80] sm:$0xf] %vm953, %v921
  %987 = vst.msk [vmem:[%s3 + $0x84] sm:$0xf] %vm953, %v922
  %988 = vst.msk [vmem:[%s3 + $0x88] sm:$0xf] %vm953, %v923
  %989 = vst.msk [vmem:[%s3 + $0x8c] sm:$0xf] %vm953, %v924
  %990 = vst.msk [vmem:[%s3 + $0x90] sm:$0xf] %vm953, %v925
  %991 = vst.msk [vmem:[%s3 + $0x94] sm:$0xf] %vm953, %v926
  %992 = vst.msk [vmem:[%s3 + $0x98] sm:$0xf] %vm953, %v927
  %993 = vst.msk [vmem:[%s3 + $0x9c] sm:$0xf] %vm953, %v928
  %994 = vst.msk [vmem:[%s3 + $0xa0] sm:$0xf] %vm953, %v929
  %995 = vst.msk [vmem:[%s3 + $0xa4] sm:$0xf] %vm953, %v930
  %996 = vst.msk [vmem:[%s3 + $0xa8] sm:$0xf] %vm953, %v931
  %997 = vst.msk [vmem:[%s3 + $0xac] sm:$0xf] %vm953, %v932
  %998 = vst.msk [vmem:[%s3 + $0xb0] sm:$0xf] %vm953, %v933
  %999 = vst.msk [vmem:[%s3 + $0xb4] sm:$0xf] %vm953, %v934
  %1000 = vst.msk [vmem:[%s3 + $0xb8] sm:$0xf] %vm953, %v935
  %1001 = vst.msk [vmem:[%s3 + $0xbc] sm:$0xf] %vm953, %v936
  %1002 = vst.msk [vmem:[%s3 + $0xc0] sm:$0xf] %vm953, %v937
  %1003 = vst.msk [vmem:[%s3 + $0xc4] sm:$0xf] %vm953, %v938
  %1004 = vst.msk [vmem:[%s3 + $0xc8] sm:$0xf] %vm953, %v939
  %1005 = vst.msk [vmem:[%s3 + $0xcc] sm:$0xf] %vm953, %v940
  %1006 = vst.msk [vmem:[%s3 + $0xd0] sm:$0xf] %vm953, %v941
  %1007 = vst.msk [vmem:[%s3 + $0xd4] sm:$0xf] %vm953, %v942
  %1008 = vst.msk [vmem:[%s3 + $0xd8] sm:$0xf] %vm953, %v943
  %1009 = vst.msk [vmem:[%s3 + $0xdc] sm:$0xf] %vm953, %v944
  %1010 = vst.msk [vmem:[%s3 + $0xe0] sm:$0xf] %vm953, %v945
  %1011 = vst.msk [vmem:[%s3 + $0xe4] sm:$0xf] %vm953, %v946
  %1012 = vst.msk [vmem:[%s3 + $0xe8] sm:$0xf] %vm953, %v947
  %1013 = vst.msk [vmem:[%s3 + $0xec] sm:$0xf] %vm953, %v948
  %1014 = vst.msk [vmem:[%s3 + $0xf0] sm:$0xf] %vm953, %v949
  %1015 = vst.msk [vmem:[%s3 + $0xf4] sm:$0xf] %vm953, %v950
  %1016 = vst.msk [vmem:[%s3 + $0xf8] sm:$0xf] %vm953, %v951
  %1017 = vst.msk [vmem:[%s3 + $0xfc] sm:$0xf] %vm953, %v952
  // Predicated region
  $region14: #{gmask_binary_list_forward.2} parent=0 // pred_check
    _
  $region15: #{gmask_binary_list_forward.2} parent=0 // pred_check_branch
    %1019 = sbr.rel (0) target = $region17
  $region16: #{gmask_binary_list_forward.2} parent=0 // pred_region
    _
  $region17: #{gmask_binary_list_forward.2} parent=0 // pred_fallthru
    _
  // Predicated region
  $region18: #{gmask_binary_list_forward.2} parent=0 // pred_check
    _
  $region19: #{gmask_binary_list_forward.2} parent=0 // pred_check_branch
    %1021 = sbr.rel (0) target = $region21
  $region20: #{gmask_binary_list_forward.2} parent=0 // pred_region
    _
  $region21: #{gmask_binary_list_forward.2} parent=0 // pred_fallthru
    _

// kernel: gmask_binary_list_forward.3
$region0: #{gmask_binary_list_forward.3}
  #allocation0 [shape = 'u32[]', space=smem, size = 0x4, offset = 0x4, fixed_abs, tag = 'smem constant byte address 0x4 - core index']
  #allocation1 [shape = 'u32[72,128]{1,0:T(1,128)}', space=vmem, size = 0x9000, scoped, tag = 'internal scratch']
  %s0 = inlined_call_operand.vmem [shape: bf16[2,4096], index: 0, kind: input, shape index: {}]
  %s1 = inlined_call_operand.vmem [shape: bf16[4096,512], index: 1, kind: input, shape index: {}]
  %s2 = inlined_call_operand.vmem [shape: f32[1,512], index: 2, kind: input, shape index: {}]
  %s3 = inlined_call_operand.vmem [shape: bf16[512,64], index: 3, kind: input, shape index: {}]
  %s4 = inlined_call_operand.vmem [shape: f32[1,64], index: 4, kind: input, shape index: {}]
  %s5 = inlined_call_operand.vmem [shape: bf16[64,1000], index: 5, kind: input, shape index: {}]
  %s6 = inlined_call_operand.vmem [shape: f32[1,1000], index: 6, kind: input, shape index: {}]
  %s7 = inlined_call_operand.vmem [shape: bf16[1000,400], index: 7, kind: input, shape index: {}]
  %s8 = inlined_call_operand.vmem [shape: f32[1,400], index: 8, kind: input, shape index: {}]
  %s9 = inlined_call_operand.hbm [shape: f32[2,400], index: 9, kind: output, shape index: {}]
  %s10 = sld [smem:[#allocation0]]
  $region46: #{gmask_binary_list_forward.3} parent=0
    _
  %s12 = ssub.s32 1, %s10
  %s13 = scalar_select 0, %s12, %s10
  $region1: #{gmask_binary_list_forward.3} parent=0
    #allocation2 [shape = 'u8[4096]{0}', space=vmem, size = 0x1000, scoped, tag = 'output window, operand 0, single buffered']
    #allocation3 [shape = 's32[1]{0}', space=sflag, size = 0x4, scoped, tag = 'scoped memory for gmask_binary_list_forward.3']
    %14 = vsyncpa [#allocation3], 0
    // Predicated region
    $region2: #{gmask_binary_list_forward.3} parent=1 // pred_check
      _
    $region3: #{gmask_binary_list_forward.3} parent=1 // pred_check_branch
      %16 = sbr.rel (0) target = $region5
    $region4: #{gmask_binary_list_forward.3} parent=1 // pred_region
      _
    $region5: #{gmask_binary_list_forward.3} parent=1 // pred_fallthru
      _
    // Predicated region
    $region6: #{gmask_binary_list_forward.3} parent=1 // pred_check
      _
    $region7: #{gmask_binary_list_forward.3} parent=1 // pred_check_branch
      %18 = sbr.rel (0) target = $region9
    $region8: #{gmask_binary_list_forward.3} parent=1 // pred_region
      _
    $region9: #{gmask_binary_list_forward.3} parent=1 // pred_fallthru
      _
    // Predicated region
    $region10: #{gmask_binary_list_forward.3} parent=1 // pred_check
      _
    $region11: #{gmask_binary_list_forward.3} parent=1 // pred_check_branch
      %20 = sbr.rel (0) target = $region13
    $region12: #{gmask_binary_list_forward.3} parent=1 // pred_region
      _
    $region13: #{gmask_binary_list_forward.3} parent=1 // pred_fallthru
      _
    // Predicated region
    $region14: #{gmask_binary_list_forward.3} parent=1 // pred_check
      _
    $region15: #{gmask_binary_list_forward.3} parent=1 // pred_check_branch
      %22 = sbr.rel (0) target = $region17
    $region16: #{gmask_binary_list_forward.3} parent=1 // pred_region
      _
    $region17: #{gmask_binary_list_forward.3} parent=1 // pred_fallthru
      _
    // Predicated region
    $region18: #{gmask_binary_list_forward.3} parent=1 // pred_check
      _
    $region19: #{gmask_binary_list_forward.3} parent=1 // pred_check_branch
      %24 = sbr.rel (0) target = $region21
    $region20: #{gmask_binary_list_forward.3} parent=1 // pred_region
      _
    $region21: #{gmask_binary_list_forward.3} parent=1 // pred_fallthru
      _
    // Predicated region
    $region22: #{gmask_binary_list_forward.3} parent=1 // pred_check
      _
    $region23: #{gmask_binary_list_forward.3} parent=1 // pred_check_branch
      %26 = sbr.rel (0) target = $region25
    $region24: #{gmask_binary_list_forward.3} parent=1 // pred_region
      _
    $region25: #{gmask_binary_list_forward.3} parent=1 // pred_fallthru
      _
    // Predicated region
    $region26: #{gmask_binary_list_forward.3} parent=1 // pred_check
      _
    $region27: #{gmask_binary_list_forward.3} parent=1 // pred_check_branch
      %28 = sbr.rel (0) target = $region29
    $region28: #{gmask_binary_list_forward.3} parent=1 // pred_region
      _
    $region29: #{gmask_binary_list_forward.3} parent=1 // pred_fallthru
      _
    // Predicated region
    $region30: #{gmask_binary_list_forward.3} parent=1 // pred_check
      _
    $region31: #{gmask_binary_list_forward.3} parent=1 // pred_check_branch
      %30 = sbr.rel (0) target = $region33
    $region32: #{gmask_binary_list_forward.3} parent=1 // pred_region
      _
    $region33: #{gmask_binary_list_forward.3} parent=1 // pred_fallthru
      _
    // Predicated region
    $region34: #{gmask_binary_list_forward.3} parent=1 // pred_check
      _
    $region35: #{gmask_binary_list_forward.3} parent=1 // pred_check_branch
      %32 = sbr.rel (0) target = $region37
    $region36: #{gmask_binary_list_forward.3} parent=1 // pred_region
      _
    $region37: #{gmask_binary_list_forward.3} parent=1 // pred_fallthru
      _
    %v34 = vld [vmem:[%s0] sm:$0xff]
    %v35 = vld [vmem:[%s0 + $0x8] sm:$0xff]
    %v36 = vld [vmem:[%s0 + $0x10] sm:$0xff]
    %v37 = vld [vmem:[%s0 + $0x18] sm:$0xff]
    %v38 = vld [vmem:[%s1] sm:$0xff]
    %v39 = vld [vmem:[%s1 + $0x8] sm:$0xff]
    %v40 = vld [vmem:[%s1 + $0x10] sm:$0xff]
    %v41 = vld [vmem:[%s1 + $0x18] sm:$0xff]
    %v42 = vld [vmem:[%s1 + $0x20] sm:$0xff]
    %v43 = vld [vmem:[%s1 + $0x28] sm:$0xff]
    %v44 = vld [vmem:[%s1 + $0x30] sm:$0xff]
    %v45 = vld [vmem:[%s1 + $0x38] sm:$0xff]
    %v46 = vld [vmem:[%s1 + $0x40] sm:$0xff]
    %v47 = vld [vmem:[%s1 + $0x48] sm:$0xff]
    %v48 = vld [vmem:[%s1 + $0x50] sm:$0xff]
    %v49 = vld [vmem:[%s1 + $0x58] sm:$0xff]
    %v50 = vld [vmem:[%s1 + $0x60] sm:$0xff]
    %v51 = vld [vmem:[%s1 + $0x68] sm:$0xff]
    %v52 = vld [vmem:[%s1 + $0x70] sm:$0xff]
    %v53 = vld [vmem:[%s1 + $0x78] sm:$0xff]
    %v54 = vld [vmem:[%s1 + $0x80] sm:$0xff]
    %v55 = vld [vmem:[%s1 + $0x88] sm:$0xff]
    %v56 = vld [vmem:[%s1 + $0x90] sm:$0xff]
    %v57 = vld [vmem:[%s1 + $0x98] sm:$0xff]
    %v58 = vld [vmem:[%s1 + $0xa0] sm:$0xff]
    %v59 = vld [vmem:[%s1 + $0xa8] sm:$0xff]
    %v60 = vld [vmem:[%s1 + $0xb0] sm:$0xff]
    %v61 = vld [vmem:[%s1 + $0xb8] sm:$0xff]
    %v62 = vld [vmem:[%s1 + $0xc0] sm:$0xff]
    %v63 = vld [vmem:[%s1 + $0xc8] sm:$0xff]
    %v64 = vld [vmem:[%s1 + $0xd0] sm:$0xff]
    %v65 = vld [vmem:[%s1 + $0xd8] sm:$0xff]
    %v66 = vld [vmem:[%s1 + $0xe0] sm:$0xff]
    %v67 = vld [vmem:[%s1 + $0xe8] sm:$0xff]
    %v68 = vld [vmem:[%s1 + $0xf0] sm:$0xff]
    %v69 = vld [vmem:[%s1 + $0xf8] sm:$0xff]
    %v70 = vld [vmem:[%s1 + $0x100] sm:$0xff]
    %v71 = vld [vmem:[%s1 + $0x108] sm:$0xff]
    %v72 = vld [vmem:[%s1 + $0x110] sm:$0xff]
    %v73 = vld [vmem:[%s1 + $0x118] sm:$0xff]
    %v74 = vld [vmem:[%s1 + $0x120] sm:$0xff]
    %v75 = vld [vmem:[%s1 + $0x128] sm:$0xff]
    %v76 = vld [vmem:[%s1 + $0x130] sm:$0xff]
    %v77 = vld [vmem:[%s1 + $0x138] sm:$0xff]
    %v78 = vld [vmem:[%s1 + $0x140] sm:$0xff]
    %v79 = vld [vmem:[%s1 + $0x148] sm:$0xff]
    %v80 = vld [vmem:[%s1 + $0x150] sm:$0xff]
    %v81 = vld [vmem:[%s1 + $0x158] sm:$0xff]
    %v82 = vld [vmem:[%s1 + $0x160] sm:$0xff]
    %v83 = vld [vmem:[%s1 + $0x168] sm:$0xff]
    %v84 = vld [vmem:[%s1 + $0x170] sm:$0xff]
    %v85 = vld [vmem:[%s1 + $0x178] sm:$0xff]
    %v86 = vld [vmem:[%s1 + $0x180] sm:$0xff]
    %v87 = vld [vmem:[%s1 + $0x188] sm:$0xff]
    %v88 = vld [vmem:[%s1 + $0x190] sm:$0xff]
    %v89 = vld [vmem:[%s1 + $0x198] sm:$0xff]
    %v90 = vld [vmem:[%s1 + $0x1a0] sm:$0xff]
    %v91 = vld [vmem:[%s1 + $0x1a8] sm:$0xff]
    %v92 = vld [vmem:[%s1 + $0x1b0] sm:$0xff]
    %v93 = vld [vmem:[%s1 + $0x1b8] sm:$0xff]
    %v94 = vld [vmem:[%s1 + $0x1c0] sm:$0xff]
    %v95 = vld [vmem:[%s1 + $0x1c8] sm:$0xff]
    %v96 = vld [vmem:[%s1 + $0x1d0] sm:$0xff]
    %v97 = vld [vmem:[%s1 + $0x1d8] sm:$0xff]
    %v98 = vld [vmem:[%s1 + $0x1e0] sm:$0xff]
    %v99 = vld [vmem:[%s1 + $0x1e8] sm:$0xff]
    %v100 = vld [vmem:[%s1 + $0x1f0] sm:$0xff]
    %v101 = vld [vmem:[%s1 + $0x1f8] sm:$0xff]
    %v102 = vld [vmem:[%s1 + $0x200] sm:$0xff]
    %v103 = vld [vmem:[%s1 + $0x208] sm:$0xff]
    %v104 = vld [vmem:[%s1 + $0x210] sm:$0xff]
    %v105 = vld [vmem:[%s1 + $0x218] sm:$0xff]
    %v106 = vld [vmem:[%s1 + $0x220] sm:$0xff]
    %v107 = vld [vmem:[%s1 + $0x228] sm:$0xff]
    %v108 = vld [vmem:[%s1 + $0x230] sm:$0xff]
    %v109 = vld [vmem:[%s1 + $0x238] sm:$0xff]
    %v110 = vld [vmem:[%s1 + $0x240] sm:$0xff]
    %v111 = vld [vmem:[%s1 + $0x248] sm:$0xff]
    %v112 = vld [vmem:[%s1 + $0x250] sm:$0xff]
    %v113 = vld [vmem:[%s1 + $0x258] sm:$0xff]
    %v114 = vld [vmem:[%s1 + $0x260] sm:$0xff]
    %v115 = vld [vmem:[%s1 + $0x268] sm:$0xff]
    %v116 = vld [vmem:[%s1 + $0x270] sm:$0xff]
    %v117 = vld [vmem:[%s1 + $0x278] sm:$0xff]
    %v118 = vld [vmem:[%s1 + $0x280] sm:$0xff]
    %v119 = vld [vmem:[%s1 + $0x288] sm:$0xff]
    %v120 = vld [vmem:[%s1 + $0x290] sm:$0xff]
    %v121 = vld [vmem:[%s1 + $0x298] sm:$0xff]
    %v122 = vld [vmem:[%s1 + $0x2a0] sm:$0xff]
    %v123 = vld [vmem:[%s1 + $0x2a8] sm:$0xff]
    %v124 = vld [vmem:[%s1 + $0x2b0] sm:$0xff]
    %v125 = vld [vmem:[%s1 + $0x2b8] sm:$0xff]
    %v126 = vld [vmem:[%s1 + $0x2c0] sm:$0xff]
    %v127 = vld [vmem:[%s1 + $0x2c8] sm:$0xff]
    %v128 = vld [vmem:[%s1 + $0x2d0] sm:$0xff]
    %v129 = vld [vmem:[%s1 + $0x2d8] sm:$0xff]
    %v130 = vld [vmem:[%s1 + $0x2e0] sm:$0xff]
    %v131 = vld [vmem:[%s1 + $0x2e8] sm:$0xff]
    %v132 = vld [vmem:[%s1 + $0x2f0] sm:$0xff]
    %v133 = vld [vmem:[%s1 + $0x2f8] sm:$0xff]
    %v134 = vld [vmem:[%s1 + $0x300] sm:$0xff]
    %v135 = vld [vmem:[%s1 + $0x308] sm:$0xff]
    %v136 = vld [vmem:[%s1 + $0x310] sm:$0xff]
    %v137 = vld [vmem:[%s1 + $0x318] sm:$0xff]
    %v138 = vld [vmem:[%s1 + $0x320] sm:$0xff]
    %v139 = vld [vmem:[%s1 + $0x328] sm:$0xff]
    %v140 = vld [vmem:[%s1 + $0x330] sm:$0xff]
    %v141 = vld [vmem:[%s1 + $0x338] sm:$0xff]
    %v142 = vld [vmem:[%s1 + $0x340] sm:$0xff]
    %v143 = vld [vmem:[%s1 + $0x348] sm:$0xff]
    %v144 = vld [vmem:[%s1 + $0x350] sm:$0xff]
    %v145 = vld [vmem:[%s1 + $0x358] sm:$0xff]
    %v146 = vld [vmem:[%s1 + $0x360] sm:$0xff]
    %v147 = vld [vmem:[%s1 + $0x368] sm:$0xff]
    %v148 = vld [vmem:[%s1 + $0x370] sm:$0xff]
    %v149 = vld [vmem:[%s1 + $0x378] sm:$0xff]
    %v150 = vld [vmem:[%s1 + $0x380] sm:$0xff]
    %v151 = vld [vmem:[%s1 + $0x388] sm:$0xff]
    %v152 = vld [vmem:[%s1 + $0x390] sm:$0xff]
    %v153 = vld [vmem:[%s1 + $0x398] sm:$0xff]
    %v154 = vld [vmem:[%s1 + $0x3a0] sm:$0xff]
    %v155 = vld [vmem:[%s1 + $0x3a8] sm:$0xff]
    %v156 = vld [vmem:[%s1 + $0x3b0] sm:$0xff]
    %v157 = vld [vmem:[%s1 + $0x3b8] sm:$0xff]
    %v158 = vld [vmem:[%s1 + $0x3c0] sm:$0xff]
    %v159 = vld [vmem:[%s1 + $0x3c8] sm:$0xff]
    %v160 = vld [vmem:[%s1 + $0x3d0] sm:$0xff]
    %v161 = vld [vmem:[%s1 + $0x3d8] sm:$0xff]
    %v162 = vld [vmem:[%s1 + $0x3e0] sm:$0xff]
    %v163 = vld [vmem:[%s1 + $0x3e8] sm:$0xff]
    %v164 = vld [vmem:[%s1 + $0x3f0] sm:$0xff]
    %v165 = vld [vmem:[%s1 + $0x3f8] sm:$0xff]
    %v166 = vld [vmem:[%s1 + $0x400] sm:$0xff]
    %v167 = vld [vmem:[%s1 + $0x408] sm:$0xff]
    %v168 = vld [vmem:[%s1 + $0x410] sm:$0xff]
    %v169 = vld [vmem:[%s1 + $0x418] sm:$0xff]
    %v170 = vld [vmem:[%s1 + $0x420] sm:$0xff]
    %v171 = vld [vmem:[%s1 + $0x428] sm:$0xff]
    %v172 = vld [vmem:[%s1 + $0x430] sm:$0xff]
    %v173 = vld [vmem:[%s1 + $0x438] sm:$0xff]
    %v174 = vld [vmem:[%s1 + $0x440] sm:$0xff]
    %v175 = vld [vmem:[%s1 + $0x448] sm:$0xff]
    %v176 = vld [vmem:[%s1 + $0x450] sm:$0xff]
    %v177 = vld [vmem:[%s1 + $0x458] sm:$0xff]
    %v178 = vld [vmem:[%s1 + $0x460] sm:$0xff]
    %v179 = vld [vmem:[%s1 + $0x468] sm:$0xff]
    %v180 = vld [vmem:[%s1 + $0x470] sm:$0xff]
    %v181 = vld [vmem:[%s1 + $0x478] sm:$0xff]
    %v182 = vld [vmem:[%s1 + $0x480] sm:$0xff]
    %v183 = vld [vmem:[%s1 + $0x488] sm:$0xff]
    %v184 = vld [vmem:[%s1 + $0x490] sm:$0xff]
    %v185 = vld [vmem:[%s1 + $0x498] sm:$0xff]
    %v186 = vld [vmem:[%s1 + $0x4a0] sm:$0xff]
    %v187 = vld [vmem:[%s1 + $0x4a8] sm:$0xff]
    %v188 = vld [vmem:[%s1 + $0x4b0] sm:$0xff]
    %v189 = vld [vmem:[%s1 + $0x4b8] sm:$0xff]
    %v190 = vld [vmem:[%s1 + $0x4c0] sm:$0xff]
    %v191 = vld [vmem:[%s1 + $0x4c8] sm:$0xff]
    %v192 = vld [vmem:[%s1 + $0x4d0] sm:$0xff]
    %v193 = vld [vmem:[%s1 + $0x4d8] sm:$0xff]
    %v194 = vld [vmem:[%s1 + $0x4e0] sm:$0xff]
    %v195 = vld [vmem:[%s1 + $0x4e8] sm:$0xff]
    %v196 = vld [vmem:[%s1 + $0x4f0] sm:$0xff]
    %v197 = vld [vmem:[%s1 + $0x4f8] sm:$0xff]
    %v198 = vld [vmem:[%s1 + $0x500] sm:$0xff]
    %v199 = vld [vmem:[%s1 + $0x508] sm:$0xff]
    %v200 = vld [vmem:[%s1 + $0x510] sm:$0xff]
    %v201 = vld [vmem:[%s1 + $0x518] sm:$0xff]
    %v202 = vld [vmem:[%s1 + $0x520] sm:$0xff]
    %v203 = vld [vmem:[%s1 + $0x528] sm:$0xff]
    %v204 = vld [vmem:[%s1 + $0x530] sm:$0xff]
    %v205 = vld [vmem:[%s1 + $0x538] sm:$0xff]
    %v206 = vld [vmem:[%s1 + $0x540] sm:$0xff]
    %v207 = vld [vmem:[%s1 + $0x548] sm:$0xff]
    %v208 = vld [vmem:[%s1 + $0x550] sm:$0xff]
    %v209 = vld [vmem:[%s1 + $0x558] sm:$0xff]
    %v210 = vld [vmem:[%s1 + $0x560] sm:$0xff]
    %v211 = vld [vmem:[%s1 + $0x568] sm:$0xff]
    %v212 = vld [vmem:[%s1 + $0x570] sm:$0xff]
    %v213 = vld [vmem:[%s1 + $0x578] sm:$0xff]
    %v214 = vld [vmem:[%s1 + $0x580] sm:$0xff]
    %v215 = vld [vmem:[%s1 + $0x588] sm:$0xff]
    %v216 = vld [vmem:[%s1 + $0x590] sm:$0xff]
    %v217 = vld [vmem:[%s1 + $0x598] sm:$0xff]
    %v218 = vld [vmem:[%s1 + $0x5a0] sm:$0xff]
    %v219 = vld [vmem:[%s1 + $0x5a8] sm:$0xff]
    %v220 = vld [vmem:[%s1 + $0x5b0] sm:$0xff]
    %v221 = vld [vmem:[%s1 + $0x5b8] sm:$0xff]
    %v222 = vld [vmem:[%s1 + $0x5c0] sm:$0xff]
    %v223 = vld [vmem:[%s1 + $0x5c8] sm:$0xff]
    %v224 = vld [vmem:[%s1 + $0x5d0] sm:$0xff]
    %v225 = vld [vmem:[%s1 + $0x5d8] sm:$0xff]
    %v226 = vld [vmem:[%s1 + $0x5e0] sm:$0xff]
    %v227 = vld [vmem:[%s1 + $0x5e8] sm:$0xff]
    %v228 = vld [vmem:[%s1 + $0x5f0] sm:$0xff]
    %v229 = vld [vmem:[%s1 + $0x5f8] sm:$0xff]
    %v230 = vld [vmem:[%s1 + $0x600] sm:$0xff]
    %v231 = vld [vmem:[%s1 + $0x608] sm:$0xff]
    %v232 = vld [vmem:[%s1 + $0x610] sm:$0xff]
    %v233 = vld [vmem:[%s1 + $0x618] sm:$0xff]
    %v234 = vld [vmem:[%s1 + $0x620] sm:$0xff]
    %v235 = vld [vmem:[%s1 + $0x628] sm:$0xff]
    %v236 = vld [vmem:[%s1 + $0x630] sm:$0xff]
    %v237 = vld [vmem:[%s1 + $0x638] sm:$0xff]
    %v238 = vld [vmem:[%s1 + $0x640] sm:$0xff]
    %v239 = vld [vmem:[%s1 + $0x648] sm:$0xff]
    %v240 = vld [vmem:[%s1 + $0x650] sm:$0xff]
    %v241 = vld [vmem:[%s1 + $0x658] sm:$0xff]
    %v242 = vld [vmem:[%s1 + $0x660] sm:$0xff]
    %v243 = vld [vmem:[%s1 + $0x668] sm:$0xff]
    %v244 = vld [vmem:[%s1 + $0x670] sm:$0xff]
    %v245 = vld [vmem:[%s1 + $0x678] sm:$0xff]
    %v246 = vld [vmem:[%s1 + $0x680] sm:$0xff]
    %v247 = vld [vmem:[%s1 + $0x688] sm:$0xff]
    %v248 = vld [vmem:[%s1 + $0x690] sm:$0xff]
    %v249 = vld [vmem:[%s1 + $0x698] sm:$0xff]
    %v250 = vld [vmem:[%s1 + $0x6a0] sm:$0xff]
    %v251 = vld [vmem:[%s1 + $0x6a8] sm:$0xff]
    %v252 = vld [vmem:[%s1 + $0x6b0] sm:$0xff]
    %v253 = vld [vmem:[%s1 + $0x6b8] sm:$0xff]
    %v254 = vld [vmem:[%s1 + $0x6c0] sm:$0xff]
    %v255 = vld [vmem:[%s1 + $0x6c8] sm:$0xff]
    %v256 = vld [vmem:[%s1 + $0x6d0] sm:$0xff]
    %v257 = vld [vmem:[%s1 + $0x6d8] sm:$0xff]
    %v258 = vld [vmem:[%s1 + $0x6e0] sm:$0xff]
    %v259 = vld [vmem:[%s1 + $0x6e8] sm:$0xff]
    %v260 = vld [vmem:[%s1 + $0x6f0] sm:$0xff]
    %v261 = vld [vmem:[%s1 + $0x6f8] sm:$0xff]
    %v262 = vld [vmem:[%s1 + $0x700] sm:$0xff]
    %v263 = vld [vmem:[%s1 + $0x708] sm:$0xff]
    %v264 = vld [vmem:[%s1 + $0x710] sm:$0xff]
    %v265 = vld [vmem:[%s1 + $0x718] sm:$0xff]
    %v266 = vld [vmem:[%s1 + $0x720] sm:$0xff]
    %v267 = vld [vmem:[%s1 + $0x728] sm:$0xff]
    %v268 = vld [vmem:[%s1 + $0x730] sm:$0xff]
    %v269 = vld [vmem:[%s1 + $0x738] sm:$0xff]
    %v270 = vld [vmem:[%s1 + $0x740] sm:$0xff]
    %v271 = vld [vmem:[%s1 + $0x748] sm:$0xff]
    %v272 = vld [vmem:[%s1 + $0x750] sm:$0xff]
    %v273 = vld [vmem:[%s1 + $0x758] sm:$0xff]
    %v274 = vld [vmem:[%s1 + $0x760] sm:$0xff]
    %v275 = vld [vmem:[%s1 + $0x768] sm:$0xff]
    %v276 = vld [vmem:[%s1 + $0x770] sm:$0xff]
    %v277 = vld [vmem:[%s1 + $0x778] sm:$0xff]
    %v278 = vld [vmem:[%s1 + $0x780] sm:$0xff]
    %v279 = vld [vmem:[%s1 + $0x788] sm:$0xff]
    %v280 = vld [vmem:[%s1 + $0x790] sm:$0xff]
    %v281 = vld [vmem:[%s1 + $0x798] sm:$0xff]
    %v282 = vld [vmem:[%s1 + $0x7a0] sm:$0xff]
    %v283 = vld [vmem:[%s1 + $0x7a8] sm:$0xff]
    %v284 = vld [vmem:[%s1 + $0x7b0] sm:$0xff]
    %v285 = vld [vmem:[%s1 + $0x7b8] sm:$0xff]
    %v286 = vld [vmem:[%s1 + $0x7c0] sm:$0xff]
    %v287 = vld [vmem:[%s1 + $0x7c8] sm:$0xff]
    %v288 = vld [vmem:[%s1 + $0x7d0] sm:$0xff]
    %v289 = vld [vmem:[%s1 + $0x7d8] sm:$0xff]
    %v290 = vld [vmem:[%s1 + $0x7e0] sm:$0xff]
    %v291 = vld [vmem:[%s1 + $0x7e8] sm:$0xff]
    %v292 = vld [vmem:[%s1 + $0x7f0] sm:$0xff]
    %v293 = vld [vmem:[%s1 + $0x7f8] sm:$0xff]
    %v294 = vld [vmem:[%s1 + $0x800] sm:$0xff]
    %v295 = vld [vmem:[%s1 + $0x808] sm:$0xff]
    %v296 = vld [vmem:[%s1 + $0x810] sm:$0xff]
    %v297 = vld [vmem:[%s1 + $0x818] sm:$0xff]
    %v298 = vld [vmem:[%s1 + $0x820] sm:$0xff]
    %v299 = vld [vmem:[%s1 + $0x828] sm:$0xff]
    %v300 = vld [vmem:[%s1 + $0x830] sm:$0xff]
    %v301 = vld [vmem:[%s1 + $0x838] sm:$0xff]
    %v302 = vld [vmem:[%s1 + $0x840] sm:$0xff]
    %v303 = vld [vmem:[%s1 + $0x848] sm:$0xff]
    %v304 = vld [vmem:[%s1 + $0x850] sm:$0xff]
    %v305 = vld [vmem:[%s1 + $0x858] sm:$0xff]
    %v306 = vld [vmem:[%s1 + $0x860] sm:$0xff]
    %v307 = vld [vmem:[%s1 + $0x868] sm:$0xff]
    %v308 = vld [vmem:[%s1 + $0x870] sm:$0xff]
    %v309 = vld [vmem:[%s1 + $0x878] sm:$0xff]
    %v310 = vld [vmem:[%s1 + $0x880] sm:$0xff]
    %v311 = vld [vmem:[%s1 + $0x888] sm:$0xff]
    %v312 = vld [vmem:[%s1 + $0x890] sm:$0xff]
    %v313 = vld [vmem:[%s1 + $0x898] sm:$0xff]
    %v314 = vld [vmem:[%s1 + $0x8a0] sm:$0xff]
    %v315 = vld [vmem:[%s1 + $0x8a8] sm:$0xff]
    %v316 = vld [vmem:[%s1 + $0x8b0] sm:$0xff]
    %v317 = vld [vmem:[%s1 + $0x8b8] sm:$0xff]
    %v318 = vld [vmem:[%s1 + $0x8c0] sm:$0xff]
    %v319 = vld [vmem:[%s1 + $0x8c8] sm:$0xff]
    %v320 = vld [vmem:[%s1 + $0x8d0] sm:$0xff]
    %v321 = vld [vmem:[%s1 + $0x8d8] sm:$0xff]
    %v322 = vld [vmem:[%s1 + $0x8e0] sm:$0xff]
    %v323 = vld [vmem:[%s1 + $0x8e8] sm:$0xff]
    %v324 = vld [vmem:[%s1 + $0x8f0] sm:$0xff]
    %v325 = vld [vmem:[%s1 + $0x8f8] sm:$0xff]
    %v326 = vld [vmem:[%s1 + $0x900] sm:$0xff]
    %v327 = vld [vmem:[%s1 + $0x908] sm:$0xff]
    %v328 = vld [vmem:[%s1 + $0x910] sm:$0xff]
    %v329 = vld [vmem:[%s1 + $0x918] sm:$0xff]
    %v330 = vld [vmem:[%s1 + $0x920] sm:$0xff]
    %v331 = vld [vmem:[%s1 + $0x928] sm:$0xff]
    %v332 = vld [vmem:[%s1 + $0x930] sm:$0xff]
    %v333 = vld [vmem:[%s1 + $0x938] sm:$0xff]
    %v334 = vld [vmem:[%s1 + $0x940] sm:$0xff]
    %v335 = vld [vmem:[%s1 + $0x948] sm:$0xff]
    %v336 = vld [vmem:[%s1 + $0x950] sm:$0xff]
    %v337 = vld [vmem:[%s1 + $0x958] sm:$0xff]
    %v338 = vld [vmem:[%s1 + $0x960] sm:$0xff]
    %v339 = vld [vmem:[%s1 + $0x968] sm:$0xff]
    %v340 = vld [vmem:[%s1 + $0x970] sm:$0xff]
    %v341 = vld [vmem:[%s1 + $0x978] sm:$0xff]
    %v342 = vld [vmem:[%s1 + $0x980] sm:$0xff]
    %v343 = vld [vmem:[%s1 + $0x988] sm:$0xff]
    %v344 = vld [vmem:[%s1 + $0x990] sm:$0xff]
    %v345 = vld [vmem:[%s1 + $0x998] sm:$0xff]
    %v346 = vld [vmem:[%s1 + $0x9a0] sm:$0xff]
    %v347 = vld [vmem:[%s1 + $0x9a8] sm:$0xff]
    %v348 = vld [vmem:[%s1 + $0x9b0] sm:$0xff]
    %v349 = vld [vmem:[%s1 + $0x9b8] sm:$0xff]
    %v350 = vld [vmem:[%s1 + $0x9c0] sm:$0xff]
    %v351 = vld [vmem:[%s1 + $0x9c8] sm:$0xff]
    %v352 = vld [vmem:[%s1 + $0x9d0] sm:$0xff]
    %v353 = vld [vmem:[%s1 + $0x9d8] sm:$0xff]
    %v354 = vld [vmem:[%s1 + $0x9e0] sm:$0xff]
    %v355 = vld [vmem:[%s1 + $0x9e8] sm:$0xff]
    %v356 = vld [vmem:[%s1 + $0x9f0] sm:$0xff]
    %v357 = vld [vmem:[%s1 + $0x9f8] sm:$0xff]
    %v358 = vld [vmem:[%s1 + $0xa00] sm:$0xff]
    %v359 = vld [vmem:[%s1 + $0xa08] sm:$0xff]
    %v360 = vld [vmem:[%s1 + $0xa10] sm:$0xff]
    %v361 = vld [vmem:[%s1 + $0xa18] sm:$0xff]
    %v362 = vld [vmem:[%s1 + $0xa20] sm:$0xff]
    %v363 = vld [vmem:[%s1 + $0xa28] sm:$0xff]
    %v364 = vld [vmem:[%s1 + $0xa30] sm:$0xff]
    %v365 = vld [vmem:[%s1 + $0xa38] sm:$0xff]
    %v366 = vld [vmem:[%s1 + $0xa40] sm:$0xff]
    %v367 = vld [vmem:[%s1 + $0xa48] sm:$0xff]
    %v368 = vld [vmem:[%s1 + $0xa50] sm:$0xff]
    %v369 = vld [vmem:[%s1 + $0xa58] sm:$0xff]
    %v370 = vld [vmem:[%s1 + $0xa60] sm:$0xff]
    %v371 = vld [vmem:[%s1 + $0xa68] sm:$0xff]
    %v372 = vld [vmem:[%s1 + $0xa70] sm:$0xff]
    %v373 = vld [vmem:[%s1 + $0xa78] sm:$0xff]
    %v374 = vld [vmem:[%s1 + $0xa80] sm:$0xff]
    %v375 = vld [vmem:[%s1 + $0xa88] sm:$0xff]
    %v376 = vld [vmem:[%s1 + $0xa90] sm:$0xff]
    %v377 = vld [vmem:[%s1 + $0xa98] sm:$0xff]
    %v378 = vld [vmem:[%s1 + $0xaa0] sm:$0xff]
    %v379 = vld [vmem:[%s1 + $0xaa8] sm:$0xff]
    %v380 = vld [vmem:[%s1 + $0xab0] sm:$0xff]
    %v381 = vld [vmem:[%s1 + $0xab8] sm:$0xff]
    %v382 = vld [vmem:[%s1 + $0xac0] sm:$0xff]
    %v383 = vld [vmem:[%s1 + $0xac8] sm:$0xff]
    %v384 = vld [vmem:[%s1 + $0xad0] sm:$0xff]
    %v385 = vld [vmem:[%s1 + $0xad8] sm:$0xff]
    %v386 = vld [vmem:[%s1 + $0xae0] sm:$0xff]
    %v387 = vld [vmem:[%s1 + $0xae8] sm:$0xff]
    %v388 = vld [vmem:[%s1 + $0xaf0] sm:$0xff]
    %v389 = vld [vmem:[%s1 + $0xaf8] sm:$0xff]
    %v390 = vld [vmem:[%s1 + $0xb00] sm:$0xff]
    %v391 = vld [vmem:[%s1 + $0xb08] sm:$0xff]
    %v392 = vld [vmem:[%s1 + $0xb10] sm:$0xff]
    %v393 = vld [vmem:[%s1 + $0xb18] sm:$0xff]
    %v394 = vld [vmem:[%s1 + $0xb20] sm:$0xff]
    %v395 = vld [vmem:[%s1 + $0xb28] sm:$0xff]
    %v396 = vld [vmem:[%s1 + $0xb30] sm:$0xff]
    %v397 = vld [vmem:[%s1 + $0xb38] sm:$0xff]
    %v398 = vld [vmem:[%s1 + $0xb40] sm:$0xff]
    %v399 = vld [vmem:[%s1 + $0xb48] sm:$0xff]
    %v400 = vld [vmem:[%s1 + $0xb50] sm:$0xff]
    %v401 = vld [vmem:[%s1 + $0xb58] sm:$0xff]
    %v402 = vld [vmem:[%s1 + $0xb60] sm:$0xff]
    %v403 = vld [vmem:[%s1 + $0xb68] sm:$0xff]
    %v404 = vld [vmem:[%s1 + $0xb70] sm:$0xff]
    %v405 = vld [vmem:[%s1 + $0xb78] sm:$0xff]
    %v406 = vld [vmem:[%s1 + $0xb80] sm:$0xff]
    %v407 = vld [vmem:[%s1 + $0xb88] sm:$0xff]
    %v408 = vld [vmem:[%s1 + $0xb90] sm:$0xff]
    %v409 = vld [vmem:[%s1 + $0xb98] sm:$0xff]
    %v410 = vld [vmem:[%s1 + $0xba0] sm:$0xff]
    %v411 = vld [vmem:[%s1 + $0xba8] sm:$0xff]
    %v412 = vld [vmem:[%s1 + $0xbb0] sm:$0xff]
    %v413 = vld [vmem:[%s1 + $0xbb8] sm:$0xff]
    %v414 = vld [vmem:[%s1 + $0xbc0] sm:$0xff]
    %v415 = vld [vmem:[%s1 + $0xbc8] sm:$0xff]
    %v416 = vld [vmem:[%s1 + $0xbd0] sm:$0xff]
    %v417 = vld [vmem:[%s1 + $0xbd8] sm:$0xff]
    %v418 = vld [vmem:[%s1 + $0xbe0] sm:$0xff]
    %v419 = vld [vmem:[%s1 + $0xbe8] sm:$0xff]
    %v420 = vld [vmem:[%s1 + $0xbf0] sm:$0xff]
    %v421 = vld [vmem:[%s1 + $0xbf8] sm:$0xff]
    %v422 = vld [vmem:[%s1 + $0xc00] sm:$0xff]
    %v423 = vld [vmem:[%s1 + $0xc08] sm:$0xff]
    %v424 = vld [vmem:[%s1 + $0xc10] sm:$0xff]
    %v425 = vld [vmem:[%s1 + $0xc18] sm:$0xff]
    %v426 = vld [vmem:[%s1 + $0xc20] sm:$0xff]
    %v427 = vld [vmem:[%s1 + $0xc28] sm:$0xff]
    %v428 = vld [vmem:[%s1 + $0xc30] sm:$0xff]
    %v429 = vld [vmem:[%s1 + $0xc38] sm:$0xff]
    %v430 = vld [vmem:[%s1 + $0xc40] sm:$0xff]
    %v431 = vld [vmem:[%s1 + $0xc48] sm:$0xff]
    %v432 = vld [vmem:[%s1 + $0xc50] sm:$0xff]
    %v433 = vld [vmem:[%s1 + $0xc58] sm:$0xff]
    %v434 = vld [vmem:[%s1 + $0xc60] sm:$0xff]
    %v435 = vld [vmem:[%s1 + $0xc68] sm:$0xff]
    %v436 = vld [vmem:[%s1 + $0xc70] sm:$0xff]
    %v437 = vld [vmem:[%s1 + $0xc78] sm:$0xff]
    %v438 = vld [vmem:[%s1 + $0xc80] sm:$0xff]
    %v439 = vld [vmem:[%s1 + $0xc88] sm:$0xff]
    %v440 = vld [vmem:[%s1 + $0xc90] sm:$0xff]
    %v441 = vld [vmem:[%s1 + $0xc98] sm:$0xff]
    %v442 = vld [vmem:[%s1 + $0xca0] sm:$0xff]
    %v443 = vld [vmem:[%s1 + $0xca8] sm:$0xff]
    %v444 = vld [vmem:[%s1 + $0xcb0] sm:$0xff]
    %v445 = vld [vmem:[%s1 + $0xcb8] sm:$0xff]
    %v446 = vld [vmem:[%s1 + $0xcc0] sm:$0xff]
    %v447 = vld [vmem:[%s1 + $0xcc8] sm:$0xff]
    %v448 = vld [vmem:[%s1 + $0xcd0] sm:$0xff]
    %v449 = vld [vmem:[%s1 + $0xcd8] sm:$0xff]
    %v450 = vld [vmem:[%s1 + $0xce0] sm:$0xff]
    %v451 = vld [vmem:[%s1 + $0xce8] sm:$0xff]
    %v452 = vld [vmem:[%s1 + $0xcf0] sm:$0xff]
    %v453 = vld [vmem:[%s1 + $0xcf8] sm:$0xff]
    %v454 = vld [vmem:[%s1 + $0xd00] sm:$0xff]
    %v455 = vld [vmem:[%s1 + $0xd08] sm:$0xff]
    %v456 = vld [vmem:[%s1 + $0xd10] sm:$0xff]
    %v457 = vld [vmem:[%s1 + $0xd18] sm:$0xff]
    %v458 = vld [vmem:[%s1 + $0xd20] sm:$0xff]
    %v459 = vld [vmem:[%s1 + $0xd28] sm:$0xff]
    %v460 = vld [vmem:[%s1 + $0xd30] sm:$0xff]
    %v461 = vld [vmem:[%s1 + $0xd38] sm:$0xff]
    %v462 = vld [vmem:[%s1 + $0xd40] sm:$0xff]
    %v463 = vld [vmem:[%s1 + $0xd48] sm:$0xff]
    %v464 = vld [vmem:[%s1 + $0xd50] sm:$0xff]
    %v465 = vld [vmem:[%s1 + $0xd58] sm:$0xff]
    %v466 = vld [vmem:[%s1 + $0xd60] sm:$0xff]
    %v467 = vld [vmem:[%s1 + $0xd68] sm:$0xff]
    %v468 = vld [vmem:[%s1 + $0xd70] sm:$0xff]
    %v469 = vld [vmem:[%s1 + $0xd78] sm:$0xff]
    %v470 = vld [vmem:[%s1 + $0xd80] sm:$0xff]
    %v471 = vld [vmem:[%s1 + $0xd88] sm:$0xff]
    %v472 = vld [vmem:[%s1 + $0xd90] sm:$0xff]
    %v473 = vld [vmem:[%s1 + $0xd98] sm:$0xff]
    %v474 = vld [vmem:[%s1 + $0xda0] sm:$0xff]
    %v475 = vld [vmem:[%s1 + $0xda8] sm:$0xff]
    %v476 = vld [vmem:[%s1 + $0xdb0] sm:$0xff]
    %v477 = vld [vmem:[%s1 + $0xdb8] sm:$0xff]
    %v478 = vld [vmem:[%s1 + $0xdc0] sm:$0xff]
    %v479 = vld [vmem:[%s1 + $0xdc8] sm:$0xff]
    %v480 = vld [vmem:[%s1 + $0xdd0] sm:$0xff]
    %v481 = vld [vmem:[%s1 + $0xdd8] sm:$0xff]
    %v482 = vld [vmem:[%s1 + $0xde0] sm:$0xff]
    %v483 = vld [vmem:[%s1 + $0xde8] sm:$0xff]
    %v484 = vld [vmem:[%s1 + $0xdf0] sm:$0xff]
    %v485 = vld [vmem:[%s1 + $0xdf8] sm:$0xff]
    %v486 = vld [vmem:[%s1 + $0xe00] sm:$0xff]
    %v487 = vld [vmem:[%s1 + $0xe08] sm:$0xff]
    %v488 = vld [vmem:[%s1 + $0xe10] sm:$0xff]
    %v489 = vld [vmem:[%s1 + $0xe18] sm:$0xff]
    %v490 = vld [vmem:[%s1 + $0xe20] sm:$0xff]
    %v491 = vld [vmem:[%s1 + $0xe28] sm:$0xff]
    %v492 = vld [vmem:[%s1 + $0xe30] sm:$0xff]
    %v493 = vld [vmem:[%s1 + $0xe38] sm:$0xff]
    %v494 = vld [vmem:[%s1 + $0xe40] sm:$0xff]
    %v495 = vld [vmem:[%s1 + $0xe48] sm:$0xff]
    %v496 = vld [vmem:[%s1 + $0xe50] sm:$0xff]
    %v497 = vld [vmem:[%s1 + $0xe58] sm:$0xff]
    %v498 = vld [vmem:[%s1 + $0xe60] sm:$0xff]
    %v499 = vld [vmem:[%s1 + $0xe68] sm:$0xff]
    %v500 = vld [vmem:[%s1 + $0xe70] sm:$0xff]
    %v501 = vld [vmem:[%s1 + $0xe78] sm:$0xff]
    %v502 = vld [vmem:[%s1 + $0xe80] sm:$0xff]
    %v503 = vld [vmem:[%s1 + $0xe88] sm:$0xff]
    %v504 = vld [vmem:[%s1 + $0xe90] sm:$0xff]
    %v505 = vld [vmem:[%s1 + $0xe98] sm:$0xff]
    %v506 = vld [vmem:[%s1 + $0xea0] sm:$0xff]
    %v507 = vld [vmem:[%s1 + $0xea8] sm:$0xff]
    %v508 = vld [vmem:[%s1 + $0xeb0] sm:$0xff]
    %v509 = vld [vmem:[%s1 + $0xeb8] sm:$0xff]
    %v510 = vld [vmem:[%s1 + $0xec0] sm:$0xff]
    %v511 = vld [vmem:[%s1 + $0xec8] sm:$0xff]
    %v512 = vld [vmem:[%s1 + $0xed0] sm:$0xff]
    %v513 = vld [vmem:[%s1 + $0xed8] sm:$0xff]
    %v514 = vld [vmem:[%s1 + $0xee0] sm:$0xff]
    %v515 = vld [vmem:[%s1 + $0xee8] sm:$0xff]
    %v516 = vld [vmem:[%s1 + $0xef0] sm:$0xff]
    %v517 = vld [vmem:[%s1 + $0xef8] sm:$0xff]
    %v518 = vld [vmem:[%s1 + $0xf00] sm:$0xff]
    %v519 = vld [vmem:[%s1 + $0xf08] sm:$0xff]
    %v520 = vld [vmem:[%s1 + $0xf10] sm:$0xff]
    %v521 = vld [vmem:[%s1 + $0xf18] sm:$0xff]
    %v522 = vld [vmem:[%s1 + $0xf20] sm:$0xff]
    %v523 = vld [vmem:[%s1 + $0xf28] sm:$0xff]
    %v524 = vld [vmem:[%s1 + $0xf30] sm:$0xff]
    %v525 = vld [vmem:[%s1 + $0xf38] sm:$0xff]
    %v526 = vld [vmem:[%s1 + $0xf40] sm:$0xff]
    %v527 = vld [vmem:[%s1 + $0xf48] sm:$0xff]
    %v528 = vld [vmem:[%s1 + $0xf50] sm:$0xff]
    %v529 = vld [vmem:[%s1 + $0xf58] sm:$0xff]
    %v530 = vld [vmem:[%s1 + $0xf60] sm:$0xff]
    %v531 = vld [vmem:[%s1 + $0xf68] sm:$0xff]
    %v532 = vld [vmem:[%s1 + $0xf70] sm:$0xff]
    %v533 = vld [vmem:[%s1 + $0xf78] sm:$0xff]
    %v534 = vld [vmem:[%s1 + $0xf80] sm:$0xff]
    %v535 = vld [vmem:[%s1 + $0xf88] sm:$0xff]
    %v536 = vld [vmem:[%s1 + $0xf90] sm:$0xff]
    %v537 = vld [vmem:[%s1 + $0xf98] sm:$0xff]
    %v538 = vld [vmem:[%s1 + $0xfa0] sm:$0xff]
    %v539 = vld [vmem:[%s1 + $0xfa8] sm:$0xff]
    %v540 = vld [vmem:[%s1 + $0xfb0] sm:$0xff]
    %v541 = vld [vmem:[%s1 + $0xfb8] sm:$0xff]
    %v542 = vld [vmem:[%s1 + $0xfc0] sm:$0xff]
    %v543 = vld [vmem:[%s1 + $0xfc8] sm:$0xff]
    %v544 = vld [vmem:[%s1 + $0xfd0] sm:$0xff]
    %v545 = vld [vmem:[%s1 + $0xfd8] sm:$0xff]
    %v546 = vld [vmem:[%s1 + $0xfe0] sm:$0xff]
    %v547 = vld [vmem:[%s1 + $0xfe8] sm:$0xff]
    %v548 = vld [vmem:[%s1 + $0xff0] sm:$0xff]
    %v549 = vld [vmem:[%s1 + $0xff8] sm:$0xff]
    %v550 = vld [vmem:[%s1 + $0x1000] sm:$0xff]
    %v551 = vld [vmem:[%s1 + $0x1008] sm:$0xff]
    %v552 = vld [vmem:[%s1 + $0x1010] sm:$0xff]
    %v553 = vld [vmem:[%s1 + $0x1018] sm:$0xff]
    %v554 = vld [vmem:[%s1 + $0x1020] sm:$0xff]
    %v555 = vld [vmem:[%s1 + $0x1028] sm:$0xff]
    %v556 = vld [vmem:[%s1 + $0x1030] sm:$0xff]
    %v557 = vld [vmem:[%s1 + $0x1038] sm:$0xff]
    %v558 = vld [vmem:[%s1 + $0x1040] sm:$0xff]
    %v559 = vld [vmem:[%s1 + $0x1048] sm:$0xff]
    %v560 = vld [vmem:[%s1 + $0x1050] sm:$0xff]
    %v561 = vld [vmem:[%s1 + $0x1058] sm:$0xff]
    %v562 = vld [vmem:[%s1 + $0x1060] sm:$0xff]
    %v563 = vld [vmem:[%s1 + $0x1068] sm:$0xff]
    %v564 = vld [vmem:[%s1 + $0x1070] sm:$0xff]
    %v565 = vld [vmem:[%s1 + $0x1078] sm:$0xff]
    %v566 = vld [vmem:[%s1 + $0x1080] sm:$0xff]
    %v567 = vld [vmem:[%s1 + $0x1088] sm:$0xff]
    %v568 = vld [vmem:[%s1 + $0x1090] sm:$0xff]
    %v569 = vld [vmem:[%s1 + $0x1098] sm:$0xff]
    %v570 = vld [vmem:[%s1 + $0x10a0] sm:$0xff]
    %v571 = vld [vmem:[%s1 + $0x10a8] sm:$0xff]
    %v572 = vld [vmem:[%s1 + $0x10b0] sm:$0xff]
    %v573 = vld [vmem:[%s1 + $0x10b8] sm:$0xff]
    %v574 = vld [vmem:[%s1 + $0x10c0] sm:$0xff]
    %v575 = vld [vmem:[%s1 + $0x10c8] sm:$0xff]
    %v576 = vld [vmem:[%s1 + $0x10d0] sm:$0xff]
    %v577 = vld [vmem:[%s1 + $0x10d8] sm:$0xff]
    %v578 = vld [vmem:[%s1 + $0x10e0] sm:$0xff]
    %v579 = vld [vmem:[%s1 + $0x10e8] sm:$0xff]
    %v580 = vld [vmem:[%s1 + $0x10f0] sm:$0xff]
    %v581 = vld [vmem:[%s1 + $0x10f8] sm:$0xff]
    %v582 = vld [vmem:[%s1 + $0x1100] sm:$0xff]
    %v583 = vld [vmem:[%s1 + $0x1108] sm:$0xff]
    %v584 = vld [vmem:[%s1 + $0x1110] sm:$0xff]
    %v585 = vld [vmem:[%s1 + $0x1118] sm:$0xff]
    %v586 = vld [vmem:[%s1 + $0x1120] sm:$0xff]
    %v587 = vld [vmem:[%s1 + $0x1128] sm:$0xff]
    %v588 = vld [vmem:[%s1 + $0x1130] sm:$0xff]
    %v589 = vld [vmem:[%s1 + $0x1138] sm:$0xff]
    %v590 = vld [vmem:[%s1 + $0x1140] sm:$0xff]
    %v591 = vld [vmem:[%s1 + $0x1148] sm:$0xff]
    %v592 = vld [vmem:[%s1 + $0x1150] sm:$0xff]
    %v593 = vld [vmem:[%s1 + $0x1158] sm:$0xff]
    %v594 = vld [vmem:[%s1 + $0x1160] sm:$0xff]
    %v595 = vld [vmem:[%s1 + $0x1168] sm:$0xff]
    %v596 = vld [vmem:[%s1 + $0x1170] sm:$0xff]
    %v597 = vld [vmem:[%s1 + $0x1178] sm:$0xff]
    %v598 = vld [vmem:[%s1 + $0x1180] sm:$0xff]
    %v599 = vld [vmem:[%s1 + $0x1188] sm:$0xff]
    %v600 = vld [vmem:[%s1 + $0x1190] sm:$0xff]
    %v601 = vld [vmem:[%s1 + $0x1198] sm:$0xff]
    %v602 = vld [vmem:[%s1 + $0x11a0] sm:$0xff]
    %v603 = vld [vmem:[%s1 + $0x11a8] sm:$0xff]
    %v604 = vld [vmem:[%s1 + $0x11b0] sm:$0xff]
    %v605 = vld [vmem:[%s1 + $0x11b8] sm:$0xff]
    %v606 = vld [vmem:[%s1 + $0x11c0] sm:$0xff]
    %v607 = vld [vmem:[%s1 + $0x11c8] sm:$0xff]
    %v608 = vld [vmem:[%s1 + $0x11d0] sm:$0xff]
    %v609 = vld [vmem:[%s1 + $0x11d8] sm:$0xff]
    %v610 = vld [vmem:[%s1 + $0x11e0] sm:$0xff]
    %v611 = vld [vmem:[%s1 + $0x11e8] sm:$0xff]
    %v612 = vld [vmem:[%s1 + $0x11f0] sm:$0xff]
    %v613 = vld [vmem:[%s1 + $0x11f8] sm:$0xff]
    %v614 = vld [vmem:[%s1 + $0x1200] sm:$0xff]
    %v615 = vld [vmem:[%s1 + $0x1208] sm:$0xff]
    %v616 = vld [vmem:[%s1 + $0x1210] sm:$0xff]
    %v617 = vld [vmem:[%s1 + $0x1218] sm:$0xff]
    %v618 = vld [vmem:[%s1 + $0x1220] sm:$0xff]
    %v619 = vld [vmem:[%s1 + $0x1228] sm:$0xff]
    %v620 = vld [vmem:[%s1 + $0x1230] sm:$0xff]
    %v621 = vld [vmem:[%s1 + $0x1238] sm:$0xff]
    %v622 = vld [vmem:[%s1 + $0x1240] sm:$0xff]
    %v623 = vld [vmem:[%s1 + $0x1248] sm:$0xff]
    %v624 = vld [vmem:[%s1 + $0x1250] sm:$0xff]
    %v625 = vld [vmem:[%s1 + $0x1258] sm:$0xff]
    %v626 = vld [vmem:[%s1 + $0x1260] sm:$0xff]
    %v627 = vld [vmem:[%s1 + $0x1268] sm:$0xff]
    %v628 = vld [vmem:[%s1 + $0x1270] sm:$0xff]
    %v629 = vld [vmem:[%s1 + $0x1278] sm:$0xff]
    %v630 = vld [vmem:[%s1 + $0x1280] sm:$0xff]
    %v631 = vld [vmem:[%s1 + $0x1288] sm:$0xff]
    %v632 = vld [vmem:[%s1 + $0x1290] sm:$0xff]
    %v633 = vld [vmem:[%s1 + $0x1298] sm:$0xff]
    %v634 = vld [vmem:[%s1 + $0x12a0] sm:$0xff]
    %v635 = vld [vmem:[%s1 + $0x12a8] sm:$0xff]
    %v636 = vld [vmem:[%s1 + $0x12b0] sm:$0xff]
    %v637 = vld [vmem:[%s1 + $0x12b8] sm:$0xff]
    %v638 = vld [vmem:[%s1 + $0x12c0] sm:$0xff]
    %v639 = vld [vmem:[%s1 + $0x12c8] sm:$0xff]
    %v640 = vld [vmem:[%s1 + $0x12d0] sm:$0xff]
    %v641 = vld [vmem:[%s1 + $0x12d8] sm:$0xff]
    %v642 = vld [vmem:[%s1 + $0x12e0] sm:$0xff]
    %v643 = vld [vmem:[%s1 + $0x12e8] sm:$0xff]
    %v644 = vld [vmem:[%s1 + $0x12f0] sm:$0xff]
    %v645 = vld [vmem:[%s1 + $0x12f8] sm:$0xff]
    %v646 = vld [vmem:[%s1 + $0x1300] sm:$0xff]
    %v647 = vld [vmem:[%s1 + $0x1308] sm:$0xff]
    %v648 = vld [vmem:[%s1 + $0x1310] sm:$0xff]
    %v649 = vld [vmem:[%s1 + $0x1318] sm:$0xff]
    %v650 = vld [vmem:[%s1 + $0x1320] sm:$0xff]
    %v651 = vld [vmem:[%s1 + $0x1328] sm:$0xff]
    %v652 = vld [vmem:[%s1 + $0x1330] sm:$0xff]
    %v653 = vld [vmem:[%s1 + $0x1338] sm:$0xff]
    %v654 = vld [vmem:[%s1 + $0x1340] sm:$0xff]
    %v655 = vld [vmem:[%s1 + $0x1348] sm:$0xff]
    %v656 = vld [vmem:[%s1 + $0x1350] sm:$0xff]
    %v657 = vld [vmem:[%s1 + $0x1358] sm:$0xff]
    %v658 = vld [vmem:[%s1 + $0x1360] sm:$0xff]
    %v659 = vld [vmem:[%s1 + $0x1368] sm:$0xff]
    %v660 = vld [vmem:[%s1 + $0x1370] sm:$0xff]
    %v661 = vld [vmem:[%s1 + $0x1378] sm:$0xff]
    %v662 = vld [vmem:[%s1 + $0x1380] sm:$0xff]
    %v663 = vld [vmem:[%s1 + $0x1388] sm:$0xff]
    %v664 = vld [vmem:[%s1 + $0x1390] sm:$0xff]
    %v665 = vld [vmem:[%s1 + $0x1398] sm:$0xff]
    %v666 = vld [vmem:[%s1 + $0x13a0] sm:$0xff]
    %v667 = vld [vmem:[%s1 + $0x13a8] sm:$0xff]
    %v668 = vld [vmem:[%s1 + $0x13b0] sm:$0xff]
    %v669 = vld [vmem:[%s1 + $0x13b8] sm:$0xff]
    %v670 = vld [vmem:[%s1 + $0x13c0] sm:$0xff]
    %v671 = vld [vmem:[%s1 + $0x13c8] sm:$0xff]
    %v672 = vld [vmem:[%s1 + $0x13d0] sm:$0xff]
    %v673 = vld [vmem:[%s1 + $0x13d8] sm:$0xff]
    %v674 = vld [vmem:[%s1 + $0x13e0] sm:$0xff]
    %v675 = vld [vmem:[%s1 + $0x13e8] sm:$0xff]
    %v676 = vld [vmem:[%s1 + $0x13f0] sm:$0xff]
    %v677 = vld [vmem:[%s1 + $0x13f8] sm:$0xff]
    %v678 = vld [vmem:[%s1 + $0x1400] sm:$0xff]
    %v679 = vld [vmem:[%s1 + $0x1408] sm:$0xff]
    %v680 = vld [vmem:[%s1 + $0x1410] sm:$0xff]
    %v681 = vld [vmem:[%s1 + $0x1418] sm:$0xff]
    %v682 = vld [vmem:[%s1 + $0x1420] sm:$0xff]
    %v683 = vld [vmem:[%s1 + $0x1428] sm:$0xff]
    %v684 = vld [vmem:[%s1 + $0x1430] sm:$0xff]
    %v685 = vld [vmem:[%s1 + $0x1438] sm:$0xff]
    %v686 = vld [vmem:[%s1 + $0x1440] sm:$0xff]
    %v687 = vld [vmem:[%s1 + $0x1448] sm:$0xff]
    %v688 = vld [vmem:[%s1 + $0x1450] sm:$0xff]
    %v689 = vld [vmem:[%s1 + $0x1458] sm:$0xff]
    %v690 = vld [vmem:[%s1 + $0x1460] sm:$0xff]
    %v691 = vld [vmem:[%s1 + $0x1468] sm:$0xff]
    %v692 = vld [vmem:[%s1 + $0x1470] sm:$0xff]
    %v693 = vld [vmem:[%s1 + $0x1478] sm:$0xff]
    %v694 = vld [vmem:[%s1 + $0x1480] sm:$0xff]
    %v695 = vld [vmem:[%s1 + $0x1488] sm:$0xff]
    %v696 = vld [vmem:[%s1 + $0x1490] sm:$0xff]
    %v697 = vld [vmem:[%s1 + $0x1498] sm:$0xff]
    %v698 = vld [vmem:[%s1 + $0x14a0] sm:$0xff]
    %v699 = vld [vmem:[%s1 + $0x14a8] sm:$0xff]
    %v700 = vld [vmem:[%s1 + $0x14b0] sm:$0xff]
    %v701 = vld [vmem:[%s1 + $0x14b8] sm:$0xff]
    %v702 = vld [vmem:[%s1 + $0x14c0] sm:$0xff]
    %v703 = vld [vmem:[%s1 + $0x14c8] sm:$0xff]
    %v704 = vld [vmem:[%s1 + $0x14d0] sm:$0xff]
    %v705 = vld [vmem:[%s1 + $0x14d8] sm:$0xff]
    %v706 = vld [vmem:[%s1 + $0x14e0] sm:$0xff]
    %v707 = vld [vmem:[%s1 + $0x14e8] sm:$0xff]
    %v708 = vld [vmem:[%s1 + $0x14f0] sm:$0xff]
    %v709 = vld [vmem:[%s1 + $0x14f8] sm:$0xff]
    %v710 = vld [vmem:[%s1 + $0x1500] sm:$0xff]
    %v711 = vld [vmem:[%s1 + $0x1508] sm:$0xff]
    %v712 = vld [vmem:[%s1 + $0x1510] sm:$0xff]
    %v713 = vld [vmem:[%s1 + $0x1518] sm:$0xff]
    %v714 = vld [vmem:[%s1 + $0x1520] sm:$0xff]
    %v715 = vld [vmem:[%s1 + $0x1528] sm:$0xff]
    %v716 = vld [vmem:[%s1 + $0x1530] sm:$0xff]
    %v717 = vld [vmem:[%s1 + $0x1538] sm:$0xff]
    %v718 = vld [vmem:[%s1 + $0x1540] sm:$0xff]
    %v719 = vld [vmem:[%s1 + $0x1548] sm:$0xff]
    %v720 = vld [vmem:[%s1 + $0x1550] sm:$0xff]
    %v721 = vld [vmem:[%s1 + $0x1558] sm:$0xff]
    %v722 = vld [vmem:[%s1 + $0x1560] sm:$0xff]
    %v723 = vld [vmem:[%s1 + $0x1568] sm:$0xff]
    %v724 = vld [vmem:[%s1 + $0x1570] sm:$0xff]
    %v725 = vld [vmem:[%s1 + $0x1578] sm:$0xff]
    %v726 = vld [vmem:[%s1 + $0x1580] sm:$0xff]
    %v727 = vld [vmem:[%s1 + $0x1588] sm:$0xff]
    %v728 = vld [vmem:[%s1 + $0x1590] sm:$0xff]
    %v729 = vld [vmem:[%s1 + $0x1598] sm:$0xff]
    %v730 = vld [vmem:[%s1 + $0x15a0] sm:$0xff]
    %v731 = vld [vmem:[%s1 + $0x15a8] sm:$0xff]
    %v732 = vld [vmem:[%s1 + $0x15b0] sm:$0xff]
    %v733 = vld [vmem:[%s1 + $0x15b8] sm:$0xff]
    %v734 = vld [vmem:[%s1 + $0x15c0] sm:$0xff]
    %v735 = vld [vmem:[%s1 + $0x15c8] sm:$0xff]
    %v736 = vld [vmem:[%s1 + $0x15d0] sm:$0xff]
    %v737 = vld [vmem:[%s1 + $0x15d8] sm:$0xff]
    %v738 = vld [vmem:[%s1 + $0x15e0] sm:$0xff]
    %v739 = vld [vmem:[%s1 + $0x15e8] sm:$0xff]
    %v740 = vld [vmem:[%s1 + $0x15f0] sm:$0xff]
    %v741 = vld [vmem:[%s1 + $0x15f8] sm:$0xff]
    %v742 = vld [vmem:[%s1 + $0x1600] sm:$0xff]
    %v743 = vld [vmem:[%s1 + $0x1608] sm:$0xff]
    %v744 = vld [vmem:[%s1 + $0x1610] sm:$0xff]
    %v745 = vld [vmem:[%s1 + $0x1618] sm:$0xff]
    %v746 = vld [vmem:[%s1 + $0x1620] sm:$0xff]
    %v747 = vld [vmem:[%s1 + $0x1628] sm:$0xff]
    %v748 = vld [vmem:[%s1 + $0x1630] sm:$0xff]
    %v749 = vld [vmem:[%s1 + $0x1638] sm:$0xff]
    %v750 = vld [vmem:[%s1 + $0x1640] sm:$0xff]
    %v751 = vld [vmem:[%s1 + $0x1648] sm:$0xff]
    %v752 = vld [vmem:[%s1 + $0x1650] sm:$0xff]
    %v753 = vld [vmem:[%s1 + $0x1658] sm:$0xff]
    %v754 = vld [vmem:[%s1 + $0x1660] sm:$0xff]
    %v755 = vld [vmem:[%s1 + $0x1668] sm:$0xff]
    %v756 = vld [vmem:[%s1 + $0x1670] sm:$0xff]
    %v757 = vld [vmem:[%s1 + $0x1678] sm:$0xff]
    %v758 = vld [vmem:[%s1 + $0x1680] sm:$0xff]
    %v759 = vld [vmem:[%s1 + $0x1688] sm:$0xff]
    %v760 = vld [vmem:[%s1 + $0x1690] sm:$0xff]
    %v761 = vld [vmem:[%s1 + $0x1698] sm:$0xff]
    %v762 = vld [vmem:[%s1 + $0x16a0] sm:$0xff]
    %v763 = vld [vmem:[%s1 + $0x16a8] sm:$0xff]
    %v764 = vld [vmem:[%s1 + $0x16b0] sm:$0xff]
    %v765 = vld [vmem:[%s1 + $0x16b8] sm:$0xff]
    %v766 = vld [vmem:[%s1 + $0x16c0] sm:$0xff]
    %v767 = vld [vmem:[%s1 + $0x16c8] sm:$0xff]
    %v768 = vld [vmem:[%s1 + $0x16d0] sm:$0xff]
    %v769 = vld [vmem:[%s1 + $0x16d8] sm:$0xff]
    %v770 = vld [vmem:[%s1 + $0x16e0] sm:$0xff]
    %v771 = vld [vmem:[%s1 + $0x16e8] sm:$0xff]
    %v772 = vld [vmem:[%s1 + $0x16f0] sm:$0xff]
    %v773 = vld [vmem:[%s1 + $0x16f8] sm:$0xff]
    %v774 = vld [vmem:[%s1 + $0x1700] sm:$0xff]
    %v775 = vld [vmem:[%s1 + $0x1708] sm:$0xff]
    %v776 = vld [vmem:[%s1 + $0x1710] sm:$0xff]
    %v777 = vld [vmem:[%s1 + $0x1718] sm:$0xff]
    %v778 = vld [vmem:[%s1 + $0x1720] sm:$0xff]
    %v779 = vld [vmem:[%s1 + $0x1728] sm:$0xff]
    %v780 = vld [vmem:[%s1 + $0x1730] sm:$0xff]
    %v781 = vld [vmem:[%s1 + $0x1738] sm:$0xff]
    %v782 = vld [vmem:[%s1 + $0x1740] sm:$0xff]
    %v783 = vld [vmem:[%s1 + $0x1748] sm:$0xff]
    %v784 = vld [vmem:[%s1 + $0x1750] sm:$0xff]
    %v785 = vld [vmem:[%s1 + $0x1758] sm:$0xff]
    %v786 = vld [vmem:[%s1 + $0x1760] sm:$0xff]
    %v787 = vld [vmem:[%s1 + $0x1768] sm:$0xff]
    %v788 = vld [vmem:[%s1 + $0x1770] sm:$0xff]
    %v789 = vld [vmem:[%s1 + $0x1778] sm:$0xff]
    %v790 = vld [vmem:[%s1 + $0x1780] sm:$0xff]
    %v791 = vld [vmem:[%s1 + $0x1788] sm:$0xff]
    %v792 = vld [vmem:[%s1 + $0x1790] sm:$0xff]
    %v793 = vld [vmem:[%s1 + $0x1798] sm:$0xff]
    %v794 = vld [vmem:[%s1 + $0x17a0] sm:$0xff]
    %v795 = vld [vmem:[%s1 + $0x17a8] sm:$0xff]
    %v796 = vld [vmem:[%s1 + $0x17b0] sm:$0xff]
    %v797 = vld [vmem:[%s1 + $0x17b8] sm:$0xff]
    %v798 = vld [vmem:[%s1 + $0x17c0] sm:$0xff]
    %v799 = vld [vmem:[%s1 + $0x17c8] sm:$0xff]
    %v800 = vld [vmem:[%s1 + $0x17d0] sm:$0xff]
    %v801 = vld [vmem:[%s1 + $0x17d8] sm:$0xff]
    %v802 = vld [vmem:[%s1 + $0x17e0] sm:$0xff]
    %v803 = vld [vmem:[%s1 + $0x17e8] sm:$0xff]
    %v804 = vld [vmem:[%s1 + $0x17f0] sm:$0xff]
    %v805 = vld [vmem:[%s1 + $0x17f8] sm:$0xff]
    %v806 = vld [vmem:[%s1 + $0x1800] sm:$0xff]
    %v807 = vld [vmem:[%s1 + $0x1808] sm:$0xff]
    %v808 = vld [vmem:[%s1 + $0x1810] sm:$0xff]
    %v809 = vld [vmem:[%s1 + $0x1818] sm:$0xff]
    %v810 = vld [vmem:[%s1 + $0x1820] sm:$0xff]
    %v811 = vld [vmem:[%s1 + $0x1828] sm:$0xff]
    %v812 = vld [vmem:[%s1 + $0x1830] sm:$0xff]
    %v813 = vld [vmem:[%s1 + $0x1838] sm:$0xff]
    %v814 = vld [vmem:[%s1 + $0x1840] sm:$0xff]
    %v815 = vld [vmem:[%s1 + $0x1848] sm:$0xff]
    %v816 = vld [vmem:[%s1 + $0x1850] sm:$0xff]
    %v817 = vld [vmem:[%s1 + $0x1858] sm:$0xff]
    %v818 = vld [vmem:[%s1 + $0x1860] sm:$0xff]
    %v819 = vld [vmem:[%s1 + $0x1868] sm:$0xff]
    %v820 = vld [vmem:[%s1 + $0x1870] sm:$0xff]
    %v821 = vld [vmem:[%s1 + $0x1878] sm:$0xff]
    %v822 = vld [vmem:[%s1 + $0x1880] sm:$0xff]
    %v823 = vld [vmem:[%s1 + $0x1888] sm:$0xff]
    %v824 = vld [vmem:[%s1 + $0x1890] sm:$0xff]
    %v825 = vld [vmem:[%s1 + $0x1898] sm:$0xff]
    %v826 = vld [vmem:[%s1 + $0x18a0] sm:$0xff]
    %v827 = vld [vmem:[%s1 + $0x18a8] sm:$0xff]
    %v828 = vld [vmem:[%s1 + $0x18b0] sm:$0xff]
    %v829 = vld [vmem:[%s1 + $0x18b8] sm:$0xff]
    %v830 = vld [vmem:[%s1 + $0x18c0] sm:$0xff]
    %v831 = vld [vmem:[%s1 + $0x18c8] sm:$0xff]
    %v832 = vld [vmem:[%s1 + $0x18d0] sm:$0xff]
    %v833 = vld [vmem:[%s1 + $0x18d8] sm:$0xff]
    %v834 = vld [vmem:[%s1 + $0x18e0] sm:$0xff]
    %v835 = vld [vmem:[%s1 + $0x18e8] sm:$0xff]
    %v836 = vld [vmem:[%s1 + $0x18f0] sm:$0xff]
    %v837 = vld [vmem:[%s1 + $0x18f8] sm:$0xff]
    %v838 = vld [vmem:[%s1 + $0x1900] sm:$0xff]
    %v839 = vld [vmem:[%s1 + $0x1908] sm:$0xff]
    %v840 = vld [vmem:[%s1 + $0x1910] sm:$0xff]
    %v841 = vld [vmem:[%s1 + $0x1918] sm:$0xff]
    %v842 = vld [vmem:[%s1 + $0x1920] sm:$0xff]
    %v843 = vld [vmem:[%s1 + $0x1928] sm:$0xff]
    %v844 = vld [vmem:[%s1 + $0x1930] sm:$0xff]
    %v845 = vld [vmem:[%s1 + $0x1938] sm:$0xff]
    %v846 = vld [vmem:[%s1 + $0x1940] sm:$0xff]
    %v847 = vld [vmem:[%s1 + $0x1948] sm:$0xff]
    %v848 = vld [vmem:[%s1 + $0x1950] sm:$0xff]
    %v849 = vld [vmem:[%s1 + $0x1958] sm:$0xff]
    %v850 = vld [vmem:[%s1 + $0x1960] sm:$0xff]
    %v851 = vld [vmem:[%s1 + $0x1968] sm:$0xff]
    %v852 = vld [vmem:[%s1 + $0x1970] sm:$0xff]
    %v853 = vld [vmem:[%s1 + $0x1978] sm:$0xff]
    %v854 = vld [vmem:[%s1 + $0x1980] sm:$0xff]
    %v855 = vld [vmem:[%s1 + $0x1988] sm:$0xff]
    %v856 = vld [vmem:[%s1 + $0x1990] sm:$0xff]
    %v857 = vld [vmem:[%s1 + $0x1998] sm:$0xff]
    %v858 = vld [vmem:[%s1 + $0x19a0] sm:$0xff]
    %v859 = vld [vmem:[%s1 + $0x19a8] sm:$0xff]
    %v860 = vld [vmem:[%s1 + $0x19b0] sm:$0xff]
    %v861 = vld [vmem:[%s1 + $0x19b8] sm:$0xff]
    %v862 = vld [vmem:[%s1 + $0x19c0] sm:$0xff]
    %v863 = vld [vmem:[%s1 + $0x19c8] sm:$0xff]
    %v864 = vld [vmem:[%s1 + $0x19d0] sm:$0xff]
    %v865 = vld [vmem:[%s1 + $0x19d8] sm:$0xff]
    %v866 = vld [vmem:[%s1 + $0x19e0] sm:$0xff]
    %v867 = vld [vmem:[%s1 + $0x19e8] sm:$0xff]
    %v868 = vld [vmem:[%s1 + $0x19f0] sm:$0xff]
    %v869 = vld [vmem:[%s1 + $0x19f8] sm:$0xff]
    %v870 = vld [vmem:[%s1 + $0x1a00] sm:$0xff]
    %v871 = vld [vmem:[%s1 + $0x1a08] sm:$0xff]
    %v872 = vld [vmem:[%s1 + $0x1a10] sm:$0xff]
    %v873 = vld [vmem:[%s1 + $0x1a18] sm:$0xff]
    %v874 = vld [vmem:[%s1 + $0x1a20] sm:$0xff]
    %v875 = vld [vmem:[%s1 + $0x1a28] sm:$0xff]
    %v876 = vld [vmem:[%s1 + $0x1a30] sm:$0xff]
    %v877 = vld [vmem:[%s1 + $0x1a38] sm:$0xff]
    %v878 = vld [vmem:[%s1 + $0x1a40] sm:$0xff]
    %v879 = vld [vmem:[%s1 + $0x1a48] sm:$0xff]
    %v880 = vld [vmem:[%s1 + $0x1a50] sm:$0xff]
    %v881 = vld [vmem:[%s1 + $0x1a58] sm:$0xff]
    %v882 = vld [vmem:[%s1 + $0x1a60] sm:$0xff]
    %v883 = vld [vmem:[%s1 + $0x1a68] sm:$0xff]
    %v884 = vld [vmem:[%s1 + $0x1a70] sm:$0xff]
    %v885 = vld [vmem:[%s1 + $0x1a78] sm:$0xff]
    %v886 = vld [vmem:[%s1 + $0x1a80] sm:$0xff]
    %v887 = vld [vmem:[%s1 + $0x1a88] sm:$0xff]
    %v888 = vld [vmem:[%s1 + $0x1a90] sm:$0xff]
    %v889 = vld [vmem:[%s1 + $0x1a98] sm:$0xff]
    %v890 = vld [vmem:[%s1 + $0x1aa0] sm:$0xff]
    %v891 = vld [vmem:[%s1 + $0x1aa8] sm:$0xff]
    %v892 = vld [vmem:[%s1 + $0x1ab0] sm:$0xff]
    %v893 = vld [vmem:[%s1 + $0x1ab8] sm:$0xff]
    %v894 = vld [vmem:[%s1 + $0x1ac0] sm:$0xff]
    %v895 = vld [vmem:[%s1 + $0x1ac8] sm:$0xff]
    %v896 = vld [vmem:[%s1 + $0x1ad0] sm:$0xff]
    %v897 = vld [vmem:[%s1 + $0x1ad8] sm:$0xff]
    %v898 = vld [vmem:[%s1 + $0x1ae0] sm:$0xff]
    %v899 = vld [vmem:[%s1 + $0x1ae8] sm:$0xff]
    %v900 = vld [vmem:[%s1 + $0x1af0] sm:$0xff]
    %v901 = vld [vmem:[%s1 + $0x1af8] sm:$0xff]
    %v902 = vld [vmem:[%s1 + $0x1b00] sm:$0xff]
    %v903 = vld [vmem:[%s1 + $0x1b08] sm:$0xff]
    %v904 = vld [vmem:[%s1 + $0x1b10] sm:$0xff]
    %v905 = vld [vmem:[%s1 + $0x1b18] sm:$0xff]
    %v906 = vld [vmem:[%s1 + $0x1b20] sm:$0xff]
    %v907 = vld [vmem:[%s1 + $0x1b28] sm:$0xff]
    %v908 = vld [vmem:[%s1 + $0x1b30] sm:$0xff]
    %v909 = vld [vmem:[%s1 + $0x1b38] sm:$0xff]
    %v910 = vld [vmem:[%s1 + $0x1b40] sm:$0xff]
    %v911 = vld [vmem:[%s1 + $0x1b48] sm:$0xff]
    %v912 = vld [vmem:[%s1 + $0x1b50] sm:$0xff]
    %v913 = vld [vmem:[%s1 + $0x1b58] sm:$0xff]
    %v914 = vld [vmem:[%s1 + $0x1b60] sm:$0xff]
    %v915 = vld [vmem:[%s1 + $0x1b68] sm:$0xff]
    %v916 = vld [vmem:[%s1 + $0x1b70] sm:$0xff]
    %v917 = vld [vmem:[%s1 + $0x1b78] sm:$0xff]
    %v918 = vld [vmem:[%s1 + $0x1b80] sm:$0xff]
    %v919 = vld [vmem:[%s1 + $0x1b88] sm:$0xff]
    %v920 = vld [vmem:[%s1 + $0x1b90] sm:$0xff]
    %v921 = vld [vmem:[%s1 + $0x1b98] sm:$0xff]
    %v922 = vld [vmem:[%s1 + $0x1ba0] sm:$0xff]
    %v923 = vld [vmem:[%s1 + $0x1ba8] sm:$0xff]
    %v924 = vld [vmem:[%s1 + $0x1bb0] sm:$0xff]
    %v925 = vld [vmem:[%s1 + $0x1bb8] sm:$0xff]
    %v926 = vld [vmem:[%s1 + $0x1bc0] sm:$0xff]
    %v927 = vld [vmem:[%s1 + $0x1bc8] sm:$0xff]
    %v928 = vld [vmem:[%s1 + $0x1bd0] sm:$0xff]
    %v929 = vld [vmem:[%s1 + $0x1bd8] sm:$0xff]
    %v930 = vld [vmem:[%s1 + $0x1be0] sm:$0xff]
    %v931 = vld [vmem:[%s1 + $0x1be8] sm:$0xff]
    %v932 = vld [vmem:[%s1 + $0x1bf0] sm:$0xff]
    %v933 = vld [vmem:[%s1 + $0x1bf8] sm:$0xff]
    %v934 = vld [vmem:[%s1 + $0x1c00] sm:$0xff]
    %v935 = vld [vmem:[%s1 + $0x1c08] sm:$0xff]
    %v936 = vld [vmem:[%s1 + $0x1c10] sm:$0xff]
    %v937 = vld [vmem:[%s1 + $0x1c18] sm:$0xff]
    %v938 = vld [vmem:[%s1 + $0x1c20] sm:$0xff]
    %v939 = vld [vmem:[%s1 + $0x1c28] sm:$0xff]
    %v940 = vld [vmem:[%s1 + $0x1c30] sm:$0xff]
    %v941 = vld [vmem:[%s1 + $0x1c38] sm:$0xff]
    %v942 = vld [vmem:[%s1 + $0x1c40] sm:$0xff]
    %v943 = vld [vmem:[%s1 + $0x1c48] sm:$0xff]
    %v944 = vld [vmem:[%s1 + $0x1c50] sm:$0xff]
    %v945 = vld [vmem:[%s1 + $0x1c58] sm:$0xff]
    %v946 = vld [vmem:[%s1 + $0x1c60] sm:$0xff]
    %v947 = vld [vmem:[%s1 + $0x1c68] sm:$0xff]
    %v948 = vld [vmem:[%s1 + $0x1c70] sm:$0xff]
    %v949 = vld [vmem:[%s1 + $0x1c78] sm:$0xff]
    %v950 = vld [vmem:[%s1 + $0x1c80] sm:$0xff]
    %v951 = vld [vmem:[%s1 + $0x1c88] sm:$0xff]
    %v952 = vld [vmem:[%s1 + $0x1c90] sm:$0xff]
    %v953 = vld [vmem:[%s1 + $0x1c98] sm:$0xff]
    %v954 = vld [vmem:[%s1 + $0x1ca0] sm:$0xff]
    %v955 = vld [vmem:[%s1 + $0x1ca8] sm:$0xff]
    %v956 = vld [vmem:[%s1 + $0x1cb0] sm:$0xff]
    %v957 = vld [vmem:[%s1 + $0x1cb8] sm:$0xff]
    %v958 = vld [vmem:[%s1 + $0x1cc0] sm:$0xff]
    %v959 = vld [vmem:[%s1 + $0x1cc8] sm:$0xff]
    %v960 = vld [vmem:[%s1 + $0x1cd0] sm:$0xff]
    %v961 = vld [vmem:[%s1 + $0x1cd8] sm:$0xff]
    %v962 = vld [vmem:[%s1 + $0x1ce0] sm:$0xff]
    %v963 = vld [vmem:[%s1 + $0x1ce8] sm:$0xff]
    %v964 = vld [vmem:[%s1 + $0x1cf0] sm:$0xff]
    %v965 = vld [vmem:[%s1 + $0x1cf8] sm:$0xff]
    %v966 = vld [vmem:[%s1 + $0x1d00] sm:$0xff]
    %v967 = vld [vmem:[%s1 + $0x1d08] sm:$0xff]
    %v968 = vld [vmem:[%s1 + $0x1d10] sm:$0xff]
    %v969 = vld [vmem:[%s1 + $0x1d18] sm:$0xff]
    %v970 = vld [vmem:[%s1 + $0x1d20] sm:$0xff]
    %v971 = vld [vmem:[%s1 + $0x1d28] sm:$0xff]
    %v972 = vld [vmem:[%s1 + $0x1d30] sm:$0xff]
    %v973 = vld [vmem:[%s1 + $0x1d38] sm:$0xff]
    %v974 = vld [vmem:[%s1 + $0x1d40] sm:$0xff]
    %v975 = vld [vmem:[%s1 + $0x1d48] sm:$0xff]
    %v976 = vld [vmem:[%s1 + $0x1d50] sm:$0xff]
    %v977 = vld [vmem:[%s1 + $0x1d58] sm:$0xff]
    %v978 = vld [vmem:[%s1 + $0x1d60] sm:$0xff]
    %v979 = vld [vmem:[%s1 + $0x1d68] sm:$0xff]
    %v980 = vld [vmem:[%s1 + $0x1d70] sm:$0xff]
    %v981 = vld [vmem:[%s1 + $0x1d78] sm:$0xff]
    %v982 = vld [vmem:[%s1 + $0x1d80] sm:$0xff]
    %v983 = vld [vmem:[%s1 + $0x1d88] sm:$0xff]
    %v984 = vld [vmem:[%s1 + $0x1d90] sm:$0xff]
    %v985 = vld [vmem:[%s1 + $0x1d98] sm:$0xff]
    %v986 = vld [vmem:[%s1 + $0x1da0] sm:$0xff]
    %v987 = vld [vmem:[%s1 + $0x1da8] sm:$0xff]
    %v988 = vld [vmem:[%s1 + $0x1db0] sm:$0xff]
    %v989 = vld [vmem:[%s1 + $0x1db8] sm:$0xff]
    %v990 = vld [vmem:[%s1 + $0x1dc0] sm:$0xff]
    %v991 = vld [vmem:[%s1 + $0x1dc8] sm:$0xff]
    %v992 = vld [vmem:[%s1 + $0x1dd0] sm:$0xff]
    %v993 = vld [vmem:[%s1 + $0x1dd8] sm:$0xff]
    %v994 = vld [vmem:[%s1 + $0x1de0] sm:$0xff]
    %v995 = vld [vmem:[%s1 + $0x1de8] sm:$0xff]
    %v996 = vld [vmem:[%s1 + $0x1df0] sm:$0xff]
    %v997 = vld [vmem:[%s1 + $0x1df8] sm:$0xff]
    %v998 = vld [vmem:[%s1 + $0x1e00] sm:$0xff]
    %v999 = vld [vmem:[%s1 + $0x1e08] sm:$0xff]
    %v1000 = vld [vmem:[%s1 + $0x1e10] sm:$0xff]
    %v1001 = vld [vmem:[%s1 + $0x1e18] sm:$0xff]
    %v1002 = vld [vmem:[%s1 + $0x1e20] sm:$0xff]
    %v1003 = vld [vmem:[%s1 + $0x1e28] sm:$0xff]
    %v1004 = vld [vmem:[%s1 + $0x1e30] sm:$0xff]
    %v1005 = vld [vmem:[%s1 + $0x1e38] sm:$0xff]
    %v1006 = vld [vmem:[%s1 + $0x1e40] sm:$0xff]
    %v1007 = vld [vmem:[%s1 + $0x1e48] sm:$0xff]
    %v1008 = vld [vmem:[%s1 + $0x1e50] sm:$0xff]
    %v1009 = vld [vmem:[%s1 + $0x1e58] sm:$0xff]
    %v1010 = vld [vmem:[%s1 + $0x1e60] sm:$0xff]
    %v1011 = vld [vmem:[%s1 + $0x1e68] sm:$0xff]
    %v1012 = vld [vmem:[%s1 + $0x1e70] sm:$0xff]
    %v1013 = vld [vmem:[%s1 + $0x1e78] sm:$0xff]
    %v1014 = vld [vmem:[%s1 + $0x1e80] sm:$0xff]
    %v1015 = vld [vmem:[%s1 + $0x1e88] sm:$0xff]
    %v1016 = vld [vmem:[%s1 + $0x1e90] sm:$0xff]
    %v1017 = vld [vmem:[%s1 + $0x1e98] sm:$0xff]
    %v1018 = vld [vmem:[%s1 + $0x1ea0] sm:$0xff]
    %v1019 = vld [vmem:[%s1 + $0x1ea8] sm:$0xff]
    %v1020 = vld [vmem:[%s1 + $0x1eb0] sm:$0xff]
    %v1021 = vld [vmem:[%s1 + $0x1eb8] sm:$0xff]
    %v1022 = vld [vmem:[%s1 + $0x1ec0] sm:$0xff]
    %v1023 = vld [vmem:[%s1 + $0x1ec8] sm:$0xff]
    %v1024 = vld [vmem:[%s1 + $0x1ed0] sm:$0xff]
    %v1025 = vld [vmem:[%s1 + $0x1ed8] sm:$0xff]
    %v1026 = vld [vmem:[%s1 + $0x1ee0] sm:$0xff]
    %v1027 = vld [vmem:[%s1 + $0x1ee8] sm:$0xff]
    %v1028 = vld [vmem:[%s1 + $0x1ef0] sm:$0xff]
    %v1029 = vld [vmem:[%s1 + $0x1ef8] sm:$0xff]
    %v1030 = vld [vmem:[%s1 + $0x1f00] sm:$0xff]
    %v1031 = vld [vmem:[%s1 + $0x1f08] sm:$0xff]
    %v1032 = vld [vmem:[%s1 + $0x1f10] sm:$0xff]
    %v1033 = vld [vmem:[%s1 + $0x1f18] sm:$0xff]
    %v1034 = vld [vmem:[%s1 + $0x1f20] sm:$0xff]
    %v1035 = vld [vmem:[%s1 + $0x1f28] sm:$0xff]
    %v1036 = vld [vmem:[%s1 + $0x1f30] sm:$0xff]
    %v1037 = vld [vmem:[%s1 + $0x1f38] sm:$0xff]
    %v1038 = vld [vmem:[%s1 + $0x1f40] sm:$0xff]
    %v1039 = vld [vmem:[%s1 + $0x1f48] sm:$0xff]
    %v1040 = vld [vmem:[%s1 + $0x1f50] sm:$0xff]
    %v1041 = vld [vmem:[%s1 + $0x1f58] sm:$0xff]
    %v1042 = vld [vmem:[%s1 + $0x1f60] sm:$0xff]
    %v1043 = vld [vmem:[%s1 + $0x1f68] sm:$0xff]
    %v1044 = vld [vmem:[%s1 + $0x1f70] sm:$0xff]
    %v1045 = vld [vmem:[%s1 + $0x1f78] sm:$0xff]
    %v1046 = vld [vmem:[%s1 + $0x1f80] sm:$0xff]
    %v1047 = vld [vmem:[%s1 + $0x1f88] sm:$0xff]
    %v1048 = vld [vmem:[%s1 + $0x1f90] sm:$0xff]
    %v1049 = vld [vmem:[%s1 + $0x1f98] sm:$0xff]
    %v1050 = vld [vmem:[%s1 + $0x1fa0] sm:$0xff]
    %v1051 = vld [vmem:[%s1 + $0x1fa8] sm:$0xff]
    %v1052 = vld [vmem:[%s1 + $0x1fb0] sm:$0xff]
    %v1053 = vld [vmem:[%s1 + $0x1fb8] sm:$0xff]
    %v1054 = vld [vmem:[%s1 + $0x1fc0] sm:$0xff]
    %v1055 = vld [vmem:[%s1 + $0x1fc8] sm:$0xff]
    %v1056 = vld [vmem:[%s1 + $0x1fd0] sm:$0xff]
    %v1057 = vld [vmem:[%s1 + $0x1fd8] sm:$0xff]
    %v1058 = vld [vmem:[%s1 + $0x1fe0] sm:$0xff]
    %v1059 = vld [vmem:[%s1 + $0x1fe8] sm:$0xff]
    %v1060 = vld [vmem:[%s1 + $0x1ff0] sm:$0xff]
    %v1061 = vld [vmem:[%s1 + $0x1ff8] sm:$0xff]
    %v1062 = vld [vmem:[%s2] sm:$0xf]
    %v1064 = vperm.slane %v1062, 0
    %v1065 = vperm.slane %v1062, 1
    %v1066 = vperm.slane %v1062, 2
    %v1067 = vperm.slane %v1062, 3
    %1073 = vst [vmem:[#allocation1] ss:$9 sm:$0xff] %v34
    %v1074 = vld [vmem:[#allocation1] sm:$0xff]
    %v1075 = vld [vmem:[#allocation1 + $0x9] sm:$0xff]
    %v1076 = vld [vmem:[#allocation1 + $0x12] sm:$0xff]
    %v1077 = vld [vmem:[#allocation1 + $0x1b] sm:$0xff]
    %v1078 = vld [vmem:[#allocation1 + $0x24] sm:$0xff]
    %v1079 = vld [vmem:[#allocation1 + $0x2d] sm:$0xff]
    %v1080 = vld [vmem:[#allocation1 + $0x36] sm:$0xff]
    %v1081 = vld [vmem:[#allocation1 + $0x3f] sm:$0xff]
    %1083 = vst [vmem:[#allocation1] ss:$9 sm:$0xff] %v35
    %v1084 = vld [vmem:[#allocation1] sm:$0xff]
    %v1085 = vld [vmem:[#allocation1 + $0x9] sm:$0xff]
    %v1086 = vld [vmem:[#allocation1 + $0x12] sm:$0xff]
    %v1087 = vld [vmem:[#allocation1 + $0x1b] sm:$0xff]
    %v1088 = vld [vmem:[#allocation1 + $0x24] sm:$0xff]
    %v1089 = vld [vmem:[#allocation1 + $0x2d] sm:$0xff]
    %v1090 = vld [vmem:[#allocation1 + $0x36] sm:$0xff]
    %v1091 = vld [vmem:[#allocation1 + $0x3f] sm:$0xff]
    %1093 = vst [vmem:[#allocation1] ss:$9 sm:$0xff] %v36
    %v1094 = vld [vmem:[#allocation1] sm:$0xff]
    %v1095 = vld [vmem:[#allocation1 + $0x9] sm:$0xff]
    %v1096 = vld [vmem:[#allocation1 + $0x12] sm:$0xff]
    %v1097 = vld [vmem:[#allocation1 + $0x1b] sm:$0xff]
    %v1098 = vld [vmem:[#allocation1 + $0x24] sm:$0xff]
    %v1099 = vld [vmem:[#allocation1 + $0x2d] sm:$0xff]
    %v1100 = vld [vmem:[#allocation1 + $0x36] sm:$0xff]
    %v1101 = vld [vmem:[#allocation1 + $0x3f] sm:$0xff]
    %1103 = vst [vmem:[#allocation1] ss:$9 sm:$0xff] %v37
    %v1104 = vld [vmem:[#allocation1] sm:$0xff]
    %v1105 = vld [vmem:[#allocation1 + $0x9] sm:$0xff]
    %v1106 = vld [vmem:[#allocation1 + $0x12] sm:$0xff]
    %v1107 = vld [vmem:[#allocation1 + $0x1b] sm:$0xff]
    %v1108 = vld [vmem:[#allocation1 + $0x24] sm:$0xff]
    %v1109 = vld [vmem:[#allocation1 + $0x2d] sm:$0xff]
    %v1110 = vld [vmem:[#allocation1 + $0x36] sm:$0xff]
    %v1111 = vld [vmem:[#allocation1 + $0x3f] sm:$0xff]
    %v2168 = vunpack.c.l.b16 %v38
    %v2169 = vunpack.c.h.b16 %v38
    %v2170 = vunpack.c.l.b16 %v39
    %v2171 = vunpack.c.h.b16 %v39
    %v2172 = vunpack.c.l.b16 %v40
    %v2173 = vunpack.c.h.b16 %v40
    %v2174 = vunpack.c.l.b16 %v41
    %v2175 = vunpack.c.h.b16 %v41
    %v2176 = vunpack.c.l.b16 %v42
    %v2177 = vunpack.c.h.b16 %v42
    %v2178 = vunpack.c.l.b16 %v43
    %v2179 = vunpack.c.h.b16 %v43
    %v2180 = vunpack.c.l.b16 %v44
    %v2181 = vunpack.c.h.b16 %v44
    %v2182 = vunpack.c.l.b16 %v45
    %v2183 = vunpack.c.h.b16 %v45
    %v2184 = vunpack.c.l.b16 %v46
    %v2185 = vunpack.c.h.b16 %v46
    %v2186 = vunpack.c.l.b16 %v47
    %v2187 = vunpack.c.h.b16 %v47
    %v2188 = vunpack.c.l.b16 %v48
    %v2189 = vunpack.c.h.b16 %v48
    %v2190 = vunpack.c.l.b16 %v49
    %v2191 = vunpack.c.h.b16 %v49
    %v2192 = vunpack.c.l.b16 %v50
    %v2193 = vunpack.c.h.b16 %v50
    %v2194 = vunpack.c.l.b16 %v51
    %v2195 = vunpack.c.h.b16 %v51
    %v2196 = vunpack.c.l.b16 %v52
    %v2197 = vunpack.c.h.b16 %v52
    %v2198 = vunpack.c.l.b16 %v53
    %v2199 = vunpack.c.h.b16 %v53
    %v2200 = vunpack.c.l.b16 %v54
    %v2201 = vunpack.c.h.b16 %v54
    %v2202 = vunpack.c.l.b16 %v55
    %v2203 = vunpack.c.h.b16 %v55
    %v2204 = vunpack.c.l.b16 %v56
    %v2205 = vunpack.c.h.b16 %v56
    %v2206 = vunpack.c.l.b16 %v57
    %v2207 = vunpack.c.h.b16 %v57
    %v2208 = vunpack.c.l.b16 %v58
    %v2209 = vunpack.c.h.b16 %v58
    %v2210 = vunpack.c.l.b16 %v59
    %v2211 = vunpack.c.h.b16 %v59
    %v2212 = vunpack.c.l.b16 %v60
    %v2213 = vunpack.c.h.b16 %v60
    %v2214 = vunpack.c.l.b16 %v61
    %v2215 = vunpack.c.h.b16 %v61
    %v2216 = vunpack.c.l.b16 %v62
    %v2217 = vunpack.c.h.b16 %v62
    %v2218 = vunpack.c.l.b16 %v63
    %v2219 = vunpack.c.h.b16 %v63
    %v2220 = vunpack.c.l.b16 %v64
    %v2221 = vunpack.c.h.b16 %v64
    %v2222 = vunpack.c.l.b16 %v65
    %v2223 = vunpack.c.h.b16 %v65
    %v2224 = vunpack.c.l.b16 %v66
    %v2225 = vunpack.c.h.b16 %v66
    %v2226 = vunpack.c.l.b16 %v67
    %v2227 = vunpack.c.h.b16 %v67
    %v2228 = vunpack.c.l.b16 %v68
    %v2229 = vunpack.c.h.b16 %v68
    %v2230 = vunpack.c.l.b16 %v69
    %v2231 = vunpack.c.h.b16 %v69
    %v2232 = vunpack.c.l.b16 %v70
    %v2233 = vunpack.c.h.b16 %v70
    %v2234 = vunpack.c.l.b16 %v71
    %v2235 = vunpack.c.h.b16 %v71
    %v2236 = vunpack.c.l.b16 %v72
    %v2237 = vunpack.c.h.b16 %v72
    %v2238 = vunpack.c.l.b16 %v73
    %v2239 = vunpack.c.h.b16 %v73
    %v2240 = vunpack.c.l.b16 %v74
    %v2241 = vunpack.c.h.b16 %v74
    %v2242 = vunpack.c.l.b16 %v75
    %v2243 = vunpack.c.h.b16 %v75
    %v2244 = vunpack.c.l.b16 %v76
    %v2245 = vunpack.c.h.b16 %v76
    %v2246 = vunpack.c.l.b16 %v77
    %v2247 = vunpack.c.h.b16 %v77
    %v2248 = vunpack.c.l.b16 %v78
    %v2249 = vunpack.c.h.b16 %v78
    %v2250 = vunpack.c.l.b16 %v79
    %v2251 = vunpack.c.h.b16 %v79
    %v2252 = vunpack.c.l.b16 %v80
    %v2253 = vunpack.c.h.b16 %v80
    %v2254 = vunpack.c.l.b16 %v81
    %v2255 = vunpack.c.h.b16 %v81
    %v2256 = vunpack.c.l.b16 %v82
    %v2257 = vunpack.c.h.b16 %v82
    %v2258 = vunpack.c.l.b16 %v83
    %v2259 = vunpack.c.h.b16 %v83
    %v2260 = vunpack.c.l.b16 %v84
    %v2261 = vunpack.c.h.b16 %v84
    %v2262 = vunpack.c.l.b16 %v85
    %v2263 = vunpack.c.h.b16 %v85
    %v2264 = vunpack.c.l.b16 %v86
    %v2265 = vunpack.c.h.b16 %v86
    %v2266 = vunpack.c.l.b16 %v87
    %v2267 = vunpack.c.h.b16 %v87
    %v2268 = vunpack.c.l.b16 %v88
    %v2269 = vunpack.c.h.b16 %v88
    %v2270 = vunpack.c.l.b16 %v89
    %v2271 = vunpack.c.h.b16 %v89
    %v2272 = vunpack.c.l.b16 %v90
    %v2273 = vunpack.c.h.b16 %v90
    %v2274 = vunpack.c.l.b16 %v91
    %v2275 = vunpack.c.h.b16 %v91
    %v2276 = vunpack.c.l.b16 %v92
    %v2277 = vunpack.c.h.b16 %v92
    %v2278 = vunpack.c.l.b16 %v93
    %v2279 = vunpack.c.h.b16 %v93
    %v2280 = vunpack.c.l.b16 %v94
    %v2281 = vunpack.c.h.b16 %v94
    %v2282 = vunpack.c.l.b16 %v95
    %v2283 = vunpack.c.h.b16 %v95
    %v2284 = vunpack.c.l.b16 %v96
    %v2285 = vunpack.c.h.b16 %v96
    %v2286 = vunpack.c.l.b16 %v97
    %v2287 = vunpack.c.h.b16 %v97
    %v2288 = vunpack.c.l.b16 %v98
    %v2289 = vunpack.c.h.b16 %v98
    %v2290 = vunpack.c.l.b16 %v99
    %v2291 = vunpack.c.h.b16 %v99
    %v2292 = vunpack.c.l.b16 %v100
    %v2293 = vunpack.c.h.b16 %v100
    %v2294 = vunpack.c.l.b16 %v101
    %v2295 = vunpack.c.h.b16 %v101
    %v2296 = vunpack.c.l.b16 %v102
    %v2297 = vunpack.c.h.b16 %v102
    %v2298 = vunpack.c.l.b16 %v103
    %v2299 = vunpack.c.h.b16 %v103
    %v2300 = vunpack.c.l.b16 %v104
    %v2301 = vunpack.c.h.b16 %v104
    %v2302 = vunpack.c.l.b16 %v105
    %v2303 = vunpack.c.h.b16 %v105
    %v2304 = vunpack.c.l.b16 %v106
    %v2305 = vunpack.c.h.b16 %v106
    %v2306 = vunpack.c.l.b16 %v107
    %v2307 = vunpack.c.h.b16 %v107
    %v2308 = vunpack.c.l.b16 %v108
    %v2309 = vunpack.c.h.b16 %v108
    %v2310 = vunpack.c.l.b16 %v109
    %v2311 = vunpack.c.h.b16 %v109
    %v2312 = vunpack.c.l.b16 %v110
    %v2313 = vunpack.c.h.b16 %v110
    %v2314 = vunpack.c.l.b16 %v111
    %v2315 = vunpack.c.h.b16 %v111
    %v2316 = vunpack.c.l.b16 %v112
    %v2317 = vunpack.c.h.b16 %v112
    %v2318 = vunpack.c.l.b16 %v113
    %v2319 = vunpack.c.h.b16 %v113
    %v2320 = vunpack.c.l.b16 %v114
    %v2321 = vunpack.c.h.b16 %v114
    %v2322 = vunpack.c.l.b16 %v115
    %v2323 = vunpack.c.h.b16 %v115
    %v2324 = vunpack.c.l.b16 %v116
    %v2325 = vunpack.c.h.b16 %v116
    %v2326 = vunpack.c.l.b16 %v117
    %v2327 = vunpack.c.h.b16 %v117
    %v2328 = vunpack.c.l.b16 %v118
    %v2329 = vunpack.c.h.b16 %v118
    %v2330 = vunpack.c.l.b16 %v119
    %v2331 = vunpack.c.h.b16 %v119
    %v2332 = vunpack.c.l.b16 %v120
    %v2333 = vunpack.c.h.b16 %v120
    %v2334 = vunpack.c.l.b16 %v121
    %v2335 = vunpack.c.h.b16 %v121
    %v2336 = vunpack.c.l.b16 %v122
    %v2337 = vunpack.c.h.b16 %v122
    %v2338 = vunpack.c.l.b16 %v123
    %v2339 = vunpack.c.h.b16 %v123
    %v2340 = vunpack.c.l.b16 %v124
    %v2341 = vunpack.c.h.b16 %v124
    %v2342 = vunpack.c.l.b16 %v125
    %v2343 = vunpack.c.h.b16 %v125
    %v2344 = vunpack.c.l.b16 %v126
    %v2345 = vunpack.c.h.b16 %v126
    %v2346 = vunpack.c.l.b16 %v127
    %v2347 = vunpack.c.h.b16 %v127
    %v2348 = vunpack.c.l.b16 %v128
    %v2349 = vunpack.c.h.b16 %v128
    %v2350 = vunpack.c.l.b16 %v129
    %v2351 = vunpack.c.h.b16 %v129
    %v2352 = vunpack.c.l.b16 %v130
    %v2353 = vunpack.c.h.b16 %v130
    %v2354 = vunpack.c.l.b16 %v131
    %v2355 = vunpack.c.h.b16 %v131
    %v2356 = vunpack.c.l.b16 %v132
    %v2357 = vunpack.c.h.b16 %v132
    %v2358 = vunpack.c.l.b16 %v133
    %v2359 = vunpack.c.h.b16 %v133
    %v2360 = vunpack.c.l.b16 %v134
    %v2361 = vunpack.c.h.b16 %v134
    %v2362 = vunpack.c.l.b16 %v135
    %v2363 = vunpack.c.h.b16 %v135
    %v2364 = vunpack.c.l.b16 %v136
    %v2365 = vunpack.c.h.b16 %v136
    %v2366 = vunpack.c.l.b16 %v137
    %v2367 = vunpack.c.h.b16 %v137
    %v2368 = vunpack.c.l.b16 %v138
    %v2369 = vunpack.c.h.b16 %v138
    %v2370 = vunpack.c.l.b16 %v139
    %v2371 = vunpack.c.h.b16 %v139
    %v2372 = vunpack.c.l.b16 %v140
    %v2373 = vunpack.c.h.b16 %v140
    %v2374 = vunpack.c.l.b16 %v141
    %v2375 = vunpack.c.h.b16 %v141
    %v2376 = vunpack.c.l.b16 %v142
    %v2377 = vunpack.c.h.b16 %v142
    %v2378 = vunpack.c.l.b16 %v143
    %v2379 = vunpack.c.h.b16 %v143
    %v2380 = vunpack.c.l.b16 %v144
    %v2381 = vunpack.c.h.b16 %v144
    %v2382 = vunpack.c.l.b16 %v145
    %v2383 = vunpack.c.h.b16 %v145
    %v2384 = vunpack.c.l.b16 %v146
    %v2385 = vunpack.c.h.b16 %v146
    %v2386 = vunpack.c.l.b16 %v147
    %v2387 = vunpack.c.h.b16 %v147
    %v2388 = vunpack.c.l.b16 %v148
    %v2389 = vunpack.c.h.b16 %v148
    %v2390 = vunpack.c.l.b16 %v149
    %v2391 = vunpack.c.h.b16 %v149
    %v2392 = vunpack.c.l.b16 %v150
    %v2393 = vunpack.c.h.b16 %v150
    %v2394 = vunpack.c.l.b16 %v151
    %v2395 = vunpack.c.h.b16 %v151
    %v2396 = vunpack.c.l.b16 %v152
    %v2397 = vunpack.c.h.b16 %v152
    %v2398 = vunpack.c.l.b16 %v153
    %v2399 = vunpack.c.h.b16 %v153
    %v2400 = vunpack.c.l.b16 %v154
    %v2401 = vunpack.c.h.b16 %v154
    %v2402 = vunpack.c.l.b16 %v155
    %v2403 = vunpack.c.h.b16 %v155
    %v2404 = vunpack.c.l.b16 %v156
    %v2405 = vunpack.c.h.b16 %v156
    %v2406 = vunpack.c.l.b16 %v157
    %v2407 = vunpack.c.h.b16 %v157
    %v2408 = vunpack.c.l.b16 %v158
    %v2409 = vunpack.c.h.b16 %v158
    %v2410 = vunpack.c.l.b16 %v159
    %v2411 = vunpack.c.h.b16 %v159
    %v2412 = vunpack.c.l.b16 %v160
    %v2413 = vunpack.c.h.b16 %v160
    %v2414 = vunpack.c.l.b16 %v161
    %v2415 = vunpack.c.h.b16 %v161
    %v2416 = vunpack.c.l.b16 %v162
    %v2417 = vunpack.c.h.b16 %v162
    %v2418 = vunpack.c.l.b16 %v163
    %v2419 = vunpack.c.h.b16 %v163
    %v2420 = vunpack.c.l.b16 %v164
    %v2421 = vunpack.c.h.b16 %v164
    %v2422 = vunpack.c.l.b16 %v165
    %v2423 = vunpack.c.h.b16 %v165
    %v2424 = vunpack.c.l.b16 %v166
    %v2425 = vunpack.c.h.b16 %v166
    %v2426 = vunpack.c.l.b16 %v167
    %v2427 = vunpack.c.h.b16 %v167
    %v2428 = vunpack.c.l.b16 %v168
    %v2429 = vunpack.c.h.b16 %v168
    %v2430 = vunpack.c.l.b16 %v169
    %v2431 = vunpack.c.h.b16 %v169
    %v2432 = vunpack.c.l.b16 %v170
    %v2433 = vunpack.c.h.b16 %v170
    %v2434 = vunpack.c.l.b16 %v171
    %v2435 = vunpack.c.h.b16 %v171
    %v2436 = vunpack.c.l.b16 %v172
    %v2437 = vunpack.c.h.b16 %v172
    %v2438 = vunpack.c.l.b16 %v173
    %v2439 = vunpack.c.h.b16 %v173
    %v2440 = vunpack.c.l.b16 %v174
    %v2441 = vunpack.c.h.b16 %v174
    %v2442 = vunpack.c.l.b16 %v175
    %v2443 = vunpack.c.h.b16 %v175
    %v2444 = vunpack.c.l.b16 %v176
    %v2445 = vunpack.c.h.b16 %v176
    %v2446 = vunpack.c.l.b16 %v177
    %v2447 = vunpack.c.h.b16 %v177
    %v2448 = vunpack.c.l.b16 %v178
    %v2449 = vunpack.c.h.b16 %v178
    %v2450 = vunpack.c.l.b16 %v179
    %v2451 = vunpack.c.h.b16 %v179
    %v2452 = vunpack.c.l.b16 %v180
    %v2453 = vunpack.c.h.b16 %v180
    %v2454 = vunpack.c.l.b16 %v181
    %v2455 = vunpack.c.h.b16 %v181
    %v2456 = vunpack.c.l.b16 %v182
    %v2457 = vunpack.c.h.b16 %v182
    %v2458 = vunpack.c.l.b16 %v183
    %v2459 = vunpack.c.h.b16 %v183
    %v2460 = vunpack.c.l.b16 %v184
    %v2461 = vunpack.c.h.b16 %v184
    %v2462 = vunpack.c.l.b16 %v185
    %v2463 = vunpack.c.h.b16 %v185
    %v2464 = vunpack.c.l.b16 %v186
    %v2465 = vunpack.c.h.b16 %v186
    %v2466 = vunpack.c.l.b16 %v187
    %v2467 = vunpack.c.h.b16 %v187
    %v2468 = vunpack.c.l.b16 %v188
    %v2469 = vunpack.c.h.b16 %v188
    %v2470 = vunpack.c.l.b16 %v189
    %v2471 = vunpack.c.h.b16 %v189
    %v2472 = vunpack.c.l.b16 %v190
    %v2473 = vunpack.c.h.b16 %v190
    %v2474 = vunpack.c.l.b16 %v191
    %v2475 = vunpack.c.h.b16 %v191
    %v2476 = vunpack.c.l.b16 %v192
    %v2477 = vunpack.c.h.b16 %v192
    %v2478 = vunpack.c.l.b16 %v193
    %v2479 = vunpack.c.h.b16 %v193
    %v2480 = vunpack.c.l.b16 %v194
    %v2481 = vunpack.c.h.b16 %v194
    %v2482 = vunpack.c.l.b16 %v195
    %v2483 = vunpack.c.h.b16 %v195
    %v2484 = vunpack.c.l.b16 %v196
    %v2485 = vunpack.c.h.b16 %v196
    %v2486 = vunpack.c.l.b16 %v197
    %v2487 = vunpack.c.h.b16 %v197
    %v2488 = vunpack.c.l.b16 %v198
    %v2489 = vunpack.c.h.b16 %v198
    %v2490 = vunpack.c.l.b16 %v199
    %v2491 = vunpack.c.h.b16 %v199
    %v2492 = vunpack.c.l.b16 %v200
    %v2493 = vunpack.c.h.b16 %v200
    %v2494 = vunpack.c.l.b16 %v201
    %v2495 = vunpack.c.h.b16 %v201
    %v2496 = vunpack.c.l.b16 %v202
    %v2497 = vunpack.c.h.b16 %v202
    %v2498 = vunpack.c.l.b16 %v203
    %v2499 = vunpack.c.h.b16 %v203
    %v2500 = vunpack.c.l.b16 %v204
    %v2501 = vunpack.c.h.b16 %v204
    %v2502 = vunpack.c.l.b16 %v205
    %v2503 = vunpack.c.h.b16 %v205
    %v2504 = vunpack.c.l.b16 %v206
    %v2505 = vunpack.c.h.b16 %v206
    %v2506 = vunpack.c.l.b16 %v207
    %v2507 = vunpack.c.h.b16 %v207
    %v2508 = vunpack.c.l.b16 %v208
    %v2509 = vunpack.c.h.b16 %v208
    %v2510 = vunpack.c.l.b16 %v209
    %v2511 = vunpack.c.h.b16 %v209
    %v2512 = vunpack.c.l.b16 %v210
    %v2513 = vunpack.c.h.b16 %v210
    %v2514 = vunpack.c.l.b16 %v211
    %v2515 = vunpack.c.h.b16 %v211
    %v2516 = vunpack.c.l.b16 %v212
    %v2517 = vunpack.c.h.b16 %v212
    %v2518 = vunpack.c.l.b16 %v213
    %v2519 = vunpack.c.h.b16 %v213
    %v2520 = vunpack.c.l.b16 %v214
    %v2521 = vunpack.c.h.b16 %v214
    %v2522 = vunpack.c.l.b16 %v215
    %v2523 = vunpack.c.h.b16 %v215
    %v2524 = vunpack.c.l.b16 %v216
    %v2525 = vunpack.c.h.b16 %v216
    %v2526 = vunpack.c.l.b16 %v217
    %v2527 = vunpack.c.h.b16 %v217
    %v2528 = vunpack.c.l.b16 %v218
    %v2529 = vunpack.c.h.b16 %v218
    %v2530 = vunpack.c.l.b16 %v219
    %v2531 = vunpack.c.h.b16 %v219
    %v2532 = vunpack.c.l.b16 %v220
    %v2533 = vunpack.c.h.b16 %v220
    %v2534 = vunpack.c.l.b16 %v221
    %v2535 = vunpack.c.h.b16 %v221
    %v2536 = vunpack.c.l.b16 %v222
    %v2537 = vunpack.c.h.b16 %v222
    %v2538 = vunpack.c.l.b16 %v223
    %v2539 = vunpack.c.h.b16 %v223
    %v2540 = vunpack.c.l.b16 %v224
    %v2541 = vunpack.c.h.b16 %v224
    %v2542 = vunpack.c.l.b16 %v225
    %v2543 = vunpack.c.h.b16 %v225
    %v2544 = vunpack.c.l.b16 %v226
    %v2545 = vunpack.c.h.b16 %v226
    %v2546 = vunpack.c.l.b16 %v227
    %v2547 = vunpack.c.h.b16 %v227
    %v2548 = vunpack.c.l.b16 %v228
    %v2549 = vunpack.c.h.b16 %v228
    %v2550 = vunpack.c.l.b16 %v229
    %v2551 = vunpack.c.h.b16 %v229
    %v2552 = vunpack.c.l.b16 %v230
    %v2553 = vunpack.c.h.b16 %v230
    %v2554 = vunpack.c.l.b16 %v231
    %v2555 = vunpack.c.h.b16 %v231
    %v2556 = vunpack.c.l.b16 %v232
    %v2557 = vunpack.c.h.b16 %v232
    %v2558 = vunpack.c.l.b16 %v233
    %v2559 = vunpack.c.h.b16 %v233
    %v2560 = vunpack.c.l.b16 %v234
    %v2561 = vunpack.c.h.b16 %v234
    %v2562 = vunpack.c.l.b16 %v235
    %v2563 = vunpack.c.h.b16 %v235
    %v2564 = vunpack.c.l.b16 %v236
    %v2565 = vunpack.c.h.b16 %v236
    %v2566 = vunpack.c.l.b16 %v237
    %v2567 = vunpack.c.h.b16 %v237
    %v2568 = vunpack.c.l.b16 %v238
    %v2569 = vunpack.c.h.b16 %v238
    %v2570 = vunpack.c.l.b16 %v239
    %v2571 = vunpack.c.h.b16 %v239
    %v2572 = vunpack.c.l.b16 %v240
    %v2573 = vunpack.c.h.b16 %v240
    %v2574 = vunpack.c.l.b16 %v241
    %v2575 = vunpack.c.h.b16 %v241
    %v2576 = vunpack.c.l.b16 %v242
    %v2577 = vunpack.c.h.b16 %v242
    %v2578 = vunpack.c.l.b16 %v243
    %v2579 = vunpack.c.h.b16 %v243
    %v2580 = vunpack.c.l.b16 %v244
    %v2581 = vunpack.c.h.b16 %v244
    %v2582 = vunpack.c.l.b16 %v245
    %v2583 = vunpack.c.h.b16 %v245
    %v2584 = vunpack.c.l.b16 %v246
    %v2585 = vunpack.c.h.b16 %v246
    %v2586 = vunpack.c.l.b16 %v247
    %v2587 = vunpack.c.h.b16 %v247
    %v2588 = vunpack.c.l.b16 %v248
    %v2589 = vunpack.c.h.b16 %v248
    %v2590 = vunpack.c.l.b16 %v249
    %v2591 = vunpack.c.h.b16 %v249
    %v2592 = vunpack.c.l.b16 %v250
    %v2593 = vunpack.c.h.b16 %v250
    %v2594 = vunpack.c.l.b16 %v251
    %v2595 = vunpack.c.h.b16 %v251
    %v2596 = vunpack.c.l.b16 %v252
    %v2597 = vunpack.c.h.b16 %v252
    %v2598 = vunpack.c.l.b16 %v253
    %v2599 = vunpack.c.h.b16 %v253
    %v2600 = vunpack.c.l.b16 %v254
    %v2601 = vunpack.c.h.b16 %v254
    %v2602 = vunpack.c.l.b16 %v255
    %v2603 = vunpack.c.h.b16 %v255
    %v2604 = vunpack.c.l.b16 %v256
    %v2605 = vunpack.c.h.b16 %v256
    %v2606 = vunpack.c.l.b16 %v257
    %v2607 = vunpack.c.h.b16 %v257
    %v2608 = vunpack.c.l.b16 %v258
    %v2609 = vunpack.c.h.b16 %v258
    %v2610 = vunpack.c.l.b16 %v259
    %v2611 = vunpack.c.h.b16 %v259
    %v2612 = vunpack.c.l.b16 %v260
    %v2613 = vunpack.c.h.b16 %v260
    %v2614 = vunpack.c.l.b16 %v261
    %v2615 = vunpack.c.h.b16 %v261
    %v2616 = vunpack.c.l.b16 %v262
    %v2617 = vunpack.c.h.b16 %v262
    %v2618 = vunpack.c.l.b16 %v263
    %v2619 = vunpack.c.h.b16 %v263
    %v2620 = vunpack.c.l.b16 %v264
    %v2621 = vunpack.c.h.b16 %v264
    %v2622 = vunpack.c.l.b16 %v265
    %v2623 = vunpack.c.h.b16 %v265
    %v2624 = vunpack.c.l.b16 %v266
    %v2625 = vunpack.c.h.b16 %v266
    %v2626 = vunpack.c.l.b16 %v267
    %v2627 = vunpack.c.h.b16 %v267
    %v2628 = vunpack.c.l.b16 %v268
    %v2629 = vunpack.c.h.b16 %v268
    %v2630 = vunpack.c.l.b16 %v269
    %v2631 = vunpack.c.h.b16 %v269
    %v2632 = vunpack.c.l.b16 %v270
    %v2633 = vunpack.c.h.b16 %v270
    %v2634 = vunpack.c.l.b16 %v271
    %v2635 = vunpack.c.h.b16 %v271
    %v2636 = vunpack.c.l.b16 %v272
    %v2637 = vunpack.c.h.b16 %v272
    %v2638 = vunpack.c.l.b16 %v273
    %v2639 = vunpack.c.h.b16 %v273
    %v2640 = vunpack.c.l.b16 %v274
    %v2641 = vunpack.c.h.b16 %v274
    %v2642 = vunpack.c.l.b16 %v275
    %v2643 = vunpack.c.h.b16 %v275
    %v2644 = vunpack.c.l.b16 %v276
    %v2645 = vunpack.c.h.b16 %v276
    %v2646 = vunpack.c.l.b16 %v277
    %v2647 = vunpack.c.h.b16 %v277
    %v2648 = vunpack.c.l.b16 %v278
    %v2649 = vunpack.c.h.b16 %v278
    %v2650 = vunpack.c.l.b16 %v279
    %v2651 = vunpack.c.h.b16 %v279
    %v2652 = vunpack.c.l.b16 %v280
    %v2653 = vunpack.c.h.b16 %v280
    %v2654 = vunpack.c.l.b16 %v281
    %v2655 = vunpack.c.h.b16 %v281
    %v2656 = vunpack.c.l.b16 %v282
    %v2657 = vunpack.c.h.b16 %v282
    %v2658 = vunpack.c.l.b16 %v283
    %v2659 = vunpack.c.h.b16 %v283
    %v2660 = vunpack.c.l.b16 %v284
    %v2661 = vunpack.c.h.b16 %v284
    %v2662 = vunpack.c.l.b16 %v285
    %v2663 = vunpack.c.h.b16 %v285
    %v2664 = vunpack.c.l.b16 %v286
    %v2665 = vunpack.c.h.b16 %v286
    %v2666 = vunpack.c.l.b16 %v287
    %v2667 = vunpack.c.h.b16 %v287
    %v2668 = vunpack.c.l.b16 %v288
    %v2669 = vunpack.c.h.b16 %v288
    %v2670 = vunpack.c.l.b16 %v289
    %v2671 = vunpack.c.h.b16 %v289
    %v2672 = vunpack.c.l.b16 %v290
    %v2673 = vunpack.c.h.b16 %v290
    %v2674 = vunpack.c.l.b16 %v291
    %v2675 = vunpack.c.h.b16 %v291
    %v2676 = vunpack.c.l.b16 %v292
    %v2677 = vunpack.c.h.b16 %v292
    %v2678 = vunpack.c.l.b16 %v293
    %v2679 = vunpack.c.h.b16 %v293
    %v2680 = vunpack.c.l.b16 %v294
    %v2681 = vunpack.c.h.b16 %v294
    %v2682 = vunpack.c.l.b16 %v295
    %v2683 = vunpack.c.h.b16 %v295
    %v2684 = vunpack.c.l.b16 %v296
    %v2685 = vunpack.c.h.b16 %v296
    %v2686 = vunpack.c.l.b16 %v297
    %v2687 = vunpack.c.h.b16 %v297
    %v2688 = vunpack.c.l.b16 %v298
    %v2689 = vunpack.c.h.b16 %v298
    %v2690 = vunpack.c.l.b16 %v299
    %v2691 = vunpack.c.h.b16 %v299
    %v2692 = vunpack.c.l.b16 %v300
    %v2693 = vunpack.c.h.b16 %v300
    %v2694 = vunpack.c.l.b16 %v301
    %v2695 = vunpack.c.h.b16 %v301
    %v2696 = vunpack.c.l.b16 %v302
    %v2697 = vunpack.c.h.b16 %v302
    %v2698 = vunpack.c.l.b16 %v303
    %v2699 = vunpack.c.h.b16 %v303
    %v2700 = vunpack.c.l.b16 %v304
    %v2701 = vunpack.c.h.b16 %v304
    %v2702 = vunpack.c.l.b16 %v305
    %v2703 = vunpack.c.h.b16 %v305
    %v2704 = vunpack.c.l.b16 %v306
    %v2705 = vunpack.c.h.b16 %v306
    %v2706 = vunpack.c.l.b16 %v307
    %v2707 = vunpack.c.h.b16 %v307
    %v2708 = vunpack.c.l.b16 %v308
    %v2709 = vunpack.c.h.b16 %v308
    %v2710 = vunpack.c.l.b16 %v309
    %v2711 = vunpack.c.h.b16 %v309
    %v2712 = vunpack.c.l.b16 %v310
    %v2713 = vunpack.c.h.b16 %v310
    %v2714 = vunpack.c.l.b16 %v311
    %v2715 = vunpack.c.h.b16 %v311
    %v2716 = vunpack.c.l.b16 %v312
    %v2717 = vunpack.c.h.b16 %v312
    %v2718 = vunpack.c.l.b16 %v313
    %v2719 = vunpack.c.h.b16 %v313
    %v2720 = vunpack.c.l.b16 %v314
    %v2721 = vunpack.c.h.b16 %v314
    %v2722 = vunpack.c.l.b16 %v315
    %v2723 = vunpack.c.h.b16 %v315
    %v2724 = vunpack.c.l.b16 %v316
    %v2725 = vunpack.c.h.b16 %v316
    %v2726 = vunpack.c.l.b16 %v317
    %v2727 = vunpack.c.h.b16 %v317
    %v2728 = vunpack.c.l.b16 %v318
    %v2729 = vunpack.c.h.b16 %v318
    %v2730 = vunpack.c.l.b16 %v319
    %v2731 = vunpack.c.h.b16 %v319
    %v2732 = vunpack.c.l.b16 %v320
    %v2733 = vunpack.c.h.b16 %v320
    %v2734 = vunpack.c.l.b16 %v321
    %v2735 = vunpack.c.h.b16 %v321
    %v2736 = vunpack.c.l.b16 %v322
    %v2737 = vunpack.c.h.b16 %v322
    %v2738 = vunpack.c.l.b16 %v323
    %v2739 = vunpack.c.h.b16 %v323
    %v2740 = vunpack.c.l.b16 %v324
    %v2741 = vunpack.c.h.b16 %v324
    %v2742 = vunpack.c.l.b16 %v325
    %v2743 = vunpack.c.h.b16 %v325
    %v2744 = vunpack.c.l.b16 %v326
    %v2745 = vunpack.c.h.b16 %v326
    %v2746 = vunpack.c.l.b16 %v327
    %v2747 = vunpack.c.h.b16 %v327
    %v2748 = vunpack.c.l.b16 %v328
    %v2749 = vunpack.c.h.b16 %v328
    %v2750 = vunpack.c.l.b16 %v329
    %v2751 = vunpack.c.h.b16 %v329
    %v2752 = vunpack.c.l.b16 %v330
    %v2753 = vunpack.c.h.b16 %v330
    %v2754 = vunpack.c.l.b16 %v331
    %v2755 = vunpack.c.h.b16 %v331
    %v2756 = vunpack.c.l.b16 %v332
    %v2757 = vunpack.c.h.b16 %v332
    %v2758 = vunpack.c.l.b16 %v333
    %v2759 = vunpack.c.h.b16 %v333
    %v2760 = vunpack.c.l.b16 %v334
    %v2761 = vunpack.c.h.b16 %v334
    %v2762 = vunpack.c.l.b16 %v335
    %v2763 = vunpack.c.h.b16 %v335
    %v2764 = vunpack.c.l.b16 %v336
    %v2765 = vunpack.c.h.b16 %v336
    %v2766 = vunpack.c.l.b16 %v337
    %v2767 = vunpack.c.h.b16 %v337
    %v2768 = vunpack.c.l.b16 %v338
    %v2769 = vunpack.c.h.b16 %v338
    %v2770 = vunpack.c.l.b16 %v339
    %v2771 = vunpack.c.h.b16 %v339
    %v2772 = vunpack.c.l.b16 %v340
    %v2773 = vunpack.c.h.b16 %v340
    %v2774 = vunpack.c.l.b16 %v341
    %v2775 = vunpack.c.h.b16 %v341
    %v2776 = vunpack.c.l.b16 %v342
    %v2777 = vunpack.c.h.b16 %v342
    %v2778 = vunpack.c.l.b16 %v343
    %v2779 = vunpack.c.h.b16 %v343
    %v2780 = vunpack.c.l.b16 %v344
    %v2781 = vunpack.c.h.b16 %v344
    %v2782 = vunpack.c.l.b16 %v345
    %v2783 = vunpack.c.h.b16 %v345
    %v2784 = vunpack.c.l.b16 %v346
    %v2785 = vunpack.c.h.b16 %v346
    %v2786 = vunpack.c.l.b16 %v347
    %v2787 = vunpack.c.h.b16 %v347
    %v2788 = vunpack.c.l.b16 %v348
    %v2789 = vunpack.c.h.b16 %v348
    %v2790 = vunpack.c.l.b16 %v349
    %v2791 = vunpack.c.h.b16 %v349
    %v2792 = vunpack.c.l.b16 %v350
    %v2793 = vunpack.c.h.b16 %v350
    %v2794 = vunpack.c.l.b16 %v351
    %v2795 = vunpack.c.h.b16 %v351
    %v2796 = vunpack.c.l.b16 %v352
    %v2797 = vunpack.c.h.b16 %v352
    %v2798 = vunpack.c.l.b16 %v353
    %v2799 = vunpack.c.h.b16 %v353
    %v2800 = vunpack.c.l.b16 %v354
    %v2801 = vunpack.c.h.b16 %v354
    %v2802 = vunpack.c.l.b16 %v355
    %v2803 = vunpack.c.h.b16 %v355
    %v2804 = vunpack.c.l.b16 %v356
    %v2805 = vunpack.c.h.b16 %v356
    %v2806 = vunpack.c.l.b16 %v357
    %v2807 = vunpack.c.h.b16 %v357
    %v2808 = vunpack.c.l.b16 %v358
    %v2809 = vunpack.c.h.b16 %v358
    %v2810 = vunpack.c.l.b16 %v359
    %v2811 = vunpack.c.h.b16 %v359
    %v2812 = vunpack.c.l.b16 %v360
    %v2813 = vunpack.c.h.b16 %v360
    %v2814 = vunpack.c.l.b16 %v361
    %v2815 = vunpack.c.h.b16 %v361
    %v2816 = vunpack.c.l.b16 %v362
    %v2817 = vunpack.c.h.b16 %v362
    %v2818 = vunpack.c.l.b16 %v363
    %v2819 = vunpack.c.h.b16 %v363
    %v2820 = vunpack.c.l.b16 %v364
    %v2821 = vunpack.c.h.b16 %v364
    %v2822 = vunpack.c.l.b16 %v365
    %v2823 = vunpack.c.h.b16 %v365
    %v2824 = vunpack.c.l.b16 %v366
    %v2825 = vunpack.c.h.b16 %v366
    %v2826 = vunpack.c.l.b16 %v367
    %v2827 = vunpack.c.h.b16 %v367
    %v2828 = vunpack.c.l.b16 %v368
    %v2829 = vunpack.c.h.b16 %v368
    %v2830 = vunpack.c.l.b16 %v369
    %v2831 = vunpack.c.h.b16 %v369
    %v2832 = vunpack.c.l.b16 %v370
    %v2833 = vunpack.c.h.b16 %v370
    %v2834 = vunpack.c.l.b16 %v371
    %v2835 = vunpack.c.h.b16 %v371
    %v2836 = vunpack.c.l.b16 %v372
    %v2837 = vunpack.c.h.b16 %v372
    %v2838 = vunpack.c.l.b16 %v373
    %v2839 = vunpack.c.h.b16 %v373
    %v2840 = vunpack.c.l.b16 %v374
    %v2841 = vunpack.c.h.b16 %v374
    %v2842 = vunpack.c.l.b16 %v375
    %v2843 = vunpack.c.h.b16 %v375
    %v2844 = vunpack.c.l.b16 %v376
    %v2845 = vunpack.c.h.b16 %v376
    %v2846 = vunpack.c.l.b16 %v377
    %v2847 = vunpack.c.h.b16 %v377
    %v2848 = vunpack.c.l.b16 %v378
    %v2849 = vunpack.c.h.b16 %v378
    %v2850 = vunpack.c.l.b16 %v379
    %v2851 = vunpack.c.h.b16 %v379
    %v2852 = vunpack.c.l.b16 %v380
    %v2853 = vunpack.c.h.b16 %v380
    %v2854 = vunpack.c.l.b16 %v381
    %v2855 = vunpack.c.h.b16 %v381
    %v2856 = vunpack.c.l.b16 %v382
    %v2857 = vunpack.c.h.b16 %v382
    %v2858 = vunpack.c.l.b16 %v383
    %v2859 = vunpack.c.h.b16 %v383
    %v2860 = vunpack.c.l.b16 %v384
    %v2861 = vunpack.c.h.b16 %v384
    %v2862 = vunpack.c.l.b16 %v385
    %v2863 = vunpack.c.h.b16 %v385
    %v2864 = vunpack.c.l.b16 %v386
    %v2865 = vunpack.c.h.b16 %v386
    %v2866 = vunpack.c.l.b16 %v387
    %v2867 = vunpack.c.h.b16 %v387
    %v2868 = vunpack.c.l.b16 %v388
    %v2869 = vunpack.c.h.b16 %v388
    %v2870 = vunpack.c.l.b16 %v389
    %v2871 = vunpack.c.h.b16 %v389
    %v2872 = vunpack.c.l.b16 %v390
    %v2873 = vunpack.c.h.b16 %v390
    %v2874 = vunpack.c.l.b16 %v391
    %v2875 = vunpack.c.h.b16 %v391
    %v2876 = vunpack.c.l.b16 %v392
    %v2877 = vunpack.c.h.b16 %v392
    %v2878 = vunpack.c.l.b16 %v393
    %v2879 = vunpack.c.h.b16 %v393
    %v2880 = vunpack.c.l.b16 %v394
    %v2881 = vunpack.c.h.b16 %v394
    %v2882 = vunpack.c.l.b16 %v395
    %v2883 = vunpack.c.h.b16 %v395
    %v2884 = vunpack.c.l.b16 %v396
    %v2885 = vunpack.c.h.b16 %v396
    %v2886 = vunpack.c.l.b16 %v397
    %v2887 = vunpack.c.h.b16 %v397
    %v2888 = vunpack.c.l.b16 %v398
    %v2889 = vunpack.c.h.b16 %v398
    %v2890 = vunpack.c.l.b16 %v399
    %v2891 = vunpack.c.h.b16 %v399
    %v2892 = vunpack.c.l.b16 %v400
    %v2893 = vunpack.c.h.b16 %v400
    %v2894 = vunpack.c.l.b16 %v401
    %v2895 = vunpack.c.h.b16 %v401
    %v2896 = vunpack.c.l.b16 %v402
    %v2897 = vunpack.c.h.b16 %v402
    %v2898 = vunpack.c.l.b16 %v403
    %v2899 = vunpack.c.h.b16 %v403
    %v2900 = vunpack.c.l.b16 %v404
    %v2901 = vunpack.c.h.b16 %v404
    %v2902 = vunpack.c.l.b16 %v405
    %v2903 = vunpack.c.h.b16 %v405
    %v2904 = vunpack.c.l.b16 %v406
    %v2905 = vunpack.c.h.b16 %v406
    %v2906 = vunpack.c.l.b16 %v407
    %v2907 = vunpack.c.h.b16 %v407
    %v2908 = vunpack.c.l.b16 %v408
    %v2909 = vunpack.c.h.b16 %v408
    %v2910 = vunpack.c.l.b16 %v409
    %v2911 = vunpack.c.h.b16 %v409
    %v2912 = vunpack.c.l.b16 %v410
    %v2913 = vunpack.c.h.b16 %v410
    %v2914 = vunpack.c.l.b16 %v411
    %v2915 = vunpack.c.h.b16 %v411
    %v2916 = vunpack.c.l.b16 %v412
    %v2917 = vunpack.c.h.b16 %v412
    %v2918 = vunpack.c.l.b16 %v413
    %v2919 = vunpack.c.h.b16 %v413
    %v2920 = vunpack.c.l.b16 %v414
    %v2921 = vunpack.c.h.b16 %v414
    %v2922 = vunpack.c.l.b16 %v415
    %v2923 = vunpack.c.h.b16 %v415
    %v2924 = vunpack.c.l.b16 %v416
    %v2925 = vunpack.c.h.b16 %v416
    %v2926 = vunpack.c.l.b16 %v417
    %v2927 = vunpack.c.h.b16 %v417
    %v2928 = vunpack.c.l.b16 %v418
    %v2929 = vunpack.c.h.b16 %v418
    %v2930 = vunpack.c.l.b16 %v419
    %v2931 = vunpack.c.h.b16 %v419
    %v2932 = vunpack.c.l.b16 %v420
    %v2933 = vunpack.c.h.b16 %v420
    %v2934 = vunpack.c.l.b16 %v421
    %v2935 = vunpack.c.h.b16 %v421
    %v2936 = vunpack.c.l.b16 %v422
    %v2937 = vunpack.c.h.b16 %v422
    %v2938 = vunpack.c.l.b16 %v423
    %v2939 = vunpack.c.h.b16 %v423
    %v2940 = vunpack.c.l.b16 %v424
    %v2941 = vunpack.c.h.b16 %v424
    %v2942 = vunpack.c.l.b16 %v425
    %v2943 = vunpack.c.h.b16 %v425
    %v2944 = vunpack.c.l.b16 %v426
    %v2945 = vunpack.c.h.b16 %v426
    %v2946 = vunpack.c.l.b16 %v427
    %v2947 = vunpack.c.h.b16 %v427
    %v2948 = vunpack.c.l.b16 %v428
    %v2949 = vunpack.c.h.b16 %v428
    %v2950 = vunpack.c.l.b16 %v429
    %v2951 = vunpack.c.h.b16 %v429
    %v2952 = vunpack.c.l.b16 %v430
    %v2953 = vunpack.c.h.b16 %v430
    %v2954 = vunpack.c.l.b16 %v431
    %v2955 = vunpack.c.h.b16 %v431
    %v2956 = vunpack.c.l.b16 %v432
    %v2957 = vunpack.c.h.b16 %v432
    %v2958 = vunpack.c.l.b16 %v433
    %v2959 = vunpack.c.h.b16 %v433
    %v2960 = vunpack.c.l.b16 %v434
    %v2961 = vunpack.c.h.b16 %v434
    %v2962 = vunpack.c.l.b16 %v435
    %v2963 = vunpack.c.h.b16 %v435
    %v2964 = vunpack.c.l.b16 %v436
    %v2965 = vunpack.c.h.b16 %v436
    %v2966 = vunpack.c.l.b16 %v437
    %v2967 = vunpack.c.h.b16 %v437
    %v2968 = vunpack.c.l.b16 %v438
    %v2969 = vunpack.c.h.b16 %v438
    %v2970 = vunpack.c.l.b16 %v439
    %v2971 = vunpack.c.h.b16 %v439
    %v2972 = vunpack.c.l.b16 %v440
    %v2973 = vunpack.c.h.b16 %v440
    %v2974 = vunpack.c.l.b16 %v441
    %v2975 = vunpack.c.h.b16 %v441
    %v2976 = vunpack.c.l.b16 %v442
    %v2977 = vunpack.c.h.b16 %v442
    %v2978 = vunpack.c.l.b16 %v443
    %v2979 = vunpack.c.h.b16 %v443
    %v2980 = vunpack.c.l.b16 %v444
    %v2981 = vunpack.c.h.b16 %v444
    %v2982 = vunpack.c.l.b16 %v445
    %v2983 = vunpack.c.h.b16 %v445
    %v2984 = vunpack.c.l.b16 %v446
    %v2985 = vunpack.c.h.b16 %v446
    %v2986 = vunpack.c.l.b16 %v447
    %v2987 = vunpack.c.h.b16 %v447
    %v2988 = vunpack.c.l.b16 %v448
    %v2989 = vunpack.c.h.b16 %v448
    %v2990 = vunpack.c.l.b16 %v449
    %v2991 = vunpack.c.h.b16 %v449
    %v2992 = vunpack.c.l.b16 %v450
    %v2993 = vunpack.c.h.b16 %v450
    %v2994 = vunpack.c.l.b16 %v451
    %v2995 = vunpack.c.h.b16 %v451
    %v2996 = vunpack.c.l.b16 %v452
    %v2997 = vunpack.c.h.b16 %v452
    %v2998 = vunpack.c.l.b16 %v453
    %v2999 = vunpack.c.h.b16 %v453
    %v3000 = vunpack.c.l.b16 %v454
    %v3001 = vunpack.c.h.b16 %v454
    %v3002 = vunpack.c.l.b16 %v455
    %v3003 = vunpack.c.h.b16 %v455
    %v3004 = vunpack.c.l.b16 %v456
    %v3005 = vunpack.c.h.b16 %v456
    %v3006 = vunpack.c.l.b16 %v457
    %v3007 = vunpack.c.h.b16 %v457
    %v3008 = vunpack.c.l.b16 %v458
    %v3009 = vunpack.c.h.b16 %v458
    %v3010 = vunpack.c.l.b16 %v459
    %v3011 = vunpack.c.h.b16 %v459
    %v3012 = vunpack.c.l.b16 %v460
    %v3013 = vunpack.c.h.b16 %v460
    %v3014 = vunpack.c.l.b16 %v461
    %v3015 = vunpack.c.h.b16 %v461
    %v3016 = vunpack.c.l.b16 %v462
    %v3017 = vunpack.c.h.b16 %v462
    %v3018 = vunpack.c.l.b16 %v463
    %v3019 = vunpack.c.h.b16 %v463
    %v3020 = vunpack.c.l.b16 %v464
    %v3021 = vunpack.c.h.b16 %v464
    %v3022 = vunpack.c.l.b16 %v465
    %v3023 = vunpack.c.h.b16 %v465
    %v3024 = vunpack.c.l.b16 %v466
    %v3025 = vunpack.c.h.b16 %v466
    %v3026 = vunpack.c.l.b16 %v467
    %v3027 = vunpack.c.h.b16 %v467
    %v3028 = vunpack.c.l.b16 %v468
    %v3029 = vunpack.c.h.b16 %v468
    %v3030 = vunpack.c.l.b16 %v469
    %v3031 = vunpack.c.h.b16 %v469
    %v3032 = vunpack.c.l.b16 %v470
    %v3033 = vunpack.c.h.b16 %v470
    %v3034 = vunpack.c.l.b16 %v471
    %v3035 = vunpack.c.h.b16 %v471
    %v3036 = vunpack.c.l.b16 %v472
    %v3037 = vunpack.c.h.b16 %v472
    %v3038 = vunpack.c.l.b16 %v473
    %v3039 = vunpack.c.h.b16 %v473
    %v3040 = vunpack.c.l.b16 %v474
    %v3041 = vunpack.c.h.b16 %v474
    %v3042 = vunpack.c.l.b16 %v475
    %v3043 = vunpack.c.h.b16 %v475
    %v3044 = vunpack.c.l.b16 %v476
    %v3045 = vunpack.c.h.b16 %v476
    %v3046 = vunpack.c.l.b16 %v477
    %v3047 = vunpack.c.h.b16 %v477
    %v3048 = vunpack.c.l.b16 %v478
    %v3049 = vunpack.c.h.b16 %v478
    %v3050 = vunpack.c.l.b16 %v479
    %v3051 = vunpack.c.h.b16 %v479
    %v3052 = vunpack.c.l.b16 %v480
    %v3053 = vunpack.c.h.b16 %v480
    %v3054 = vunpack.c.l.b16 %v481
    %v3055 = vunpack.c.h.b16 %v481
    %v3056 = vunpack.c.l.b16 %v482
    %v3057 = vunpack.c.h.b16 %v482
    %v3058 = vunpack.c.l.b16 %v483
    %v3059 = vunpack.c.h.b16 %v483
    %v3060 = vunpack.c.l.b16 %v484
    %v3061 = vunpack.c.h.b16 %v484
    %v3062 = vunpack.c.l.b16 %v485
    %v3063 = vunpack.c.h.b16 %v485
    %v3064 = vunpack.c.l.b16 %v486
    %v3065 = vunpack.c.h.b16 %v486
    %v3066 = vunpack.c.l.b16 %v487
    %v3067 = vunpack.c.h.b16 %v487
    %v3068 = vunpack.c.l.b16 %v488
    %v3069 = vunpack.c.h.b16 %v488
    %v3070 = vunpack.c.l.b16 %v489
    %v3071 = vunpack.c.h.b16 %v489
    %v3072 = vunpack.c.l.b16 %v490
    %v3073 = vunpack.c.h.b16 %v490
    %v3074 = vunpack.c.l.b16 %v491
    %v3075 = vunpack.c.h.b16 %v491
    %v3076 = vunpack.c.l.b16 %v492
    %v3077 = vunpack.c.h.b16 %v492
    %v3078 = vunpack.c.l.b16 %v493
    %v3079 = vunpack.c.h.b16 %v493
    %v3080 = vunpack.c.l.b16 %v494
    %v3081 = vunpack.c.h.b16 %v494
    %v3082 = vunpack.c.l.b16 %v495
    %v3083 = vunpack.c.h.b16 %v495
    %v3084 = vunpack.c.l.b16 %v496
    %v3085 = vunpack.c.h.b16 %v496
    %v3086 = vunpack.c.l.b16 %v497
    %v3087 = vunpack.c.h.b16 %v497
    %v3088 = vunpack.c.l.b16 %v498
    %v3089 = vunpack.c.h.b16 %v498
    %v3090 = vunpack.c.l.b16 %v499
    %v3091 = vunpack.c.h.b16 %v499
    %v3092 = vunpack.c.l.b16 %v500
    %v3093 = vunpack.c.h.b16 %v500
    %v3094 = vunpack.c.l.b16 %v501
    %v3095 = vunpack.c.h.b16 %v501
    %v3096 = vunpack.c.l.b16 %v502
    %v3097 = vunpack.c.h.b16 %v502
    %v3098 = vunpack.c.l.b16 %v503
    %v3099 = vunpack.c.h.b16 %v503
    %v3100 = vunpack.c.l.b16 %v504
    %v3101 = vunpack.c.h.b16 %v504
    %v3102 = vunpack.c.l.b16 %v505
    %v3103 = vunpack.c.h.b16 %v505
    %v3104 = vunpack.c.l.b16 %v506
    %v3105 = vunpack.c.h.b16 %v506
    %v3106 = vunpack.c.l.b16 %v507
    %v3107 = vunpack.c.h.b16 %v507
    %v3108 = vunpack.c.l.b16 %v508
    %v3109 = vunpack.c.h.b16 %v508
    %v3110 = vunpack.c.l.b16 %v509
    %v3111 = vunpack.c.h.b16 %v509
    %v3112 = vunpack.c.l.b16 %v510
    %v3113 = vunpack.c.h.b16 %v510
    %v3114 = vunpack.c.l.b16 %v511
    %v3115 = vunpack.c.h.b16 %v511
    %v3116 = vunpack.c.l.b16 %v512
    %v3117 = vunpack.c.h.b16 %v512
    %v3118 = vunpack.c.l.b16 %v513
    %v3119 = vunpack.c.h.b16 %v513
    %v3120 = vunpack.c.l.b16 %v514
    %v3121 = vunpack.c.h.b16 %v514
    %v3122 = vunpack.c.l.b16 %v515
    %v3123 = vunpack.c.h.b16 %v515
    %v3124 = vunpack.c.l.b16 %v516
    %v3125 = vunpack.c.h.b16 %v516
    %v3126 = vunpack.c.l.b16 %v517
    %v3127 = vunpack.c.h.b16 %v517
    %v3128 = vunpack.c.l.b16 %v518
    %v3129 = vunpack.c.h.b16 %v518
    %v3130 = vunpack.c.l.b16 %v519
    %v3131 = vunpack.c.h.b16 %v519
    %v3132 = vunpack.c.l.b16 %v520
    %v3133 = vunpack.c.h.b16 %v520
    %v3134 = vunpack.c.l.b16 %v521
    %v3135 = vunpack.c.h.b16 %v521
    %v3136 = vunpack.c.l.b16 %v522
    %v3137 = vunpack.c.h.b16 %v522
    %v3138 = vunpack.c.l.b16 %v523
    %v3139 = vunpack.c.h.b16 %v523
    %v3140 = vunpack.c.l.b16 %v524
    %v3141 = vunpack.c.h.b16 %v524
    %v3142 = vunpack.c.l.b16 %v525
    %v3143 = vunpack.c.h.b16 %v525
    %v3144 = vunpack.c.l.b16 %v526
    %v3145 = vunpack.c.h.b16 %v526
    %v3146 = vunpack.c.l.b16 %v527
    %v3147 = vunpack.c.h.b16 %v527
    %v3148 = vunpack.c.l.b16 %v528
    %v3149 = vunpack.c.h.b16 %v528
    %v3150 = vunpack.c.l.b16 %v529
    %v3151 = vunpack.c.h.b16 %v529
    %v3152 = vunpack.c.l.b16 %v530
    %v3153 = vunpack.c.h.b16 %v530
    %v3154 = vunpack.c.l.b16 %v531
    %v3155 = vunpack.c.h.b16 %v531
    %v3156 = vunpack.c.l.b16 %v532
    %v3157 = vunpack.c.h.b16 %v532
    %v3158 = vunpack.c.l.b16 %v533
    %v3159 = vunpack.c.h.b16 %v533
    %v3160 = vunpack.c.l.b16 %v534
    %v3161 = vunpack.c.h.b16 %v534
    %v3162 = vunpack.c.l.b16 %v535
    %v3163 = vunpack.c.h.b16 %v535
    %v3164 = vunpack.c.l.b16 %v536
    %v3165 = vunpack.c.h.b16 %v536
    %v3166 = vunpack.c.l.b16 %v537
    %v3167 = vunpack.c.h.b16 %v537
    %v3168 = vunpack.c.l.b16 %v538
    %v3169 = vunpack.c.h.b16 %v538
    %v3170 = vunpack.c.l.b16 %v539
    %v3171 = vunpack.c.h.b16 %v539
    %v3172 = vunpack.c.l.b16 %v540
    %v3173 = vunpack.c.h.b16 %v540
    %v3174 = vunpack.c.l.b16 %v541
    %v3175 = vunpack.c.h.b16 %v541
    %v3176 = vunpack.c.l.b16 %v542
    %v3177 = vunpack.c.h.b16 %v542
    %v3178 = vunpack.c.l.b16 %v543
    %v3179 = vunpack.c.h.b16 %v543
    %v3180 = vunpack.c.l.b16 %v544
    %v3181 = vunpack.c.h.b16 %v544
    %v3182 = vunpack.c.l.b16 %v545
    %v3183 = vunpack.c.h.b16 %v545
    %v3184 = vunpack.c.l.b16 %v546
    %v3185 = vunpack.c.h.b16 %v546
    %v3186 = vunpack.c.l.b16 %v547
    %v3187 = vunpack.c.h.b16 %v547
    %v3188 = vunpack.c.l.b16 %v548
    %v3189 = vunpack.c.h.b16 %v548
    %v3190 = vunpack.c.l.b16 %v549
    %v3191 = vunpack.c.h.b16 %v549
    %v3192 = vunpack.c.l.b16 %v550
    %v3193 = vunpack.c.h.b16 %v550
    %v3194 = vunpack.c.l.b16 %v551
    %v3195 = vunpack.c.h.b16 %v551
    %v3196 = vunpack.c.l.b16 %v552
    %v3197 = vunpack.c.h.b16 %v552
    %v3198 = vunpack.c.l.b16 %v553
    %v3199 = vunpack.c.h.b16 %v553
    %v3200 = vunpack.c.l.b16 %v554
    %v3201 = vunpack.c.h.b16 %v554
    %v3202 = vunpack.c.l.b16 %v555
    %v3203 = vunpack.c.h.b16 %v555
    %v3204 = vunpack.c.l.b16 %v556
    %v3205 = vunpack.c.h.b16 %v556
    %v3206 = vunpack.c.l.b16 %v557
    %v3207 = vunpack.c.h.b16 %v557
    %v3208 = vunpack.c.l.b16 %v558
    %v3209 = vunpack.c.h.b16 %v558
    %v3210 = vunpack.c.l.b16 %v559
    %v3211 = vunpack.c.h.b16 %v559
    %v3212 = vunpack.c.l.b16 %v560
    %v3213 = vunpack.c.h.b16 %v560
    %v3214 = vunpack.c.l.b16 %v561
    %v3215 = vunpack.c.h.b16 %v561
    %v3216 = vunpack.c.l.b16 %v562
    %v3217 = vunpack.c.h.b16 %v562
    %v3218 = vunpack.c.l.b16 %v563
    %v3219 = vunpack.c.h.b16 %v563
    %v3220 = vunpack.c.l.b16 %v564
    %v3221 = vunpack.c.h.b16 %v564
    %v3222 = vunpack.c.l.b16 %v565
    %v3223 = vunpack.c.h.b16 %v565
    %v3224 = vunpack.c.l.b16 %v566
    %v3225 = vunpack.c.h.b16 %v566
    %v3226 = vunpack.c.l.b16 %v567
    %v3227 = vunpack.c.h.b16 %v567
    %v3228 = vunpack.c.l.b16 %v568
    %v3229 = vunpack.c.h.b16 %v568
    %v3230 = vunpack.c.l.b16 %v569
    %v3231 = vunpack.c.h.b16 %v569
    %v3232 = vunpack.c.l.b16 %v570
    %v3233 = vunpack.c.h.b16 %v570
    %v3234 = vunpack.c.l.b16 %v571
    %v3235 = vunpack.c.h.b16 %v571
    %v3236 = vunpack.c.l.b16 %v572
    %v3237 = vunpack.c.h.b16 %v572
    %v3238 = vunpack.c.l.b16 %v573
    %v3239 = vunpack.c.h.b16 %v573
    %v3240 = vunpack.c.l.b16 %v574
    %v3241 = vunpack.c.h.b16 %v574
    %v3242 = vunpack.c.l.b16 %v575
    %v3243 = vunpack.c.h.b16 %v575
    %v3244 = vunpack.c.l.b16 %v576
    %v3245 = vunpack.c.h.b16 %v576
    %v3246 = vunpack.c.l.b16 %v577
    %v3247 = vunpack.c.h.b16 %v577
    %v3248 = vunpack.c.l.b16 %v578
    %v3249 = vunpack.c.h.b16 %v578
    %v3250 = vunpack.c.l.b16 %v579
    %v3251 = vunpack.c.h.b16 %v579
    %v3252 = vunpack.c.l.b16 %v580
    %v3253 = vunpack.c.h.b16 %v580
    %v3254 = vunpack.c.l.b16 %v581
    %v3255 = vunpack.c.h.b16 %v581
    %v3256 = vunpack.c.l.b16 %v582
    %v3257 = vunpack.c.h.b16 %v582
    %v3258 = vunpack.c.l.b16 %v583
    %v3259 = vunpack.c.h.b16 %v583
    %v3260 = vunpack.c.l.b16 %v584
    %v3261 = vunpack.c.h.b16 %v584
    %v3262 = vunpack.c.l.b16 %v585
    %v3263 = vunpack.c.h.b16 %v585
    %v3264 = vunpack.c.l.b16 %v586
    %v3265 = vunpack.c.h.b16 %v586
    %v3266 = vunpack.c.l.b16 %v587
    %v3267 = vunpack.c.h.b16 %v587
    %v3268 = vunpack.c.l.b16 %v588
    %v3269 = vunpack.c.h.b16 %v588
    %v3270 = vunpack.c.l.b16 %v589
    %v3271 = vunpack.c.h.b16 %v589
    %v3272 = vunpack.c.l.b16 %v590
    %v3273 = vunpack.c.h.b16 %v590
    %v3274 = vunpack.c.l.b16 %v591
    %v3275 = vunpack.c.h.b16 %v591
    %v3276 = vunpack.c.l.b16 %v592
    %v3277 = vunpack.c.h.b16 %v592
    %v3278 = vunpack.c.l.b16 %v593
    %v3279 = vunpack.c.h.b16 %v593
    %v3280 = vunpack.c.l.b16 %v594
    %v3281 = vunpack.c.h.b16 %v594
    %v3282 = vunpack.c.l.b16 %v595
    %v3283 = vunpack.c.h.b16 %v595
    %v3284 = vunpack.c.l.b16 %v596
    %v3285 = vunpack.c.h.b16 %v596
    %v3286 = vunpack.c.l.b16 %v597
    %v3287 = vunpack.c.h.b16 %v597
    %v3288 = vunpack.c.l.b16 %v598
    %v3289 = vunpack.c.h.b16 %v598
    %v3290 = vunpack.c.l.b16 %v599
    %v3291 = vunpack.c.h.b16 %v599
    %v3292 = vunpack.c.l.b16 %v600
    %v3293 = vunpack.c.h.b16 %v600
    %v3294 = vunpack.c.l.b16 %v601
    %v3295 = vunpack.c.h.b16 %v601
    %v3296 = vunpack.c.l.b16 %v602
    %v3297 = vunpack.c.h.b16 %v602
    %v3298 = vunpack.c.l.b16 %v603
    %v3299 = vunpack.c.h.b16 %v603
    %v3300 = vunpack.c.l.b16 %v604
    %v3301 = vunpack.c.h.b16 %v604
    %v3302 = vunpack.c.l.b16 %v605
    %v3303 = vunpack.c.h.b16 %v605
    %v3304 = vunpack.c.l.b16 %v606
    %v3305 = vunpack.c.h.b16 %v606
    %v3306 = vunpack.c.l.b16 %v607
    %v3307 = vunpack.c.h.b16 %v607
    %v3308 = vunpack.c.l.b16 %v608
    %v3309 = vunpack.c.h.b16 %v608
    %v3310 = vunpack.c.l.b16 %v609
    %v3311 = vunpack.c.h.b16 %v609
    %v3312 = vunpack.c.l.b16 %v610
    %v3313 = vunpack.c.h.b16 %v610
    %v3314 = vunpack.c.l.b16 %v611
    %v3315 = vunpack.c.h.b16 %v611
    %v3316 = vunpack.c.l.b16 %v612
    %v3317 = vunpack.c.h.b16 %v612
    %v3318 = vunpack.c.l.b16 %v613
    %v3319 = vunpack.c.h.b16 %v613
    %v3320 = vunpack.c.l.b16 %v614
    %v3321 = vunpack.c.h.b16 %v614
    %v3322 = vunpack.c.l.b16 %v615
    %v3323 = vunpack.c.h.b16 %v615
    %v3324 = vunpack.c.l.b16 %v616
    %v3325 = vunpack.c.h.b16 %v616
    %v3326 = vunpack.c.l.b16 %v617
    %v3327 = vunpack.c.h.b16 %v617
    %v3328 = vunpack.c.l.b16 %v618
    %v3329 = vunpack.c.h.b16 %v618
    %v3330 = vunpack.c.l.b16 %v619
    %v3331 = vunpack.c.h.b16 %v619
    %v3332 = vunpack.c.l.b16 %v620
    %v3333 = vunpack.c.h.b16 %v620
    %v3334 = vunpack.c.l.b16 %v621
    %v3335 = vunpack.c.h.b16 %v621
    %v3336 = vunpack.c.l.b16 %v622
    %v3337 = vunpack.c.h.b16 %v622
    %v3338 = vunpack.c.l.b16 %v623
    %v3339 = vunpack.c.h.b16 %v623
    %v3340 = vunpack.c.l.b16 %v624
    %v3341 = vunpack.c.h.b16 %v624
    %v3342 = vunpack.c.l.b16 %v625
    %v3343 = vunpack.c.h.b16 %v625
    %v3344 = vunpack.c.l.b16 %v626
    %v3345 = vunpack.c.h.b16 %v626
    %v3346 = vunpack.c.l.b16 %v627
    %v3347 = vunpack.c.h.b16 %v627
    %v3348 = vunpack.c.l.b16 %v628
    %v3349 = vunpack.c.h.b16 %v628
    %v3350 = vunpack.c.l.b16 %v629
    %v3351 = vunpack.c.h.b16 %v629
    %v3352 = vunpack.c.l.b16 %v630
    %v3353 = vunpack.c.h.b16 %v630
    %v3354 = vunpack.c.l.b16 %v631
    %v3355 = vunpack.c.h.b16 %v631
    %v3356 = vunpack.c.l.b16 %v632
    %v3357 = vunpack.c.h.b16 %v632
    %v3358 = vunpack.c.l.b16 %v633
    %v3359 = vunpack.c.h.b16 %v633
    %v3360 = vunpack.c.l.b16 %v634
    %v3361 = vunpack.c.h.b16 %v634
    %v3362 = vunpack.c.l.b16 %v635
    %v3363 = vunpack.c.h.b16 %v635
    %v3364 = vunpack.c.l.b16 %v636
    %v3365 = vunpack.c.h.b16 %v636
    %v3366 = vunpack.c.l.b16 %v637
    %v3367 = vunpack.c.h.b16 %v637
    %v3368 = vunpack.c.l.b16 %v638
    %v3369 = vunpack.c.h.b16 %v638
    %v3370 = vunpack.c.l.b16 %v639
    %v3371 = vunpack.c.h.b16 %v639
    %v3372 = vunpack.c.l.b16 %v640
    %v3373 = vunpack.c.h.b16 %v640
    %v3374 = vunpack.c.l.b16 %v641
    %v3375 = vunpack.c.h.b16 %v641
    %v3376 = vunpack.c.l.b16 %v642
    %v3377 = vunpack.c.h.b16 %v642
    %v3378 = vunpack.c.l.b16 %v643
    %v3379 = vunpack.c.h.b16 %v643
    %v3380 = vunpack.c.l.b16 %v644
    %v3381 = vunpack.c.h.b16 %v644
    %v3382 = vunpack.c.l.b16 %v645
    %v3383 = vunpack.c.h.b16 %v645
    %v3384 = vunpack.c.l.b16 %v646
    %v3385 = vunpack.c.h.b16 %v646
    %v3386 = vunpack.c.l.b16 %v647
    %v3387 = vunpack.c.h.b16 %v647
    %v3388 = vunpack.c.l.b16 %v648
    %v3389 = vunpack.c.h.b16 %v648
    %v3390 = vunpack.c.l.b16 %v649
    %v3391 = vunpack.c.h.b16 %v649
    %v3392 = vunpack.c.l.b16 %v650
    %v3393 = vunpack.c.h.b16 %v650
    %v3394 = vunpack.c.l.b16 %v651
    %v3395 = vunpack.c.h.b16 %v651
    %v3396 = vunpack.c.l.b16 %v652
    %v3397 = vunpack.c.h.b16 %v652
    %v3398 = vunpack.c.l.b16 %v653
    %v3399 = vunpack.c.h.b16 %v653
    %v3400 = vunpack.c.l.b16 %v654
    %v3401 = vunpack.c.h.b16 %v654
    %v3402 = vunpack.c.l.b16 %v655
    %v3403 = vunpack.c.h.b16 %v655
    %v3404 = vunpack.c.l.b16 %v656
    %v3405 = vunpack.c.h.b16 %v656
    %v3406 = vunpack.c.l.b16 %v657
    %v3407 = vunpack.c.h.b16 %v657
    %v3408 = vunpack.c.l.b16 %v658
    %v3409 = vunpack.c.h.b16 %v658
    %v3410 = vunpack.c.l.b16 %v659
    %v3411 = vunpack.c.h.b16 %v659
    %v3412 = vunpack.c.l.b16 %v660
    %v3413 = vunpack.c.h.b16 %v660
    %v3414 = vunpack.c.l.b16 %v661
    %v3415 = vunpack.c.h.b16 %v661
    %v3416 = vunpack.c.l.b16 %v662
    %v3417 = vunpack.c.h.b16 %v662
    %v3418 = vunpack.c.l.b16 %v663
    %v3419 = vunpack.c.h.b16 %v663
    %v3420 = vunpack.c.l.b16 %v664
    %v3421 = vunpack.c.h.b16 %v664
    %v3422 = vunpack.c.l.b16 %v665
    %v3423 = vunpack.c.h.b16 %v665
    %v3424 = vunpack.c.l.b16 %v666
    %v3425 = vunpack.c.h.b16 %v666
    %v3426 = vunpack.c.l.b16 %v667
    %v3427 = vunpack.c.h.b16 %v667
    %v3428 = vunpack.c.l.b16 %v668
    %v3429 = vunpack.c.h.b16 %v668
    %v3430 = vunpack.c.l.b16 %v669
    %v3431 = vunpack.c.h.b16 %v669
    %v3432 = vunpack.c.l.b16 %v670
    %v3433 = vunpack.c.h.b16 %v670
    %v3434 = vunpack.c.l.b16 %v671
    %v3435 = vunpack.c.h.b16 %v671
    %v3436 = vunpack.c.l.b16 %v672
    %v3437 = vunpack.c.h.b16 %v672
    %v3438 = vunpack.c.l.b16 %v673
    %v3439 = vunpack.c.h.b16 %v673
    %v3440 = vunpack.c.l.b16 %v674
    %v3441 = vunpack.c.h.b16 %v674
    %v3442 = vunpack.c.l.b16 %v675
    %v3443 = vunpack.c.h.b16 %v675
    %v3444 = vunpack.c.l.b16 %v676
    %v3445 = vunpack.c.h.b16 %v676
    %v3446 = vunpack.c.l.b16 %v677
    %v3447 = vunpack.c.h.b16 %v677
    %v3448 = vunpack.c.l.b16 %v678
    %v3449 = vunpack.c.h.b16 %v678
    %v3450 = vunpack.c.l.b16 %v679
    %v3451 = vunpack.c.h.b16 %v679
    %v3452 = vunpack.c.l.b16 %v680
    %v3453 = vunpack.c.h.b16 %v680
    %v3454 = vunpack.c.l.b16 %v681
    %v3455 = vunpack.c.h.b16 %v681
    %v3456 = vunpack.c.l.b16 %v682
    %v3457 = vunpack.c.h.b16 %v682
    %v3458 = vunpack.c.l.b16 %v683
    %v3459 = vunpack.c.h.b16 %v683
    %v3460 = vunpack.c.l.b16 %v684
    %v3461 = vunpack.c.h.b16 %v684
    %v3462 = vunpack.c.l.b16 %v685
    %v3463 = vunpack.c.h.b16 %v685
    %v3464 = vunpack.c.l.b16 %v686
    %v3465 = vunpack.c.h.b16 %v686
    %v3466 = vunpack.c.l.b16 %v687
    %v3467 = vunpack.c.h.b16 %v687
    %v3468 = vunpack.c.l.b16 %v688
    %v3469 = vunpack.c.h.b16 %v688
    %v3470 = vunpack.c.l.b16 %v689
    %v3471 = vunpack.c.h.b16 %v689
    %v3472 = vunpack.c.l.b16 %v690
    %v3473 = vunpack.c.h.b16 %v690
    %v3474 = vunpack.c.l.b16 %v691
    %v3475 = vunpack.c.h.b16 %v691
    %v3476 = vunpack.c.l.b16 %v692
    %v3477 = vunpack.c.h.b16 %v692
    %v3478 = vunpack.c.l.b16 %v693
    %v3479 = vunpack.c.h.b16 %v693
    %v3480 = vunpack.c.l.b16 %v694
    %v3481 = vunpack.c.h.b16 %v694
    %v3482 = vunpack.c.l.b16 %v695
    %v3483 = vunpack.c.h.b16 %v695
    %v3484 = vunpack.c.l.b16 %v696
    %v3485 = vunpack.c.h.b16 %v696
    %v3486 = vunpack.c.l.b16 %v697
    %v3487 = vunpack.c.h.b16 %v697
    %v3488 = vunpack.c.l.b16 %v698
    %v3489 = vunpack.c.h.b16 %v698
    %v3490 = vunpack.c.l.b16 %v699
    %v3491 = vunpack.c.h.b16 %v699
    %v3492 = vunpack.c.l.b16 %v700
    %v3493 = vunpack.c.h.b16 %v700
    %v3494 = vunpack.c.l.b16 %v701
    %v3495 = vunpack.c.h.b16 %v701
    %v3496 = vunpack.c.l.b16 %v702
    %v3497 = vunpack.c.h.b16 %v702
    %v3498 = vunpack.c.l.b16 %v703
    %v3499 = vunpack.c.h.b16 %v703
    %v3500 = vunpack.c.l.b16 %v704
    %v3501 = vunpack.c.h.b16 %v704
    %v3502 = vunpack.c.l.b16 %v705
    %v3503 = vunpack.c.h.b16 %v705
    %v3504 = vunpack.c.l.b16 %v706
    %v3505 = vunpack.c.h.b16 %v706
    %v3506 = vunpack.c.l.b16 %v707
    %v3507 = vunpack.c.h.b16 %v707
    %v3508 = vunpack.c.l.b16 %v708
    %v3509 = vunpack.c.h.b16 %v708
    %v3510 = vunpack.c.l.b16 %v709
    %v3511 = vunpack.c.h.b16 %v709
    %v3512 = vunpack.c.l.b16 %v710
    %v3513 = vunpack.c.h.b16 %v710
    %v3514 = vunpack.c.l.b16 %v711
    %v3515 = vunpack.c.h.b16 %v711
    %v3516 = vunpack.c.l.b16 %v712
    %v3517 = vunpack.c.h.b16 %v712
    %v3518 = vunpack.c.l.b16 %v713
    %v3519 = vunpack.c.h.b16 %v713
    %v3520 = vunpack.c.l.b16 %v714
    %v3521 = vunpack.c.h.b16 %v714
    %v3522 = vunpack.c.l.b16 %v715
    %v3523 = vunpack.c.h.b16 %v715
    %v3524 = vunpack.c.l.b16 %v716
    %v3525 = vunpack.c.h.b16 %v716
    %v3526 = vunpack.c.l.b16 %v717
    %v3527 = vunpack.c.h.b16 %v717
    %v3528 = vunpack.c.l.b16 %v718
    %v3529 = vunpack.c.h.b16 %v718
    %v3530 = vunpack.c.l.b16 %v719
    %v3531 = vunpack.c.h.b16 %v719
    %v3532 = vunpack.c.l.b16 %v720
    %v3533 = vunpack.c.h.b16 %v720
    %v3534 = vunpack.c.l.b16 %v721
    %v3535 = vunpack.c.h.b16 %v721
    %v3536 = vunpack.c.l.b16 %v722
    %v3537 = vunpack.c.h.b16 %v722
    %v3538 = vunpack.c.l.b16 %v723
    %v3539 = vunpack.c.h.b16 %v723
    %v3540 = vunpack.c.l.b16 %v724
    %v3541 = vunpack.c.h.b16 %v724
    %v3542 = vunpack.c.l.b16 %v725
    %v3543 = vunpack.c.h.b16 %v725
    %v3544 = vunpack.c.l.b16 %v726
    %v3545 = vunpack.c.h.b16 %v726
    %v3546 = vunpack.c.l.b16 %v727
    %v3547 = vunpack.c.h.b16 %v727
    %v3548 = vunpack.c.l.b16 %v728
    %v3549 = vunpack.c.h.b16 %v728
    %v3550 = vunpack.c.l.b16 %v729
    %v3551 = vunpack.c.h.b16 %v729
    %v3552 = vunpack.c.l.b16 %v730
    %v3553 = vunpack.c.h.b16 %v730
    %v3554 = vunpack.c.l.b16 %v731
    %v3555 = vunpack.c.h.b16 %v731
    %v3556 = vunpack.c.l.b16 %v732
    %v3557 = vunpack.c.h.b16 %v732
    %v3558 = vunpack.c.l.b16 %v733
    %v3559 = vunpack.c.h.b16 %v733
    %v3560 = vunpack.c.l.b16 %v734
    %v3561 = vunpack.c.h.b16 %v734
    %v3562 = vunpack.c.l.b16 %v735
    %v3563 = vunpack.c.h.b16 %v735
    %v3564 = vunpack.c.l.b16 %v736
    %v3565 = vunpack.c.h.b16 %v736
    %v3566 = vunpack.c.l.b16 %v737
    %v3567 = vunpack.c.h.b16 %v737
    %v3568 = vunpack.c.l.b16 %v738
    %v3569 = vunpack.c.h.b16 %v738
    %v3570 = vunpack.c.l.b16 %v739
    %v3571 = vunpack.c.h.b16 %v739
    %v3572 = vunpack.c.l.b16 %v740
    %v3573 = vunpack.c.h.b16 %v740
    %v3574 = vunpack.c.l.b16 %v741
    %v3575 = vunpack.c.h.b16 %v741
    %v3576 = vunpack.c.l.b16 %v742
    %v3577 = vunpack.c.h.b16 %v742
    %v3578 = vunpack.c.l.b16 %v743
    %v3579 = vunpack.c.h.b16 %v743
    %v3580 = vunpack.c.l.b16 %v744
    %v3581 = vunpack.c.h.b16 %v744
    %v3582 = vunpack.c.l.b16 %v745
    %v3583 = vunpack.c.h.b16 %v745
    %v3584 = vunpack.c.l.b16 %v746
    %v3585 = vunpack.c.h.b16 %v746
    %v3586 = vunpack.c.l.b16 %v747
    %v3587 = vunpack.c.h.b16 %v747
    %v3588 = vunpack.c.l.b16 %v748
    %v3589 = vunpack.c.h.b16 %v748
    %v3590 = vunpack.c.l.b16 %v749
    %v3591 = vunpack.c.h.b16 %v749
    %v3592 = vunpack.c.l.b16 %v750
    %v3593 = vunpack.c.h.b16 %v750
    %v3594 = vunpack.c.l.b16 %v751
    %v3595 = vunpack.c.h.b16 %v751
    %v3596 = vunpack.c.l.b16 %v752
    %v3597 = vunpack.c.h.b16 %v752
    %v3598 = vunpack.c.l.b16 %v753
    %v3599 = vunpack.c.h.b16 %v753
    %v3600 = vunpack.c.l.b16 %v754
    %v3601 = vunpack.c.h.b16 %v754
    %v3602 = vunpack.c.l.b16 %v755
    %v3603 = vunpack.c.h.b16 %v755
    %v3604 = vunpack.c.l.b16 %v756
    %v3605 = vunpack.c.h.b16 %v756
    %v3606 = vunpack.c.l.b16 %v757
    %v3607 = vunpack.c.h.b16 %v757
    %v3608 = vunpack.c.l.b16 %v758
    %v3609 = vunpack.c.h.b16 %v758
    %v3610 = vunpack.c.l.b16 %v759
    %v3611 = vunpack.c.h.b16 %v759
    %v3612 = vunpack.c.l.b16 %v760
    %v3613 = vunpack.c.h.b16 %v760
    %v3614 = vunpack.c.l.b16 %v761
    %v3615 = vunpack.c.h.b16 %v761
    %v3616 = vunpack.c.l.b16 %v762
    %v3617 = vunpack.c.h.b16 %v762
    %v3618 = vunpack.c.l.b16 %v763
    %v3619 = vunpack.c.h.b16 %v763
    %v3620 = vunpack.c.l.b16 %v764
    %v3621 = vunpack.c.h.b16 %v764
    %v3622 = vunpack.c.l.b16 %v765
    %v3623 = vunpack.c.h.b16 %v765
    %v3624 = vunpack.c.l.b16 %v766
    %v3625 = vunpack.c.h.b16 %v766
    %v3626 = vunpack.c.l.b16 %v767
    %v3627 = vunpack.c.h.b16 %v767
    %v3628 = vunpack.c.l.b16 %v768
    %v3629 = vunpack.c.h.b16 %v768
    %v3630 = vunpack.c.l.b16 %v769
    %v3631 = vunpack.c.h.b16 %v769
    %v3632 = vunpack.c.l.b16 %v770
    %v3633 = vunpack.c.h.b16 %v770
    %v3634 = vunpack.c.l.b16 %v771
    %v3635 = vunpack.c.h.b16 %v771
    %v3636 = vunpack.c.l.b16 %v772
    %v3637 = vunpack.c.h.b16 %v772
    %v3638 = vunpack.c.l.b16 %v773
    %v3639 = vunpack.c.h.b16 %v773
    %v3640 = vunpack.c.l.b16 %v774
    %v3641 = vunpack.c.h.b16 %v774
    %v3642 = vunpack.c.l.b16 %v775
    %v3643 = vunpack.c.h.b16 %v775
    %v3644 = vunpack.c.l.b16 %v776
    %v3645 = vunpack.c.h.b16 %v776
    %v3646 = vunpack.c.l.b16 %v777
    %v3647 = vunpack.c.h.b16 %v777
    %v3648 = vunpack.c.l.b16 %v778
    %v3649 = vunpack.c.h.b16 %v778
    %v3650 = vunpack.c.l.b16 %v779
    %v3651 = vunpack.c.h.b16 %v779
    %v3652 = vunpack.c.l.b16 %v780
    %v3653 = vunpack.c.h.b16 %v780
    %v3654 = vunpack.c.l.b16 %v781
    %v3655 = vunpack.c.h.b16 %v781
    %v3656 = vunpack.c.l.b16 %v782
    %v3657 = vunpack.c.h.b16 %v782
    %v3658 = vunpack.c.l.b16 %v783
    %v3659 = vunpack.c.h.b16 %v783
    %v3660 = vunpack.c.l.b16 %v784
    %v3661 = vunpack.c.h.b16 %v784
    %v3662 = vunpack.c.l.b16 %v785
    %v3663 = vunpack.c.h.b16 %v785
    %v3664 = vunpack.c.l.b16 %v786
    %v3665 = vunpack.c.h.b16 %v786
    %v3666 = vunpack.c.l.b16 %v787
    %v3667 = vunpack.c.h.b16 %v787
    %v3668 = vunpack.c.l.b16 %v788
    %v3669 = vunpack.c.h.b16 %v788
    %v3670 = vunpack.c.l.b16 %v789
    %v3671 = vunpack.c.h.b16 %v789
    %v3672 = vunpack.c.l.b16 %v790
    %v3673 = vunpack.c.h.b16 %v790
    %v3674 = vunpack.c.l.b16 %v791
    %v3675 = vunpack.c.h.b16 %v791
    %v3676 = vunpack.c.l.b16 %v792
    %v3677 = vunpack.c.h.b16 %v792
    %v3678 = vunpack.c.l.b16 %v793
    %v3679 = vunpack.c.h.b16 %v793
    %v3680 = vunpack.c.l.b16 %v794
    %v3681 = vunpack.c.h.b16 %v794
    %v3682 = vunpack.c.l.b16 %v795
    %v3683 = vunpack.c.h.b16 %v795
    %v3684 = vunpack.c.l.b16 %v796
    %v3685 = vunpack.c.h.b16 %v796
    %v3686 = vunpack.c.l.b16 %v797
    %v3687 = vunpack.c.h.b16 %v797
    %v3688 = vunpack.c.l.b16 %v798
    %v3689 = vunpack.c.h.b16 %v798
    %v3690 = vunpack.c.l.b16 %v799
    %v3691 = vunpack.c.h.b16 %v799
    %v3692 = vunpack.c.l.b16 %v800
    %v3693 = vunpack.c.h.b16 %v800
    %v3694 = vunpack.c.l.b16 %v801
    %v3695 = vunpack.c.h.b16 %v801
    %v3696 = vunpack.c.l.b16 %v802
    %v3697 = vunpack.c.h.b16 %v802
    %v3698 = vunpack.c.l.b16 %v803
    %v3699 = vunpack.c.h.b16 %v803
    %v3700 = vunpack.c.l.b16 %v804
    %v3701 = vunpack.c.h.b16 %v804
    %v3702 = vunpack.c.l.b16 %v805
    %v3703 = vunpack.c.h.b16 %v805
    %v3704 = vunpack.c.l.b16 %v806
    %v3705 = vunpack.c.h.b16 %v806
    %v3706 = vunpack.c.l.b16 %v807
    %v3707 = vunpack.c.h.b16 %v807
    %v3708 = vunpack.c.l.b16 %v808
    %v3709 = vunpack.c.h.b16 %v808
    %v3710 = vunpack.c.l.b16 %v809
    %v3711 = vunpack.c.h.b16 %v809
    %v3712 = vunpack.c.l.b16 %v810
    %v3713 = vunpack.c.h.b16 %v810
    %v3714 = vunpack.c.l.b16 %v811
    %v3715 = vunpack.c.h.b16 %v811
    %v3716 = vunpack.c.l.b16 %v812
    %v3717 = vunpack.c.h.b16 %v812
    %v3718 = vunpack.c.l.b16 %v813
    %v3719 = vunpack.c.h.b16 %v813
    %v3720 = vunpack.c.l.b16 %v814
    %v3721 = vunpack.c.h.b16 %v814
    %v3722 = vunpack.c.l.b16 %v815
    %v3723 = vunpack.c.h.b16 %v815
    %v3724 = vunpack.c.l.b16 %v816
    %v3725 = vunpack.c.h.b16 %v816
    %v3726 = vunpack.c.l.b16 %v817
    %v3727 = vunpack.c.h.b16 %v817
    %v3728 = vunpack.c.l.b16 %v818
    %v3729 = vunpack.c.h.b16 %v818
    %v3730 = vunpack.c.l.b16 %v819
    %v3731 = vunpack.c.h.b16 %v819
    %v3732 = vunpack.c.l.b16 %v820
    %v3733 = vunpack.c.h.b16 %v820
    %v3734 = vunpack.c.l.b16 %v821
    %v3735 = vunpack.c.h.b16 %v821
    %v3736 = vunpack.c.l.b16 %v822
    %v3737 = vunpack.c.h.b16 %v822
    %v3738 = vunpack.c.l.b16 %v823
    %v3739 = vunpack.c.h.b16 %v823
    %v3740 = vunpack.c.l.b16 %v824
    %v3741 = vunpack.c.h.b16 %v824
    %v3742 = vunpack.c.l.b16 %v825
    %v3743 = vunpack.c.h.b16 %v825
    %v3744 = vunpack.c.l.b16 %v826
    %v3745 = vunpack.c.h.b16 %v826
    %v3746 = vunpack.c.l.b16 %v827
    %v3747 = vunpack.c.h.b16 %v827
    %v3748 = vunpack.c.l.b16 %v828
    %v3749 = vunpack.c.h.b16 %v828
    %v3750 = vunpack.c.l.b16 %v829
    %v3751 = vunpack.c.h.b16 %v829
    %v3752 = vunpack.c.l.b16 %v830
    %v3753 = vunpack.c.h.b16 %v830
    %v3754 = vunpack.c.l.b16 %v831
    %v3755 = vunpack.c.h.b16 %v831
    %v3756 = vunpack.c.l.b16 %v832
    %v3757 = vunpack.c.h.b16 %v832
    %v3758 = vunpack.c.l.b16 %v833
    %v3759 = vunpack.c.h.b16 %v833
    %v3760 = vunpack.c.l.b16 %v834
    %v3761 = vunpack.c.h.b16 %v834
    %v3762 = vunpack.c.l.b16 %v835
    %v3763 = vunpack.c.h.b16 %v835
    %v3764 = vunpack.c.l.b16 %v836
    %v3765 = vunpack.c.h.b16 %v836
    %v3766 = vunpack.c.l.b16 %v837
    %v3767 = vunpack.c.h.b16 %v837
    %v3768 = vunpack.c.l.b16 %v838
    %v3769 = vunpack.c.h.b16 %v838
    %v3770 = vunpack.c.l.b16 %v839
    %v3771 = vunpack.c.h.b16 %v839
    %v3772 = vunpack.c.l.b16 %v840
    %v3773 = vunpack.c.h.b16 %v840
    %v3774 = vunpack.c.l.b16 %v841
    %v3775 = vunpack.c.h.b16 %v841
    %v3776 = vunpack.c.l.b16 %v842
    %v3777 = vunpack.c.h.b16 %v842
    %v3778 = vunpack.c.l.b16 %v843
    %v3779 = vunpack.c.h.b16 %v843
    %v3780 = vunpack.c.l.b16 %v844
    %v3781 = vunpack.c.h.b16 %v844
    %v3782 = vunpack.c.l.b16 %v845
    %v3783 = vunpack.c.h.b16 %v845
    %v3784 = vunpack.c.l.b16 %v846
    %v3785 = vunpack.c.h.b16 %v846
    %v3786 = vunpack.c.l.b16 %v847
    %v3787 = vunpack.c.h.b16 %v847
    %v3788 = vunpack.c.l.b16 %v848
    %v3789 = vunpack.c.h.b16 %v848
    %v3790 = vunpack.c.l.b16 %v849
    %v3791 = vunpack.c.h.b16 %v849
    %v3792 = vunpack.c.l.b16 %v850
    %v3793 = vunpack.c.h.b16 %v850
    %v3794 = vunpack.c.l.b16 %v851
    %v3795 = vunpack.c.h.b16 %v851
    %v3796 = vunpack.c.l.b16 %v852
    %v3797 = vunpack.c.h.b16 %v852
    %v3798 = vunpack.c.l.b16 %v853
    %v3799 = vunpack.c.h.b16 %v853
    %v3800 = vunpack.c.l.b16 %v854
    %v3801 = vunpack.c.h.b16 %v854
    %v3802 = vunpack.c.l.b16 %v855
    %v3803 = vunpack.c.h.b16 %v855
    %v3804 = vunpack.c.l.b16 %v856
    %v3805 = vunpack.c.h.b16 %v856
    %v3806 = vunpack.c.l.b16 %v857
    %v3807 = vunpack.c.h.b16 %v857
    %v3808 = vunpack.c.l.b16 %v858
    %v3809 = vunpack.c.h.b16 %v858
    %v3810 = vunpack.c.l.b16 %v859
    %v3811 = vunpack.c.h.b16 %v859
    %v3812 = vunpack.c.l.b16 %v860
    %v3813 = vunpack.c.h.b16 %v860
    %v3814 = vunpack.c.l.b16 %v861
    %v3815 = vunpack.c.h.b16 %v861
    %v3816 = vunpack.c.l.b16 %v862
    %v3817 = vunpack.c.h.b16 %v862
    %v3818 = vunpack.c.l.b16 %v863
    %v3819 = vunpack.c.h.b16 %v863
    %v3820 = vunpack.c.l.b16 %v864
    %v3821 = vunpack.c.h.b16 %v864
    %v3822 = vunpack.c.l.b16 %v865
    %v3823 = vunpack.c.h.b16 %v865
    %v3824 = vunpack.c.l.b16 %v866
    %v3825 = vunpack.c.h.b16 %v866
    %v3826 = vunpack.c.l.b16 %v867
    %v3827 = vunpack.c.h.b16 %v867
    %v3828 = vunpack.c.l.b16 %v868
    %v3829 = vunpack.c.h.b16 %v868
    %v3830 = vunpack.c.l.b16 %v869
    %v3831 = vunpack.c.h.b16 %v869
    %v3832 = vunpack.c.l.b16 %v870
    %v3833 = vunpack.c.h.b16 %v870
    %v3834 = vunpack.c.l.b16 %v871
    %v3835 = vunpack.c.h.b16 %v871
    %v3836 = vunpack.c.l.b16 %v872
    %v3837 = vunpack.c.h.b16 %v872
    %v3838 = vunpack.c.l.b16 %v873
    %v3839 = vunpack.c.h.b16 %v873
    %v3840 = vunpack.c.l.b16 %v874
    %v3841 = vunpack.c.h.b16 %v874
    %v3842 = vunpack.c.l.b16 %v875
    %v3843 = vunpack.c.h.b16 %v875
    %v3844 = vunpack.c.l.b16 %v876
    %v3845 = vunpack.c.h.b16 %v876
    %v3846 = vunpack.c.l.b16 %v877
    %v3847 = vunpack.c.h.b16 %v877
    %v3848 = vunpack.c.l.b16 %v878
    %v3849 = vunpack.c.h.b16 %v878
    %v3850 = vunpack.c.l.b16 %v879
    %v3851 = vunpack.c.h.b16 %v879
    %v3852 = vunpack.c.l.b16 %v880
    %v3853 = vunpack.c.h.b16 %v880
    %v3854 = vunpack.c.l.b16 %v881
    %v3855 = vunpack.c.h.b16 %v881
    %v3856 = vunpack.c.l.b16 %v882
    %v3857 = vunpack.c.h.b16 %v882
    %v3858 = vunpack.c.l.b16 %v883
    %v3859 = vunpack.c.h.b16 %v883
    %v3860 = vunpack.c.l.b16 %v884
    %v3861 = vunpack.c.h.b16 %v884
    %v3862 = vunpack.c.l.b16 %v885
    %v3863 = vunpack.c.h.b16 %v885
    %v3864 = vunpack.c.l.b16 %v886
    %v3865 = vunpack.c.h.b16 %v886
    %v3866 = vunpack.c.l.b16 %v887
    %v3867 = vunpack.c.h.b16 %v887
    %v3868 = vunpack.c.l.b16 %v888
    %v3869 = vunpack.c.h.b16 %v888
    %v3870 = vunpack.c.l.b16 %v889
    %v3871 = vunpack.c.h.b16 %v889
    %v3872 = vunpack.c.l.b16 %v890
    %v3873 = vunpack.c.h.b16 %v890
    %v3874 = vunpack.c.l.b16 %v891
    %v3875 = vunpack.c.h.b16 %v891
    %v3876 = vunpack.c.l.b16 %v892
    %v3877 = vunpack.c.h.b16 %v892
    %v3878 = vunpack.c.l.b16 %v893
    %v3879 = vunpack.c.h.b16 %v893
    %v3880 = vunpack.c.l.b16 %v894
    %v3881 = vunpack.c.h.b16 %v894
    %v3882 = vunpack.c.l.b16 %v895
    %v3883 = vunpack.c.h.b16 %v895
    %v3884 = vunpack.c.l.b16 %v896
    %v3885 = vunpack.c.h.b16 %v896
    %v3886 = vunpack.c.l.b16 %v897
    %v3887 = vunpack.c.h.b16 %v897
    %v3888 = vunpack.c.l.b16 %v898
    %v3889 = vunpack.c.h.b16 %v898
    %v3890 = vunpack.c.l.b16 %v899
    %v3891 = vunpack.c.h.b16 %v899
    %v3892 = vunpack.c.l.b16 %v900
    %v3893 = vunpack.c.h.b16 %v900
    %v3894 = vunpack.c.l.b16 %v901
    %v3895 = vunpack.c.h.b16 %v901
    %v3896 = vunpack.c.l.b16 %v902
    %v3897 = vunpack.c.h.b16 %v902
    %v3898 = vunpack.c.l.b16 %v903
    %v3899 = vunpack.c.h.b16 %v903
    %v3900 = vunpack.c.l.b16 %v904
    %v3901 = vunpack.c.h.b16 %v904
    %v3902 = vunpack.c.l.b16 %v905
    %v3903 = vunpack.c.h.b16 %v905
    %v3904 = vunpack.c.l.b16 %v906
    %v3905 = vunpack.c.h.b16 %v906
    %v3906 = vunpack.c.l.b16 %v907
    %v3907 = vunpack.c.h.b16 %v907
    %v3908 = vunpack.c.l.b16 %v908
    %v3909 = vunpack.c.h.b16 %v908
    %v3910 = vunpack.c.l.b16 %v909
    %v3911 = vunpack.c.h.b16 %v909
    %v3912 = vunpack.c.l.b16 %v910
    %v3913 = vunpack.c.h.b16 %v910
    %v3914 = vunpack.c.l.b16 %v911
    %v3915 = vunpack.c.h.b16 %v911
    %v3916 = vunpack.c.l.b16 %v912
    %v3917 = vunpack.c.h.b16 %v912
    %v3918 = vunpack.c.l.b16 %v913
    %v3919 = vunpack.c.h.b16 %v913
    %v3920 = vunpack.c.l.b16 %v914
    %v3921 = vunpack.c.h.b16 %v914
    %v3922 = vunpack.c.l.b16 %v915
    %v3923 = vunpack.c.h.b16 %v915
    %v3924 = vunpack.c.l.b16 %v916
    %v3925 = vunpack.c.h.b16 %v916
    %v3926 = vunpack.c.l.b16 %v917
    %v3927 = vunpack.c.h.b16 %v917
    %v3928 = vunpack.c.l.b16 %v918
    %v3929 = vunpack.c.h.b16 %v918
    %v3930 = vunpack.c.l.b16 %v919
    %v3931 = vunpack.c.h.b16 %v919
    %v3932 = vunpack.c.l.b16 %v920
    %v3933 = vunpack.c.h.b16 %v920
    %v3934 = vunpack.c.l.b16 %v921
    %v3935 = vunpack.c.h.b16 %v921
    %v3936 = vunpack.c.l.b16 %v922
    %v3937 = vunpack.c.h.b16 %v922
    %v3938 = vunpack.c.l.b16 %v923
    %v3939 = vunpack.c.h.b16 %v923
    %v3940 = vunpack.c.l.b16 %v924
    %v3941 = vunpack.c.h.b16 %v924
    %v3942 = vunpack.c.l.b16 %v925
    %v3943 = vunpack.c.h.b16 %v925
    %v3944 = vunpack.c.l.b16 %v926
    %v3945 = vunpack.c.h.b16 %v926
    %v3946 = vunpack.c.l.b16 %v927
    %v3947 = vunpack.c.h.b16 %v927
    %v3948 = vunpack.c.l.b16 %v928
    %v3949 = vunpack.c.h.b16 %v928
    %v3950 = vunpack.c.l.b16 %v929
    %v3951 = vunpack.c.h.b16 %v929
    %v3952 = vunpack.c.l.b16 %v930
    %v3953 = vunpack.c.h.b16 %v930
    %v3954 = vunpack.c.l.b16 %v931
    %v3955 = vunpack.c.h.b16 %v931
    %v3956 = vunpack.c.l.b16 %v932
    %v3957 = vunpack.c.h.b16 %v932
    %v3958 = vunpack.c.l.b16 %v933
    %v3959 = vunpack.c.h.b16 %v933
    %v3960 = vunpack.c.l.b16 %v934
    %v3961 = vunpack.c.h.b16 %v934
    %v3962 = vunpack.c.l.b16 %v935
    %v3963 = vunpack.c.h.b16 %v935
    %v3964 = vunpack.c.l.b16 %v936
    %v3965 = vunpack.c.h.b16 %v936
    %v3966 = vunpack.c.l.b16 %v937
    %v3967 = vunpack.c.h.b16 %v937
    %v3968 = vunpack.c.l.b16 %v938
    %v3969 = vunpack.c.h.b16 %v938
    %v3970 = vunpack.c.l.b16 %v939
    %v3971 = vunpack.c.h.b16 %v939
    %v3972 = vunpack.c.l.b16 %v940
    %v3973 = vunpack.c.h.b16 %v940
    %v3974 = vunpack.c.l.b16 %v941
    %v3975 = vunpack.c.h.b16 %v941
    %v3976 = vunpack.c.l.b16 %v942
    %v3977 = vunpack.c.h.b16 %v942
    %v3978 = vunpack.c.l.b16 %v943
    %v3979 = vunpack.c.h.b16 %v943
    %v3980 = vunpack.c.l.b16 %v944
    %v3981 = vunpack.c.h.b16 %v944
    %v3982 = vunpack.c.l.b16 %v945
    %v3983 = vunpack.c.h.b16 %v945
    %v3984 = vunpack.c.l.b16 %v946
    %v3985 = vunpack.c.h.b16 %v946
    %v3986 = vunpack.c.l.b16 %v947
    %v3987 = vunpack.c.h.b16 %v947
    %v3988 = vunpack.c.l.b16 %v948
    %v3989 = vunpack.c.h.b16 %v948
    %v3990 = vunpack.c.l.b16 %v949
    %v3991 = vunpack.c.h.b16 %v949
    %v3992 = vunpack.c.l.b16 %v950
    %v3993 = vunpack.c.h.b16 %v950
    %v3994 = vunpack.c.l.b16 %v951
    %v3995 = vunpack.c.h.b16 %v951
    %v3996 = vunpack.c.l.b16 %v952
    %v3997 = vunpack.c.h.b16 %v952
    %v3998 = vunpack.c.l.b16 %v953
    %v3999 = vunpack.c.h.b16 %v953
    %v4000 = vunpack.c.l.b16 %v954
    %v4001 = vunpack.c.h.b16 %v954
    %v4002 = vunpack.c.l.b16 %v955
    %v4003 = vunpack.c.h.b16 %v955
    %v4004 = vunpack.c.l.b16 %v956
    %v4005 = vunpack.c.h.b16 %v956
    %v4006 = vunpack.c.l.b16 %v957
    %v4007 = vunpack.c.h.b16 %v957
    %v4008 = vunpack.c.l.b16 %v958
    %v4009 = vunpack.c.h.b16 %v958
    %v4010 = vunpack.c.l.b16 %v959
    %v4011 = vunpack.c.h.b16 %v959
    %v4012 = vunpack.c.l.b16 %v960
    %v4013 = vunpack.c.h.b16 %v960
    %v4014 = vunpack.c.l.b16 %v961
    %v4015 = vunpack.c.h.b16 %v961
    %v4016 = vunpack.c.l.b16 %v962
    %v4017 = vunpack.c.h.b16 %v962
    %v4018 = vunpack.c.l.b16 %v963
    %v4019 = vunpack.c.h.b16 %v963
    %v4020 = vunpack.c.l.b16 %v964
    %v4021 = vunpack.c.h.b16 %v964
    %v4022 = vunpack.c.l.b16 %v965
    %v4023 = vunpack.c.h.b16 %v965
    %v4024 = vunpack.c.l.b16 %v966
    %v4025 = vunpack.c.h.b16 %v966
    %v4026 = vunpack.c.l.b16 %v967
    %v4027 = vunpack.c.h.b16 %v967
    %v4028 = vunpack.c.l.b16 %v968
    %v4029 = vunpack.c.h.b16 %v968
    %v4030 = vunpack.c.l.b16 %v969
    %v4031 = vunpack.c.h.b16 %v969
    %v4032 = vunpack.c.l.b16 %v970
    %v4033 = vunpack.c.h.b16 %v970
    %v4034 = vunpack.c.l.b16 %v971
    %v4035 = vunpack.c.h.b16 %v971
    %v4036 = vunpack.c.l.b16 %v972
    %v4037 = vunpack.c.h.b16 %v972
    %v4038 = vunpack.c.l.b16 %v973
    %v4039 = vunpack.c.h.b16 %v973
    %v4040 = vunpack.c.l.b16 %v974
    %v4041 = vunpack.c.h.b16 %v974
    %v4042 = vunpack.c.l.b16 %v975
    %v4043 = vunpack.c.h.b16 %v975
    %v4044 = vunpack.c.l.b16 %v976
    %v4045 = vunpack.c.h.b16 %v976
    %v4046 = vunpack.c.l.b16 %v977
    %v4047 = vunpack.c.h.b16 %v977
    %v4048 = vunpack.c.l.b16 %v978
    %v4049 = vunpack.c.h.b16 %v978
    %v4050 = vunpack.c.l.b16 %v979
    %v4051 = vunpack.c.h.b16 %v979
    %v4052 = vunpack.c.l.b16 %v980
    %v4053 = vunpack.c.h.b16 %v980
    %v4054 = vunpack.c.l.b16 %v981
    %v4055 = vunpack.c.h.b16 %v981
    %v4056 = vunpack.c.l.b16 %v982
    %v4057 = vunpack.c.h.b16 %v982
    %v4058 = vunpack.c.l.b16 %v983
    %v4059 = vunpack.c.h.b16 %v983
    %v4060 = vunpack.c.l.b16 %v984
    %v4061 = vunpack.c.h.b16 %v984
    %v4062 = vunpack.c.l.b16 %v985
    %v4063 = vunpack.c.h.b16 %v985
    %v4064 = vunpack.c.l.b16 %v986
    %v4065 = vunpack.c.h.b16 %v986
    %v4066 = vunpack.c.l.b16 %v987
    %v4067 = vunpack.c.h.b16 %v987
    %v4068 = vunpack.c.l.b16 %v988
    %v4069 = vunpack.c.h.b16 %v988
    %v4070 = vunpack.c.l.b16 %v989
    %v4071 = vunpack.c.h.b16 %v989
    %v4072 = vunpack.c.l.b16 %v990
    %v4073 = vunpack.c.h.b16 %v990
    %v4074 = vunpack.c.l.b16 %v991
    %v4075 = vunpack.c.h.b16 %v991
    %v4076 = vunpack.c.l.b16 %v992
    %v4077 = vunpack.c.h.b16 %v992
    %v4078 = vunpack.c.l.b16 %v993
    %v4079 = vunpack.c.h.b16 %v993
    %v4080 = vunpack.c.l.b16 %v994
    %v4081 = vunpack.c.h.b16 %v994
    %v4082 = vunpack.c.l.b16 %v995
    %v4083 = vunpack.c.h.b16 %v995
    %v4084 = vunpack.c.l.b16 %v996
    %v4085 = vunpack.c.h.b16 %v996
    %v4086 = vunpack.c.l.b16 %v997
    %v4087 = vunpack.c.h.b16 %v997
    %v4088 = vunpack.c.l.b16 %v998
    %v4089 = vunpack.c.h.b16 %v998
    %v4090 = vunpack.c.l.b16 %v999
    %v4091 = vunpack.c.h.b16 %v999
    %v4092 = vunpack.c.l.b16 %v1000
    %v4093 = vunpack.c.h.b16 %v1000
    %v4094 = vunpack.c.l.b16 %v1001
    %v4095 = vunpack.c.h.b16 %v1001
    %v4096 = vunpack.c.l.b16 %v1002
    %v4097 = vunpack.c.h.b16 %v1002
    %v4098 = vunpack.c.l.b16 %v1003
    %v4099 = vunpack.c.h.b16 %v1003
    %v4100 = vunpack.c.l.b16 %v1004
    %v4101 = vunpack.c.h.b16 %v1004
    %v4102 = vunpack.c.l.b16 %v1005
    %v4103 = vunpack.c.h.b16 %v1005
    %v4104 = vunpack.c.l.b16 %v1006
    %v4105 = vunpack.c.h.b16 %v1006
    %v4106 = vunpack.c.l.b16 %v1007
    %v4107 = vunpack.c.h.b16 %v1007
    %v4108 = vunpack.c.l.b16 %v1008
    %v4109 = vunpack.c.h.b16 %v1008
    %v4110 = vunpack.c.l.b16 %v1009
    %v4111 = vunpack.c.h.b16 %v1009
    %v4112 = vunpack.c.l.b16 %v1010
    %v4113 = vunpack.c.h.b16 %v1010
    %v4114 = vunpack.c.l.b16 %v1011
    %v4115 = vunpack.c.h.b16 %v1011
    %v4116 = vunpack.c.l.b16 %v1012
    %v4117 = vunpack.c.h.b16 %v1012
    %v4118 = vunpack.c.l.b16 %v1013
    %v4119 = vunpack.c.h.b16 %v1013
    %v4120 = vunpack.c.l.b16 %v1014
    %v4121 = vunpack.c.h.b16 %v1014
    %v4122 = vunpack.c.l.b16 %v1015
    %v4123 = vunpack.c.h.b16 %v1015
    %v4124 = vunpack.c.l.b16 %v1016
    %v4125 = vunpack.c.h.b16 %v1016
    %v4126 = vunpack.c.l.b16 %v1017
    %v4127 = vunpack.c.h.b16 %v1017
    %v4128 = vunpack.c.l.b16 %v1018
    %v4129 = vunpack.c.h.b16 %v1018
    %v4130 = vunpack.c.l.b16 %v1019
    %v4131 = vunpack.c.h.b16 %v1019
    %v4132 = vunpack.c.l.b16 %v1020
    %v4133 = vunpack.c.h.b16 %v1020
    %v4134 = vunpack.c.l.b16 %v1021
    %v4135 = vunpack.c.h.b16 %v1021
    %v4136 = vunpack.c.l.b16 %v1022
    %v4137 = vunpack.c.h.b16 %v1022
    %v4138 = vunpack.c.l.b16 %v1023
    %v4139 = vunpack.c.h.b16 %v1023
    %v4140 = vunpack.c.l.b16 %v1024
    %v4141 = vunpack.c.h.b16 %v1024
    %v4142 = vunpack.c.l.b16 %v1025
    %v4143 = vunpack.c.h.b16 %v1025
    %v4144 = vunpack.c.l.b16 %v1026
    %v4145 = vunpack.c.h.b16 %v1026
    %v4146 = vunpack.c.l.b16 %v1027
    %v4147 = vunpack.c.h.b16 %v1027
    %v4148 = vunpack.c.l.b16 %v1028
    %v4149 = vunpack.c.h.b16 %v1028
    %v4150 = vunpack.c.l.b16 %v1029
    %v4151 = vunpack.c.h.b16 %v1029
    %v4152 = vunpack.c.l.b16 %v1030
    %v4153 = vunpack.c.h.b16 %v1030
    %v4154 = vunpack.c.l.b16 %v1031
    %v4155 = vunpack.c.h.b16 %v1031
    %v4156 = vunpack.c.l.b16 %v1032
    %v4157 = vunpack.c.h.b16 %v1032
    %v4158 = vunpack.c.l.b16 %v1033
    %v4159 = vunpack.c.h.b16 %v1033
    %v4160 = vunpack.c.l.b16 %v1034
    %v4161 = vunpack.c.h.b16 %v1034
    %v4162 = vunpack.c.l.b16 %v1035
    %v4163 = vunpack.c.h.b16 %v1035
    %v4164 = vunpack.c.l.b16 %v1036
    %v4165 = vunpack.c.h.b16 %v1036
    %v4166 = vunpack.c.l.b16 %v1037
    %v4167 = vunpack.c.h.b16 %v1037
    %v4168 = vunpack.c.l.b16 %v1038
    %v4169 = vunpack.c.h.b16 %v1038
    %v4170 = vunpack.c.l.b16 %v1039
    %v4171 = vunpack.c.h.b16 %v1039
    %v4172 = vunpack.c.l.b16 %v1040
    %v4173 = vunpack.c.h.b16 %v1040
    %v4174 = vunpack.c.l.b16 %v1041
    %v4175 = vunpack.c.h.b16 %v1041
    %v4176 = vunpack.c.l.b16 %v1042
    %v4177 = vunpack.c.h.b16 %v1042
    %v4178 = vunpack.c.l.b16 %v1043
    %v4179 = vunpack.c.h.b16 %v1043
    %v4180 = vunpack.c.l.b16 %v1044
    %v4181 = vunpack.c.h.b16 %v1044
    %v4182 = vunpack.c.l.b16 %v1045
    %v4183 = vunpack.c.h.b16 %v1045
    %v4184 = vunpack.c.l.b16 %v1046
    %v4185 = vunpack.c.h.b16 %v1046
    %v4186 = vunpack.c.l.b16 %v1047
    %v4187 = vunpack.c.h.b16 %v1047
    %v4188 = vunpack.c.l.b16 %v1048
    %v4189 = vunpack.c.h.b16 %v1048
    %v4190 = vunpack.c.l.b16 %v1049
    %v4191 = vunpack.c.h.b16 %v1049
    %v4192 = vunpack.c.l.b16 %v1050
    %v4193 = vunpack.c.h.b16 %v1050
    %v4194 = vunpack.c.l.b16 %v1051
    %v4195 = vunpack.c.h.b16 %v1051
    %v4196 = vunpack.c.l.b16 %v1052
    %v4197 = vunpack.c.h.b16 %v1052
    %v4198 = vunpack.c.l.b16 %v1053
    %v4199 = vunpack.c.h.b16 %v1053
    %v4200 = vunpack.c.l.b16 %v1054
    %v4201 = vunpack.c.h.b16 %v1054
    %v4202 = vunpack.c.l.b16 %v1055
    %v4203 = vunpack.c.h.b16 %v1055
    %v4204 = vunpack.c.l.b16 %v1056
    %v4205 = vunpack.c.h.b16 %v1056
    %v4206 = vunpack.c.l.b16 %v1057
    %v4207 = vunpack.c.h.b16 %v1057
    %v4208 = vunpack.c.l.b16 %v1058
    %v4209 = vunpack.c.h.b16 %v1058
    %v4210 = vunpack.c.l.b16 %v1059
    %v4211 = vunpack.c.h.b16 %v1059
    %v4212 = vunpack.c.l.b16 %v1060
    %v4213 = vunpack.c.h.b16 %v1060
    %v4214 = vunpack.c.l.b16 %v1061
    %v4215 = vunpack.c.h.b16 %v1061
    %v4216 = vpack.c.b16 %v2172, %v2168
    %v4217 = vpack.c.b16 %v2173, %v2169
    %v4218 = vpack.c.b16 %v2174, %v2170
    %v4219 = vpack.c.b16 %v2175, %v2171
    %v4220 = vpack.c.b16 %v2180, %v2176
    %v4221 = vpack.c.b16 %v2181, %v2177
    %v4222 = vpack.c.b16 %v2182, %v2178
    %v4223 = vpack.c.b16 %v2183, %v2179
    %v4224 = vpack.c.b16 %v2188, %v2184
    %v4225 = vpack.c.b16 %v2189, %v2185
    %v4226 = vpack.c.b16 %v2190, %v2186
    %v4227 = vpack.c.b16 %v2191, %v2187
    %v4228 = vpack.c.b16 %v2196, %v2192
    %v4229 = vpack.c.b16 %v2197, %v2193
    %v4230 = vpack.c.b16 %v2198, %v2194
    %v4231 = vpack.c.b16 %v2199, %v2195
    %v4232 = vpack.c.b16 %v2204, %v2200
    %v4233 = vpack.c.b16 %v2205, %v2201
    %v4234 = vpack.c.b16 %v2206, %v2202
    %v4235 = vpack.c.b16 %v2207, %v2203
    %v4236 = vpack.c.b16 %v2212, %v2208
    %v4237 = vpack.c.b16 %v2213, %v2209
    %v4238 = vpack.c.b16 %v2214, %v2210
    %v4239 = vpack.c.b16 %v2215, %v2211
    %v4240 = vpack.c.b16 %v2220, %v2216
    %v4241 = vpack.c.b16 %v2221, %v2217
    %v4242 = vpack.c.b16 %v2222, %v2218
    %v4243 = vpack.c.b16 %v2223, %v2219
    %v4244 = vpack.c.b16 %v2228, %v2224
    %v4245 = vpack.c.b16 %v2229, %v2225
    %v4246 = vpack.c.b16 %v2230, %v2226
    %v4247 = vpack.c.b16 %v2231, %v2227
    %v4248 = vpack.c.b16 %v2236, %v2232
    %v4249 = vpack.c.b16 %v2237, %v2233
    %v4250 = vpack.c.b16 %v2238, %v2234
    %v4251 = vpack.c.b16 %v2239, %v2235
    %v4252 = vpack.c.b16 %v2244, %v2240
    %v4253 = vpack.c.b16 %v2245, %v2241
    %v4254 = vpack.c.b16 %v2246, %v2242
    %v4255 = vpack.c.b16 %v2247, %v2243
    %v4256 = vpack.c.b16 %v2252, %v2248
    %v4257 = vpack.c.b16 %v2253, %v2249
    %v4258 = vpack.c.b16 %v2254, %v2250
    %v4259 = vpack.c.b16 %v2255, %v2251
    %v4260 = vpack.c.b16 %v2260, %v2256
    %v4261 = vpack.c.b16 %v2261, %v2257
    %v4262 = vpack.c.b16 %v2262, %v2258
    %v4263 = vpack.c.b16 %v2263, %v2259
    %v4264 = vpack.c.b16 %v2268, %v2264
    %v4265 = vpack.c.b16 %v2269, %v2265
    %v4266 = vpack.c.b16 %v2270, %v2266
    %v4267 = vpack.c.b16 %v2271, %v2267
    %v4268 = vpack.c.b16 %v2276, %v2272
    %v4269 = vpack.c.b16 %v2277, %v2273
    %v4270 = vpack.c.b16 %v2278, %v2274
    %v4271 = vpack.c.b16 %v2279, %v2275
    %v4272 = vpack.c.b16 %v2284, %v2280
    %v4273 = vpack.c.b16 %v2285, %v2281
    %v4274 = vpack.c.b16 %v2286, %v2282
    %v4275 = vpack.c.b16 %v2287, %v2283
    %v4276 = vpack.c.b16 %v2292, %v2288
    %v4277 = vpack.c.b16 %v2293, %v2289
    %v4278 = vpack.c.b16 %v2294, %v2290
    %v4279 = vpack.c.b16 %v2295, %v2291
    %v4280 = vpack.c.b16 %v2300, %v2296
    %v4281 = vpack.c.b16 %v2301, %v2297
    %v4282 = vpack.c.b16 %v2302, %v2298
    %v4283 = vpack.c.b16 %v2303, %v2299
    %v4284 = vpack.c.b16 %v2308, %v2304
    %v4285 = vpack.c.b16 %v2309, %v2305
    %v4286 = vpack.c.b16 %v2310, %v2306
    %v4287 = vpack.c.b16 %v2311, %v2307
    %v4288 = vpack.c.b16 %v2316, %v2312
    %v4289 = vpack.c.b16 %v2317, %v2313
    %v4290 = vpack.c.b16 %v2318, %v2314
    %v4291 = vpack.c.b16 %v2319, %v2315
    %v4292 = vpack.c.b16 %v2324, %v2320
    %v4293 = vpack.c.b16 %v2325, %v2321
    %v4294 = vpack.c.b16 %v2326, %v2322
    %v4295 = vpack.c.b16 %v2327, %v2323
    %v4296 = vpack.c.b16 %v2332, %v2328
    %v4297 = vpack.c.b16 %v2333, %v2329
    %v4298 = vpack.c.b16 %v2334, %v2330
    %v4299 = vpack.c.b16 %v2335, %v2331
    %v4300 = vpack.c.b16 %v2340, %v2336
    %v4301 = vpack.c.b16 %v2341, %v2337
    %v4302 = vpack.c.b16 %v2342, %v2338
    %v4303 = vpack.c.b16 %v2343, %v2339
    %v4304 = vpack.c.b16 %v2348, %v2344
    %v4305 = vpack.c.b16 %v2349, %v2345
    %v4306 = vpack.c.b16 %v2350, %v2346
    %v4307 = vpack.c.b16 %v2351, %v2347
    %v4308 = vpack.c.b16 %v2356, %v2352
    %v4309 = vpack.c.b16 %v2357, %v2353
    %v4310 = vpack.c.b16 %v2358, %v2354
    %v4311 = vpack.c.b16 %v2359, %v2355
    %v4312 = vpack.c.b16 %v2364, %v2360
    %v4313 = vpack.c.b16 %v2365, %v2361
    %v4314 = vpack.c.b16 %v2366, %v2362
    %v4315 = vpack.c.b16 %v2367, %v2363
    %v4316 = vpack.c.b16 %v2372, %v2368
    %v4317 = vpack.c.b16 %v2373, %v2369
    %v4318 = vpack.c.b16 %v2374, %v2370
    %v4319 = vpack.c.b16 %v2375, %v2371
    %v4320 = vpack.c.b16 %v2380, %v2376
    %v4321 = vpack.c.b16 %v2381, %v2377
    %v4322 = vpack.c.b16 %v2382, %v2378
    %v4323 = vpack.c.b16 %v2383, %v2379
    %v4324 = vpack.c.b16 %v2388, %v2384
    %v4325 = vpack.c.b16 %v2389, %v2385
    %v4326 = vpack.c.b16 %v2390, %v2386
    %v4327 = vpack.c.b16 %v2391, %v2387
    %v4328 = vpack.c.b16 %v2396, %v2392
    %v4329 = vpack.c.b16 %v2397, %v2393
    %v4330 = vpack.c.b16 %v2398, %v2394
    %v4331 = vpack.c.b16 %v2399, %v2395
    %v4332 = vpack.c.b16 %v2404, %v2400
    %v4333 = vpack.c.b16 %v2405, %v2401
    %v4334 = vpack.c.b16 %v2406, %v2402
    %v4335 = vpack.c.b16 %v2407, %v2403
    %v4336 = vpack.c.b16 %v2412, %v2408
    %v4337 = vpack.c.b16 %v2413, %v2409
    %v4338 = vpack.c.b16 %v2414, %v2410
    %v4339 = vpack.c.b16 %v2415, %v2411
    %v4340 = vpack.c.b16 %v2420, %v2416
    %v4341 = vpack.c.b16 %v2421, %v2417
    %v4342 = vpack.c.b16 %v2422, %v2418
    %v4343 = vpack.c.b16 %v2423, %v2419
    %v4344 = vpack.c.b16 %v2428, %v2424
    %v4345 = vpack.c.b16 %v2429, %v2425
    %v4346 = vpack.c.b16 %v2430, %v2426
    %v4347 = vpack.c.b16 %v2431, %v2427
    %v4348 = vpack.c.b16 %v2436, %v2432
    %v4349 = vpack.c.b16 %v2437, %v2433
    %v4350 = vpack.c.b16 %v2438, %v2434
    %v4351 = vpack.c.b16 %v2439, %v2435
    %v4352 = vpack.c.b16 %v2444, %v2440
    %v4353 = vpack.c.b16 %v2445, %v2441
    %v4354 = vpack.c.b16 %v2446, %v2442
    %v4355 = vpack.c.b16 %v2447, %v2443
    %v4356 = vpack.c.b16 %v2452, %v2448
    %v4357 = vpack.c.b16 %v2453, %v2449
    %v4358 = vpack.c.b16 %v2454, %v2450
    %v4359 = vpack.c.b16 %v2455, %v2451
    %v4360 = vpack.c.b16 %v2460, %v2456
    %v4361 = vpack.c.b16 %v2461, %v2457
    %v4362 = vpack.c.b16 %v2462, %v2458
    %v4363 = vpack.c.b16 %v2463, %v2459
    %v4364 = vpack.c.b16 %v2468, %v2464
    %v4365 = vpack.c.b16 %v2469, %v2465
    %v4366 = vpack.c.b16 %v2470, %v2466
    %v4367 = vpack.c.b16 %v2471, %v2467
    %v4368 = vpack.c.b16 %v2476, %v2472
    %v4369 = vpack.c.b16 %v2477, %v2473
    %v4370 = vpack.c.b16 %v2478, %v2474
    %v4371 = vpack.c.b16 %v2479, %v2475
    %v4372 = vpack.c.b16 %v2484, %v2480
    %v4373 = vpack.c.b16 %v2485, %v2481
    %v4374 = vpack.c.b16 %v2486, %v2482
    %v4375 = vpack.c.b16 %v2487, %v2483
    %v4376 = vpack.c.b16 %v2492, %v2488
    %v4377 = vpack.c.b16 %v2493, %v2489
    %v4378 = vpack.c.b16 %v2494, %v2490
    %v4379 = vpack.c.b16 %v2495, %v2491
    %v4380 = vpack.c.b16 %v2500, %v2496
    %v4381 = vpack.c.b16 %v2501, %v2497
    %v4382 = vpack.c.b16 %v2502, %v2498
    %v4383 = vpack.c.b16 %v2503, %v2499
    %v4384 = vpack.c.b16 %v2508, %v2504
    %v4385 = vpack.c.b16 %v2509, %v2505
    %v4386 = vpack.c.b16 %v2510, %v2506
    %v4387 = vpack.c.b16 %v2511, %v2507
    %v4388 = vpack.c.b16 %v2516, %v2512
    %v4389 = vpack.c.b16 %v2517, %v2513
    %v4390 = vpack.c.b16 %v2518, %v2514
    %v4391 = vpack.c.b16 %v2519, %v2515
    %v4392 = vpack.c.b16 %v2524, %v2520
    %v4393 = vpack.c.b16 %v2525, %v2521
    %v4394 = vpack.c.b16 %v2526, %v2522
    %v4395 = vpack.c.b16 %v2527, %v2523
    %v4396 = vpack.c.b16 %v2532, %v2528
    %v4397 = vpack.c.b16 %v2533, %v2529
    %v4398 = vpack.c.b16 %v2534, %v2530
    %v4399 = vpack.c.b16 %v2535, %v2531
    %v4400 = vpack.c.b16 %v2540, %v2536
    %v4401 = vpack.c.b16 %v2541, %v2537
    %v4402 = vpack.c.b16 %v2542, %v2538
    %v4403 = vpack.c.b16 %v2543, %v2539
    %v4404 = vpack.c.b16 %v2548, %v2544
    %v4405 = vpack.c.b16 %v2549, %v2545
    %v4406 = vpack.c.b16 %v2550, %v2546
    %v4407 = vpack.c.b16 %v2551, %v2547
    %v4408 = vpack.c.b16 %v2556, %v2552
    %v4409 = vpack.c.b16 %v2557, %v2553
    %v4410 = vpack.c.b16 %v2558, %v2554
    %v4411 = vpack.c.b16 %v2559, %v2555
    %v4412 = vpack.c.b16 %v2564, %v2560
    %v4413 = vpack.c.b16 %v2565, %v2561
    %v4414 = vpack.c.b16 %v2566, %v2562
    %v4415 = vpack.c.b16 %v2567, %v2563
    %v4416 = vpack.c.b16 %v2572, %v2568
    %v4417 = vpack.c.b16 %v2573, %v2569
    %v4418 = vpack.c.b16 %v2574, %v2570
    %v4419 = vpack.c.b16 %v2575, %v2571
    %v4420 = vpack.c.b16 %v2580, %v2576
    %v4421 = vpack.c.b16 %v2581, %v2577
    %v4422 = vpack.c.b16 %v2582, %v2578
    %v4423 = vpack.c.b16 %v2583, %v2579
    %v4424 = vpack.c.b16 %v2588, %v2584
    %v4425 = vpack.c.b16 %v2589, %v2585
    %v4426 = vpack.c.b16 %v2590, %v2586
    %v4427 = vpack.c.b16 %v2591, %v2587
    %v4428 = vpack.c.b16 %v2596, %v2592
    %v4429 = vpack.c.b16 %v2597, %v2593
    %v4430 = vpack.c.b16 %v2598, %v2594
    %v4431 = vpack.c.b16 %v2599, %v2595
    %v4432 = vpack.c.b16 %v2604, %v2600
    %v4433 = vpack.c.b16 %v2605, %v2601
    %v4434 = vpack.c.b16 %v2606, %v2602
    %v4435 = vpack.c.b16 %v2607, %v2603
    %v4436 = vpack.c.b16 %v2612, %v2608
    %v4437 = vpack.c.b16 %v2613, %v2609
    %v4438 = vpack.c.b16 %v2614, %v2610
    %v4439 = vpack.c.b16 %v2615, %v2611
    %v4440 = vpack.c.b16 %v2620, %v2616
    %v4441 = vpack.c.b16 %v2621, %v2617
    %v4442 = vpack.c.b16 %v2622, %v2618
    %v4443 = vpack.c.b16 %v2623, %v2619
    %v4444 = vpack.c.b16 %v2628, %v2624
    %v4445 = vpack.c.b16 %v2629, %v2625
    %v4446 = vpack.c.b16 %v2630, %v2626
    %v4447 = vpack.c.b16 %v2631, %v2627
    %v4448 = vpack.c.b16 %v2636, %v2632
    %v4449 = vpack.c.b16 %v2637, %v2633
    %v4450 = vpack.c.b16 %v2638, %v2634
    %v4451 = vpack.c.b16 %v2639, %v2635
    %v4452 = vpack.c.b16 %v2644, %v2640
    %v4453 = vpack.c.b16 %v2645, %v2641
    %v4454 = vpack.c.b16 %v2646, %v2642
    %v4455 = vpack.c.b16 %v2647, %v2643
    %v4456 = vpack.c.b16 %v2652, %v2648
    %v4457 = vpack.c.b16 %v2653, %v2649
    %v4458 = vpack.c.b16 %v2654, %v2650
    %v4459 = vpack.c.b16 %v2655, %v2651
    %v4460 = vpack.c.b16 %v2660, %v2656
    %v4461 = vpack.c.b16 %v2661, %v2657
    %v4462 = vpack.c.b16 %v2662, %v2658
    %v4463 = vpack.c.b16 %v2663, %v2659
    %v4464 = vpack.c.b16 %v2668, %v2664
    %v4465 = vpack.c.b16 %v2669, %v2665
    %v4466 = vpack.c.b16 %v2670, %v2666
    %v4467 = vpack.c.b16 %v2671, %v2667
    %v4468 = vpack.c.b16 %v2676, %v2672
    %v4469 = vpack.c.b16 %v2677, %v2673
    %v4470 = vpack.c.b16 %v2678, %v2674
    %v4471 = vpack.c.b16 %v2679, %v2675
    %v4472 = vpack.c.b16 %v2684, %v2680
    %v4473 = vpack.c.b16 %v2685, %v2681
    %v4474 = vpack.c.b16 %v2686, %v2682
    %v4475 = vpack.c.b16 %v2687, %v2683
    %v4476 = vpack.c.b16 %v2692, %v2688
    %v4477 = vpack.c.b16 %v2693, %v2689
    %v4478 = vpack.c.b16 %v2694, %v2690
    %v4479 = vpack.c.b16 %v2695, %v2691
    %v4480 = vpack.c.b16 %v2700, %v2696
    %v4481 = vpack.c.b16 %v2701, %v2697
    %v4482 = vpack.c.b16 %v2702, %v2698
    %v4483 = vpack.c.b16 %v2703, %v2699
    %v4484 = vpack.c.b16 %v2708, %v2704
    %v4485 = vpack.c.b16 %v2709, %v2705
    %v4486 = vpack.c.b16 %v2710, %v2706
    %v4487 = vpack.c.b16 %v2711, %v2707
    %v4488 = vpack.c.b16 %v2716, %v2712
    %v4489 = vpack.c.b16 %v2717, %v2713
    %v4490 = vpack.c.b16 %v2718, %v2714
    %v4491 = vpack.c.b16 %v2719, %v2715
    %v4492 = vpack.c.b16 %v2724, %v2720
    %v4493 = vpack.c.b16 %v2725, %v2721
    %v4494 = vpack.c.b16 %v2726, %v2722
    %v4495 = vpack.c.b16 %v2727, %v2723
    %v4496 = vpack.c.b16 %v2732, %v2728
    %v4497 = vpack.c.b16 %v2733, %v2729
    %v4498 = vpack.c.b16 %v2734, %v2730
    %v4499 = vpack.c.b16 %v2735, %v2731
    %v4500 = vpack.c.b16 %v2740, %v2736
    %v4501 = vpack.c.b16 %v2741, %v2737
    %v4502 = vpack.c.b16 %v2742, %v2738
    %v4503 = vpack.c.b16 %v2743, %v2739
    %v4504 = vpack.c.b16 %v2748, %v2744
    %v4505 = vpack.c.b16 %v2749, %v2745
    %v4506 = vpack.c.b16 %v2750, %v2746
    %v4507 = vpack.c.b16 %v2751, %v2747
    %v4508 = vpack.c.b16 %v2756, %v2752
    %v4509 = vpack.c.b16 %v2757, %v2753
    %v4510 = vpack.c.b16 %v2758, %v2754
    %v4511 = vpack.c.b16 %v2759, %v2755
    %v4512 = vpack.c.b16 %v2764, %v2760
    %v4513 = vpack.c.b16 %v2765, %v2761
    %v4514 = vpack.c.b16 %v2766, %v2762
    %v4515 = vpack.c.b16 %v2767, %v2763
    %v4516 = vpack.c.b16 %v2772, %v2768
    %v4517 = vpack.c.b16 %v2773, %v2769
    %v4518 = vpack.c.b16 %v2774, %v2770
    %v4519 = vpack.c.b16 %v2775, %v2771
    %v4520 = vpack.c.b16 %v2780, %v2776
    %v4521 = vpack.c.b16 %v2781, %v2777
    %v4522 = vpack.c.b16 %v2782, %v2778
    %v4523 = vpack.c.b16 %v2783, %v2779
    %v4524 = vpack.c.b16 %v2788, %v2784
    %v4525 = vpack.c.b16 %v2789, %v2785
    %v4526 = vpack.c.b16 %v2790, %v2786
    %v4527 = vpack.c.b16 %v2791, %v2787
    %v4528 = vpack.c.b16 %v2796, %v2792
    %v4529 = vpack.c.b16 %v2797, %v2793
    %v4530 = vpack.c.b16 %v2798, %v2794
    %v4531 = vpack.c.b16 %v2799, %v2795
    %v4532 = vpack.c.b16 %v2804, %v2800
    %v4533 = vpack.c.b16 %v2805, %v2801
    %v4534 = vpack.c.b16 %v2806, %v2802
    %v4535 = vpack.c.b16 %v2807, %v2803
    %v4536 = vpack.c.b16 %v2812, %v2808
    %v4537 = vpack.c.b16 %v2813, %v2809
    %v4538 = vpack.c.b16 %v2814, %v2810
    %v4539 = vpack.c.b16 %v2815, %v2811
    %v4540 = vpack.c.b16 %v2820, %v2816
    %v4541 = vpack.c.b16 %v2821, %v2817
    %v4542 = vpack.c.b16 %v2822, %v2818
    %v4543 = vpack.c.b16 %v2823, %v2819
    %v4544 = vpack.c.b16 %v2828, %v2824
    %v4545 = vpack.c.b16 %v2829, %v2825
    %v4546 = vpack.c.b16 %v2830, %v2826
    %v4547 = vpack.c.b16 %v2831, %v2827
    %v4548 = vpack.c.b16 %v2836, %v2832
    %v4549 = vpack.c.b16 %v2837, %v2833
    %v4550 = vpack.c.b16 %v2838, %v2834
    %v4551 = vpack.c.b16 %v2839, %v2835
    %v4552 = vpack.c.b16 %v2844, %v2840
    %v4553 = vpack.c.b16 %v2845, %v2841
    %v4554 = vpack.c.b16 %v2846, %v2842
    %v4555 = vpack.c.b16 %v2847, %v2843
    %v4556 = vpack.c.b16 %v2852, %v2848
    %v4557 = vpack.c.b16 %v2853, %v2849
    %v4558 = vpack.c.b16 %v2854, %v2850
    %v4559 = vpack.c.b16 %v2855, %v2851
    %v4560 = vpack.c.b16 %v2860, %v2856
    %v4561 = vpack.c.b16 %v2861, %v2857
    %v4562 = vpack.c.b16 %v2862, %v2858
    %v4563 = vpack.c.b16 %v2863, %v2859
    %v4564 = vpack.c.b16 %v2868, %v2864
    %v4565 = vpack.c.b16 %v2869, %v2865
    %v4566 = vpack.c.b16 %v2870, %v2866
    %v4567 = vpack.c.b16 %v2871, %v2867
    %v4568 = vpack.c.b16 %v2876, %v2872
    %v4569 = vpack.c.b16 %v2877, %v2873
    %v4570 = vpack.c.b16 %v2878, %v2874
    %v4571 = vpack.c.b16 %v2879, %v2875
    %v4572 = vpack.c.b16 %v2884, %v2880
    %v4573 = vpack.c.b16 %v2885, %v2881
    %v4574 = vpack.c.b16 %v2886, %v2882
    %v4575 = vpack.c.b16 %v2887, %v2883
    %v4576 = vpack.c.b16 %v2892, %v2888
    %v4577 = vpack.c.b16 %v2893, %v2889
    %v4578 = vpack.c.b16 %v2894, %v2890
    %v4579 = vpack.c.b16 %v2895, %v2891
    %v4580 = vpack.c.b16 %v2900, %v2896
    %v4581 = vpack.c.b16 %v2901, %v2897
    %v4582 = vpack.c.b16 %v2902, %v2898
    %v4583 = vpack.c.b16 %v2903, %v2899
    %v4584 = vpack.c.b16 %v2908, %v2904
    %v4585 = vpack.c.b16 %v2909, %v2905
    %v4586 = vpack.c.b16 %v2910, %v2906
    %v4587 = vpack.c.b16 %v2911, %v2907
    %v4588 = vpack.c.b16 %v2916, %v2912
    %v4589 = vpack.c.b16 %v2917, %v2913
    %v4590 = vpack.c.b16 %v2918, %v2914
    %v4591 = vpack.c.b16 %v2919, %v2915
    %v4592 = vpack.c.b16 %v2924, %v2920
    %v4593 = vpack.c.b16 %v2925, %v2921
    %v4594 = vpack.c.b16 %v2926, %v2922
    %v4595 = vpack.c.b16 %v2927, %v2923
    %v4596 = vpack.c.b16 %v2932, %v2928
    %v4597 = vpack.c.b16 %v2933, %v2929
    %v4598 = vpack.c.b16 %v2934, %v2930
    %v4599 = vpack.c.b16 %v2935, %v2931
    %v4600 = vpack.c.b16 %v2940, %v2936
    %v4601 = vpack.c.b16 %v2941, %v2937
    %v4602 = vpack.c.b16 %v2942, %v2938
    %v4603 = vpack.c.b16 %v2943, %v2939
    %v4604 = vpack.c.b16 %v2948, %v2944
    %v4605 = vpack.c.b16 %v2949, %v2945
    %v4606 = vpack.c.b16 %v2950, %v2946
    %v4607 = vpack.c.b16 %v2951, %v2947
    %v4608 = vpack.c.b16 %v2956, %v2952
    %v4609 = vpack.c.b16 %v2957, %v2953
    %v4610 = vpack.c.b16 %v2958, %v2954
    %v4611 = vpack.c.b16 %v2959, %v2955
    %v4612 = vpack.c.b16 %v2964, %v2960
    %v4613 = vpack.c.b16 %v2965, %v2961
    %v4614 = vpack.c.b16 %v2966, %v2962
    %v4615 = vpack.c.b16 %v2967, %v2963
    %v4616 = vpack.c.b16 %v2972, %v2968
    %v4617 = vpack.c.b16 %v2973, %v2969
    %v4618 = vpack.c.b16 %v2974, %v2970
    %v4619 = vpack.c.b16 %v2975, %v2971
    %v4620 = vpack.c.b16 %v2980, %v2976
    %v4621 = vpack.c.b16 %v2981, %v2977
    %v4622 = vpack.c.b16 %v2982, %v2978
    %v4623 = vpack.c.b16 %v2983, %v2979
    %v4624 = vpack.c.b16 %v2988, %v2984
    %v4625 = vpack.c.b16 %v2989, %v2985
    %v4626 = vpack.c.b16 %v2990, %v2986
    %v4627 = vpack.c.b16 %v2991, %v2987
    %v4628 = vpack.c.b16 %v2996, %v2992
    %v4629 = vpack.c.b16 %v2997, %v2993
    %v4630 = vpack.c.b16 %v2998, %v2994
    %v4631 = vpack.c.b16 %v2999, %v2995
    %v4632 = vpack.c.b16 %v3004, %v3000
    %v4633 = vpack.c.b16 %v3005, %v3001
    %v4634 = vpack.c.b16 %v3006, %v3002
    %v4635 = vpack.c.b16 %v3007, %v3003
    %v4636 = vpack.c.b16 %v3012, %v3008
    %v4637 = vpack.c.b16 %v3013, %v3009
    %v4638 = vpack.c.b16 %v3014, %v3010
    %v4639 = vpack.c.b16 %v3015, %v3011
    %v4640 = vpack.c.b16 %v3020, %v3016
    %v4641 = vpack.c.b16 %v3021, %v3017
    %v4642 = vpack.c.b16 %v3022, %v3018
    %v4643 = vpack.c.b16 %v3023, %v3019
    %v4644 = vpack.c.b16 %v3028, %v3024
    %v4645 = vpack.c.b16 %v3029, %v3025
    %v4646 = vpack.c.b16 %v3030, %v3026
    %v4647 = vpack.c.b16 %v3031, %v3027
    %v4648 = vpack.c.b16 %v3036, %v3032
    %v4649 = vpack.c.b16 %v3037, %v3033
    %v4650 = vpack.c.b16 %v3038, %v3034
    %v4651 = vpack.c.b16 %v3039, %v3035
    %v4652 = vpack.c.b16 %v3044, %v3040
    %v4653 = vpack.c.b16 %v3045, %v3041
    %v4654 = vpack.c.b16 %v3046, %v3042
    %v4655 = vpack.c.b16 %v3047, %v3043
    %v4656 = vpack.c.b16 %v3052, %v3048
    %v4657 = vpack.c.b16 %v3053, %v3049
    %v4658 = vpack.c.b16 %v3054, %v3050
    %v4659 = vpack.c.b16 %v3055, %v3051
    %v4660 = vpack.c.b16 %v3060, %v3056
    %v4661 = vpack.c.b16 %v3061, %v3057
    %v4662 = vpack.c.b16 %v3062, %v3058
    %v4663 = vpack.c.b16 %v3063, %v3059
    %v4664 = vpack.c.b16 %v3068, %v3064
    %v4665 = vpack.c.b16 %v3069, %v3065
    %v4666 = vpack.c.b16 %v3070, %v3066
    %v4667 = vpack.c.b16 %v3071, %v3067
    %v4668 = vpack.c.b16 %v3076, %v3072
    %v4669 = vpack.c.b16 %v3077, %v3073
    %v4670 = vpack.c.b16 %v3078, %v3074
    %v4671 = vpack.c.b16 %v3079, %v3075
    %v4672 = vpack.c.b16 %v3084, %v3080
    %v4673 = vpack.c.b16 %v3085, %v3081
    %v4674 = vpack.c.b16 %v3086, %v3082
    %v4675 = vpack.c.b16 %v3087, %v3083
    %v4676 = vpack.c.b16 %v3092, %v3088
    %v4677 = vpack.c.b16 %v3093, %v3089
    %v4678 = vpack.c.b16 %v3094, %v3090
    %v4679 = vpack.c.b16 %v3095, %v3091
    %v4680 = vpack.c.b16 %v3100, %v3096
    %v4681 = vpack.c.b16 %v3101, %v3097
    %v4682 = vpack.c.b16 %v3102, %v3098
    %v4683 = vpack.c.b16 %v3103, %v3099
    %v4684 = vpack.c.b16 %v3108, %v3104
    %v4685 = vpack.c.b16 %v3109, %v3105
    %v4686 = vpack.c.b16 %v3110, %v3106
    %v4687 = vpack.c.b16 %v3111, %v3107
    %v4688 = vpack.c.b16 %v3116, %v3112
    %v4689 = vpack.c.b16 %v3117, %v3113
    %v4690 = vpack.c.b16 %v3118, %v3114
    %v4691 = vpack.c.b16 %v3119, %v3115
    %v4692 = vpack.c.b16 %v3124, %v3120
    %v4693 = vpack.c.b16 %v3125, %v3121
    %v4694 = vpack.c.b16 %v3126, %v3122
    %v4695 = vpack.c.b16 %v3127, %v3123
    %v4696 = vpack.c.b16 %v3132, %v3128
    %v4697 = vpack.c.b16 %v3133, %v3129
    %v4698 = vpack.c.b16 %v3134, %v3130
    %v4699 = vpack.c.b16 %v3135, %v3131
    %v4700 = vpack.c.b16 %v3140, %v3136
    %v4701 = vpack.c.b16 %v3141, %v3137
    %v4702 = vpack.c.b16 %v3142, %v3138
    %v4703 = vpack.c.b16 %v3143, %v3139
    %v4704 = vpack.c.b16 %v3148, %v3144
    %v4705 = vpack.c.b16 %v3149, %v3145
    %v4706 = vpack.c.b16 %v3150, %v3146
    %v4707 = vpack.c.b16 %v3151, %v3147
    %v4708 = vpack.c.b16 %v3156, %v3152
    %v4709 = vpack.c.b16 %v3157, %v3153
    %v4710 = vpack.c.b16 %v3158, %v3154
    %v4711 = vpack.c.b16 %v3159, %v3155
    %v4712 = vpack.c.b16 %v3164, %v3160
    %v4713 = vpack.c.b16 %v3165, %v3161
    %v4714 = vpack.c.b16 %v3166, %v3162
    %v4715 = vpack.c.b16 %v3167, %v3163
    %v4716 = vpack.c.b16 %v3172, %v3168
    %v4717 = vpack.c.b16 %v3173, %v3169
    %v4718 = vpack.c.b16 %v3174, %v3170
    %v4719 = vpack.c.b16 %v3175, %v3171
    %v4720 = vpack.c.b16 %v3180, %v3176
    %v4721 = vpack.c.b16 %v3181, %v3177
    %v4722 = vpack.c.b16 %v3182, %v3178
    %v4723 = vpack.c.b16 %v3183, %v3179
    %v4724 = vpack.c.b16 %v3188, %v3184
    %v4725 = vpack.c.b16 %v3189, %v3185
    %v4726 = vpack.c.b16 %v3190, %v3186
    %v4727 = vpack.c.b16 %v3191, %v3187
    %v4728 = vpack.c.b16 %v3196, %v3192
    %v4729 = vpack.c.b16 %v3197, %v3193
    %v4730 = vpack.c.b16 %v3198, %v3194
    %v4731 = vpack.c.b16 %v3199, %v3195
    %v4732 = vpack.c.b16 %v3204, %v3200
    %v4733 = vpack.c.b16 %v3205, %v3201
    %v4734 = vpack.c.b16 %v3206, %v3202
    %v4735 = vpack.c.b16 %v3207, %v3203
    %v4736 = vpack.c.b16 %v3212, %v3208
    %v4737 = vpack.c.b16 %v3213, %v3209
    %v4738 = vpack.c.b16 %v3214, %v3210
    %v4739 = vpack.c.b16 %v3215, %v3211
    %v4740 = vpack.c.b16 %v3220, %v3216
    %v4741 = vpack.c.b16 %v3221, %v3217
    %v4742 = vpack.c.b16 %v3222, %v3218
    %v4743 = vpack.c.b16 %v3223, %v3219
    %v4744 = vpack.c.b16 %v3228, %v3224
    %v4745 = vpack.c.b16 %v3229, %v3225
    %v4746 = vpack.c.b16 %v3230, %v3226
    %v4747 = vpack.c.b16 %v3231, %v3227
    %v4748 = vpack.c.b16 %v3236, %v3232
    %v4749 = vpack.c.b16 %v3237, %v3233
    %v4750 = vpack.c.b16 %v3238, %v3234
    %v4751 = vpack.c.b16 %v3239, %v3235
    %v4752 = vpack.c.b16 %v3244, %v3240
    %v4753 = vpack.c.b16 %v3245, %v3241
    %v4754 = vpack.c.b16 %v3246, %v3242
    %v4755 = vpack.c.b16 %v3247, %v3243
    %v4756 = vpack.c.b16 %v3252, %v3248
    %v4757 = vpack.c.b16 %v3253, %v3249
    %v4758 = vpack.c.b16 %v3254, %v3250
    %v4759 = vpack.c.b16 %v3255, %v3251
    %v4760 = vpack.c.b16 %v3260, %v3256
    %v4761 = vpack.c.b16 %v3261, %v3257
    %v4762 = vpack.c.b16 %v3262, %v3258
    %v4763 = vpack.c.b16 %v3263, %v3259
    %v4764 = vpack.c.b16 %v3268, %v3264
    %v4765 = vpack.c.b16 %v3269, %v3265
    %v4766 = vpack.c.b16 %v3270, %v3266
    %v4767 = vpack.c.b16 %v3271, %v3267
    %v4768 = vpack.c.b16 %v3276, %v3272
    %v4769 = vpack.c.b16 %v3277, %v3273
    %v4770 = vpack.c.b16 %v3278, %v3274
    %v4771 = vpack.c.b16 %v3279, %v3275
    %v4772 = vpack.c.b16 %v3284, %v3280
    %v4773 = vpack.c.b16 %v3285, %v3281
    %v4774 = vpack.c.b16 %v3286, %v3282
    %v4775 = vpack.c.b16 %v3287, %v3283
    %v4776 = vpack.c.b16 %v3292, %v3288
    %v4777 = vpack.c.b16 %v3293, %v3289
    %v4778 = vpack.c.b16 %v3294, %v3290
    %v4779 = vpack.c.b16 %v3295, %v3291
    %v4780 = vpack.c.b16 %v3300, %v3296
    %v4781 = vpack.c.b16 %v3301, %v3297
    %v4782 = vpack.c.b16 %v3302, %v3298
    %v4783 = vpack.c.b16 %v3303, %v3299
    %v4784 = vpack.c.b16 %v3308, %v3304
    %v4785 = vpack.c.b16 %v3309, %v3305
    %v4786 = vpack.c.b16 %v3310, %v3306
    %v4787 = vpack.c.b16 %v3311, %v3307
    %v4788 = vpack.c.b16 %v3316, %v3312
    %v4789 = vpack.c.b16 %v3317, %v3313
    %v4790 = vpack.c.b16 %v3318, %v3314
    %v4791 = vpack.c.b16 %v3319, %v3315
    %v4792 = vpack.c.b16 %v3324, %v3320
    %v4793 = vpack.c.b16 %v3325, %v3321
    %v4794 = vpack.c.b16 %v3326, %v3322
    %v4795 = vpack.c.b16 %v3327, %v3323
    %v4796 = vpack.c.b16 %v3332, %v3328
    %v4797 = vpack.c.b16 %v3333, %v3329
    %v4798 = vpack.c.b16 %v3334, %v3330
    %v4799 = vpack.c.b16 %v3335, %v3331
    %v4800 = vpack.c.b16 %v3340, %v3336
    %v4801 = vpack.c.b16 %v3341, %v3337
    %v4802 = vpack.c.b16 %v3342, %v3338
    %v4803 = vpack.c.b16 %v3343, %v3339
    %v4804 = vpack.c.b16 %v3348, %v3344
    %v4805 = vpack.c.b16 %v3349, %v3345
    %v4806 = vpack.c.b16 %v3350, %v3346
    %v4807 = vpack.c.b16 %v3351, %v3347
    %v4808 = vpack.c.b16 %v3356, %v3352
    %v4809 = vpack.c.b16 %v3357, %v3353
    %v4810 = vpack.c.b16 %v3358, %v3354
    %v4811 = vpack.c.b16 %v3359, %v3355
    %v4812 = vpack.c.b16 %v3364, %v3360
    %v4813 = vpack.c.b16 %v3365, %v3361
    %v4814 = vpack.c.b16 %v3366, %v3362
    %v4815 = vpack.c.b16 %v3367, %v3363
    %v4816 = vpack.c.b16 %v3372, %v3368
    %v4817 = vpack.c.b16 %v3373, %v3369
    %v4818 = vpack.c.b16 %v3374, %v3370
    %v4819 = vpack.c.b16 %v3375, %v3371
    %v4820 = vpack.c.b16 %v3380, %v3376
    %v4821 = vpack.c.b16 %v3381, %v3377
    %v4822 = vpack.c.b16 %v3382, %v3378
    %v4823 = vpack.c.b16 %v3383, %v3379
    %v4824 = vpack.c.b16 %v3388, %v3384
    %v4825 = vpack.c.b16 %v3389, %v3385
    %v4826 = vpack.c.b16 %v3390, %v3386
    %v4827 = vpack.c.b16 %v3391, %v3387
    %v4828 = vpack.c.b16 %v3396, %v3392
    %v4829 = vpack.c.b16 %v3397, %v3393
    %v4830 = vpack.c.b16 %v3398, %v3394
    %v4831 = vpack.c.b16 %v3399, %v3395
    %v4832 = vpack.c.b16 %v3404, %v3400
    %v4833 = vpack.c.b16 %v3405, %v3401
    %v4834 = vpack.c.b16 %v3406, %v3402
    %v4835 = vpack.c.b16 %v3407, %v3403
    %v4836 = vpack.c.b16 %v3412, %v3408
    %v4837 = vpack.c.b16 %v3413, %v3409
    %v4838 = vpack.c.b16 %v3414, %v3410
    %v4839 = vpack.c.b16 %v3415, %v3411
    %v4840 = vpack.c.b16 %v3420, %v3416
    %v4841 = vpack.c.b16 %v3421, %v3417
    %v4842 = vpack.c.b16 %v3422, %v3418
    %v4843 = vpack.c.b16 %v3423, %v3419
    %v4844 = vpack.c.b16 %v3428, %v3424
    %v4845 = vpack.c.b16 %v3429, %v3425
    %v4846 = vpack.c.b16 %v3430, %v3426
    %v4847 = vpack.c.b16 %v3431, %v3427
    %v4848 = vpack.c.b16 %v3436, %v3432
    %v4849 = vpack.c.b16 %v3437, %v3433
    %v4850 = vpack.c.b16 %v3438, %v3434
    %v4851 = vpack.c.b16 %v3439, %v3435
    %v4852 = vpack.c.b16 %v3444, %v3440
    %v4853 = vpack.c.b16 %v3445, %v3441
    %v4854 = vpack.c.b16 %v3446, %v3442
    %v4855 = vpack.c.b16 %v3447, %v3443
    %v4856 = vpack.c.b16 %v3452, %v3448
    %v4857 = vpack.c.b16 %v3453, %v3449
    %v4858 = vpack.c.b16 %v3454, %v3450
    %v4859 = vpack.c.b16 %v3455, %v3451
    %v4860 = vpack.c.b16 %v3460, %v3456
    %v4861 = vpack.c.b16 %v3461, %v3457
    %v4862 = vpack.c.b16 %v3462, %v3458
    %v4863 = vpack.c.b16 %v3463, %v3459
    %v4864 = vpack.c.b16 %v3468, %v3464
    %v4865 = vpack.c.b16 %v3469, %v3465
    %v4866 = vpack.c.b16 %v3470, %v3466
    %v4867 = vpack.c.b16 %v3471, %v3467
    %v4868 = vpack.c.b16 %v3476, %v3472
    %v4869 = vpack.c.b16 %v3477, %v3473
    %v4870 = vpack.c.b16 %v3478, %v3474
    %v4871 = vpack.c.b16 %v3479, %v3475
    %v4872 = vpack.c.b16 %v3484, %v3480
    %v4873 = vpack.c.b16 %v3485, %v3481
    %v4874 = vpack.c.b16 %v3486, %v3482
    %v4875 = vpack.c.b16 %v3487, %v3483
    %v4876 = vpack.c.b16 %v3492, %v3488
    %v4877 = vpack.c.b16 %v3493, %v3489
    %v4878 = vpack.c.b16 %v3494, %v3490
    %v4879 = vpack.c.b16 %v3495, %v3491
    %v4880 = vpack.c.b16 %v3500, %v3496
    %v4881 = vpack.c.b16 %v3501, %v3497
    %v4882 = vpack.c.b16 %v3502, %v3498
    %v4883 = vpack.c.b16 %v3503, %v3499
    %v4884 = vpack.c.b16 %v3508, %v3504
    %v4885 = vpack.c.b16 %v3509, %v3505
    %v4886 = vpack.c.b16 %v3510, %v3506
    %v4887 = vpack.c.b16 %v3511, %v3507
    %v4888 = vpack.c.b16 %v3516, %v3512
    %v4889 = vpack.c.b16 %v3517, %v3513
    %v4890 = vpack.c.b16 %v3518, %v3514
    %v4891 = vpack.c.b16 %v3519, %v3515
    %v4892 = vpack.c.b16 %v3524, %v3520
    %v4893 = vpack.c.b16 %v3525, %v3521
    %v4894 = vpack.c.b16 %v3526, %v3522
    %v4895 = vpack.c.b16 %v3527, %v3523
    %v4896 = vpack.c.b16 %v3532, %v3528
    %v4897 = vpack.c.b16 %v3533, %v3529
    %v4898 = vpack.c.b16 %v3534, %v3530
    %v4899 = vpack.c.b16 %v3535, %v3531
    %v4900 = vpack.c.b16 %v3540, %v3536
    %v4901 = vpack.c.b16 %v3541, %v3537
    %v4902 = vpack.c.b16 %v3542, %v3538
    %v4903 = vpack.c.b16 %v3543, %v3539
    %v4904 = vpack.c.b16 %v3548, %v3544
    %v4905 = vpack.c.b16 %v3549, %v3545
    %v4906 = vpack.c.b16 %v3550, %v3546
    %v4907 = vpack.c.b16 %v3551, %v3547
    %v4908 = vpack.c.b16 %v3556, %v3552
    %v4909 = vpack.c.b16 %v3557, %v3553
    %v4910 = vpack.c.b16 %v3558, %v3554
    %v4911 = vpack.c.b16 %v3559, %v3555
    %v4912 = vpack.c.b16 %v3564, %v3560
    %v4913 = vpack.c.b16 %v3565, %v3561
    %v4914 = vpack.c.b16 %v3566, %v3562
    %v4915 = vpack.c.b16 %v3567, %v3563
    %v4916 = vpack.c.b16 %v3572, %v3568
    %v4917 = vpack.c.b16 %v3573, %v3569
    %v4918 = vpack.c.b16 %v3574, %v3570
    %v4919 = vpack.c.b16 %v3575, %v3571
    %v4920 = vpack.c.b16 %v3580, %v3576
    %v4921 = vpack.c.b16 %v3581, %v3577
    %v4922 = vpack.c.b16 %v3582, %v3578
    %v4923 = vpack.c.b16 %v3583, %v3579
    %v4924 = vpack.c.b16 %v3588, %v3584
    %v4925 = vpack.c.b16 %v3589, %v3585
    %v4926 = vpack.c.b16 %v3590, %v3586
    %v4927 = vpack.c.b16 %v3591, %v3587
    %v4928 = vpack.c.b16 %v3596, %v3592
    %v4929 = vpack.c.b16 %v3597, %v3593
    %v4930 = vpack.c.b16 %v3598, %v3594
    %v4931 = vpack.c.b16 %v3599, %v3595
    %v4932 = vpack.c.b16 %v3604, %v3600
    %v4933 = vpack.c.b16 %v3605, %v3601
    %v4934 = vpack.c.b16 %v3606, %v3602
    %v4935 = vpack.c.b16 %v3607, %v3603
    %v4936 = vpack.c.b16 %v3612, %v3608
    %v4937 = vpack.c.b16 %v3613, %v3609
    %v4938 = vpack.c.b16 %v3614, %v3610
    %v4939 = vpack.c.b16 %v3615, %v3611
    %v4940 = vpack.c.b16 %v3620, %v3616
    %v4941 = vpack.c.b16 %v3621, %v3617
    %v4942 = vpack.c.b16 %v3622, %v3618
    %v4943 = vpack.c.b16 %v3623, %v3619
    %v4944 = vpack.c.b16 %v3628, %v3624
    %v4945 = vpack.c.b16 %v3629, %v3625
    %v4946 = vpack.c.b16 %v3630, %v3626
    %v4947 = vpack.c.b16 %v3631, %v3627
    %v4948 = vpack.c.b16 %v3636, %v3632
    %v4949 = vpack.c.b16 %v3637, %v3633
    %v4950 = vpack.c.b16 %v3638, %v3634
    %v4951 = vpack.c.b16 %v3639, %v3635
    %v4952 = vpack.c.b16 %v3644, %v3640
    %v4953 = vpack.c.b16 %v3645, %v3641
    %v4954 = vpack.c.b16 %v3646, %v3642
    %v4955 = vpack.c.b16 %v3647, %v3643
    %v4956 = vpack.c.b16 %v3652, %v3648
    %v4957 = vpack.c.b16 %v3653, %v3649
    %v4958 = vpack.c.b16 %v3654, %v3650
    %v4959 = vpack.c.b16 %v3655, %v3651
    %v4960 = vpack.c.b16 %v3660, %v3656
    %v4961 = vpack.c.b16 %v3661, %v3657
    %v4962 = vpack.c.b16 %v3662, %v3658
    %v4963 = vpack.c.b16 %v3663, %v3659
    %v4964 = vpack.c.b16 %v3668, %v3664
    %v4965 = vpack.c.b16 %v3669, %v3665
    %v4966 = vpack.c.b16 %v3670, %v3666
    %v4967 = vpack.c.b16 %v3671, %v3667
    %v4968 = vpack.c.b16 %v3676, %v3672
    %v4969 = vpack.c.b16 %v3677, %v3673
    %v4970 = vpack.c.b16 %v3678, %v3674
    %v4971 = vpack.c.b16 %v3679, %v3675
    %v4972 = vpack.c.b16 %v3684, %v3680
    %v4973 = vpack.c.b16 %v3685, %v3681
    %v4974 = vpack.c.b16 %v3686, %v3682
    %v4975 = vpack.c.b16 %v3687, %v3683
    %v4976 = vpack.c.b16 %v3692, %v3688
    %v4977 = vpack.c.b16 %v3693, %v3689
    %v4978 = vpack.c.b16 %v3694, %v3690
    %v4979 = vpack.c.b16 %v3695, %v3691
    %v4980 = vpack.c.b16 %v3700, %v3696
    %v4981 = vpack.c.b16 %v3701, %v3697
    %v4982 = vpack.c.b16 %v3702, %v3698
    %v4983 = vpack.c.b16 %v3703, %v3699
    %v4984 = vpack.c.b16 %v3708, %v3704
    %v4985 = vpack.c.b16 %v3709, %v3705
    %v4986 = vpack.c.b16 %v3710, %v3706
    %v4987 = vpack.c.b16 %v3711, %v3707
    %v4988 = vpack.c.b16 %v3716, %v3712
    %v4989 = vpack.c.b16 %v3717, %v3713
    %v4990 = vpack.c.b16 %v3718, %v3714
    %v4991 = vpack.c.b16 %v3719, %v3715
    %v4992 = vpack.c.b16 %v3724, %v3720
    %v4993 = vpack.c.b16 %v3725, %v3721
    %v4994 = vpack.c.b16 %v3726, %v3722
    %v4995 = vpack.c.b16 %v3727, %v3723
    %v4996 = vpack.c.b16 %v3732, %v3728
    %v4997 = vpack.c.b16 %v3733, %v3729
    %v4998 = vpack.c.b16 %v3734, %v3730
    %v4999 = vpack.c.b16 %v3735, %v3731
    %v5000 = vpack.c.b16 %v3740, %v3736
    %v5001 = vpack.c.b16 %v3741, %v3737
    %v5002 = vpack.c.b16 %v3742, %v3738
    %v5003 = vpack.c.b16 %v3743, %v3739
    %v5004 = vpack.c.b16 %v3748, %v3744
    %v5005 = vpack.c.b16 %v3749, %v3745
    %v5006 = vpack.c.b16 %v3750, %v3746
    %v5007 = vpack.c.b16 %v3751, %v3747
    %v5008 = vpack.c.b16 %v3756, %v3752
    %v5009 = vpack.c.b16 %v3757, %v3753
    %v5010 = vpack.c.b16 %v3758, %v3754
    %v5011 = vpack.c.b16 %v3759, %v3755
    %v5012 = vpack.c.b16 %v3764, %v3760
    %v5013 = vpack.c.b16 %v3765, %v3761
    %v5014 = vpack.c.b16 %v3766, %v3762
    %v5015 = vpack.c.b16 %v3767, %v3763
    %v5016 = vpack.c.b16 %v3772, %v3768
    %v5017 = vpack.c.b16 %v3773, %v3769
    %v5018 = vpack.c.b16 %v3774, %v3770
    %v5019 = vpack.c.b16 %v3775, %v3771
    %v5020 = vpack.c.b16 %v3780, %v3776
    %v5021 = vpack.c.b16 %v3781, %v3777
    %v5022 = vpack.c.b16 %v3782, %v3778
    %v5023 = vpack.c.b16 %v3783, %v3779
    %v5024 = vpack.c.b16 %v3788, %v3784
    %v5025 = vpack.c.b16 %v3789, %v3785
    %v5026 = vpack.c.b16 %v3790, %v3786
    %v5027 = vpack.c.b16 %v3791, %v3787
    %v5028 = vpack.c.b16 %v3796, %v3792
    %v5029 = vpack.c.b16 %v3797, %v3793
    %v5030 = vpack.c.b16 %v3798, %v3794
    %v5031 = vpack.c.b16 %v3799, %v3795
    %v5032 = vpack.c.b16 %v3804, %v3800
    %v5033 = vpack.c.b16 %v3805, %v3801
    %v5034 = vpack.c.b16 %v3806, %v3802
    %v5035 = vpack.c.b16 %v3807, %v3803
    %v5036 = vpack.c.b16 %v3812, %v3808
    %v5037 = vpack.c.b16 %v3813, %v3809
    %v5038 = vpack.c.b16 %v3814, %v3810
    %v5039 = vpack.c.b16 %v3815, %v3811
    %v5040 = vpack.c.b16 %v3820, %v3816
    %v5041 = vpack.c.b16 %v3821, %v3817
    %v5042 = vpack.c.b16 %v3822, %v3818
    %v5043 = vpack.c.b16 %v3823, %v3819
    %v5044 = vpack.c.b16 %v3828, %v3824
    %v5045 = vpack.c.b16 %v3829, %v3825
    %v5046 = vpack.c.b16 %v3830, %v3826
    %v5047 = vpack.c.b16 %v3831, %v3827
    %v5048 = vpack.c.b16 %v3836, %v3832
    %v5049 = vpack.c.b16 %v3837, %v3833
    %v5050 = vpack.c.b16 %v3838, %v3834
    %v5051 = vpack.c.b16 %v3839, %v3835
    %v5052 = vpack.c.b16 %v3844, %v3840
    %v5053 = vpack.c.b16 %v3845, %v3841
    %v5054 = vpack.c.b16 %v3846, %v3842
    %v5055 = vpack.c.b16 %v3847, %v3843
    %v5056 = vpack.c.b16 %v3852, %v3848
    %v5057 = vpack.c.b16 %v3853, %v3849
    %v5058 = vpack.c.b16 %v3854, %v3850
    %v5059 = vpack.c.b16 %v3855, %v3851
    %v5060 = vpack.c.b16 %v3860, %v3856
    %v5061 = vpack.c.b16 %v3861, %v3857
    %v5062 = vpack.c.b16 %v3862, %v3858
    %v5063 = vpack.c.b16 %v3863, %v3859
    %v5064 = vpack.c.b16 %v3868, %v3864
    %v5065 = vpack.c.b16 %v3869, %v3865
    %v5066 = vpack.c.b16 %v3870, %v3866
    %v5067 = vpack.c.b16 %v3871, %v3867
    %v5068 = vpack.c.b16 %v3876, %v3872
    %v5069 = vpack.c.b16 %v3877, %v3873
    %v5070 = vpack.c.b16 %v3878, %v3874
    %v5071 = vpack.c.b16 %v3879, %v3875
    %v5072 = vpack.c.b16 %v3884, %v3880
    %v5073 = vpack.c.b16 %v3885, %v3881
    %v5074 = vpack.c.b16 %v3886, %v3882
    %v5075 = vpack.c.b16 %v3887, %v3883
    %v5076 = vpack.c.b16 %v3892, %v3888
    %v5077 = vpack.c.b16 %v3893, %v3889
    %v5078 = vpack.c.b16 %v3894, %v3890
    %v5079 = vpack.c.b16 %v3895, %v3891
    %v5080 = vpack.c.b16 %v3900, %v3896
    %v5081 = vpack.c.b16 %v3901, %v3897
    %v5082 = vpack.c.b16 %v3902, %v3898
    %v5083 = vpack.c.b16 %v3903, %v3899
    %v5084 = vpack.c.b16 %v3908, %v3904
    %v5085 = vpack.c.b16 %v3909, %v3905
    %v5086 = vpack.c.b16 %v3910, %v3906
    %v5087 = vpack.c.b16 %v3911, %v3907
    %v5088 = vpack.c.b16 %v3916, %v3912
    %v5089 = vpack.c.b16 %v3917, %v3913
    %v5090 = vpack.c.b16 %v3918, %v3914
    %v5091 = vpack.c.b16 %v3919, %v3915
    %v5092 = vpack.c.b16 %v3924, %v3920
    %v5093 = vpack.c.b16 %v3925, %v3921
    %v5094 = vpack.c.b16 %v3926, %v3922
    %v5095 = vpack.c.b16 %v3927, %v3923
    %v5096 = vpack.c.b16 %v3932, %v3928
    %v5097 = vpack.c.b16 %v3933, %v3929
    %v5098 = vpack.c.b16 %v3934, %v3930
    %v5099 = vpack.c.b16 %v3935, %v3931
    %v5100 = vpack.c.b16 %v3940, %v3936
    %v5101 = vpack.c.b16 %v3941, %v3937
    %v5102 = vpack.c.b16 %v3942, %v3938
    %v5103 = vpack.c.b16 %v3943, %v3939
    %v5104 = vpack.c.b16 %v3948, %v3944
    %v5105 = vpack.c.b16 %v3949, %v3945
    %v5106 = vpack.c.b16 %v3950, %v3946
    %v5107 = vpack.c.b16 %v3951, %v3947
    %v5108 = vpack.c.b16 %v3956, %v3952
    %v5109 = vpack.c.b16 %v3957, %v3953
    %v5110 = vpack.c.b16 %v3958, %v3954
    %v5111 = vpack.c.b16 %v3959, %v3955
    %v5112 = vpack.c.b16 %v3964, %v3960
    %v5113 = vpack.c.b16 %v3965, %v3961
    %v5114 = vpack.c.b16 %v3966, %v3962
    %v5115 = vpack.c.b16 %v3967, %v3963
    %v5116 = vpack.c.b16 %v3972, %v3968
    %v5117 = vpack.c.b16 %v3973, %v3969
    %v5118 = vpack.c.b16 %v3974, %v3970
    %v5119 = vpack.c.b16 %v3975, %v3971
    %v5120 = vpack.c.b16 %v3980, %v3976
    %v5121 = vpack.c.b16 %v3981, %v3977
    %v5122 = vpack.c.b16 %v3982, %v3978
    %v5123 = vpack.c.b16 %v3983, %v3979
    %v5124 = vpack.c.b16 %v3988, %v3984
    %v5125 = vpack.c.b16 %v3989, %v3985
    %v5126 = vpack.c.b16 %v3990, %v3986
    %v5127 = vpack.c.b16 %v3991, %v3987
    %v5128 = vpack.c.b16 %v3996, %v3992
    %v5129 = vpack.c.b16 %v3997, %v3993
    %v5130 = vpack.c.b16 %v3998, %v3994
    %v5131 = vpack.c.b16 %v3999, %v3995
    %v5132 = vpack.c.b16 %v4004, %v4000
    %v5133 = vpack.c.b16 %v4005, %v4001
    %v5134 = vpack.c.b16 %v4006, %v4002
    %v5135 = vpack.c.b16 %v4007, %v4003
    %v5136 = vpack.c.b16 %v4012, %v4008
    %v5137 = vpack.c.b16 %v4013, %v4009
    %v5138 = vpack.c.b16 %v4014, %v4010
    %v5139 = vpack.c.b16 %v4015, %v4011
    %v5140 = vpack.c.b16 %v4020, %v4016
    %v5141 = vpack.c.b16 %v4021, %v4017
    %v5142 = vpack.c.b16 %v4022, %v4018
    %v5143 = vpack.c.b16 %v4023, %v4019
    %v5144 = vpack.c.b16 %v4028, %v4024
    %v5145 = vpack.c.b16 %v4029, %v4025
    %v5146 = vpack.c.b16 %v4030, %v4026
    %v5147 = vpack.c.b16 %v4031, %v4027
    %v5148 = vpack.c.b16 %v4036, %v4032
    %v5149 = vpack.c.b16 %v4037, %v4033
    %v5150 = vpack.c.b16 %v4038, %v4034
    %v5151 = vpack.c.b16 %v4039, %v4035
    %v5152 = vpack.c.b16 %v4044, %v4040
    %v5153 = vpack.c.b16 %v4045, %v4041
    %v5154 = vpack.c.b16 %v4046, %v4042
    %v5155 = vpack.c.b16 %v4047, %v4043
    %v5156 = vpack.c.b16 %v4052, %v4048
    %v5157 = vpack.c.b16 %v4053, %v4049
    %v5158 = vpack.c.b16 %v4054, %v4050
    %v5159 = vpack.c.b16 %v4055, %v4051
    %v5160 = vpack.c.b16 %v4060, %v4056
    %v5161 = vpack.c.b16 %v4061, %v4057
    %v5162 = vpack.c.b16 %v4062, %v4058
    %v5163 = vpack.c.b16 %v4063, %v4059
    %v5164 = vpack.c.b16 %v4068, %v4064
    %v5165 = vpack.c.b16 %v4069, %v4065
    %v5166 = vpack.c.b16 %v4070, %v4066
    %v5167 = vpack.c.b16 %v4071, %v4067
    %v5168 = vpack.c.b16 %v4076, %v4072
    %v5169 = vpack.c.b16 %v4077, %v4073
    %v5170 = vpack.c.b16 %v4078, %v4074
    %v5171 = vpack.c.b16 %v4079, %v4075
    %v5172 = vpack.c.b16 %v4084, %v4080
    %v5173 = vpack.c.b16 %v4085, %v4081
    %v5174 = vpack.c.b16 %v4086, %v4082
    %v5175 = vpack.c.b16 %v4087, %v4083
    %v5176 = vpack.c.b16 %v4092, %v4088
    %v5177 = vpack.c.b16 %v4093, %v4089
    %v5178 = vpack.c.b16 %v4094, %v4090
    %v5179 = vpack.c.b16 %v4095, %v4091
    %v5180 = vpack.c.b16 %v4100, %v4096
    %v5181 = vpack.c.b16 %v4101, %v4097
    %v5182 = vpack.c.b16 %v4102, %v4098
    %v5183 = vpack.c.b16 %v4103, %v4099
    %v5184 = vpack.c.b16 %v4108, %v4104
    %v5185 = vpack.c.b16 %v4109, %v4105
    %v5186 = vpack.c.b16 %v4110, %v4106
    %v5187 = vpack.c.b16 %v4111, %v4107
    %v5188 = vpack.c.b16 %v4116, %v4112
    %v5189 = vpack.c.b16 %v4117, %v4113
    %v5190 = vpack.c.b16 %v4118, %v4114
    %v5191 = vpack.c.b16 %v4119, %v4115
    %v5192 = vpack.c.b16 %v4124, %v4120
    %v5193 = vpack.c.b16 %v4125, %v4121
    %v5194 = vpack.c.b16 %v4126, %v4122
    %v5195 = vpack.c.b16 %v4127, %v4123
    %v5196 = vpack.c.b16 %v4132, %v4128
    %v5197 = vpack.c.b16 %v4133, %v4129
    %v5198 = vpack.c.b16 %v4134, %v4130
    %v5199 = vpack.c.b16 %v4135, %v4131
    %v5200 = vpack.c.b16 %v4140, %v4136
    %v5201 = vpack.c.b16 %v4141, %v4137
    %v5202 = vpack.c.b16 %v4142, %v4138
    %v5203 = vpack.c.b16 %v4143, %v4139
    %v5204 = vpack.c.b16 %v4148, %v4144
    %v5205 = vpack.c.b16 %v4149, %v4145
    %v5206 = vpack.c.b16 %v4150, %v4146
    %v5207 = vpack.c.b16 %v4151, %v4147
    %v5208 = vpack.c.b16 %v4156, %v4152
    %v5209 = vpack.c.b16 %v4157, %v4153
    %v5210 = vpack.c.b16 %v4158, %v4154
    %v5211 = vpack.c.b16 %v4159, %v4155
    %v5212 = vpack.c.b16 %v4164, %v4160
    %v5213 = vpack.c.b16 %v4165, %v4161
    %v5214 = vpack.c.b16 %v4166, %v4162
    %v5215 = vpack.c.b16 %v4167, %v4163
    %v5216 = vpack.c.b16 %v4172, %v4168
    %v5217 = vpack.c.b16 %v4173, %v4169
    %v5218 = vpack.c.b16 %v4174, %v4170
    %v5219 = vpack.c.b16 %v4175, %v4171
    %v5220 = vpack.c.b16 %v4180, %v4176
    %v5221 = vpack.c.b16 %v4181, %v4177
    %v5222 = vpack.c.b16 %v4182, %v4178
    %v5223 = vpack.c.b16 %v4183, %v4179
    %v5224 = vpack.c.b16 %v4188, %v4184
    %v5225 = vpack.c.b16 %v4189, %v4185
    %v5226 = vpack.c.b16 %v4190, %v4186
    %v5227 = vpack.c.b16 %v4191, %v4187
    %v5228 = vpack.c.b16 %v4196, %v4192
    %v5229 = vpack.c.b16 %v4197, %v4193
    %v5230 = vpack.c.b16 %v4198, %v4194
    %v5231 = vpack.c.b16 %v4199, %v4195
    %v5232 = vpack.c.b16 %v4204, %v4200
    %v5233 = vpack.c.b16 %v4205, %v4201
    %v5234 = vpack.c.b16 %v4206, %v4202
    %v5235 = vpack.c.b16 %v4207, %v4203
    %v5236 = vpack.c.b16 %v4212, %v4208
    %v5237 = vpack.c.b16 %v4213, %v4209
    %v5238 = vpack.c.b16 %v4214, %v4210
    %v5239 = vpack.c.b16 %v4215, %v4211
    %6264 = vmatpush.bf16.msra.mxu0 %v4244
    %6265 = vmatpush.bf16.msra.mxu0 %v4240
    %6266 = vmatpush.bf16.msra.mxu0 %v4236
    %6267 = vmatpush.bf16.msra.mxu0 %v4232
    %6268 = vmatpush.bf16.msra.mxu0 %v4228
    %6269 = vmatpush.bf16.msra.mxu0 %v4224
    %6270 = vmatpush.bf16.msra.mxu0 %v4220
    %6271 = vmatpush.bf16.msra.mxu0 %v4216
    %6272 = vmatmul.bf16.gmra.mxu0 %v1074
    %v6273 = vpop.f32.mrf.mxu0
    %v6274 = vadd.f32 %v1064, %v6273
    %v6275 = vpop.f32.mrf.mxu0
    %6276 = vdwg.mxu0
    %6277 = vmatpush.bf16.msra.mxu0 %v4276
    %6278 = vmatpush.bf16.msra.mxu0 %v4272
    %6279 = vmatpush.bf16.msra.mxu0 %v4268
    %6280 = vmatpush.bf16.msra.mxu0 %v4264
    %6281 = vmatpush.bf16.msra.mxu0 %v4260
    %6282 = vmatpush.bf16.msra.mxu0 %v4256
    %6283 = vmatpush.bf16.msra.mxu0 %v4252
    %6284 = vmatpush.bf16.msra.mxu0 %v4248
    %6285 = vmatmul.bf16.gmra.mxu0 %v1075
    %v6286 = vpop.f32.mrf.mxu0
    %v6287 = vadd.f32 %v6274, %v6286
    %v6288 = vpop.f32.mrf.mxu0
    %6289 = vdwg.mxu0
    %6290 = vmatpush.bf16.msra.mxu0 %v4308
    %6291 = vmatpush.bf16.msra.mxu0 %v4304
    %6292 = vmatpush.bf16.msra.mxu0 %v4300
    %6293 = vmatpush.bf16.msra.mxu0 %v4296
    %6294 = vmatpush.bf16.msra.mxu0 %v4292
    %6295 = vmatpush.bf16.msra.mxu0 %v4288
    %6296 = vmatpush.bf16.msra.mxu0 %v4284
    %6297 = vmatpush.bf16.msra.mxu0 %v4280
    %6298 = vmatmul.bf16.gmra.mxu0 %v1076
    %v6299 = vpop.f32.mrf.mxu0
    %v6300 = vadd.f32 %v6287, %v6299
    %v6301 = vpop.f32.mrf.mxu0
    %6302 = vdwg.mxu0
    %6303 = vmatpush.bf16.msra.mxu0 %v4340
    %6304 = vmatpush.bf16.msra.mxu0 %v4336
    %6305 = vmatpush.bf16.msra.mxu0 %v4332
    %6306 = vmatpush.bf16.msra.mxu0 %v4328
    %6307 = vmatpush.bf16.msra.mxu0 %v4324
    %6308 = vmatpush.bf16.msra.mxu0 %v4320
    %6309 = vmatpush.bf16.msra.mxu0 %v4316
    %6310 = vmatpush.bf16.msra.mxu0 %v4312
    %6311 = vmatmul.bf16.gmra.mxu0 %v1077
    %v6312 = vpop.f32.mrf.mxu0
    %v6313 = vadd.f32 %v6300, %v6312
    %v6314 = vpop.f32.mrf.mxu0
    %6315 = vdwg.mxu0
    %6316 = vmatpush.bf16.msra.mxu0 %v4372
    %6317 = vmatpush.bf16.msra.mxu0 %v4368
    %6318 = vmatpush.bf16.msra.mxu0 %v4364
    %6319 = vmatpush.bf16.msra.mxu0 %v4360
    %6320 = vmatpush.bf16.msra.mxu0 %v4356
    %6321 = vmatpush.bf16.msra.mxu0 %v4352
    %6322 = vmatpush.bf16.msra.mxu0 %v4348
    %6323 = vmatpush.bf16.msra.mxu0 %v4344
    %6324 = vmatmul.bf16.gmra.mxu0 %v1078
    %v6325 = vpop.f32.mrf.mxu0
    %v6326 = vadd.f32 %v6313, %v6325
    %v6327 = vpop.f32.mrf.mxu0
    %6328 = vdwg.mxu0
    %6329 = vmatpush.bf16.msra.mxu0 %v4404
    %6330 = vmatpush.bf16.msra.mxu0 %v4400
    %6331 = vmatpush.bf16.msra.mxu0 %v4396
    %6332 = vmatpush.bf16.msra.mxu0 %v4392
    %6333 = vmatpush.bf16.msra.mxu0 %v4388
    %6334 = vmatpush.bf16.msra.mxu0 %v4384
    %6335 = vmatpush.bf16.msra.mxu0 %v4380
    %6336 = vmatpush.bf16.msra.mxu0 %v4376
    %6337 = vmatmul.bf16.gmra.mxu0 %v1079
    %v6338 = vpop.f32.mrf.mxu0
    %v6339 = vadd.f32 %v6326, %v6338
    %v6340 = vpop.f32.mrf.mxu0
    %6341 = vdwg.mxu0
    %6342 = vmatpush.bf16.msra.mxu0 %v4436
    %6343 = vmatpush.bf16.msra.mxu0 %v4432
    %6344 = vmatpush.bf16.msra.mxu0 %v4428
    %6345 = vmatpush.bf16.msra.mxu0 %v4424
    %6346 = vmatpush.bf16.msra.mxu0 %v4420
    %6347 = vmatpush.bf16.msra.mxu0 %v4416
    %6348 = vmatpush.bf16.msra.mxu0 %v4412
    %6349 = vmatpush.bf16.msra.mxu0 %v4408
    %6350 = vmatmul.bf16.gmra.mxu0 %v1080
    %v6351 = vpop.f32.mrf.mxu0
    %v6352 = vadd.f32 %v6339, %v6351
    %v6353 = vpop.f32.mrf.mxu0
    %6354 = vdwg.mxu0
    %6355 = vmatpush.bf16.msra.mxu0 %v4468
    %6356 = vmatpush.bf16.msra.mxu0 %v4464
    %6357 = vmatpush.bf16.msra.mxu0 %v4460
    %6358 = vmatpush.bf16.msra.mxu0 %v4456
    %6359 = vmatpush.bf16.msra.mxu0 %v4452
    %6360 = vmatpush.bf16.msra.mxu0 %v4448
    %6361 = vmatpush.bf16.msra.mxu0 %v4444
    %6362 = vmatpush.bf16.msra.mxu0 %v4440
    %6363 = vmatmul.bf16.gmra.mxu0 %v1081
    %v6364 = vpop.f32.mrf.mxu0
    %v6365 = vadd.f32 %v6352, %v6364
    %v6366 = vpop.f32.mrf.mxu0
    %6367 = vdwg.mxu0
    %6368 = vmatpush.bf16.msra.mxu0 %v4500
    %6369 = vmatpush.bf16.msra.mxu0 %v4496
    %6370 = vmatpush.bf16.msra.mxu0 %v4492
    %6371 = vmatpush.bf16.msra.mxu0 %v4488
    %6372 = vmatpush.bf16.msra.mxu0 %v4484
    %6373 = vmatpush.bf16.msra.mxu0 %v4480
    %6374 = vmatpush.bf16.msra.mxu0 %v4476
    %6375 = vmatpush.bf16.msra.mxu0 %v4472
    %6376 = vmatmul.bf16.gmra.mxu0 %v1084
    %v6377 = vpop.f32.mrf.mxu0
    %v6378 = vadd.f32 %v6365, %v6377
    %v6379 = vpop.f32.mrf.mxu0
    %6380 = vdwg.mxu0
    %6381 = vmatpush.bf16.msra.mxu0 %v4532
    %6382 = vmatpush.bf16.msra.mxu0 %v4528
    %6383 = vmatpush.bf16.msra.mxu0 %v4524
    %6384 = vmatpush.bf16.msra.mxu0 %v4520
    %6385 = vmatpush.bf16.msra.mxu0 %v4516
    %6386 = vmatpush.bf16.msra.mxu0 %v4512
    %6387 = vmatpush.bf16.msra.mxu0 %v4508
    %6388 = vmatpush.bf16.msra.mxu0 %v4504
    %6389 = vmatmul.bf16.gmra.mxu0 %v1085
    %v6390 = vpop.f32.mrf.mxu0
    %v6391 = vadd.f32 %v6378, %v6390
    %v6392 = vpop.f32.mrf.mxu0
    %6393 = vdwg.mxu0
    %6394 = vmatpush.bf16.msra.mxu0 %v4564
    %6395 = vmatpush.bf16.msra.mxu0 %v4560
    %6396 = vmatpush.bf16.msra.mxu0 %v4556
    %6397 = vmatpush.bf16.msra.mxu0 %v4552
    %6398 = vmatpush.bf16.msra.mxu0 %v4548
    %6399 = vmatpush.bf16.msra.mxu0 %v4544
    %6400 = vmatpush.bf16.msra.mxu0 %v4540
    %6401 = vmatpush.bf16.msra.mxu0 %v4536
    %6402 = vmatmul.bf16.gmra.mxu0 %v1086
    %v6403 = vpop.f32.mrf.mxu0
    %v6404 = vadd.f32 %v6391, %v6403
    %v6405 = vpop.f32.mrf.mxu0
    %6406 = vdwg.mxu0
    %6407 = vmatpush.bf16.msra.mxu0 %v4596
    %6408 = vmatpush.bf16.msra.mxu0 %v4592
    %6409 = vmatpush.bf16.msra.mxu0 %v4588
    %6410 = vmatpush.bf16.msra.mxu0 %v4584
    %6411 = vmatpush.bf16.msra.mxu0 %v4580
    %6412 = vmatpush.bf16.msra.mxu0 %v4576
    %6413 = vmatpush.bf16.msra.mxu0 %v4572
    %6414 = vmatpush.bf16.msra.mxu0 %v4568
    %6415 = vmatmul.bf16.gmra.mxu0 %v1087
    %v6416 = vpop.f32.mrf.mxu0
    %v6417 = vadd.f32 %v6404, %v6416
    %v6418 = vpop.f32.mrf.mxu0
    %6419 = vdwg.mxu0
    %6420 = vmatpush.bf16.msra.mxu0 %v4628
    %6421 = vmatpush.bf16.msra.mxu0 %v4624
    %6422 = vmatpush.bf16.msra.mxu0 %v4620
    %6423 = vmatpush.bf16.msra.mxu0 %v4616
    %6424 = vmatpush.bf16.msra.mxu0 %v4612
    %6425 = vmatpush.bf16.msra.mxu0 %v4608
    %6426 = vmatpush.bf16.msra.mxu0 %v4604
    %6427 = vmatpush.bf16.msra.mxu0 %v4600
    %6428 = vmatmul.bf16.gmra.mxu0 %v1088
    %v6429 = vpop.f32.mrf.mxu0
    %v6430 = vadd.f32 %v6417, %v6429
    %v6431 = vpop.f32.mrf.mxu0
    %6432 = vdwg.mxu0
    %6433 = vmatpush.bf16.msra.mxu0 %v4660
    %6434 = vmatpush.bf16.msra.mxu0 %v4656
    %6435 = vmatpush.bf16.msra.mxu0 %v4652
    %6436 = vmatpush.bf16.msra.mxu0 %v4648
    %6437 = vmatpush.bf16.msra.mxu0 %v4644
    %6438 = vmatpush.bf16.msra.mxu0 %v4640
    %6439 = vmatpush.bf16.msra.mxu0 %v4636
    %6440 = vmatpush.bf16.msra.mxu0 %v4632
    %6441 = vmatmul.bf16.gmra.mxu0 %v1089
    %v6442 = vpop.f32.mrf.mxu0
    %v6443 = vadd.f32 %v6430, %v6442
    %v6444 = vpop.f32.mrf.mxu0
    %6445 = vdwg.mxu0
    %6446 = vmatpush.bf16.msra.mxu0 %v4692
    %6447 = vmatpush.bf16.msra.mxu0 %v4688
    %6448 = vmatpush.bf16.msra.mxu0 %v4684
    %6449 = vmatpush.bf16.msra.mxu0 %v4680
    %6450 = vmatpush.bf16.msra.mxu0 %v4676
    %6451 = vmatpush.bf16.msra.mxu0 %v4672
    %6452 = vmatpush.bf16.msra.mxu0 %v4668
    %6453 = vmatpush.bf16.msra.mxu0 %v4664
    %6454 = vmatmul.bf16.gmra.mxu0 %v1090
    %v6455 = vpop.f32.mrf.mxu0
    %v6456 = vadd.f32 %v6443, %v6455
    %v6457 = vpop.f32.mrf.mxu0
    %6458 = vdwg.mxu0
    %6459 = vmatpush.bf16.msra.mxu0 %v4724
    %6460 = vmatpush.bf16.msra.mxu0 %v4720
    %6461 = vmatpush.bf16.msra.mxu0 %v4716
    %6462 = vmatpush.bf16.msra.mxu0 %v4712
    %6463 = vmatpush.bf16.msra.mxu0 %v4708
    %6464 = vmatpush.bf16.msra.mxu0 %v4704
    %6465 = vmatpush.bf16.msra.mxu0 %v4700
    %6466 = vmatpush.bf16.msra.mxu0 %v4696
    %6467 = vmatmul.bf16.gmra.mxu0 %v1091
    %v6468 = vpop.f32.mrf.mxu0
    %v6469 = vadd.f32 %v6456, %v6468
    %v6470 = vpop.f32.mrf.mxu0
    %6471 = vdwg.mxu0
    %6472 = vmatpush.bf16.msra.mxu0 %v4756
    %6473 = vmatpush.bf16.msra.mxu0 %v4752
    %6474 = vmatpush.bf16.msra.mxu0 %v4748
    %6475 = vmatpush.bf16.msra.mxu0 %v4744
    %6476 = vmatpush.bf16.msra.mxu0 %v4740
    %6477 = vmatpush.bf16.msra.mxu0 %v4736
    %6478 = vmatpush.bf16.msra.mxu0 %v4732
    %6479 = vmatpush.bf16.msra.mxu0 %v4728
    %6480 = vmatmul.bf16.gmra.mxu0 %v1094
    %v6481 = vpop.f32.mrf.mxu0
    %v6482 = vadd.f32 %v6469, %v6481
    %v6483 = vpop.f32.mrf.mxu0
    %6484 = vdwg.mxu0
    %6485 = vmatpush.bf16.msra.mxu0 %v4788
    %6486 = vmatpush.bf16.msra.mxu0 %v4784
    %6487 = vmatpush.bf16.msra.mxu0 %v4780
    %6488 = vmatpush.bf16.msra.mxu0 %v4776
    %6489 = vmatpush.bf16.msra.mxu0 %v4772
    %6490 = vmatpush.bf16.msra.mxu0 %v4768
    %6491 = vmatpush.bf16.msra.mxu0 %v4764
    %6492 = vmatpush.bf16.msra.mxu0 %v4760
    %6493 = vmatmul.bf16.gmra.mxu0 %v1095
    %v6494 = vpop.f32.mrf.mxu0
    %v6495 = vadd.f32 %v6482, %v6494
    %v6496 = vpop.f32.mrf.mxu0
    %6497 = vdwg.mxu0
    %6498 = vmatpush.bf16.msra.mxu0 %v4820
    %6499 = vmatpush.bf16.msra.mxu0 %v4816
    %6500 = vmatpush.bf16.msra.mxu0 %v4812
    %6501 = vmatpush.bf16.msra.mxu0 %v4808
    %6502 = vmatpush.bf16.msra.mxu0 %v4804
    %6503 = vmatpush.bf16.msra.mxu0 %v4800
    %6504 = vmatpush.bf16.msra.mxu0 %v4796
    %6505 = vmatpush.bf16.msra.mxu0 %v4792
    %6506 = vmatmul.bf16.gmra.mxu0 %v1096
    %v6507 = vpop.f32.mrf.mxu0
    %v6508 = vadd.f32 %v6495, %v6507
    %v6509 = vpop.f32.mrf.mxu0
    %6510 = vdwg.mxu0
    %6511 = vmatpush.bf16.msra.mxu0 %v4852
    %6512 = vmatpush.bf16.msra.mxu0 %v4848
    %6513 = vmatpush.bf16.msra.mxu0 %v4844
    %6514 = vmatpush.bf16.msra.mxu0 %v4840
    %6515 = vmatpush.bf16.msra.mxu0 %v4836
    %6516 = vmatpush.bf16.msra.mxu0 %v4832
    %6517 = vmatpush.bf16.msra.mxu0 %v4828
    %6518 = vmatpush.bf16.msra.mxu0 %v4824
    %6519 = vmatmul.bf16.gmra.mxu0 %v1097
    %v6520 = vpop.f32.mrf.mxu0
    %v6521 = vadd.f32 %v6508, %v6520
    %v6522 = vpop.f32.mrf.mxu0
    %6523 = vdwg.mxu0
    %6524 = vmatpush.bf16.msra.mxu0 %v4884
    %6525 = vmatpush.bf16.msra.mxu0 %v4880
    %6526 = vmatpush.bf16.msra.mxu0 %v4876
    %6527 = vmatpush.bf16.msra.mxu0 %v4872
    %6528 = vmatpush.bf16.msra.mxu0 %v4868
    %6529 = vmatpush.bf16.msra.mxu0 %v4864
    %6530 = vmatpush.bf16.msra.mxu0 %v4860
    %6531 = vmatpush.bf16.msra.mxu0 %v4856
    %6532 = vmatmul.bf16.gmra.mxu0 %v1098
    %v6533 = vpop.f32.mrf.mxu0
    %v6534 = vadd.f32 %v6521, %v6533
    %v6535 = vpop.f32.mrf.mxu0
    %6536 = vdwg.mxu0
    %6537 = vmatpush.bf16.msra.mxu0 %v4916
    %6538 = vmatpush.bf16.msra.mxu0 %v4912
    %6539 = vmatpush.bf16.msra.mxu0 %v4908
    %6540 = vmatpush.bf16.msra.mxu0 %v4904
    %6541 = vmatpush.bf16.msra.mxu0 %v4900
    %6542 = vmatpush.bf16.msra.mxu0 %v4896
    %6543 = vmatpush.bf16.msra.mxu0 %v4892
    %6544 = vmatpush.bf16.msra.mxu0 %v4888
    %6545 = vmatmul.bf16.gmra.mxu0 %v1099
    %v6546 = vpop.f32.mrf.mxu0
    %v6547 = vadd.f32 %v6534, %v6546
    %v6548 = vpop.f32.mrf.mxu0
    %6549 = vdwg.mxu0
    %6550 = vmatpush.bf16.msra.mxu0 %v4948
    %6551 = vmatpush.bf16.msra.mxu0 %v4944
    %6552 = vmatpush.bf16.msra.mxu0 %v4940
    %6553 = vmatpush.bf16.msra.mxu0 %v4936
    %6554 = vmatpush.bf16.msra.mxu0 %v4932
    %6555 = vmatpush.bf16.msra.mxu0 %v4928
    %6556 = vmatpush.bf16.msra.mxu0 %v4924
    %6557 = vmatpush.bf16.msra.mxu0 %v4920
    %6558 = vmatmul.bf16.gmra.mxu0 %v1100
    %v6559 = vpop.f32.mrf.mxu0
    %v6560 = vadd.f32 %v6547, %v6559
    %v6561 = vpop.f32.mrf.mxu0
    %6562 = vdwg.mxu0
    %6563 = vmatpush.bf16.msra.mxu0 %v4980
    %6564 = vmatpush.bf16.msra.mxu0 %v4976
    %6565 = vmatpush.bf16.msra.mxu0 %v4972
    %6566 = vmatpush.bf16.msra.mxu0 %v4968
    %6567 = vmatpush.bf16.msra.mxu0 %v4964
    %6568 = vmatpush.bf16.msra.mxu0 %v4960
    %6569 = vmatpush.bf16.msra.mxu0 %v4956
    %6570 = vmatpush.bf16.msra.mxu0 %v4952
    %6571 = vmatmul.bf16.gmra.mxu0 %v1101
    %v6572 = vpop.f32.mrf.mxu0
    %v6573 = vadd.f32 %v6560, %v6572
    %v6574 = vpop.f32.mrf.mxu0
    %6575 = vdwg.mxu0
    %6576 = vmatpush.bf16.msra.mxu0 %v5012
    %6577 = vmatpush.bf16.msra.mxu0 %v5008
    %6578 = vmatpush.bf16.msra.mxu0 %v5004
    %6579 = vmatpush.bf16.msra.mxu0 %v5000
    %6580 = vmatpush.bf16.msra.mxu0 %v4996
    %6581 = vmatpush.bf16.msra.mxu0 %v4992
    %6582 = vmatpush.bf16.msra.mxu0 %v4988
    %6583 = vmatpush.bf16.msra.mxu0 %v4984
    %6584 = vmatmul.bf16.gmra.mxu0 %v1104
    %v6585 = vpop.f32.mrf.mxu0
    %v6586 = vadd.f32 %v6573, %v6585
    %v6587 = vpop.f32.mrf.mxu0
    %6588 = vdwg.mxu0
    %6589 = vmatpush.bf16.msra.mxu0 %v5044
    %6590 = vmatpush.bf16.msra.mxu0 %v5040
    %6591 = vmatpush.bf16.msra.mxu0 %v5036
    %6592 = vmatpush.bf16.msra.mxu0 %v5032
    %6593 = vmatpush.bf16.msra.mxu0 %v5028
    %6594 = vmatpush.bf16.msra.mxu0 %v5024
    %6595 = vmatpush.bf16.msra.mxu0 %v5020
    %6596 = vmatpush.bf16.msra.mxu0 %v5016
    %6597 = vmatmul.bf16.gmra.mxu0 %v1105
    %v6598 = vpop.f32.mrf.mxu0
    %v6599 = vadd.f32 %v6586, %v6598
    %v6600 = vpop.f32.mrf.mxu0
    %6601 = vdwg.mxu0
    %6602 = vmatpush.bf16.msra.mxu0 %v5076
    %6603 = vmatpush.bf16.msra.mxu0 %v5072
    %6604 = vmatpush.bf16.msra.mxu0 %v5068
    %6605 = vmatpush.bf16.msra.mxu0 %v5064
    %6606 = vmatpush.bf16.msra.mxu0 %v5060
    %6607 = vmatpush.bf16.msra.mxu0 %v5056
    %6608 = vmatpush.bf16.msra.mxu0 %v5052
    %6609 = vmatpush.bf16.msra.mxu0 %v5048
    %6610 = vmatmul.bf16.gmra.mxu0 %v1106
    %v6611 = vpop.f32.mrf.mxu0
    %v6612 = vadd.f32 %v6599, %v6611
    %v6613 = vpop.f32.mrf.mxu0
    %6614 = vdwg.mxu0
    %6615 = vmatpush.bf16.msra.mxu0 %v5108
    %6616 = vmatpush.bf16.msra.mxu0 %v5104
    %6617 = vmatpush.bf16.msra.mxu0 %v5100
    %6618 = vmatpush.bf16.msra.mxu0 %v5096
    %6619 = vmatpush.bf16.msra.mxu0 %v5092
    %6620 = vmatpush.bf16.msra.mxu0 %v5088
    %6621 = vmatpush.bf16.msra.mxu0 %v5084
    %6622 = vmatpush.bf16.msra.mxu0 %v5080
    %6623 = vmatmul.bf16.gmra.mxu0 %v1107
    %v6624 = vpop.f32.mrf.mxu0
    %v6625 = vadd.f32 %v6612, %v6624
    %v6626 = vpop.f32.mrf.mxu0
    %6627 = vdwg.mxu0
    %6628 = vmatpush.bf16.msra.mxu0 %v5140
    %6629 = vmatpush.bf16.msra.mxu0 %v5136
    %6630 = vmatpush.bf16.msra.mxu0 %v5132
    %6631 = vmatpush.bf16.msra.mxu0 %v5128
    %6632 = vmatpush.bf16.msra.mxu0 %v5124
    %6633 = vmatpush.bf16.msra.mxu0 %v5120
    %6634 = vmatpush.bf16.msra.mxu0 %v5116
    %6635 = vmatpush.bf16.msra.mxu0 %v5112
    %6636 = vmatmul.bf16.gmra.mxu0 %v1108
    %v6637 = vpop.f32.mrf.mxu0
    %v6638 = vadd.f32 %v6625, %v6637
    %v6639 = vpop.f32.mrf.mxu0
    %6640 = vdwg.mxu0
    %6641 = vmatpush.bf16.msra.mxu0 %v5172
    %6642 = vmatpush.bf16.msra.mxu0 %v5168
    %6643 = vmatpush.bf16.msra.mxu0 %v5164
    %6644 = vmatpush.bf16.msra.mxu0 %v5160
    %6645 = vmatpush.bf16.msra.mxu0 %v5156
    %6646 = vmatpush.bf16.msra.mxu0 %v5152
    %6647 = vmatpush.bf16.msra.mxu0 %v5148
    %6648 = vmatpush.bf16.msra.mxu0 %v5144
    %6649 = vmatmul.bf16.gmra.mxu0 %v1109
    %v6650 = vpop.f32.mrf.mxu0
    %v6651 = vadd.f32 %v6638, %v6650
    %v6652 = vpop.f32.mrf.mxu0
    %6653 = vdwg.mxu0
    %6654 = vmatpush.bf16.msra.mxu0 %v5204
    %6655 = vmatpush.bf16.msra.mxu0 %v5200
    %6656 = vmatpush.bf16.msra.mxu0 %v5196
    %6657 = vmatpush.bf16.msra.mxu0 %v5192
    %6658 = vmatpush.bf16.msra.mxu0 %v5188
    %6659 = vmatpush.bf16.msra.mxu0 %v5184
    %6660 = vmatpush.bf16.msra.mxu0 %v5180
    %6661 = vmatpush.bf16.msra.mxu0 %v5176
    %6662 = vmatmul.bf16.gmra.mxu0 %v1110
    %v6663 = vpop.f32.mrf.mxu0
    %v6664 = vadd.f32 %v6651, %v6663
    %v6665 = vpop.f32.mrf.mxu0
    %6666 = vdwg.mxu0
    %6667 = vmatpush.bf16.msra.mxu0 %v5236
    %6668 = vmatpush.bf16.msra.mxu0 %v5232
    %6669 = vmatpush.bf16.msra.mxu0 %v5228
    %6670 = vmatpush.bf16.msra.mxu0 %v5224
    %6671 = vmatpush.bf16.msra.mxu0 %v5220
    %6672 = vmatpush.bf16.msra.mxu0 %v5216
    %6673 = vmatpush.bf16.msra.mxu0 %v5212
    %6674 = vmatpush.bf16.msra.mxu0 %v5208
    %6675 = vmatmul.bf16.gmra.mxu0 %v1111
    %v6676 = vpop.f32.mrf.mxu0
    %v6677 = vadd.f32 %v6664, %v6676
    %v6678 = vpop.f32.mrf.mxu0
    %6679 = vdwg.mxu0
    %6680 = vmatpush.bf16.msra.mxu0 %v4245
    %6681 = vmatpush.bf16.msra.mxu0 %v4241
    %6682 = vmatpush.bf16.msra.mxu0 %v4237
    %6683 = vmatpush.bf16.msra.mxu0 %v4233
    %6684 = vmatpush.bf16.msra.mxu0 %v4229
    %6685 = vmatpush.bf16.msra.mxu0 %v4225
    %6686 = vmatpush.bf16.msra.mxu0 %v4221
    %6687 = vmatpush.bf16.msra.mxu0 %v4217
    %6688 = vmatmul.bf16.gmra.mxu0 %v1074
    %v6689 = vpop.f32.mrf.mxu0
    %v6690 = vadd.f32 %v1065, %v6689
    %v6691 = vpop.f32.mrf.mxu0
    %6692 = vdwg.mxu0
    %6693 = vmatpush.bf16.msra.mxu0 %v4277
    %6694 = vmatpush.bf16.msra.mxu0 %v4273
    %6695 = vmatpush.bf16.msra.mxu0 %v4269
    %6696 = vmatpush.bf16.msra.mxu0 %v4265
    %6697 = vmatpush.bf16.msra.mxu0 %v4261
    %6698 = vmatpush.bf16.msra.mxu0 %v4257
    %6699 = vmatpush.bf16.msra.mxu0 %v4253
    %6700 = vmatpush.bf16.msra.mxu0 %v4249
    %6701 = vmatmul.bf16.gmra.mxu0 %v1075
    %v6702 = vpop.f32.mrf.mxu0
    %v6703 = vadd.f32 %v6690, %v6702
    %v6704 = vpop.f32.mrf.mxu0
    %6705 = vdwg.mxu0
    %6706 = vmatpush.bf16.msra.mxu0 %v4309
    %6707 = vmatpush.bf16.msra.mxu0 %v4305
    %6708 = vmatpush.bf16.msra.mxu0 %v4301
    %6709 = vmatpush.bf16.msra.mxu0 %v4297
    %6710 = vmatpush.bf16.msra.mxu0 %v4293
    %6711 = vmatpush.bf16.msra.mxu0 %v4289
    %6712 = vmatpush.bf16.msra.mxu0 %v4285
    %6713 = vmatpush.bf16.msra.mxu0 %v4281
    %6714 = vmatmul.bf16.gmra.mxu0 %v1076
    %v6715 = vpop.f32.mrf.mxu0
    %v6716 = vadd.f32 %v6703, %v6715
    %v6717 = vpop.f32.mrf.mxu0
    %6718 = vdwg.mxu0
    %6719 = vmatpush.bf16.msra.mxu0 %v4341
    %6720 = vmatpush.bf16.msra.mxu0 %v4337
    %6721 = vmatpush.bf16.msra.mxu0 %v4333
    %6722 = vmatpush.bf16.msra.mxu0 %v4329
    %6723 = vmatpush.bf16.msra.mxu0 %v4325
    %6724 = vmatpush.bf16.msra.mxu0 %v4321
    %6725 = vmatpush.bf16.msra.mxu0 %v4317
    %6726 = vmatpush.bf16.msra.mxu0 %v4313
    %6727 = vmatmul.bf16.gmra.mxu0 %v1077
    %v6728 = vpop.f32.mrf.mxu0
    %v6729 = vadd.f32 %v6716, %v6728
    %v6730 = vpop.f32.mrf.mxu0
    %6731 = vdwg.mxu0
    %6732 = vmatpush.bf16.msra.mxu0 %v4373
    %6733 = vmatpush.bf16.msra.mxu0 %v4369
    %6734 = vmatpush.bf16.msra.mxu0 %v4365
    %6735 = vmatpush.bf16.msra.mxu0 %v4361
    %6736 = vmatpush.bf16.msra.mxu0 %v4357
    %6737 = vmatpush.bf16.msra.mxu0 %v4353
    %6738 = vmatpush.bf16.msra.mxu0 %v4349
    %6739 = vmatpush.bf16.msra.mxu0 %v4345
    %6740 = vmatmul.bf16.gmra.mxu0 %v1078
    %v6741 = vpop.f32.mrf.mxu0
    %v6742 = vadd.f32 %v6729, %v6741
    %v6743 = vpop.f32.mrf.mxu0
    %6744 = vdwg.mxu0
    %6745 = vmatpush.bf16.msra.mxu0 %v4405
    %6746 = vmatpush.bf16.msra.mxu0 %v4401
    %6747 = vmatpush.bf16.msra.mxu0 %v4397
    %6748 = vmatpush.bf16.msra.mxu0 %v4393
    %6749 = vmatpush.bf16.msra.mxu0 %v4389
    %6750 = vmatpush.bf16.msra.mxu0 %v4385
    %6751 = vmatpush.bf16.msra.mxu0 %v4381
    %6752 = vmatpush.bf16.msra.mxu0 %v4377
    %6753 = vmatmul.bf16.gmra.mxu0 %v1079
    %v6754 = vpop.f32.mrf.mxu0
    %v6755 = vadd.f32 %v6742, %v6754
    %v6756 = vpop.f32.mrf.mxu0
    %6757 = vdwg.mxu0
    %6758 = vmatpush.bf16.msra.mxu0 %v4437
    %6759 = vmatpush.bf16.msra.mxu0 %v4433
    %6760 = vmatpush.bf16.msra.mxu0 %v4429
    %6761 = vmatpush.bf16.msra.mxu0 %v4425
    %6762 = vmatpush.bf16.msra.mxu0 %v4421
    %6763 = vmatpush.bf16.msra.mxu0 %v4417
    %6764 = vmatpush.bf16.msra.mxu0 %v4413
    %6765 = vmatpush.bf16.msra.mxu0 %v4409
    %6766 = vmatmul.bf16.gmra.mxu0 %v1080
    %v6767 = vpop.f32.mrf.mxu0
    %v6768 = vadd.f32 %v6755, %v6767
    %v6769 = vpop.f32.mrf.mxu0
    %6770 = vdwg.mxu0
    %6771 = vmatpush.bf16.msra.mxu0 %v4469
    %6772 = vmatpush.bf16.msra.mxu0 %v4465
    %6773 = vmatpush.bf16.msra.mxu0 %v4461
    %6774 = vmatpush.bf16.msra.mxu0 %v4457
    %6775 = vmatpush.bf16.msra.mxu0 %v4453
    %6776 = vmatpush.bf16.msra.mxu0 %v4449
    %6777 = vmatpush.bf16.msra.mxu0 %v4445
    %6778 = vmatpush.bf16.msra.mxu0 %v4441
    %6779 = vmatmul.bf16.gmra.mxu0 %v1081
    %v6780 = vpop.f32.mrf.mxu0
    %v6781 = vadd.f32 %v6768, %v6780
    %v6782 = vpop.f32.mrf.mxu0
    %6783 = vdwg.mxu0
    %6784 = vmatpush.bf16.msra.mxu0 %v4501
    %6785 = vmatpush.bf16.msra.mxu0 %v4497
    %6786 = vmatpush.bf16.msra.mxu0 %v4493
    %6787 = vmatpush.bf16.msra.mxu0 %v4489
    %6788 = vmatpush.bf16.msra.mxu0 %v4485
    %6789 = vmatpush.bf16.msra.mxu0 %v4481
    %6790 = vmatpush.bf16.msra.mxu0 %v4477
    %6791 = vmatpush.bf16.msra.mxu0 %v4473
    %6792 = vmatmul.bf16.gmra.mxu0 %v1084
    %v6793 = vpop.f32.mrf.mxu0
    %v6794 = vadd.f32 %v6781, %v6793
    %v6795 = vpop.f32.mrf.mxu0
    %6796 = vdwg.mxu0
    %6797 = vmatpush.bf16.msra.mxu0 %v4533
    %6798 = vmatpush.bf16.msra.mxu0 %v4529
    %6799 = vmatpush.bf16.msra.mxu0 %v4525
    %6800 = vmatpush.bf16.msra.mxu0 %v4521
    %6801 = vmatpush.bf16.msra.mxu0 %v4517
    %6802 = vmatpush.bf16.msra.mxu0 %v4513
    %6803 = vmatpush.bf16.msra.mxu0 %v4509
    %6804 = vmatpush.bf16.msra.mxu0 %v4505
    %6805 = vmatmul.bf16.gmra.mxu0 %v1085
    %v6806 = vpop.f32.mrf.mxu0
    %v6807 = vadd.f32 %v6794, %v6806
    %v6808 = vpop.f32.mrf.mxu0
    %6809 = vdwg.mxu0
    %6810 = vmatpush.bf16.msra.mxu0 %v4565
    %6811 = vmatpush.bf16.msra.mxu0 %v4561
    %6812 = vmatpush.bf16.msra.mxu0 %v4557
    %6813 = vmatpush.bf16.msra.mxu0 %v4553
    %6814 = vmatpush.bf16.msra.mxu0 %v4549
    %6815 = vmatpush.bf16.msra.mxu0 %v4545
    %6816 = vmatpush.bf16.msra.mxu0 %v4541
    %6817 = vmatpush.bf16.msra.mxu0 %v4537
    %6818 = vmatmul.bf16.gmra.mxu0 %v1086
    %v6819 = vpop.f32.mrf.mxu0
    %v6820 = vadd.f32 %v6807, %v6819
    %v6821 = vpop.f32.mrf.mxu0
    %6822 = vdwg.mxu0
    %6823 = vmatpush.bf16.msra.mxu0 %v4597
    %6824 = vmatpush.bf16.msra.mxu0 %v4593
    %6825 = vmatpush.bf16.msra.mxu0 %v4589
    %6826 = vmatpush.bf16.msra.mxu0 %v4585
    %6827 = vmatpush.bf16.msra.mxu0 %v4581
    %6828 = vmatpush.bf16.msra.mxu0 %v4577
    %6829 = vmatpush.bf16.msra.mxu0 %v4573
    %6830 = vmatpush.bf16.msra.mxu0 %v4569
    %6831 = vmatmul.bf16.gmra.mxu0 %v1087
    %v6832 = vpop.f32.mrf.mxu0
    %v6833 = vadd.f32 %v6820, %v6832
    %v6834 = vpop.f32.mrf.mxu0
    %6835 = vdwg.mxu0
    %6836 = vmatpush.bf16.msra.mxu0 %v4629
    %6837 = vmatpush.bf16.msra.mxu0 %v4625
    %6838 = vmatpush.bf16.msra.mxu0 %v4621
    %6839 = vmatpush.bf16.msra.mxu0 %v4617
    %6840 = vmatpush.bf16.msra.mxu0 %v4613
    %6841 = vmatpush.bf16.msra.mxu0 %v4609
    %6842 = vmatpush.bf16.msra.mxu0 %v4605
    %6843 = vmatpush.bf16.msra.mxu0 %v4601
    %6844 = vmatmul.bf16.gmra.mxu0 %v1088
    %v6845 = vpop.f32.mrf.mxu0
    %v6846 = vadd.f32 %v6833, %v6845
    %v6847 = vpop.f32.mrf.mxu0
    %6848 = vdwg.mxu0
    %6849 = vmatpush.bf16.msra.mxu0 %v4661
    %6850 = vmatpush.bf16.msra.mxu0 %v4657
    %6851 = vmatpush.bf16.msra.mxu0 %v4653
    %6852 = vmatpush.bf16.msra.mxu0 %v4649
    %6853 = vmatpush.bf16.msra.mxu0 %v4645
    %6854 = vmatpush.bf16.msra.mxu0 %v4641
    %6855 = vmatpush.bf16.msra.mxu0 %v4637
    %6856 = vmatpush.bf16.msra.mxu0 %v4633
    %6857 = vmatmul.bf16.gmra.mxu0 %v1089
    %v6858 = vpop.f32.mrf.mxu0
    %v6859 = vadd.f32 %v6846, %v6858
    %v6860 = vpop.f32.mrf.mxu0
    %6861 = vdwg.mxu0
    %6862 = vmatpush.bf16.msra.mxu0 %v4693
    %6863 = vmatpush.bf16.msra.mxu0 %v4689
    %6864 = vmatpush.bf16.msra.mxu0 %v4685
    %6865 = vmatpush.bf16.msra.mxu0 %v4681
    %6866 = vmatpush.bf16.msra.mxu0 %v4677
    %6867 = vmatpush.bf16.msra.mxu0 %v4673
    %6868 = vmatpush.bf16.msra.mxu0 %v4669
    %6869 = vmatpush.bf16.msra.mxu0 %v4665
    %6870 = vmatmul.bf16.gmra.mxu0 %v1090
    %v6871 = vpop.f32.mrf.mxu0
    %v6872 = vadd.f32 %v6859, %v6871
    %v6873 = vpop.f32.mrf.mxu0
    %6874 = vdwg.mxu0
    %6875 = vmatpush.bf16.msra.mxu0 %v4725
    %6876 = vmatpush.bf16.msra.mxu0 %v4721
    %6877 = vmatpush.bf16.msra.mxu0 %v4717
    %6878 = vmatpush.bf16.msra.mxu0 %v4713
    %6879 = vmatpush.bf16.msra.mxu0 %v4709
    %6880 = vmatpush.bf16.msra.mxu0 %v4705
    %6881 = vmatpush.bf16.msra.mxu0 %v4701
    %6882 = vmatpush.bf16.msra.mxu0 %v4697
    %6883 = vmatmul.bf16.gmra.mxu0 %v1091
    %v6884 = vpop.f32.mrf.mxu0
    %v6885 = vadd.f32 %v6872, %v6884
    %v6886 = vpop.f32.mrf.mxu0
    %6887 = vdwg.mxu0
    %6888 = vmatpush.bf16.msra.mxu0 %v4757
    %6889 = vmatpush.bf16.msra.mxu0 %v4753
    %6890 = vmatpush.bf16.msra.mxu0 %v4749
    %6891 = vmatpush.bf16.msra.mxu0 %v4745
    %6892 = vmatpush.bf16.msra.mxu0 %v4741
    %6893 = vmatpush.bf16.msra.mxu0 %v4737
    %6894 = vmatpush.bf16.msra.mxu0 %v4733
    %6895 = vmatpush.bf16.msra.mxu0 %v4729
    %6896 = vmatmul.bf16.gmra.mxu0 %v1094
    %v6897 = vpop.f32.mrf.mxu0
    %v6898 = vadd.f32 %v6885, %v6897
    %v6899 = vpop.f32.mrf.mxu0
    %6900 = vdwg.mxu0
    %6901 = vmatpush.bf16.msra.mxu0 %v4789
    %6902 = vmatpush.bf16.msra.mxu0 %v4785
    %6903 = vmatpush.bf16.msra.mxu0 %v4781
    %6904 = vmatpush.bf16.msra.mxu0 %v4777
    %6905 = vmatpush.bf16.msra.mxu0 %v4773
    %6906 = vmatpush.bf16.msra.mxu0 %v4769
    %6907 = vmatpush.bf16.msra.mxu0 %v4765
    %6908 = vmatpush.bf16.msra.mxu0 %v4761
    %6909 = vmatmul.bf16.gmra.mxu0 %v1095
    %v6910 = vpop.f32.mrf.mxu0
    %v6911 = vadd.f32 %v6898, %v6910
    %v6912 = vpop.f32.mrf.mxu0
    %6913 = vdwg.mxu0
    %6914 = vmatpush.bf16.msra.mxu0 %v4821
    %6915 = vmatpush.bf16.msra.mxu0 %v4817
    %6916 = vmatpush.bf16.msra.mxu0 %v4813
    %6917 = vmatpush.bf16.msra.mxu0 %v4809
    %6918 = vmatpush.bf16.msra.mxu0 %v4805
    %6919 = vmatpush.bf16.msra.mxu0 %v4801
    %6920 = vmatpush.bf16.msra.mxu0 %v4797
    %6921 = vmatpush.bf16.msra.mxu0 %v4793
    %6922 = vmatmul.bf16.gmra.mxu0 %v1096
    %v6923 = vpop.f32.mrf.mxu0
    %v6924 = vadd.f32 %v6911, %v6923
    %v6925 = vpop.f32.mrf.mxu0
    %6926 = vdwg.mxu0
    %6927 = vmatpush.bf16.msra.mxu0 %v4853
    %6928 = vmatpush.bf16.msra.mxu0 %v4849
    %6929 = vmatpush.bf16.msra.mxu0 %v4845
    %6930 = vmatpush.bf16.msra.mxu0 %v4841
    %6931 = vmatpush.bf16.msra.mxu0 %v4837
    %6932 = vmatpush.bf16.msra.mxu0 %v4833
    %6933 = vmatpush.bf16.msra.mxu0 %v4829
    %6934 = vmatpush.bf16.msra.mxu0 %v4825
    %6935 = vmatmul.bf16.gmra.mxu0 %v1097
    %v6936 = vpop.f32.mrf.mxu0
    %v6937 = vadd.f32 %v6924, %v6936
    %v6938 = vpop.f32.mrf.mxu0
    %6939 = vdwg.mxu0
    %6940 = vmatpush.bf16.msra.mxu0 %v4885
    %6941 = vmatpush.bf16.msra.mxu0 %v4881
    %6942 = vmatpush.bf16.msra.mxu0 %v4877
    %6943 = vmatpush.bf16.msra.mxu0 %v4873
    %6944 = vmatpush.bf16.msra.mxu0 %v4869
    %6945 = vmatpush.bf16.msra.mxu0 %v4865
    %6946 = vmatpush.bf16.msra.mxu0 %v4861
    %6947 = vmatpush.bf16.msra.mxu0 %v4857
    %6948 = vmatmul.bf16.gmra.mxu0 %v1098
    %v6949 = vpop.f32.mrf.mxu0
    %v6950 = vadd.f32 %v6937, %v6949
    %v6951 = vpop.f32.mrf.mxu0
    %6952 = vdwg.mxu0
    %6953 = vmatpush.bf16.msra.mxu0 %v4917
    %6954 = vmatpush.bf16.msra.mxu0 %v4913
    %6955 = vmatpush.bf16.msra.mxu0 %v4909
    %6956 = vmatpush.bf16.msra.mxu0 %v4905
    %6957 = vmatpush.bf16.msra.mxu0 %v4901
    %6958 = vmatpush.bf16.msra.mxu0 %v4897
    %6959 = vmatpush.bf16.msra.mxu0 %v4893
    %6960 = vmatpush.bf16.msra.mxu0 %v4889
    %6961 = vmatmul.bf16.gmra.mxu0 %v1099
    %v6962 = vpop.f32.mrf.mxu0
    %v6963 = vadd.f32 %v6950, %v6962
    %v6964 = vpop.f32.mrf.mxu0
    %6965 = vdwg.mxu0
    %6966 = vmatpush.bf16.msra.mxu0 %v4949
    %6967 = vmatpush.bf16.msra.mxu0 %v4945
    %6968 = vmatpush.bf16.msra.mxu0 %v4941
    %6969 = vmatpush.bf16.msra.mxu0 %v4937
    %6970 = vmatpush.bf16.msra.mxu0 %v4933
    %6971 = vmatpush.bf16.msra.mxu0 %v4929
    %6972 = vmatpush.bf16.msra.mxu0 %v4925
    %6973 = vmatpush.bf16.msra.mxu0 %v4921
    %6974 = vmatmul.bf16.gmra.mxu0 %v1100
    %v6975 = vpop.f32.mrf.mxu0
    %v6976 = vadd.f32 %v6963, %v6975
    %v6977 = vpop.f32.mrf.mxu0
    %6978 = vdwg.mxu0
    %6979 = vmatpush.bf16.msra.mxu0 %v4981
    %6980 = vmatpush.bf16.msra.mxu0 %v4977
    %6981 = vmatpush.bf16.msra.mxu0 %v4973
    %6982 = vmatpush.bf16.msra.mxu0 %v4969
    %6983 = vmatpush.bf16.msra.mxu0 %v4965
    %6984 = vmatpush.bf16.msra.mxu0 %v4961
    %6985 = vmatpush.bf16.msra.mxu0 %v4957
    %6986 = vmatpush.bf16.msra.mxu0 %v4953
    %6987 = vmatmul.bf16.gmra.mxu0 %v1101
    %v6988 = vpop.f32.mrf.mxu0
    %v6989 = vadd.f32 %v6976, %v6988
    %v6990 = vpop.f32.mrf.mxu0
    %6991 = vdwg.mxu0
    %6992 = vmatpush.bf16.msra.mxu0 %v5013
    %6993 = vmatpush.bf16.msra.mxu0 %v5009
    %6994 = vmatpush.bf16.msra.mxu0 %v5005
    %6995 = vmatpush.bf16.msra.mxu0 %v5001
    %6996 = vmatpush.bf16.msra.mxu0 %v4997
    %6997 = vmatpush.bf16.msra.mxu0 %v4993
    %6998 = vmatpush.bf16.msra.mxu0 %v4989
    %6999 = vmatpush.bf16.msra.mxu0 %v4985
    %7000 = vmatmul.bf16.gmra.mxu0 %v1104
    %v7001 = vpop.f32.mrf.mxu0
    %v7002 = vadd.f32 %v6989, %v7001
    %v7003 = vpop.f32.mrf.mxu0
    %7004 = vdwg.mxu0
    %7005 = vmatpush.bf16.msra.mxu0 %v5045
    %7006 = vmatpush.bf16.msra.mxu0 %v5041
    %7007 = vmatpush.bf16.msra.mxu0 %v5037
    %7008 = vmatpush.bf16.msra.mxu0 %v5033
    %7009 = vmatpush.bf16.msra.mxu0 %v5029
    %7010 = vmatpush.bf16.msra.mxu0 %v5025
    %7011 = vmatpush.bf16.msra.mxu0 %v5021
    %7012 = vmatpush.bf16.msra.mxu0 %v5017
    %7013 = vmatmul.bf16.gmra.mxu0 %v1105
    %v7014 = vpop.f32.mrf.mxu0
    %v7015 = vadd.f32 %v7002, %v7014
    %v7016 = vpop.f32.mrf.mxu0
    %7017 = vdwg.mxu0
    %7018 = vmatpush.bf16.msra.mxu0 %v5077
    %7019 = vmatpush.bf16.msra.mxu0 %v5073
    %7020 = vmatpush.bf16.msra.mxu0 %v5069
    %7021 = vmatpush.bf16.msra.mxu0 %v5065
    %7022 = vmatpush.bf16.msra.mxu0 %v5061
    %7023 = vmatpush.bf16.msra.mxu0 %v5057
    %7024 = vmatpush.bf16.msra.mxu0 %v5053
    %7025 = vmatpush.bf16.msra.mxu0 %v5049
    %7026 = vmatmul.bf16.gmra.mxu0 %v1106
    %v7027 = vpop.f32.mrf.mxu0
    %v7028 = vadd.f32 %v7015, %v7027
    %v7029 = vpop.f32.mrf.mxu0
    %7030 = vdwg.mxu0
    %7031 = vmatpush.bf16.msra.mxu0 %v5109
    %7032 = vmatpush.bf16.msra.mxu0 %v5105
    %7033 = vmatpush.bf16.msra.mxu0 %v5101
    %7034 = vmatpush.bf16.msra.mxu0 %v5097
    %7035 = vmatpush.bf16.msra.mxu0 %v5093
    %7036 = vmatpush.bf16.msra.mxu0 %v5089
    %7037 = vmatpush.bf16.msra.mxu0 %v5085
    %7038 = vmatpush.bf16.msra.mxu0 %v5081
    %7039 = vmatmul.bf16.gmra.mxu0 %v1107
    %v7040 = vpop.f32.mrf.mxu0
    %v7041 = vadd.f32 %v7028, %v7040
    %v7042 = vpop.f32.mrf.mxu0
    %7043 = vdwg.mxu0
    %7044 = vmatpush.bf16.msra.mxu0 %v5141
    %7045 = vmatpush.bf16.msra.mxu0 %v5137
    %7046 = vmatpush.bf16.msra.mxu0 %v5133
    %7047 = vmatpush.bf16.msra.mxu0 %v5129
    %7048 = vmatpush.bf16.msra.mxu0 %v5125
    %7049 = vmatpush.bf16.msra.mxu0 %v5121
    %7050 = vmatpush.bf16.msra.mxu0 %v5117
    %7051 = vmatpush.bf16.msra.mxu0 %v5113
    %7052 = vmatmul.bf16.gmra.mxu0 %v1108
    %v7053 = vpop.f32.mrf.mxu0
    %v7054 = vadd.f32 %v7041, %v7053
    %v7055 = vpop.f32.mrf.mxu0
    %7056 = vdwg.mxu0
    %7057 = vmatpush.bf16.msra.mxu0 %v5173
    %7058 = vmatpush.bf16.msra.mxu0 %v5169
    %7059 = vmatpush.bf16.msra.mxu0 %v5165
    %7060 = vmatpush.bf16.msra.mxu0 %v5161
    %7061 = vmatpush.bf16.msra.mxu0 %v5157
    %7062 = vmatpush.bf16.msra.mxu0 %v5153
    %7063 = vmatpush.bf16.msra.mxu0 %v5149
    %7064 = vmatpush.bf16.msra.mxu0 %v5145
    %7065 = vmatmul.bf16.gmra.mxu0 %v1109
    %v7066 = vpop.f32.mrf.mxu0
    %v7067 = vadd.f32 %v7054, %v7066
    %v7068 = vpop.f32.mrf.mxu0
    %7069 = vdwg.mxu0
    %7070 = vmatpush.bf16.msra.mxu0 %v5205
    %7071 = vmatpush.bf16.msra.mxu0 %v5201
    %7072 = vmatpush.bf16.msra.mxu0 %v5197
    %7073 = vmatpush.bf16.msra.mxu0 %v5193
    %7074 = vmatpush.bf16.msra.mxu0 %v5189
    %7075 = vmatpush.bf16.msra.mxu0 %v5185
    %7076 = vmatpush.bf16.msra.mxu0 %v5181
    %7077 = vmatpush.bf16.msra.mxu0 %v5177
    %7078 = vmatmul.bf16.gmra.mxu0 %v1110
    %v7079 = vpop.f32.mrf.mxu0
    %v7080 = vadd.f32 %v7067, %v7079
    %v7081 = vpop.f32.mrf.mxu0
    %7082 = vdwg.mxu0
    %7083 = vmatpush.bf16.msra.mxu0 %v5237
    %7084 = vmatpush.bf16.msra.mxu0 %v5233
    %7085 = vmatpush.bf16.msra.mxu0 %v5229
    %7086 = vmatpush.bf16.msra.mxu0 %v5225
    %7087 = vmatpush.bf16.msra.mxu0 %v5221
    %7088 = vmatpush.bf16.msra.mxu0 %v5217
    %7089 = vmatpush.bf16.msra.mxu0 %v5213
    %7090 = vmatpush.bf16.msra.mxu0 %v5209
    %7091 = vmatmul.bf16.gmra.mxu0 %v1111
    %v7092 = vpop.f32.mrf.mxu0
    %v7093 = vadd.f32 %v7080, %v7092
    %v7094 = vpop.f32.mrf.mxu0
    %7095 = vdwg.mxu0
    %7096 = vmatpush.bf16.msra.mxu0 %v4246
    %7097 = vmatpush.bf16.msra.mxu0 %v4242
    %7098 = vmatpush.bf16.msra.mxu0 %v4238
    %7099 = vmatpush.bf16.msra.mxu0 %v4234
    %7100 = vmatpush.bf16.msra.mxu0 %v4230
    %7101 = vmatpush.bf16.msra.mxu0 %v4226
    %7102 = vmatpush.bf16.msra.mxu0 %v4222
    %7103 = vmatpush.bf16.msra.mxu0 %v4218
    %7104 = vmatmul.bf16.gmra.mxu0 %v1074
    %v7105 = vpop.f32.mrf.mxu0
    %v7106 = vadd.f32 %v1066, %v7105
    %v7107 = vpop.f32.mrf.mxu0
    %7108 = vdwg.mxu0
    %7109 = vmatpush.bf16.msra.mxu0 %v4278
    %7110 = vmatpush.bf16.msra.mxu0 %v4274
    %7111 = vmatpush.bf16.msra.mxu0 %v4270
    %7112 = vmatpush.bf16.msra.mxu0 %v4266
    %7113 = vmatpush.bf16.msra.mxu0 %v4262
    %7114 = vmatpush.bf16.msra.mxu0 %v4258
    %7115 = vmatpush.bf16.msra.mxu0 %v4254
    %7116 = vmatpush.bf16.msra.mxu0 %v4250
    %7117 = vmatmul.bf16.gmra.mxu0 %v1075
    %v7118 = vpop.f32.mrf.mxu0
    %v7119 = vadd.f32 %v7106, %v7118
    %v7120 = vpop.f32.mrf.mxu0
    %7121 = vdwg.mxu0
    %7122 = vmatpush.bf16.msra.mxu0 %v4310
    %7123 = vmatpush.bf16.msra.mxu0 %v4306
    %7124 = vmatpush.bf16.msra.mxu0 %v4302
    %7125 = vmatpush.bf16.msra.mxu0 %v4298
    %7126 = vmatpush.bf16.msra.mxu0 %v4294
    %7127 = vmatpush.bf16.msra.mxu0 %v4290
    %7128 = vmatpush.bf16.msra.mxu0 %v4286
    %7129 = vmatpush.bf16.msra.mxu0 %v4282
    %7130 = vmatmul.bf16.gmra.mxu0 %v1076
    %v7131 = vpop.f32.mrf.mxu0
    %v7132 = vadd.f32 %v7119, %v7131
    %v7133 = vpop.f32.mrf.mxu0
    %7134 = vdwg.mxu0
    %7135 = vmatpush.bf16.msra.mxu0 %v4342
    %7136 = vmatpush.bf16.msra.mxu0 %v4338
    %7137 = vmatpush.bf16.msra.mxu0 %v4334
    %7138 = vmatpush.bf16.msra.mxu0 %v4330
    %7139 = vmatpush.bf16.msra.mxu0 %v4326
    %7140 = vmatpush.bf16.msra.mxu0 %v4322
    %7141 = vmatpush.bf16.msra.mxu0 %v4318
    %7142 = vmatpush.bf16.msra.mxu0 %v4314
    %7143 = vmatmul.bf16.gmra.mxu0 %v1077
    %v7144 = vpop.f32.mrf.mxu0
    %v7145 = vadd.f32 %v7132, %v7144
    %v7146 = vpop.f32.mrf.mxu0
    %7147 = vdwg.mxu0
    %7148 = vmatpush.bf16.msra.mxu0 %v4374
    %7149 = vmatpush.bf16.msra.mxu0 %v4370
    %7150 = vmatpush.bf16.msra.mxu0 %v4366
    %7151 = vmatpush.bf16.msra.mxu0 %v4362
    %7152 = vmatpush.bf16.msra.mxu0 %v4358
    %7153 = vmatpush.bf16.msra.mxu0 %v4354
    %7154 = vmatpush.bf16.msra.mxu0 %v4350
    %7155 = vmatpush.bf16.msra.mxu0 %v4346
    %7156 = vmatmul.bf16.gmra.mxu0 %v1078
    %v7157 = vpop.f32.mrf.mxu0
    %v7158 = vadd.f32 %v7145, %v7157
    %v7159 = vpop.f32.mrf.mxu0
    %7160 = vdwg.mxu0
    %7161 = vmatpush.bf16.msra.mxu0 %v4406
    %7162 = vmatpush.bf16.msra.mxu0 %v4402
    %7163 = vmatpush.bf16.msra.mxu0 %v4398
    %7164 = vmatpush.bf16.msra.mxu0 %v4394
    %7165 = vmatpush.bf16.msra.mxu0 %v4390
    %7166 = vmatpush.bf16.msra.mxu0 %v4386
    %7167 = vmatpush.bf16.msra.mxu0 %v4382
    %7168 = vmatpush.bf16.msra.mxu0 %v4378
    %7169 = vmatmul.bf16.gmra.mxu0 %v1079
    %v7170 = vpop.f32.mrf.mxu0
    %v7171 = vadd.f32 %v7158, %v7170
    %v7172 = vpop.f32.mrf.mxu0
    %7173 = vdwg.mxu0
    %7174 = vmatpush.bf16.msra.mxu0 %v4438
    %7175 = vmatpush.bf16.msra.mxu0 %v4434
    %7176 = vmatpush.bf16.msra.mxu0 %v4430
    %7177 = vmatpush.bf16.msra.mxu0 %v4426
    %7178 = vmatpush.bf16.msra.mxu0 %v4422
    %7179 = vmatpush.bf16.msra.mxu0 %v4418
    %7180 = vmatpush.bf16.msra.mxu0 %v4414
    %7181 = vmatpush.bf16.msra.mxu0 %v4410
    %7182 = vmatmul.bf16.gmra.mxu0 %v1080
    %v7183 = vpop.f32.mrf.mxu0
    %v7184 = vadd.f32 %v7171, %v7183
    %v7185 = vpop.f32.mrf.mxu0
    %7186 = vdwg.mxu0
    %7187 = vmatpush.bf16.msra.mxu0 %v4470
    %7188 = vmatpush.bf16.msra.mxu0 %v4466
    %7189 = vmatpush.bf16.msra.mxu0 %v4462
    %7190 = vmatpush.bf16.msra.mxu0 %v4458
    %7191 = vmatpush.bf16.msra.mxu0 %v4454
    %7192 = vmatpush.bf16.msra.mxu0 %v4450
    %7193 = vmatpush.bf16.msra.mxu0 %v4446
    %7194 = vmatpush.bf16.msra.mxu0 %v4442
    %7195 = vmatmul.bf16.gmra.mxu0 %v1081
    %v7196 = vpop.f32.mrf.mxu0
    %v7197 = vadd.f32 %v7184, %v7196
    %v7198 = vpop.f32.mrf.mxu0
    %7199 = vdwg.mxu0
    %7200 = vmatpush.bf16.msra.mxu0 %v4502
    %7201 = vmatpush.bf16.msra.mxu0 %v4498
    %7202 = vmatpush.bf16.msra.mxu0 %v4494
    %7203 = vmatpush.bf16.msra.mxu0 %v4490
    %7204 = vmatpush.bf16.msra.mxu0 %v4486
    %7205 = vmatpush.bf16.msra.mxu0 %v4482
    %7206 = vmatpush.bf16.msra.mxu0 %v4478
    %7207 = vmatpush.bf16.msra.mxu0 %v4474
    %7208 = vmatmul.bf16.gmra.mxu0 %v1084
    %v7209 = vpop.f32.mrf.mxu0
    %v7210 = vadd.f32 %v7197, %v7209
    %v7211 = vpop.f32.mrf.mxu0
    %7212 = vdwg.mxu0
    %7213 = vmatpush.bf16.msra.mxu0 %v4534
    %7214 = vmatpush.bf16.msra.mxu0 %v4530
    %7215 = vmatpush.bf16.msra.mxu0 %v4526
    %7216 = vmatpush.bf16.msra.mxu0 %v4522
    %7217 = vmatpush.bf16.msra.mxu0 %v4518
    %7218 = vmatpush.bf16.msra.mxu0 %v4514
    %7219 = vmatpush.bf16.msra.mxu0 %v4510
    %7220 = vmatpush.bf16.msra.mxu0 %v4506
    %7221 = vmatmul.bf16.gmra.mxu0 %v1085
    %v7222 = vpop.f32.mrf.mxu0
    %v7223 = vadd.f32 %v7210, %v7222
    %v7224 = vpop.f32.mrf.mxu0
    %7225 = vdwg.mxu0
    %7226 = vmatpush.bf16.msra.mxu0 %v4566
    %7227 = vmatpush.bf16.msra.mxu0 %v4562
    %7228 = vmatpush.bf16.msra.mxu0 %v4558
    %7229 = vmatpush.bf16.msra.mxu0 %v4554
    %7230 = vmatpush.bf16.msra.mxu0 %v4550
    %7231 = vmatpush.bf16.msra.mxu0 %v4546
    %7232 = vmatpush.bf16.msra.mxu0 %v4542
    %7233 = vmatpush.bf16.msra.mxu0 %v4538
    %7234 = vmatmul.bf16.gmra.mxu0 %v1086
    %v7235 = vpop.f32.mrf.mxu0
    %v7236 = vadd.f32 %v7223, %v7235
    %v7237 = vpop.f32.mrf.mxu0
    %7238 = vdwg.mxu0
    %7239 = vmatpush.bf16.msra.mxu0 %v4598
    %7240 = vmatpush.bf16.msra.mxu0 %v4594
    %7241 = vmatpush.bf16.msra.mxu0 %v4590
    %7242 = vmatpush.bf16.msra.mxu0 %v4586
    %7243 = vmatpush.bf16.msra.mxu0 %v4582
    %7244 = vmatpush.bf16.msra.mxu0 %v4578
    %7245 = vmatpush.bf16.msra.mxu0 %v4574
    %7246 = vmatpush.bf16.msra.mxu0 %v4570
    %7247 = vmatmul.bf16.gmra.mxu0 %v1087
    %v7248 = vpop.f32.mrf.mxu0
    %v7249 = vadd.f32 %v7236, %v7248
    %v7250 = vpop.f32.mrf.mxu0
    %7251 = vdwg.mxu0
    %7252 = vmatpush.bf16.msra.mxu0 %v4630
    %7253 = vmatpush.bf16.msra.mxu0 %v4626
    %7254 = vmatpush.bf16.msra.mxu0 %v4622
    %7255 = vmatpush.bf16.msra.mxu0 %v4618
    %7256 = vmatpush.bf16.msra.mxu0 %v4614
    %7257 = vmatpush.bf16.msra.mxu0 %v4610
    %7258 = vmatpush.bf16.msra.mxu0 %v4606
    %7259 = vmatpush.bf16.msra.mxu0 %v4602
    %7260 = vmatmul.bf16.gmra.mxu0 %v1088
    %v7261 = vpop.f32.mrf.mxu0
    %v7262 = vadd.f32 %v7249, %v7261
    %v7263 = vpop.f32.mrf.mxu0
    %7264 = vdwg.mxu0
    %7265 = vmatpush.bf16.msra.mxu0 %v4662
    %7266 = vmatpush.bf16.msra.mxu0 %v4658
    %7267 = vmatpush.bf16.msra.mxu0 %v4654
    %7268 = vmatpush.bf16.msra.mxu0 %v4650
    %7269 = vmatpush.bf16.msra.mxu0 %v4646
    %7270 = vmatpush.bf16.msra.mxu0 %v4642
    %7271 = vmatpush.bf16.msra.mxu0 %v4638
    %7272 = vmatpush.bf16.msra.mxu0 %v4634
    %7273 = vmatmul.bf16.gmra.mxu0 %v1089
    %v7274 = vpop.f32.mrf.mxu0
    %v7275 = vadd.f32 %v7262, %v7274
    %v7276 = vpop.f32.mrf.mxu0
    %7277 = vdwg.mxu0
    %7278 = vmatpush.bf16.msra.mxu0 %v4694
    %7279 = vmatpush.bf16.msra.mxu0 %v4690
    %7280 = vmatpush.bf16.msra.mxu0 %v4686
    %7281 = vmatpush.bf16.msra.mxu0 %v4682
    %7282 = vmatpush.bf16.msra.mxu0 %v4678
    %7283 = vmatpush.bf16.msra.mxu0 %v4674
    %7284 = vmatpush.bf16.msra.mxu0 %v4670
    %7285 = vmatpush.bf16.msra.mxu0 %v4666
    %7286 = vmatmul.bf16.gmra.mxu0 %v1090
    %v7287 = vpop.f32.mrf.mxu0
    %v7288 = vadd.f32 %v7275, %v7287
    %v7289 = vpop.f32.mrf.mxu0
    %7290 = vdwg.mxu0
    %7291 = vmatpush.bf16.msra.mxu0 %v4726
    %7292 = vmatpush.bf16.msra.mxu0 %v4722
    %7293 = vmatpush.bf16.msra.mxu0 %v4718
    %7294 = vmatpush.bf16.msra.mxu0 %v4714
    %7295 = vmatpush.bf16.msra.mxu0 %v4710
    %7296 = vmatpush.bf16.msra.mxu0 %v4706
    %7297 = vmatpush.bf16.msra.mxu0 %v4702
    %7298 = vmatpush.bf16.msra.mxu0 %v4698
    %7299 = vmatmul.bf16.gmra.mxu0 %v1091
    %v7300 = vpop.f32.mrf.mxu0
    %v7301 = vadd.f32 %v7288, %v7300
    %v7302 = vpop.f32.mrf.mxu0
    %7303 = vdwg.mxu0
    %7304 = vmatpush.bf16.msra.mxu0 %v4758
    %7305 = vmatpush.bf16.msra.mxu0 %v4754
    %7306 = vmatpush.bf16.msra.mxu0 %v4750
    %7307 = vmatpush.bf16.msra.mxu0 %v4746
    %7308 = vmatpush.bf16.msra.mxu0 %v4742
    %7309 = vmatpush.bf16.msra.mxu0 %v4738
    %7310 = vmatpush.bf16.msra.mxu0 %v4734
    %7311 = vmatpush.bf16.msra.mxu0 %v4730
    %7312 = vmatmul.bf16.gmra.mxu0 %v1094
    %v7313 = vpop.f32.mrf.mxu0
    %v7314 = vadd.f32 %v7301, %v7313
    %v7315 = vpop.f32.mrf.mxu0
    %7316 = vdwg.mxu0
    %7317 = vmatpush.bf16.msra.mxu0 %v4790
    %7318 = vmatpush.bf16.msra.mxu0 %v4786
    %7319 = vmatpush.bf16.msra.mxu0 %v4782
    %7320 = vmatpush.bf16.msra.mxu0 %v4778
    %7321 = vmatpush.bf16.msra.mxu0 %v4774
    %7322 = vmatpush.bf16.msra.mxu0 %v4770
    %7323 = vmatpush.bf16.msra.mxu0 %v4766
    %7324 = vmatpush.bf16.msra.mxu0 %v4762
    %7325 = vmatmul.bf16.gmra.mxu0 %v1095
    %v7326 = vpop.f32.mrf.mxu0
    %v7327 = vadd.f32 %v7314, %v7326
    %v7328 = vpop.f32.mrf.mxu0
    %7329 = vdwg.mxu0
    %7330 = vmatpush.bf16.msra.mxu0 %v4822
    %7331 = vmatpush.bf16.msra.mxu0 %v4818
    %7332 = vmatpush.bf16.msra.mxu0 %v4814
    %7333 = vmatpush.bf16.msra.mxu0 %v4810
    %7334 = vmatpush.bf16.msra.mxu0 %v4806
    %7335 = vmatpush.bf16.msra.mxu0 %v4802
    %7336 = vmatpush.bf16.msra.mxu0 %v4798
    %7337 = vmatpush.bf16.msra.mxu0 %v4794
    %7338 = vmatmul.bf16.gmra.mxu0 %v1096
    %v7339 = vpop.f32.mrf.mxu0
    %v7340 = vadd.f32 %v7327, %v7339
    %v7341 = vpop.f32.mrf.mxu0
    %7342 = vdwg.mxu0
    %7343 = vmatpush.bf16.msra.mxu0 %v4854
    %7344 = vmatpush.bf16.msra.mxu0 %v4850
    %7345 = vmatpush.bf16.msra.mxu0 %v4846
    %7346 = vmatpush.bf16.msra.mxu0 %v4842
    %7347 = vmatpush.bf16.msra.mxu0 %v4838
    %7348 = vmatpush.bf16.msra.mxu0 %v4834
    %7349 = vmatpush.bf16.msra.mxu0 %v4830
    %7350 = vmatpush.bf16.msra.mxu0 %v4826
    %7351 = vmatmul.bf16.gmra.mxu0 %v1097
    %v7352 = vpop.f32.mrf.mxu0
    %v7353 = vadd.f32 %v7340, %v7352
    %v7354 = vpop.f32.mrf.mxu0
    %7355 = vdwg.mxu0
    %7356 = vmatpush.bf16.msra.mxu0 %v4886
    %7357 = vmatpush.bf16.msra.mxu0 %v4882
    %7358 = vmatpush.bf16.msra.mxu0 %v4878
    %7359 = vmatpush.bf16.msra.mxu0 %v4874
    %7360 = vmatpush.bf16.msra.mxu0 %v4870
    %7361 = vmatpush.bf16.msra.mxu0 %v4866
    %7362 = vmatpush.bf16.msra.mxu0 %v4862
    %7363 = vmatpush.bf16.msra.mxu0 %v4858
    %7364 = vmatmul.bf16.gmra.mxu0 %v1098
    %v7365 = vpop.f32.mrf.mxu0
    %v7366 = vadd.f32 %v7353, %v7365
    %v7367 = vpop.f32.mrf.mxu0
    %7368 = vdwg.mxu0
    %7369 = vmatpush.bf16.msra.mxu0 %v4918
    %7370 = vmatpush.bf16.msra.mxu0 %v4914
    %7371 = vmatpush.bf16.msra.mxu0 %v4910
    %7372 = vmatpush.bf16.msra.mxu0 %v4906
    %7373 = vmatpush.bf16.msra.mxu0 %v4902
    %7374 = vmatpush.bf16.msra.mxu0 %v4898
    %7375 = vmatpush.bf16.msra.mxu0 %v4894
    %7376 = vmatpush.bf16.msra.mxu0 %v4890
    %7377 = vmatmul.bf16.gmra.mxu0 %v1099
    %v7378 = vpop.f32.mrf.mxu0
    %v7379 = vadd.f32 %v7366, %v7378
    %v7380 = vpop.f32.mrf.mxu0
    %7381 = vdwg.mxu0
    %7382 = vmatpush.bf16.msra.mxu0 %v4950
    %7383 = vmatpush.bf16.msra.mxu0 %v4946
    %7384 = vmatpush.bf16.msra.mxu0 %v4942
    %7385 = vmatpush.bf16.msra.mxu0 %v4938
    %7386 = vmatpush.bf16.msra.mxu0 %v4934
    %7387 = vmatpush.bf16.msra.mxu0 %v4930
    %7388 = vmatpush.bf16.msra.mxu0 %v4926
    %7389 = vmatpush.bf16.msra.mxu0 %v4922
    %7390 = vmatmul.bf16.gmra.mxu0 %v1100
    %v7391 = vpop.f32.mrf.mxu0
    %v7392 = vadd.f32 %v7379, %v7391
    %v7393 = vpop.f32.mrf.mxu0
    %7394 = vdwg.mxu0
    %7395 = vmatpush.bf16.msra.mxu0 %v4982
    %7396 = vmatpush.bf16.msra.mxu0 %v4978
    %7397 = vmatpush.bf16.msra.mxu0 %v4974
    %7398 = vmatpush.bf16.msra.mxu0 %v4970
    %7399 = vmatpush.bf16.msra.mxu0 %v4966
    %7400 = vmatpush.bf16.msra.mxu0 %v4962
    %7401 = vmatpush.bf16.msra.mxu0 %v4958
    %7402 = vmatpush.bf16.msra.mxu0 %v4954
    %7403 = vmatmul.bf16.gmra.mxu0 %v1101
    %v7404 = vpop.f32.mrf.mxu0
    %v7405 = vadd.f32 %v7392, %v7404
    %v7406 = vpop.f32.mrf.mxu0
    %7407 = vdwg.mxu0
    %7408 = vmatpush.bf16.msra.mxu0 %v5014
    %7409 = vmatpush.bf16.msra.mxu0 %v5010
    %7410 = vmatpush.bf16.msra.mxu0 %v5006
    %7411 = vmatpush.bf16.msra.mxu0 %v5002
    %7412 = vmatpush.bf16.msra.mxu0 %v4998
    %7413 = vmatpush.bf16.msra.mxu0 %v4994
    %7414 = vmatpush.bf16.msra.mxu0 %v4990
    %7415 = vmatpush.bf16.msra.mxu0 %v4986
    %7416 = vmatmul.bf16.gmra.mxu0 %v1104
    %v7417 = vpop.f32.mrf.mxu0
    %v7418 = vadd.f32 %v7405, %v7417
    %v7419 = vpop.f32.mrf.mxu0
    %7420 = vdwg.mxu0
    %7421 = vmatpush.bf16.msra.mxu0 %v5046
    %7422 = vmatpush.bf16.msra.mxu0 %v5042
    %7423 = vmatpush.bf16.msra.mxu0 %v5038
    %7424 = vmatpush.bf16.msra.mxu0 %v5034
    %7425 = vmatpush.bf16.msra.mxu0 %v5030
    %7426 = vmatpush.bf16.msra.mxu0 %v5026
    %7427 = vmatpush.bf16.msra.mxu0 %v5022
    %7428 = vmatpush.bf16.msra.mxu0 %v5018
    %7429 = vmatmul.bf16.gmra.mxu0 %v1105
    %v7430 = vpop.f32.mrf.mxu0
    %v7431 = vadd.f32 %v7418, %v7430
    %v7432 = vpop.f32.mrf.mxu0
    %7433 = vdwg.mxu0
    %7434 = vmatpush.bf16.msra.mxu0 %v5078
    %7435 = vmatpush.bf16.msra.mxu0 %v5074
    %7436 = vmatpush.bf16.msra.mxu0 %v5070
    %7437 = vmatpush.bf16.msra.mxu0 %v5066
    %7438 = vmatpush.bf16.msra.mxu0 %v5062
    %7439 = vmatpush.bf16.msra.mxu0 %v5058
    %7440 = vmatpush.bf16.msra.mxu0 %v5054
    %7441 = vmatpush.bf16.msra.mxu0 %v5050
    %7442 = vmatmul.bf16.gmra.mxu0 %v1106
    %v7443 = vpop.f32.mrf.mxu0
    %v7444 = vadd.f32 %v7431, %v7443
    %v7445 = vpop.f32.mrf.mxu0
    %7446 = vdwg.mxu0
    %7447 = vmatpush.bf16.msra.mxu0 %v5110
    %7448 = vmatpush.bf16.msra.mxu0 %v5106
    %7449 = vmatpush.bf16.msra.mxu0 %v5102
    %7450 = vmatpush.bf16.msra.mxu0 %v5098
    %7451 = vmatpush.bf16.msra.mxu0 %v5094
    %7452 = vmatpush.bf16.msra.mxu0 %v5090
    %7453 = vmatpush.bf16.msra.mxu0 %v5086
    %7454 = vmatpush.bf16.msra.mxu0 %v5082
    %7455 = vmatmul.bf16.gmra.mxu0 %v1107
    %v7456 = vpop.f32.mrf.mxu0
    %v7457 = vadd.f32 %v7444, %v7456
    %v7458 = vpop.f32.mrf.mxu0
    %7459 = vdwg.mxu0
    %7460 = vmatpush.bf16.msra.mxu0 %v5142
    %7461 = vmatpush.bf16.msra.mxu0 %v5138
    %7462 = vmatpush.bf16.msra.mxu0 %v5134
    %7463 = vmatpush.bf16.msra.mxu0 %v5130
    %7464 = vmatpush.bf16.msra.mxu0 %v5126
    %7465 = vmatpush.bf16.msra.mxu0 %v5122
    %7466 = vmatpush.bf16.msra.mxu0 %v5118
    %7467 = vmatpush.bf16.msra.mxu0 %v5114
    %7468 = vmatmul.bf16.gmra.mxu0 %v1108
    %v7469 = vpop.f32.mrf.mxu0
    %v7470 = vadd.f32 %v7457, %v7469
    %v7471 = vpop.f32.mrf.mxu0
    %7472 = vdwg.mxu0
    %7473 = vmatpush.bf16.msra.mxu0 %v5174
    %7474 = vmatpush.bf16.msra.mxu0 %v5170
    %7475 = vmatpush.bf16.msra.mxu0 %v5166
    %7476 = vmatpush.bf16.msra.mxu0 %v5162
    %7477 = vmatpush.bf16.msra.mxu0 %v5158
    %7478 = vmatpush.bf16.msra.mxu0 %v5154
    %7479 = vmatpush.bf16.msra.mxu0 %v5150
    %7480 = vmatpush.bf16.msra.mxu0 %v5146
    %7481 = vmatmul.bf16.gmra.mxu0 %v1109
    %v7482 = vpop.f32.mrf.mxu0
    %v7483 = vadd.f32 %v7470, %v7482
    %v7484 = vpop.f32.mrf.mxu0
    %7485 = vdwg.mxu0
    %7486 = vmatpush.bf16.msra.mxu0 %v5206
    %7487 = vmatpush.bf16.msra.mxu0 %v5202
    %7488 = vmatpush.bf16.msra.mxu0 %v5198
    %7489 = vmatpush.bf16.msra.mxu0 %v5194
    %7490 = vmatpush.bf16.msra.mxu0 %v5190
    %7491 = vmatpush.bf16.msra.mxu0 %v5186
    %7492 = vmatpush.bf16.msra.mxu0 %v5182
    %7493 = vmatpush.bf16.msra.mxu0 %v5178
    %7494 = vmatmul.bf16.gmra.mxu0 %v1110
    %v7495 = vpop.f32.mrf.mxu0
    %v7496 = vadd.f32 %v7483, %v7495
    %v7497 = vpop.f32.mrf.mxu0
    %7498 = vdwg.mxu0
    %7499 = vmatpush.bf16.msra.mxu0 %v5238
    %7500 = vmatpush.bf16.msra.mxu0 %v5234
    %7501 = vmatpush.bf16.msra.mxu0 %v5230
    %7502 = vmatpush.bf16.msra.mxu0 %v5226
    %7503 = vmatpush.bf16.msra.mxu0 %v5222
    %7504 = vmatpush.bf16.msra.mxu0 %v5218
    %7505 = vmatpush.bf16.msra.mxu0 %v5214
    %7506 = vmatpush.bf16.msra.mxu0 %v5210
    %7507 = vmatmul.bf16.gmra.mxu0 %v1111
    %v7508 = vpop.f32.mrf.mxu0
    %v7509 = vadd.f32 %v7496, %v7508
    %v7510 = vpop.f32.mrf.mxu0
    %7511 = vdwg.mxu0
    %7512 = vmatpush.bf16.msra.mxu0 %v4247
    %7513 = vmatpush.bf16.msra.mxu0 %v4243
    %7514 = vmatpush.bf16.msra.mxu0 %v4239
    %7515 = vmatpush.bf16.msra.mxu0 %v4235
    %7516 = vmatpush.bf16.msra.mxu0 %v4231
    %7517 = vmatpush.bf16.msra.mxu0 %v4227
    %7518 = vmatpush.bf16.msra.mxu0 %v4223
    %7519 = vmatpush.bf16.msra.mxu0 %v4219
    %7520 = vmatmul.bf16.gmra.mxu0 %v1074
    %v7521 = vpop.f32.mrf.mxu0
    %v7522 = vadd.f32 %v1067, %v7521
    %v7523 = vpop.f32.mrf.mxu0
    %7524 = vdwg.mxu0
    %7525 = vmatpush.bf16.msra.mxu0 %v4279
    %7526 = vmatpush.bf16.msra.mxu0 %v4275
    %7527 = vmatpush.bf16.msra.mxu0 %v4271
    %7528 = vmatpush.bf16.msra.mxu0 %v4267
    %7529 = vmatpush.bf16.msra.mxu0 %v4263
    %7530 = vmatpush.bf16.msra.mxu0 %v4259
    %7531 = vmatpush.bf16.msra.mxu0 %v4255
    %7532 = vmatpush.bf16.msra.mxu0 %v4251
    %7533 = vmatmul.bf16.gmra.mxu0 %v1075
    %v7534 = vpop.f32.mrf.mxu0
    %v7535 = vadd.f32 %v7522, %v7534
    %v7536 = vpop.f32.mrf.mxu0
    %7537 = vdwg.mxu0
    %7538 = vmatpush.bf16.msra.mxu0 %v4311
    %7539 = vmatpush.bf16.msra.mxu0 %v4307
    %7540 = vmatpush.bf16.msra.mxu0 %v4303
    %7541 = vmatpush.bf16.msra.mxu0 %v4299
    %7542 = vmatpush.bf16.msra.mxu0 %v4295
    %7543 = vmatpush.bf16.msra.mxu0 %v4291
    %7544 = vmatpush.bf16.msra.mxu0 %v4287
    %7545 = vmatpush.bf16.msra.mxu0 %v4283
    %7546 = vmatmul.bf16.gmra.mxu0 %v1076
    %v7547 = vpop.f32.mrf.mxu0
    %v7548 = vadd.f32 %v7535, %v7547
    %v7549 = vpop.f32.mrf.mxu0
    %7550 = vdwg.mxu0
    %7551 = vmatpush.bf16.msra.mxu0 %v4343
    %7552 = vmatpush.bf16.msra.mxu0 %v4339
    %7553 = vmatpush.bf16.msra.mxu0 %v4335
    %7554 = vmatpush.bf16.msra.mxu0 %v4331
    %7555 = vmatpush.bf16.msra.mxu0 %v4327
    %7556 = vmatpush.bf16.msra.mxu0 %v4323
    %7557 = vmatpush.bf16.msra.mxu0 %v4319
    %7558 = vmatpush.bf16.msra.mxu0 %v4315
    %7559 = vmatmul.bf16.gmra.mxu0 %v1077
    %v7560 = vpop.f32.mrf.mxu0
    %v7561 = vadd.f32 %v7548, %v7560
    %v7562 = vpop.f32.mrf.mxu0
    %7563 = vdwg.mxu0
    %7564 = vmatpush.bf16.msra.mxu0 %v4375
    %7565 = vmatpush.bf16.msra.mxu0 %v4371
    %7566 = vmatpush.bf16.msra.mxu0 %v4367
    %7567 = vmatpush.bf16.msra.mxu0 %v4363
    %7568 = vmatpush.bf16.msra.mxu0 %v4359
    %7569 = vmatpush.bf16.msra.mxu0 %v4355
    %7570 = vmatpush.bf16.msra.mxu0 %v4351
    %7571 = vmatpush.bf16.msra.mxu0 %v4347
    %7572 = vmatmul.bf16.gmra.mxu0 %v1078
    %v7573 = vpop.f32.mrf.mxu0
    %v7574 = vadd.f32 %v7561, %v7573
    %v7575 = vpop.f32.mrf.mxu0
    %7576 = vdwg.mxu0
    %7577 = vmatpush.bf16.msra.mxu0 %v4407
    %7578 = vmatpush.bf16.msra.mxu0 %v4403
    %7579 = vmatpush.bf16.msra.mxu0 %v4399
    %7580 = vmatpush.bf16.msra.mxu0 %v4395
    %7581 = vmatpush.bf16.msra.mxu0 %v4391
    %7582 = vmatpush.bf16.msra.mxu0 %v4387
    %7583 = vmatpush.bf16.msra.mxu0 %v4383
    %7584 = vmatpush.bf16.msra.mxu0 %v4379
    %7585 = vmatmul.bf16.gmra.mxu0 %v1079
    %v7586 = vpop.f32.mrf.mxu0
    %v7587 = vadd.f32 %v7574, %v7586
    %v7588 = vpop.f32.mrf.mxu0
    %7589 = vdwg.mxu0
    %7590 = vmatpush.bf16.msra.mxu0 %v4439
    %7591 = vmatpush.bf16.msra.mxu0 %v4435
    %7592 = vmatpush.bf16.msra.mxu0 %v4431
    %7593 = vmatpush.bf16.msra.mxu0 %v4427
    %7594 = vmatpush.bf16.msra.mxu0 %v4423
    %7595 = vmatpush.bf16.msra.mxu0 %v4419
    %7596 = vmatpush.bf16.msra.mxu0 %v4415
    %7597 = vmatpush.bf16.msra.mxu0 %v4411
    %7598 = vmatmul.bf16.gmra.mxu0 %v1080
    %v7599 = vpop.f32.mrf.mxu0
    %v7600 = vadd.f32 %v7587, %v7599
    %v7601 = vpop.f32.mrf.mxu0
    %7602 = vdwg.mxu0
    %7603 = vmatpush.bf16.msra.mxu0 %v4471
    %7604 = vmatpush.bf16.msra.mxu0 %v4467
    %7605 = vmatpush.bf16.msra.mxu0 %v4463
    %7606 = vmatpush.bf16.msra.mxu0 %v4459
    %7607 = vmatpush.bf16.msra.mxu0 %v4455
    %7608 = vmatpush.bf16.msra.mxu0 %v4451
    %7609 = vmatpush.bf16.msra.mxu0 %v4447
    %7610 = vmatpush.bf16.msra.mxu0 %v4443
    %7611 = vmatmul.bf16.gmra.mxu0 %v1081
    %v7612 = vpop.f32.mrf.mxu0
    %v7613 = vadd.f32 %v7600, %v7612
    %v7614 = vpop.f32.mrf.mxu0
    %7615 = vdwg.mxu0
    %7616 = vmatpush.bf16.msra.mxu0 %v4503
    %7617 = vmatpush.bf16.msra.mxu0 %v4499
    %7618 = vmatpush.bf16.msra.mxu0 %v4495
    %7619 = vmatpush.bf16.msra.mxu0 %v4491
    %7620 = vmatpush.bf16.msra.mxu0 %v4487
    %7621 = vmatpush.bf16.msra.mxu0 %v4483
    %7622 = vmatpush.bf16.msra.mxu0 %v4479
    %7623 = vmatpush.bf16.msra.mxu0 %v4475
    %7624 = vmatmul.bf16.gmra.mxu0 %v1084
    %v7625 = vpop.f32.mrf.mxu0
    %v7626 = vadd.f32 %v7613, %v7625
    %v7627 = vpop.f32.mrf.mxu0
    %7628 = vdwg.mxu0
    %7629 = vmatpush.bf16.msra.mxu0 %v4535
    %7630 = vmatpush.bf16.msra.mxu0 %v4531
    %7631 = vmatpush.bf16.msra.mxu0 %v4527
    %7632 = vmatpush.bf16.msra.mxu0 %v4523
    %7633 = vmatpush.bf16.msra.mxu0 %v4519
    %7634 = vmatpush.bf16.msra.mxu0 %v4515
    %7635 = vmatpush.bf16.msra.mxu0 %v4511
    %7636 = vmatpush.bf16.msra.mxu0 %v4507
    %7637 = vmatmul.bf16.gmra.mxu0 %v1085
    %v7638 = vpop.f32.mrf.mxu0
    %v7639 = vadd.f32 %v7626, %v7638
    %v7640 = vpop.f32.mrf.mxu0
    %7641 = vdwg.mxu0
    %7642 = vmatpush.bf16.msra.mxu0 %v4567
    %7643 = vmatpush.bf16.msra.mxu0 %v4563
    %7644 = vmatpush.bf16.msra.mxu0 %v4559
    %7645 = vmatpush.bf16.msra.mxu0 %v4555
    %7646 = vmatpush.bf16.msra.mxu0 %v4551
    %7647 = vmatpush.bf16.msra.mxu0 %v4547
    %7648 = vmatpush.bf16.msra.mxu0 %v4543
    %7649 = vmatpush.bf16.msra.mxu0 %v4539
    %7650 = vmatmul.bf16.gmra.mxu0 %v1086
    %v7651 = vpop.f32.mrf.mxu0
    %v7652 = vadd.f32 %v7639, %v7651
    %v7653 = vpop.f32.mrf.mxu0
    %7654 = vdwg.mxu0
    %7655 = vmatpush.bf16.msra.mxu0 %v4599
    %7656 = vmatpush.bf16.msra.mxu0 %v4595
    %7657 = vmatpush.bf16.msra.mxu0 %v4591
    %7658 = vmatpush.bf16.msra.mxu0 %v4587
    %7659 = vmatpush.bf16.msra.mxu0 %v4583
    %7660 = vmatpush.bf16.msra.mxu0 %v4579
    %7661 = vmatpush.bf16.msra.mxu0 %v4575
    %7662 = vmatpush.bf16.msra.mxu0 %v4571
    %7663 = vmatmul.bf16.gmra.mxu0 %v1087
    %v7664 = vpop.f32.mrf.mxu0
    %v7665 = vadd.f32 %v7652, %v7664
    %v7666 = vpop.f32.mrf.mxu0
    %7667 = vdwg.mxu0
    %7668 = vmatpush.bf16.msra.mxu0 %v4631
    %7669 = vmatpush.bf16.msra.mxu0 %v4627
    %7670 = vmatpush.bf16.msra.mxu0 %v4623
    %7671 = vmatpush.bf16.msra.mxu0 %v4619
    %7672 = vmatpush.bf16.msra.mxu0 %v4615
    %7673 = vmatpush.bf16.msra.mxu0 %v4611
    %7674 = vmatpush.bf16.msra.mxu0 %v4607
    %7675 = vmatpush.bf16.msra.mxu0 %v4603
    %7676 = vmatmul.bf16.gmra.mxu0 %v1088
    %v7677 = vpop.f32.mrf.mxu0
    %v7678 = vadd.f32 %v7665, %v7677
    %v7679 = vpop.f32.mrf.mxu0
    %7680 = vdwg.mxu0
    %7681 = vmatpush.bf16.msra.mxu0 %v4663
    %7682 = vmatpush.bf16.msra.mxu0 %v4659
    %7683 = vmatpush.bf16.msra.mxu0 %v4655
    %7684 = vmatpush.bf16.msra.mxu0 %v4651
    %7685 = vmatpush.bf16.msra.mxu0 %v4647
    %7686 = vmatpush.bf16.msra.mxu0 %v4643
    %7687 = vmatpush.bf16.msra.mxu0 %v4639
    %7688 = vmatpush.bf16.msra.mxu0 %v4635
    %7689 = vmatmul.bf16.gmra.mxu0 %v1089
    %v7690 = vpop.f32.mrf.mxu0
    %v7691 = vadd.f32 %v7678, %v7690
    %v7692 = vpop.f32.mrf.mxu0
    %7693 = vdwg.mxu0
    %7694 = vmatpush.bf16.msra.mxu0 %v4695
    %7695 = vmatpush.bf16.msra.mxu0 %v4691
    %7696 = vmatpush.bf16.msra.mxu0 %v4687
    %7697 = vmatpush.bf16.msra.mxu0 %v4683
    %7698 = vmatpush.bf16.msra.mxu0 %v4679
    %7699 = vmatpush.bf16.msra.mxu0 %v4675
    %7700 = vmatpush.bf16.msra.mxu0 %v4671
    %7701 = vmatpush.bf16.msra.mxu0 %v4667
    %7702 = vmatmul.bf16.gmra.mxu0 %v1090
    %v7703 = vpop.f32.mrf.mxu0
    %v7704 = vadd.f32 %v7691, %v7703
    %v7705 = vpop.f32.mrf.mxu0
    %7706 = vdwg.mxu0
    %7707 = vmatpush.bf16.msra.mxu0 %v4727
    %7708 = vmatpush.bf16.msra.mxu0 %v4723
    %7709 = vmatpush.bf16.msra.mxu0 %v4719
    %7710 = vmatpush.bf16.msra.mxu0 %v4715
    %7711 = vmatpush.bf16.msra.mxu0 %v4711
    %7712 = vmatpush.bf16.msra.mxu0 %v4707
    %7713 = vmatpush.bf16.msra.mxu0 %v4703
    %7714 = vmatpush.bf16.msra.mxu0 %v4699
    %7715 = vmatmul.bf16.gmra.mxu0 %v1091
    %v7716 = vpop.f32.mrf.mxu0
    %v7717 = vadd.f32 %v7704, %v7716
    %v7718 = vpop.f32.mrf.mxu0
    %7719 = vdwg.mxu0
    %7720 = vmatpush.bf16.msra.mxu0 %v4759
    %7721 = vmatpush.bf16.msra.mxu0 %v4755
    %7722 = vmatpush.bf16.msra.mxu0 %v4751
    %7723 = vmatpush.bf16.msra.mxu0 %v4747
    %7724 = vmatpush.bf16.msra.mxu0 %v4743
    %7725 = vmatpush.bf16.msra.mxu0 %v4739
    %7726 = vmatpush.bf16.msra.mxu0 %v4735
    %7727 = vmatpush.bf16.msra.mxu0 %v4731
    %7728 = vmatmul.bf16.gmra.mxu0 %v1094
    %v7729 = vpop.f32.mrf.mxu0
    %v7730 = vadd.f32 %v7717, %v7729
    %v7731 = vpop.f32.mrf.mxu0
    %7732 = vdwg.mxu0
    %7733 = vmatpush.bf16.msra.mxu0 %v4791
    %7734 = vmatpush.bf16.msra.mxu0 %v4787
    %7735 = vmatpush.bf16.msra.mxu0 %v4783
    %7736 = vmatpush.bf16.msra.mxu0 %v4779
    %7737 = vmatpush.bf16.msra.mxu0 %v4775
    %7738 = vmatpush.bf16.msra.mxu0 %v4771
    %7739 = vmatpush.bf16.msra.mxu0 %v4767
    %7740 = vmatpush.bf16.msra.mxu0 %v4763
    %7741 = vmatmul.bf16.gmra.mxu0 %v1095
    %v7742 = vpop.f32.mrf.mxu0
    %v7743 = vadd.f32 %v7730, %v7742
    %v7744 = vpop.f32.mrf.mxu0
    %7745 = vdwg.mxu0
    %7746 = vmatpush.bf16.msra.mxu0 %v4823
    %7747 = vmatpush.bf16.msra.mxu0 %v4819
    %7748 = vmatpush.bf16.msra.mxu0 %v4815
    %7749 = vmatpush.bf16.msra.mxu0 %v4811
    %7750 = vmatpush.bf16.msra.mxu0 %v4807
    %7751 = vmatpush.bf16.msra.mxu0 %v4803
    %7752 = vmatpush.bf16.msra.mxu0 %v4799
    %7753 = vmatpush.bf16.msra.mxu0 %v4795
    %7754 = vmatmul.bf16.gmra.mxu0 %v1096
    %v7755 = vpop.f32.mrf.mxu0
    %v7756 = vadd.f32 %v7743, %v7755
    %v7757 = vpop.f32.mrf.mxu0
    %7758 = vdwg.mxu0
    %7759 = vmatpush.bf16.msra.mxu0 %v4855
    %7760 = vmatpush.bf16.msra.mxu0 %v4851
    %7761 = vmatpush.bf16.msra.mxu0 %v4847
    %7762 = vmatpush.bf16.msra.mxu0 %v4843
    %7763 = vmatpush.bf16.msra.mxu0 %v4839
    %7764 = vmatpush.bf16.msra.mxu0 %v4835
    %7765 = vmatpush.bf16.msra.mxu0 %v4831
    %7766 = vmatpush.bf16.msra.mxu0 %v4827
    %7767 = vmatmul.bf16.gmra.mxu0 %v1097
    %v7768 = vpop.f32.mrf.mxu0
    %v7769 = vadd.f32 %v7756, %v7768
    %v7770 = vpop.f32.mrf.mxu0
    %7771 = vdwg.mxu0
    %7772 = vmatpush.bf16.msra.mxu0 %v4887
    %7773 = vmatpush.bf16.msra.mxu0 %v4883
    %7774 = vmatpush.bf16.msra.mxu0 %v4879
    %7775 = vmatpush.bf16.msra.mxu0 %v4875
    %7776 = vmatpush.bf16.msra.mxu0 %v4871
    %7777 = vmatpush.bf16.msra.mxu0 %v4867
    %7778 = vmatpush.bf16.msra.mxu0 %v4863
    %7779 = vmatpush.bf16.msra.mxu0 %v4859
    %7780 = vmatmul.bf16.gmra.mxu0 %v1098
    %v7781 = vpop.f32.mrf.mxu0
    %v7782 = vadd.f32 %v7769, %v7781
    %v7783 = vpop.f32.mrf.mxu0
    %7784 = vdwg.mxu0
    %7785 = vmatpush.bf16.msra.mxu0 %v4919
    %7786 = vmatpush.bf16.msra.mxu0 %v4915
    %7787 = vmatpush.bf16.msra.mxu0 %v4911
    %7788 = vmatpush.bf16.msra.mxu0 %v4907
    %7789 = vmatpush.bf16.msra.mxu0 %v4903
    %7790 = vmatpush.bf16.msra.mxu0 %v4899
    %7791 = vmatpush.bf16.msra.mxu0 %v4895
    %7792 = vmatpush.bf16.msra.mxu0 %v4891
    %7793 = vmatmul.bf16.gmra.mxu0 %v1099
    %v7794 = vpop.f32.mrf.mxu0
    %v7795 = vadd.f32 %v7782, %v7794
    %v7796 = vpop.f32.mrf.mxu0
    %7797 = vdwg.mxu0
    %7798 = vmatpush.bf16.msra.mxu0 %v4951
    %7799 = vmatpush.bf16.msra.mxu0 %v4947
    %7800 = vmatpush.bf16.msra.mxu0 %v4943
    %7801 = vmatpush.bf16.msra.mxu0 %v4939
    %7802 = vmatpush.bf16.msra.mxu0 %v4935
    %7803 = vmatpush.bf16.msra.mxu0 %v4931
    %7804 = vmatpush.bf16.msra.mxu0 %v4927
    %7805 = vmatpush.bf16.msra.mxu0 %v4923
    %7806 = vmatmul.bf16.gmra.mxu0 %v1100
    %v7807 = vpop.f32.mrf.mxu0
    %v7808 = vadd.f32 %v7795, %v7807
    %v7809 = vpop.f32.mrf.mxu0
    %7810 = vdwg.mxu0
    %7811 = vmatpush.bf16.msra.mxu0 %v4983
    %7812 = vmatpush.bf16.msra.mxu0 %v4979
    %7813 = vmatpush.bf16.msra.mxu0 %v4975
    %7814 = vmatpush.bf16.msra.mxu0 %v4971
    %7815 = vmatpush.bf16.msra.mxu0 %v4967
    %7816 = vmatpush.bf16.msra.mxu0 %v4963
    %7817 = vmatpush.bf16.msra.mxu0 %v4959
    %7818 = vmatpush.bf16.msra.mxu0 %v4955
    %7819 = vmatmul.bf16.gmra.mxu0 %v1101
    %v7820 = vpop.f32.mrf.mxu0
    %v7821 = vadd.f32 %v7808, %v7820
    %v7822 = vpop.f32.mrf.mxu0
    %7823 = vdwg.mxu0
    %7824 = vmatpush.bf16.msra.mxu0 %v5015
    %7825 = vmatpush.bf16.msra.mxu0 %v5011
    %7826 = vmatpush.bf16.msra.mxu0 %v5007
    %7827 = vmatpush.bf16.msra.mxu0 %v5003
    %7828 = vmatpush.bf16.msra.mxu0 %v4999
    %7829 = vmatpush.bf16.msra.mxu0 %v4995
    %7830 = vmatpush.bf16.msra.mxu0 %v4991
    %7831 = vmatpush.bf16.msra.mxu0 %v4987
    %7832 = vmatmul.bf16.gmra.mxu0 %v1104
    %v7833 = vpop.f32.mrf.mxu0
    %v7834 = vadd.f32 %v7821, %v7833
    %v7835 = vpop.f32.mrf.mxu0
    %7836 = vdwg.mxu0
    %7837 = vmatpush.bf16.msra.mxu0 %v5047
    %7838 = vmatpush.bf16.msra.mxu0 %v5043
    %7839 = vmatpush.bf16.msra.mxu0 %v5039
    %7840 = vmatpush.bf16.msra.mxu0 %v5035
    %7841 = vmatpush.bf16.msra.mxu0 %v5031
    %7842 = vmatpush.bf16.msra.mxu0 %v5027
    %7843 = vmatpush.bf16.msra.mxu0 %v5023
    %7844 = vmatpush.bf16.msra.mxu0 %v5019
    %7845 = vmatmul.bf16.gmra.mxu0 %v1105
    %v7846 = vpop.f32.mrf.mxu0
    %v7847 = vadd.f32 %v7834, %v7846
    %v7848 = vpop.f32.mrf.mxu0
    %7849 = vdwg.mxu0
    %7850 = vmatpush.bf16.msra.mxu0 %v5079
    %7851 = vmatpush.bf16.msra.mxu0 %v5075
    %7852 = vmatpush.bf16.msra.mxu0 %v5071
    %7853 = vmatpush.bf16.msra.mxu0 %v5067
    %7854 = vmatpush.bf16.msra.mxu0 %v5063
    %7855 = vmatpush.bf16.msra.mxu0 %v5059
    %7856 = vmatpush.bf16.msra.mxu0 %v5055
    %7857 = vmatpush.bf16.msra.mxu0 %v5051
    %7858 = vmatmul.bf16.gmra.mxu0 %v1106
    %v7859 = vpop.f32.mrf.mxu0
    %v7860 = vadd.f32 %v7847, %v7859
    %v7861 = vpop.f32.mrf.mxu0
    %7862 = vdwg.mxu0
    %7863 = vmatpush.bf16.msra.mxu0 %v5111
    %7864 = vmatpush.bf16.msra.mxu0 %v5107
    %7865 = vmatpush.bf16.msra.mxu0 %v5103
    %7866 = vmatpush.bf16.msra.mxu0 %v5099
    %7867 = vmatpush.bf16.msra.mxu0 %v5095
    %7868 = vmatpush.bf16.msra.mxu0 %v5091
    %7869 = vmatpush.bf16.msra.mxu0 %v5087
    %7870 = vmatpush.bf16.msra.mxu0 %v5083
    %7871 = vmatmul.bf16.gmra.mxu0 %v1107
    %v7872 = vpop.f32.mrf.mxu0
    %v7873 = vadd.f32 %v7860, %v7872
    %v7874 = vpop.f32.mrf.mxu0
    %7875 = vdwg.mxu0
    %7876 = vmatpush.bf16.msra.mxu0 %v5143
    %7877 = vmatpush.bf16.msra.mxu0 %v5139
    %7878 = vmatpush.bf16.msra.mxu0 %v5135
    %7879 = vmatpush.bf16.msra.mxu0 %v5131
    %7880 = vmatpush.bf16.msra.mxu0 %v5127
    %7881 = vmatpush.bf16.msra.mxu0 %v5123
    %7882 = vmatpush.bf16.msra.mxu0 %v5119
    %7883 = vmatpush.bf16.msra.mxu0 %v5115
    %7884 = vmatmul.bf16.gmra.mxu0 %v1108
    %v7885 = vpop.f32.mrf.mxu0
    %v7886 = vadd.f32 %v7873, %v7885
    %v7887 = vpop.f32.mrf.mxu0
    %7888 = vdwg.mxu0
    %7889 = vmatpush.bf16.msra.mxu0 %v5175
    %7890 = vmatpush.bf16.msra.mxu0 %v5171
    %7891 = vmatpush.bf16.msra.mxu0 %v5167
    %7892 = vmatpush.bf16.msra.mxu0 %v5163
    %7893 = vmatpush.bf16.msra.mxu0 %v5159
    %7894 = vmatpush.bf16.msra.mxu0 %v5155
    %7895 = vmatpush.bf16.msra.mxu0 %v5151
    %7896 = vmatpush.bf16.msra.mxu0 %v5147
    %7897 = vmatmul.bf16.gmra.mxu0 %v1109
    %v7898 = vpop.f32.mrf.mxu0
    %v7899 = vadd.f32 %v7886, %v7898
    %v7900 = vpop.f32.mrf.mxu0
    %7901 = vdwg.mxu0
    %7902 = vmatpush.bf16.msra.mxu0 %v5207
    %7903 = vmatpush.bf16.msra.mxu0 %v5203
    %7904 = vmatpush.bf16.msra.mxu0 %v5199
    %7905 = vmatpush.bf16.msra.mxu0 %v5195
    %7906 = vmatpush.bf16.msra.mxu0 %v5191
    %7907 = vmatpush.bf16.msra.mxu0 %v5187
    %7908 = vmatpush.bf16.msra.mxu0 %v5183
    %7909 = vmatpush.bf16.msra.mxu0 %v5179
    %7910 = vmatmul.bf16.gmra.mxu0 %v1110
    %v7911 = vpop.f32.mrf.mxu0
    %v7912 = vadd.f32 %v7899, %v7911
    %v7913 = vpop.f32.mrf.mxu0
    %7914 = vdwg.mxu0
    %7915 = vmatpush.bf16.msra.mxu0 %v5239
    %7916 = vmatpush.bf16.msra.mxu0 %v5235
    %7917 = vmatpush.bf16.msra.mxu0 %v5231
    %7918 = vmatpush.bf16.msra.mxu0 %v5227
    %7919 = vmatpush.bf16.msra.mxu0 %v5223
    %7920 = vmatpush.bf16.msra.mxu0 %v5219
    %7921 = vmatpush.bf16.msra.mxu0 %v5215
    %7922 = vmatpush.bf16.msra.mxu0 %v5211
    %7923 = vmatmul.bf16.gmra.mxu0 %v1111
    %v7924 = vpop.f32.mrf.mxu0
    %v7925 = vadd.f32 %v7912, %v7924
    %v7926 = vpop.f32.mrf.mxu0
    %7927 = vdwg.mxu0
    %v7928 = vpack.c.bf16 %v6677, %v6677
    %v7929 = vpack.c.bf16 %v7093, %v7093
    %v7930 = vpack.c.bf16 %v7509, %v7509
    %v7931 = vpack.c.bf16 %v7925, %v7925
    %v7932 = vld [vmem:[%s3] sm:$0xf]
    %v7933 = vld [vmem:[%s3 + $0x4] sm:$0xf]
    %v7934 = vld [vmem:[%s3 + $0x8] sm:$0xf]
    %v7935 = vld [vmem:[%s3 + $0xc] sm:$0xf]
    %v7936 = vld [vmem:[%s3 + $0x10] sm:$0xf]
    %v7937 = vld [vmem:[%s3 + $0x14] sm:$0xf]
    %v7938 = vld [vmem:[%s3 + $0x18] sm:$0xf]
    %v7939 = vld [vmem:[%s3 + $0x1c] sm:$0xf]
    %v7940 = vld [vmem:[%s3 + $0x20] sm:$0xf]
    %v7941 = vld [vmem:[%s3 + $0x24] sm:$0xf]
    %v7942 = vld [vmem:[%s3 + $0x28] sm:$0xf]
    %v7943 = vld [vmem:[%s3 + $0x2c] sm:$0xf]
    %v7944 = vld [vmem:[%s3 + $0x30] sm:$0xf]
    %v7945 = vld [vmem:[%s3 + $0x34] sm:$0xf]
    %v7946 = vld [vmem:[%s3 + $0x38] sm:$0xf]
    %v7947 = vld [vmem:[%s3 + $0x3c] sm:$0xf]
    %v7948 = vld [vmem:[%s3 + $0x40] sm:$0xf]
    %v7949 = vld [vmem:[%s3 + $0x44] sm:$0xf]
    %v7950 = vld [vmem:[%s3 + $0x48] sm:$0xf]
    %v7951 = vld [vmem:[%s3 + $0x4c] sm:$0xf]
    %v7952 = vld [vmem:[%s3 + $0x50] sm:$0xf]
    %v7953 = vld [vmem:[%s3 + $0x54] sm:$0xf]
    %v7954 = vld [vmem:[%s3 + $0x58] sm:$0xf]
    %v7955 = vld [vmem:[%s3 + $0x5c] sm:$0xf]
    %v7956 = vld [vmem:[%s3 + $0x60] sm:$0xf]
    %v7957 = vld [vmem:[%s3 + $0x64] sm:$0xf]
    %v7958 = vld [vmem:[%s3 + $0x68] sm:$0xf]
    %v7959 = vld [vmem:[%s3 + $0x6c] sm:$0xf]
    %v7960 = vld [vmem:[%s3 + $0x70] sm:$0xf]
    %v7961 = vld [vmem:[%s3 + $0x74] sm:$0xf]
    %v7962 = vld [vmem:[%s3 + $0x78] sm:$0xf]
    %v7963 = vld [vmem:[%s3 + $0x7c] sm:$0xf]
    %v7964 = vld [vmem:[%s3 + $0x80] sm:$0xf]
    %v7965 = vld [vmem:[%s3 + $0x84] sm:$0xf]
    %v7966 = vld [vmem:[%s3 + $0x88] sm:$0xf]
    %v7967 = vld [vmem:[%s3 + $0x8c] sm:$0xf]
    %v7968 = vld [vmem:[%s3 + $0x90] sm:$0xf]
    %v7969 = vld [vmem:[%s3 + $0x94] sm:$0xf]
    %v7970 = vld [vmem:[%s3 + $0x98] sm:$0xf]
    %v7971 = vld [vmem:[%s3 + $0x9c] sm:$0xf]
    %v7972 = vld [vmem:[%s3 + $0xa0] sm:$0xf]
    %v7973 = vld [vmem:[%s3 + $0xa4] sm:$0xf]
    %v7974 = vld [vmem:[%s3 + $0xa8] sm:$0xf]
    %v7975 = vld [vmem:[%s3 + $0xac] sm:$0xf]
    %v7976 = vld [vmem:[%s3 + $0xb0] sm:$0xf]
    %v7977 = vld [vmem:[%s3 + $0xb4] sm:$0xf]
    %v7978 = vld [vmem:[%s3 + $0xb8] sm:$0xf]
    %v7979 = vld [vmem:[%s3 + $0xbc] sm:$0xf]
    %v7980 = vld [vmem:[%s3 + $0xc0] sm:$0xf]
    %v7981 = vld [vmem:[%s3 + $0xc4] sm:$0xf]
    %v7982 = vld [vmem:[%s3 + $0xc8] sm:$0xf]
    %v7983 = vld [vmem:[%s3 + $0xcc] sm:$0xf]
    %v7984 = vld [vmem:[%s3 + $0xd0] sm:$0xf]
    %v7985 = vld [vmem:[%s3 + $0xd4] sm:$0xf]
    %v7986 = vld [vmem:[%s3 + $0xd8] sm:$0xf]
    %v7987 = vld [vmem:[%s3 + $0xdc] sm:$0xf]
    %v7988 = vld [vmem:[%s3 + $0xe0] sm:$0xf]
    %v7989 = vld [vmem:[%s3 + $0xe4] sm:$0xf]
    %v7990 = vld [vmem:[%s3 + $0xe8] sm:$0xf]
    %v7991 = vld [vmem:[%s3 + $0xec] sm:$0xf]
    %v7992 = vld [vmem:[%s3 + $0xf0] sm:$0xf]
    %v7993 = vld [vmem:[%s3 + $0xf4] sm:$0xf]
    %v7994 = vld [vmem:[%s3 + $0xf8] sm:$0xf]
    %v7995 = vld [vmem:[%s3 + $0xfc] sm:$0xf]
    %v7996 = vld [vmem:[%s4] sm:$0x1]
    %v7998 = vperm.slane %v7996, 0
    %v8064 = vunpack.c.l.b16 %v7932
    %v8065 = vunpack.c.l.b16 %v7933
    %v8066 = vunpack.c.l.b16 %v7934
    %v8067 = vunpack.c.l.b16 %v7935
    %v8068 = vunpack.c.l.b16 %v7936
    %v8069 = vunpack.c.l.b16 %v7937
    %v8070 = vunpack.c.l.b16 %v7938
    %v8071 = vunpack.c.l.b16 %v7939
    %v8072 = vunpack.c.l.b16 %v7940
    %v8073 = vunpack.c.l.b16 %v7941
    %v8074 = vunpack.c.l.b16 %v7942
    %v8075 = vunpack.c.l.b16 %v7943
    %v8076 = vunpack.c.l.b16 %v7944
    %v8077 = vunpack.c.l.b16 %v7945
    %v8078 = vunpack.c.l.b16 %v7946
    %v8079 = vunpack.c.l.b16 %v7947
    %v8080 = vunpack.c.l.b16 %v7948
    %v8081 = vunpack.c.l.b16 %v7949
    %v8082 = vunpack.c.l.b16 %v7950
    %v8083 = vunpack.c.l.b16 %v7951
    %v8084 = vunpack.c.l.b16 %v7952
    %v8085 = vunpack.c.l.b16 %v7953
    %v8086 = vunpack.c.l.b16 %v7954
    %v8087 = vunpack.c.l.b16 %v7955
    %v8088 = vunpack.c.l.b16 %v7956
    %v8089 = vunpack.c.l.b16 %v7957
    %v8090 = vunpack.c.l.b16 %v7958
    %v8091 = vunpack.c.l.b16 %v7959
    %v8092 = vunpack.c.l.b16 %v7960
    %v8093 = vunpack.c.l.b16 %v7961
    %v8094 = vunpack.c.l.b16 %v7962
    %v8095 = vunpack.c.l.b16 %v7963
    %v8096 = vunpack.c.l.b16 %v7964
    %v8097 = vunpack.c.l.b16 %v7965
    %v8098 = vunpack.c.l.b16 %v7966
    %v8099 = vunpack.c.l.b16 %v7967
    %v8100 = vunpack.c.l.b16 %v7968
    %v8101 = vunpack.c.l.b16 %v7969
    %v8102 = vunpack.c.l.b16 %v7970
    %v8103 = vunpack.c.l.b16 %v7971
    %v8104 = vunpack.c.l.b16 %v7972
    %v8105 = vunpack.c.l.b16 %v7973
    %v8106 = vunpack.c.l.b16 %v7974
    %v8107 = vunpack.c.l.b16 %v7975
    %v8108 = vunpack.c.l.b16 %v7976
    %v8109 = vunpack.c.l.b16 %v7977
    %v8110 = vunpack.c.l.b16 %v7978
    %v8111 = vunpack.c.l.b16 %v7979
    %v8112 = vunpack.c.l.b16 %v7980
    %v8113 = vunpack.c.l.b16 %v7981
    %v8114 = vunpack.c.l.b16 %v7982
    %v8115 = vunpack.c.l.b16 %v7983
    %v8116 = vunpack.c.l.b16 %v7984
    %v8117 = vunpack.c.l.b16 %v7985
    %v8118 = vunpack.c.l.b16 %v7986
    %v8119 = vunpack.c.l.b16 %v7987
    %v8120 = vunpack.c.l.b16 %v7988
    %v8121 = vunpack.c.l.b16 %v7989
    %v8122 = vunpack.c.l.b16 %v7990
    %v8123 = vunpack.c.l.b16 %v7991
    %v8124 = vunpack.c.l.b16 %v7992
    %v8125 = vunpack.c.l.b16 %v7993
    %v8126 = vunpack.c.l.b16 %v7994
    %v8127 = vunpack.c.l.b16 %v7995
    %v8128 = vpack.c.b16 %v8065, %v8064
    %v8129 = vpack.c.b16 %v8067, %v8066
    %v8130 = vpack.c.b16 %v8069, %v8068
    %v8131 = vpack.c.b16 %v8071, %v8070
    %v8132 = vpack.c.b16 %v8073, %v8072
    %v8133 = vpack.c.b16 %v8075, %v8074
    %v8134 = vpack.c.b16 %v8077, %v8076
    %v8135 = vpack.c.b16 %v8079, %v8078
    %v8136 = vpack.c.b16 %v8081, %v8080
    %v8137 = vpack.c.b16 %v8083, %v8082
    %v8138 = vpack.c.b16 %v8085, %v8084
    %v8139 = vpack.c.b16 %v8087, %v8086
    %v8140 = vpack.c.b16 %v8089, %v8088
    %v8141 = vpack.c.b16 %v8091, %v8090
    %v8142 = vpack.c.b16 %v8093, %v8092
    %v8143 = vpack.c.b16 %v8095, %v8094
    %v8144 = vpack.c.b16 %v8097, %v8096
    %v8145 = vpack.c.b16 %v8099, %v8098
    %v8146 = vpack.c.b16 %v8101, %v8100
    %v8147 = vpack.c.b16 %v8103, %v8102
    %v8148 = vpack.c.b16 %v8105, %v8104
    %v8149 = vpack.c.b16 %v8107, %v8106
    %v8150 = vpack.c.b16 %v8109, %v8108
    %v8151 = vpack.c.b16 %v8111, %v8110
    %v8152 = vpack.c.b16 %v8113, %v8112
    %v8153 = vpack.c.b16 %v8115, %v8114
    %v8154 = vpack.c.b16 %v8117, %v8116
    %v8155 = vpack.c.b16 %v8119, %v8118
    %v8156 = vpack.c.b16 %v8121, %v8120
    %v8157 = vpack.c.b16 %v8123, %v8122
    %v8158 = vpack.c.b16 %v8125, %v8124
    %v8159 = vpack.c.b16 %v8127, %v8126
    %8192 = vmatpush.bf16.msra.mxu0 %v8135
    %8193 = vmatpush.bf16.msra.mxu0 %v8134
    %8194 = vmatpush.bf16.msra.mxu0 %v8133
    %8195 = vmatpush.bf16.msra.mxu0 %v8132
    %8196 = vmatpush.bf16.msra.mxu0 %v8131
    %8197 = vmatpush.bf16.msra.mxu0 %v8130
    %8198 = vmatpush.bf16.msra.mxu0 %v8129
    %8199 = vmatpush.bf16.msra.mxu0 %v8128
    %8200 = vmatmul.bf16.gmra.mxu0 %v7928
    %v8201 = vpop.f32.mrf.mxu0
    %v8202 = vadd.f32 %v7998, %v8201
    %v8203 = vpop.f32.mrf.mxu0
    %8204 = vdwg.mxu0
    %8205 = vmatpush.bf16.msra.mxu0 %v8143
    %8206 = vmatpush.bf16.msra.mxu0 %v8142
    %8207 = vmatpush.bf16.msra.mxu0 %v8141
    %8208 = vmatpush.bf16.msra.mxu0 %v8140
    %8209 = vmatpush.bf16.msra.mxu0 %v8139
    %8210 = vmatpush.bf16.msra.mxu0 %v8138
    %8211 = vmatpush.bf16.msra.mxu0 %v8137
    %8212 = vmatpush.bf16.msra.mxu0 %v8136
    %8213 = vmatmul.bf16.gmra.mxu0 %v7929
    %v8214 = vpop.f32.mrf.mxu0
    %v8215 = vadd.f32 %v8202, %v8214
    %v8216 = vpop.f32.mrf.mxu0
    %8217 = vdwg.mxu0
    %8218 = vmatpush.bf16.msra.mxu0 %v8151
    %8219 = vmatpush.bf16.msra.mxu0 %v8150
    %8220 = vmatpush.bf16.msra.mxu0 %v8149
    %8221 = vmatpush.bf16.msra.mxu0 %v8148
    %8222 = vmatpush.bf16.msra.mxu0 %v8147
    %8223 = vmatpush.bf16.msra.mxu0 %v8146
    %8224 = vmatpush.bf16.msra.mxu0 %v8145
    %8225 = vmatpush.bf16.msra.mxu0 %v8144
    %8226 = vmatmul.bf16.gmra.mxu0 %v7930
    %v8227 = vpop.f32.mrf.mxu0
    %v8228 = vadd.f32 %v8215, %v8227
    %v8229 = vpop.f32.mrf.mxu0
    %8230 = vdwg.mxu0
    %8231 = vmatpush.bf16.msra.mxu0 %v8159
    %8232 = vmatpush.bf16.msra.mxu0 %v8158
    %8233 = vmatpush.bf16.msra.mxu0 %v8157
    %8234 = vmatpush.bf16.msra.mxu0 %v8156
    %8235 = vmatpush.bf16.msra.mxu0 %v8155
    %8236 = vmatpush.bf16.msra.mxu0 %v8154
    %8237 = vmatpush.bf16.msra.mxu0 %v8153
    %8238 = vmatpush.bf16.msra.mxu0 %v8152
    %8239 = vmatmul.bf16.gmra.mxu0 %v7931
    %v8240 = vpop.f32.mrf.mxu0
    %v8241 = vadd.f32 %v8228, %v8240
    %v8242 = vpop.f32.mrf.mxu0
    %8243 = vdwg.mxu0
    %v8244 = vpack.c.bf16 %v8241, %v8241
    %v8245 = vld [vmem:[%s5] sm:$0xff]
    %v8246 = vld [vmem:[%s5 + $0x8] sm:$0xff]
    %v8247 = vld [vmem:[%s5 + $0x10] sm:$0xff]
    %v8248 = vld [vmem:[%s5 + $0x18] sm:$0xff]
    %v8249 = vld [vmem:[%s5 + $0x20] sm:$0xff]
    %v8250 = vld [vmem:[%s5 + $0x28] sm:$0xff]
    %v8251 = vld [vmem:[%s5 + $0x30] sm:$0xff]
    %v8252 = vld [vmem:[%s5 + $0x38] sm:$0xff]
    %v8253 = vld [vmem:[%s5 + $0x40] sm:$0xff]
    %v8254 = vld [vmem:[%s5 + $0x48] sm:$0xff]
    %v8255 = vld [vmem:[%s5 + $0x50] sm:$0xff]
    %v8256 = vld [vmem:[%s5 + $0x58] sm:$0xff]
    %v8257 = vld [vmem:[%s5 + $0x60] sm:$0xff]
    %v8258 = vld [vmem:[%s5 + $0x68] sm:$0xff]
    %v8259 = vld [vmem:[%s5 + $0x70] sm:$0xff]
    %v8260 = vld [vmem:[%s5 + $0x78] sm:$0xff]
    %v8261 = vld [vmem:[%s5 + $0x80] sm:$0xff]
    %v8262 = vld [vmem:[%s5 + $0x88] sm:$0xff]
    %v8263 = vld [vmem:[%s5 + $0x90] sm:$0xff]
    %v8264 = vld [vmem:[%s5 + $0x98] sm:$0xff]
    %v8265 = vld [vmem:[%s5 + $0xa0] sm:$0xff]
    %v8266 = vld [vmem:[%s5 + $0xa8] sm:$0xff]
    %v8267 = vld [vmem:[%s5 + $0xb0] sm:$0xff]
    %v8268 = vld [vmem:[%s5 + $0xb8] sm:$0xff]
    %v8269 = vld [vmem:[%s5 + $0xc0] sm:$0xff]
    %v8270 = vld [vmem:[%s5 + $0xc8] sm:$0xff]
    %v8271 = vld [vmem:[%s5 + $0xd0] sm:$0xff]
    %v8272 = vld [vmem:[%s5 + $0xd8] sm:$0xff]
    %v8273 = vld [vmem:[%s5 + $0xe0] sm:$0xff]
    %v8274 = vld [vmem:[%s5 + $0xe8] sm:$0xff]
    %v8275 = vld [vmem:[%s5 + $0xf0] sm:$0xff]
    %v8276 = vld [vmem:[%s5 + $0xf8] sm:$0xff]
    %v8277 = vld [vmem:[%s6] sm:$0xff]
    %v8279 = vperm.slane %v8277, 0
    %v8280 = vperm.slane %v8277, 1
    %v8281 = vperm.slane %v8277, 2
    %v8282 = vperm.slane %v8277, 3
    %v8283 = vperm.slane %v8277, 4
    %v8284 = vperm.slane %v8277, 5
    %v8285 = vperm.slane %v8277, 6
    %v8286 = vperm.slane %v8277, 7
    %v8327 = vunpack.c.l.b16 %v8245
    %v8328 = vunpack.c.h.b16 %v8245
    %v8329 = vunpack.c.l.b16 %v8246
    %v8330 = vunpack.c.h.b16 %v8246
    %v8331 = vunpack.c.l.b16 %v8247
    %v8332 = vunpack.c.h.b16 %v8247
    %v8333 = vunpack.c.l.b16 %v8248
    %v8334 = vunpack.c.h.b16 %v8248
    %v8335 = vunpack.c.l.b16 %v8249
    %v8336 = vunpack.c.h.b16 %v8249
    %v8337 = vunpack.c.l.b16 %v8250
    %v8338 = vunpack.c.h.b16 %v8250
    %v8339 = vunpack.c.l.b16 %v8251
    %v8340 = vunpack.c.h.b16 %v8251
    %v8341 = vunpack.c.l.b16 %v8252
    %v8342 = vunpack.c.h.b16 %v8252
    %v8343 = vunpack.c.l.b16 %v8253
    %v8344 = vunpack.c.h.b16 %v8253
    %v8345 = vunpack.c.l.b16 %v8254
    %v8346 = vunpack.c.h.b16 %v8254
    %v8347 = vunpack.c.l.b16 %v8255
    %v8348 = vunpack.c.h.b16 %v8255
    %v8349 = vunpack.c.l.b16 %v8256
    %v8350 = vunpack.c.h.b16 %v8256
    %v8351 = vunpack.c.l.b16 %v8257
    %v8352 = vunpack.c.h.b16 %v8257
    %v8353 = vunpack.c.l.b16 %v8258
    %v8354 = vunpack.c.h.b16 %v8258
    %v8355 = vunpack.c.l.b16 %v8259
    %v8356 = vunpack.c.h.b16 %v8259
    %v8357 = vunpack.c.l.b16 %v8260
    %v8358 = vunpack.c.h.b16 %v8260
    %v8359 = vunpack.c.l.b16 %v8261
    %v8360 = vunpack.c.h.b16 %v8261
    %v8361 = vunpack.c.l.b16 %v8262
    %v8362 = vunpack.c.h.b16 %v8262
    %v8363 = vunpack.c.l.b16 %v8263
    %v8364 = vunpack.c.h.b16 %v8263
    %v8365 = vunpack.c.l.b16 %v8264
    %v8366 = vunpack.c.h.b16 %v8264
    %v8367 = vunpack.c.l.b16 %v8265
    %v8368 = vunpack.c.h.b16 %v8265
    %v8369 = vunpack.c.l.b16 %v8266
    %v8370 = vunpack.c.h.b16 %v8266
    %v8371 = vunpack.c.l.b16 %v8267
    %v8372 = vunpack.c.h.b16 %v8267
    %v8373 = vunpack.c.l.b16 %v8268
    %v8374 = vunpack.c.h.b16 %v8268
    %v8375 = vunpack.c.l.b16 %v8269
    %v8376 = vunpack.c.h.b16 %v8269
    %v8377 = vunpack.c.l.b16 %v8270
    %v8378 = vunpack.c.h.b16 %v8270
    %v8379 = vunpack.c.l.b16 %v8271
    %v8380 = vunpack.c.h.b16 %v8271
    %v8381 = vunpack.c.l.b16 %v8272
    %v8382 = vunpack.c.h.b16 %v8272
    %v8383 = vunpack.c.l.b16 %v8273
    %v8384 = vunpack.c.h.b16 %v8273
    %v8385 = vunpack.c.l.b16 %v8274
    %v8386 = vunpack.c.h.b16 %v8274
    %v8387 = vunpack.c.l.b16 %v8275
    %v8388 = vunpack.c.h.b16 %v8275
    %v8389 = vunpack.c.l.b16 %v8276
    %v8390 = vunpack.c.h.b16 %v8276
    %v8391 = vpack.c.b16 %v8335, %v8327
    %v8392 = vpack.c.b16 %v8336, %v8328
    %v8393 = vpack.c.b16 %v8337, %v8329
    %v8394 = vpack.c.b16 %v8338, %v8330
    %v8395 = vpack.c.b16 %v8339, %v8331
    %v8396 = vpack.c.b16 %v8340, %v8332
    %v8397 = vpack.c.b16 %v8341, %v8333
    %v8398 = vpack.c.b16 %v8342, %v8334
    %v8399 = vpack.c.b16 %v8351, %v8343
    %v8400 = vpack.c.b16 %v8352, %v8344
    %v8401 = vpack.c.b16 %v8353, %v8345
    %v8402 = vpack.c.b16 %v8354, %v8346
    %v8403 = vpack.c.b16 %v8355, %v8347
    %v8404 = vpack.c.b16 %v8356, %v8348
    %v8405 = vpack.c.b16 %v8357, %v8349
    %v8406 = vpack.c.b16 %v8358, %v8350
    %v8407 = vpack.c.b16 %v8367, %v8359
    %v8408 = vpack.c.b16 %v8368, %v8360
    %v8409 = vpack.c.b16 %v8369, %v8361
    %v8410 = vpack.c.b16 %v8370, %v8362
    %v8411 = vpack.c.b16 %v8371, %v8363
    %v8412 = vpack.c.b16 %v8372, %v8364
    %v8413 = vpack.c.b16 %v8373, %v8365
    %v8414 = vpack.c.b16 %v8374, %v8366
    %v8415 = vpack.c.b16 %v8383, %v8375
    %v8416 = vpack.c.b16 %v8384, %v8376
    %v8417 = vpack.c.b16 %v8385, %v8377
    %v8418 = vpack.c.b16 %v8386, %v8378
    %v8419 = vpack.c.b16 %v8387, %v8379
    %v8420 = vpack.c.b16 %v8388, %v8380
    %v8421 = vpack.c.b16 %v8389, %v8381
    %v8422 = vpack.c.b16 %v8390, %v8382
    %vm8455 = vcmask 523264
    %v8457 = vsel %vm8455, %v8244, 0
    %8459 = vmatpush.bf16.msra.mxu0 0
    %8460 = vmatpush.bf16.msra.mxu0 0
    %8461 = vmatpush.bf16.msra.mxu0 0
    %8462 = vmatpush.bf16.msra.mxu0 0
    %8463 = vmatpush.bf16.msra.mxu0 %v8415
    %8464 = vmatpush.bf16.msra.mxu0 %v8407
    %8465 = vmatpush.bf16.msra.mxu0 %v8399
    %8466 = vmatpush.bf16.msra.mxu0 %v8391
    %8467 = vmatmul.bf16.gmra.mxu0 %v8457
    %v8468 = vpop.f32.mrf.mxu0
    %v8469 = vadd.f32 %v8279, %v8468
    %v8470 = vpop.f32.mrf.mxu0
    %8471 = vdwg.mxu0
    %8472 = vmatpush.bf16.msra.mxu0 0
    %8473 = vmatpush.bf16.msra.mxu0 0
    %8474 = vmatpush.bf16.msra.mxu0 0
    %8475 = vmatpush.bf16.msra.mxu0 0
    %8476 = vmatpush.bf16.msra.mxu0 %v8416
    %8477 = vmatpush.bf16.msra.mxu0 %v8408
    %8478 = vmatpush.bf16.msra.mxu0 %v8400
    %8479 = vmatpush.bf16.msra.mxu0 %v8392
    %8480 = vmatmul.bf16.gmra.mxu0 %v8457
    %v8481 = vpop.f32.mrf.mxu0
    %v8482 = vadd.f32 %v8280, %v8481
    %v8483 = vpop.f32.mrf.mxu0
    %8484 = vdwg.mxu0
    %8485 = vmatpush.bf16.msra.mxu0 0
    %8486 = vmatpush.bf16.msra.mxu0 0
    %8487 = vmatpush.bf16.msra.mxu0 0
    %8488 = vmatpush.bf16.msra.mxu0 0
    %8489 = vmatpush.bf16.msra.mxu0 %v8417
    %8490 = vmatpush.bf16.msra.mxu0 %v8409
    %8491 = vmatpush.bf16.msra.mxu0 %v8401
    %8492 = vmatpush.bf16.msra.mxu0 %v8393
    %8493 = vmatmul.bf16.gmra.mxu0 %v8457
    %v8494 = vpop.f32.mrf.mxu0
    %v8495 = vadd.f32 %v8281, %v8494
    %v8496 = vpop.f32.mrf.mxu0
    %8497 = vdwg.mxu0
    %8498 = vmatpush.bf16.msra.mxu0 0
    %8499 = vmatpush.bf16.msra.mxu0 0
    %8500 = vmatpush.bf16.msra.mxu0 0
    %8501 = vmatpush.bf16.msra.mxu0 0
    %8502 = vmatpush.bf16.msra.mxu0 %v8418
    %8503 = vmatpush.bf16.msra.mxu0 %v8410
    %8504 = vmatpush.bf16.msra.mxu0 %v8402
    %8505 = vmatpush.bf16.msra.mxu0 %v8394
    %8506 = vmatmul.bf16.gmra.mxu0 %v8457
    %v8507 = vpop.f32.mrf.mxu0
    %v8508 = vadd.f32 %v8282, %v8507
    %v8509 = vpop.f32.mrf.mxu0
    %8510 = vdwg.mxu0
    %8511 = vmatpush.bf16.msra.mxu0 0
    %8512 = vmatpush.bf16.msra.mxu0 0
    %8513 = vmatpush.bf16.msra.mxu0 0
    %8514 = vmatpush.bf16.msra.mxu0 0
    %8515 = vmatpush.bf16.msra.mxu0 %v8419
    %8516 = vmatpush.bf16.msra.mxu0 %v8411
    %8517 = vmatpush.bf16.msra.mxu0 %v8403
    %8518 = vmatpush.bf16.msra.mxu0 %v8395
    %8519 = vmatmul.bf16.gmra.mxu0 %v8457
    %v8520 = vpop.f32.mrf.mxu0
    %v8521 = vadd.f32 %v8283, %v8520
    %v8522 = vpop.f32.mrf.mxu0
    %8523 = vdwg.mxu0
    %8524 = vmatpush.bf16.msra.mxu0 0
    %8525 = vmatpush.bf16.msra.mxu0 0
    %8526 = vmatpush.bf16.msra.mxu0 0
    %8527 = vmatpush.bf16.msra.mxu0 0
    %8528 = vmatpush.bf16.msra.mxu0 %v8420
    %8529 = vmatpush.bf16.msra.mxu0 %v8412
    %8530 = vmatpush.bf16.msra.mxu0 %v8404
    %8531 = vmatpush.bf16.msra.mxu0 %v8396
    %8532 = vmatmul.bf16.gmra.mxu0 %v8457
    %v8533 = vpop.f32.mrf.mxu0
    %v8534 = vadd.f32 %v8284, %v8533
    %v8535 = vpop.f32.mrf.mxu0
    %8536 = vdwg.mxu0
    %8537 = vmatpush.bf16.msra.mxu0 0
    %8538 = vmatpush.bf16.msra.mxu0 0
    %8539 = vmatpush.bf16.msra.mxu0 0
    %8540 = vmatpush.bf16.msra.mxu0 0
    %8541 = vmatpush.bf16.msra.mxu0 %v8421
    %8542 = vmatpush.bf16.msra.mxu0 %v8413
    %8543 = vmatpush.bf16.msra.mxu0 %v8405
    %8544 = vmatpush.bf16.msra.mxu0 %v8397
    %8545 = vmatmul.bf16.gmra.mxu0 %v8457
    %v8546 = vpop.f32.mrf.mxu0
    %v8547 = vadd.f32 %v8285, %v8546
    %v8548 = vpop.f32.mrf.mxu0
    %8549 = vdwg.mxu0
    %8550 = vmatpush.bf16.msra.mxu0 0
    %8551 = vmatpush.bf16.msra.mxu0 0
    %8552 = vmatpush.bf16.msra.mxu0 0
    %8553 = vmatpush.bf16.msra.mxu0 0
    %8554 = vmatpush.bf16.msra.mxu0 %v8422
    %8555 = vmatpush.bf16.msra.mxu0 %v8414
    %8556 = vmatpush.bf16.msra.mxu0 %v8406
    %8557 = vmatpush.bf16.msra.mxu0 %v8398
    %8558 = vmatmul.bf16.gmra.mxu0 %v8457
    %v8559 = vpop.f32.mrf.mxu0
    %v8560 = vadd.f32 %v8286, %v8559
    %v8561 = vpop.f32.mrf.mxu0
    %8562 = vdwg.mxu0
    %v8563 = vpack.c.bf16 %v8469, %v8469
    %v8564 = vpack.c.bf16 %v8482, %v8482
    %v8565 = vpack.c.bf16 %v8495, %v8495
    %v8566 = vpack.c.bf16 %v8508, %v8508
    %v8567 = vpack.c.bf16 %v8521, %v8521
    %v8568 = vpack.c.bf16 %v8534, %v8534
    %v8569 = vpack.c.bf16 %v8547, %v8547
    %v8570 = vpack.c.bf16 %v8560, %v8560
    %v8571 = vld [vmem:[%s7] sm:$0xff]
    %v8572 = vld [vmem:[%s7 + $0x8] sm:$0xff]
    %v8573 = vld [vmem:[%s7 + $0x10] sm:$0xff]
    %v8574 = vld [vmem:[%s7 + $0x18] sm:$0xff]
    %v8575 = vld [vmem:[%s7 + $0x20] sm:$0xff]
    %v8576 = vld [vmem:[%s7 + $0x28] sm:$0xff]
    %v8577 = vld [vmem:[%s7 + $0x30] sm:$0xff]
    %v8578 = vld [vmem:[%s7 + $0x38] sm:$0xff]
    %v8579 = vld [vmem:[%s7 + $0x40] sm:$0xff]
    %v8580 = vld [vmem:[%s7 + $0x48] sm:$0xff]
    %v8581 = vld [vmem:[%s7 + $0x50] sm:$0xff]
    %v8582 = vld [vmem:[%s7 + $0x58] sm:$0xff]
    %v8583 = vld [vmem:[%s7 + $0x60] sm:$0xff]
    %v8584 = vld [vmem:[%s7 + $0x68] sm:$0xff]
    %v8585 = vld [vmem:[%s7 + $0x70] sm:$0xff]
    %v8586 = vld [vmem:[%s7 + $0x78] sm:$0xff]
    %v8587 = vld [vmem:[%s7 + $0x80] sm:$0xff]
    %v8588 = vld [vmem:[%s7 + $0x88] sm:$0xff]
    %v8589 = vld [vmem:[%s7 + $0x90] sm:$0xff]
    %v8590 = vld [vmem:[%s7 + $0x98] sm:$0xff]
    %v8591 = vld [vmem:[%s7 + $0xa0] sm:$0xff]
    %v8592 = vld [vmem:[%s7 + $0xa8] sm:$0xff]
    %v8593 = vld [vmem:[%s7 + $0xb0] sm:$0xff]
    %v8594 = vld [vmem:[%s7 + $0xb8] sm:$0xff]
    %v8595 = vld [vmem:[%s7 + $0xc0] sm:$0xff]
    %v8596 = vld [vmem:[%s7 + $0xc8] sm:$0xff]
    %v8597 = vld [vmem:[%s7 + $0xd0] sm:$0xff]
    %v8598 = vld [vmem:[%s7 + $0xd8] sm:$0xff]
    %v8599 = vld [vmem:[%s7 + $0xe0] sm:$0xff]
    %v8600 = vld [vmem:[%s7 + $0xe8] sm:$0xff]
    %v8601 = vld [vmem:[%s7 + $0xf0] sm:$0xff]
    %v8602 = vld [vmem:[%s7 + $0xf8] sm:$0xff]
    %v8603 = vld [vmem:[%s7 + $0x100] sm:$0xff]
    %v8604 = vld [vmem:[%s7 + $0x108] sm:$0xff]
    %v8605 = vld [vmem:[%s7 + $0x110] sm:$0xff]
    %v8606 = vld [vmem:[%s7 + $0x118] sm:$0xff]
    %v8607 = vld [vmem:[%s7 + $0x120] sm:$0xff]
    %v8608 = vld [vmem:[%s7 + $0x128] sm:$0xff]
    %v8609 = vld [vmem:[%s7 + $0x130] sm:$0xff]
    %v8610 = vld [vmem:[%s7 + $0x138] sm:$0xff]
    %v8611 = vld [vmem:[%s7 + $0x140] sm:$0xff]
    %v8612 = vld [vmem:[%s7 + $0x148] sm:$0xff]
    %v8613 = vld [vmem:[%s7 + $0x150] sm:$0xff]
    %v8614 = vld [vmem:[%s7 + $0x158] sm:$0xff]
    %v8615 = vld [vmem:[%s7 + $0x160] sm:$0xff]
    %v8616 = vld [vmem:[%s7 + $0x168] sm:$0xff]
    %v8617 = vld [vmem:[%s7 + $0x170] sm:$0xff]
    %v8618 = vld [vmem:[%s7 + $0x178] sm:$0xff]
    %v8619 = vld [vmem:[%s7 + $0x180] sm:$0xff]
    %v8620 = vld [vmem:[%s7 + $0x188] sm:$0xff]
    %v8621 = vld [vmem:[%s7 + $0x190] sm:$0xff]
    %v8622 = vld [vmem:[%s7 + $0x198] sm:$0xff]
    %v8623 = vld [vmem:[%s7 + $0x1a0] sm:$0xff]
    %v8624 = vld [vmem:[%s7 + $0x1a8] sm:$0xff]
    %v8625 = vld [vmem:[%s7 + $0x1b0] sm:$0xff]
    %v8626 = vld [vmem:[%s7 + $0x1b8] sm:$0xff]
    %v8627 = vld [vmem:[%s7 + $0x1c0] sm:$0xff]
    %v8628 = vld [vmem:[%s7 + $0x1c8] sm:$0xff]
    %v8629 = vld [vmem:[%s7 + $0x1d0] sm:$0xff]
    %v8630 = vld [vmem:[%s7 + $0x1d8] sm:$0xff]
    %v8631 = vld [vmem:[%s7 + $0x1e0] sm:$0xff]
    %v8632 = vld [vmem:[%s7 + $0x1e8] sm:$0xff]
    %v8633 = vld [vmem:[%s7 + $0x1f0] sm:$0xff]
    %v8634 = vld [vmem:[%s7 + $0x1f8] sm:$0xff]
    %v8635 = vld [vmem:[%s7 + $0x200] sm:$0xff]
    %v8636 = vld [vmem:[%s7 + $0x208] sm:$0xff]
    %v8637 = vld [vmem:[%s7 + $0x210] sm:$0xff]
    %v8638 = vld [vmem:[%s7 + $0x218] sm:$0xff]
    %v8639 = vld [vmem:[%s7 + $0x220] sm:$0xff]
    %v8640 = vld [vmem:[%s7 + $0x228] sm:$0xff]
    %v8641 = vld [vmem:[%s7 + $0x230] sm:$0xff]
    %v8642 = vld [vmem:[%s7 + $0x238] sm:$0xff]
    %v8643 = vld [vmem:[%s7 + $0x240] sm:$0xff]
    %v8644 = vld [vmem:[%s7 + $0x248] sm:$0xff]
    %v8645 = vld [vmem:[%s7 + $0x250] sm:$0xff]
    %v8646 = vld [vmem:[%s7 + $0x258] sm:$0xff]
    %v8647 = vld [vmem:[%s7 + $0x260] sm:$0xff]
    %v8648 = vld [vmem:[%s7 + $0x268] sm:$0xff]
    %v8649 = vld [vmem:[%s7 + $0x270] sm:$0xff]
    %v8650 = vld [vmem:[%s7 + $0x278] sm:$0xff]
    %v8651 = vld [vmem:[%s7 + $0x280] sm:$0xff]
    %v8652 = vld [vmem:[%s7 + $0x288] sm:$0xff]
    %v8653 = vld [vmem:[%s7 + $0x290] sm:$0xff]
    %v8654 = vld [vmem:[%s7 + $0x298] sm:$0xff]
    %v8655 = vld [vmem:[%s7 + $0x2a0] sm:$0xff]
    %v8656 = vld [vmem:[%s7 + $0x2a8] sm:$0xff]
    %v8657 = vld [vmem:[%s7 + $0x2b0] sm:$0xff]
    %v8658 = vld [vmem:[%s7 + $0x2b8] sm:$0xff]
    %v8659 = vld [vmem:[%s7 + $0x2c0] sm:$0xff]
    %v8660 = vld [vmem:[%s7 + $0x2c8] sm:$0xff]
    %v8661 = vld [vmem:[%s7 + $0x2d0] sm:$0xff]
    %v8662 = vld [vmem:[%s7 + $0x2d8] sm:$0xff]
    %v8663 = vld [vmem:[%s7 + $0x2e0] sm:$0xff]
    %v8664 = vld [vmem:[%s7 + $0x2e8] sm:$0xff]
    %v8665 = vld [vmem:[%s7 + $0x2f0] sm:$0xff]
    %v8666 = vld [vmem:[%s7 + $0x2f8] sm:$0xff]
    %v8667 = vld [vmem:[%s7 + $0x300] sm:$0xff]
    %v8668 = vld [vmem:[%s7 + $0x308] sm:$0xff]
    %v8669 = vld [vmem:[%s7 + $0x310] sm:$0xff]
    %v8670 = vld [vmem:[%s7 + $0x318] sm:$0xff]
    %v8671 = vld [vmem:[%s7 + $0x320] sm:$0xff]
    %v8672 = vld [vmem:[%s7 + $0x328] sm:$0xff]
    %v8673 = vld [vmem:[%s7 + $0x330] sm:$0xff]
    %v8674 = vld [vmem:[%s7 + $0x338] sm:$0xff]
    %v8675 = vld [vmem:[%s7 + $0x340] sm:$0xff]
    %v8676 = vld [vmem:[%s7 + $0x348] sm:$0xff]
    %v8677 = vld [vmem:[%s7 + $0x350] sm:$0xff]
    %v8678 = vld [vmem:[%s7 + $0x358] sm:$0xff]
    %v8679 = vld [vmem:[%s7 + $0x360] sm:$0xff]
    %v8680 = vld [vmem:[%s7 + $0x368] sm:$0xff]
    %v8681 = vld [vmem:[%s7 + $0x370] sm:$0xff]
    %v8682 = vld [vmem:[%s7 + $0x378] sm:$0xff]
    %v8683 = vld [vmem:[%s7 + $0x380] sm:$0xff]
    %v8684 = vld [vmem:[%s7 + $0x388] sm:$0xff]
    %v8685 = vld [vmem:[%s7 + $0x390] sm:$0xff]
    %v8686 = vld [vmem:[%s7 + $0x398] sm:$0xff]
    %v8687 = vld [vmem:[%s7 + $0x3a0] sm:$0xff]
    %v8688 = vld [vmem:[%s7 + $0x3a8] sm:$0xff]
    %v8689 = vld [vmem:[%s7 + $0x3b0] sm:$0xff]
    %v8690 = vld [vmem:[%s7 + $0x3b8] sm:$0xff]
    %v8691 = vld [vmem:[%s7 + $0x3c0] sm:$0xff]
    %v8692 = vld [vmem:[%s7 + $0x3c8] sm:$0xff]
    %v8693 = vld [vmem:[%s7 + $0x3d0] sm:$0xff]
    %v8694 = vld [vmem:[%s7 + $0x3d8] sm:$0xff]
    %v8695 = vld [vmem:[%s7 + $0x3e0] sm:$0xff]
    %v8696 = vld [vmem:[%s7 + $0x3e8] sm:$0xff]
    %v8697 = vld [vmem:[%s7 + $0x3f0] sm:$0xff]
    %v8698 = vld [vmem:[%s7 + $0x3f8] sm:$0xff]
    %v8699 = vld [vmem:[%s7 + $0x400] sm:$0xff]
    %v8700 = vld [vmem:[%s7 + $0x408] sm:$0xff]
    %v8701 = vld [vmem:[%s7 + $0x410] sm:$0xff]
    %v8702 = vld [vmem:[%s7 + $0x418] sm:$0xff]
    %v8703 = vld [vmem:[%s7 + $0x420] sm:$0xff]
    %v8704 = vld [vmem:[%s7 + $0x428] sm:$0xff]
    %v8705 = vld [vmem:[%s7 + $0x430] sm:$0xff]
    %v8706 = vld [vmem:[%s7 + $0x438] sm:$0xff]
    %v8707 = vld [vmem:[%s7 + $0x440] sm:$0xff]
    %v8708 = vld [vmem:[%s7 + $0x448] sm:$0xff]
    %v8709 = vld [vmem:[%s7 + $0x450] sm:$0xff]
    %v8710 = vld [vmem:[%s7 + $0x458] sm:$0xff]
    %v8711 = vld [vmem:[%s7 + $0x460] sm:$0xff]
    %v8712 = vld [vmem:[%s7 + $0x468] sm:$0xff]
    %v8713 = vld [vmem:[%s7 + $0x470] sm:$0xff]
    %v8714 = vld [vmem:[%s7 + $0x478] sm:$0xff]
    %v8715 = vld [vmem:[%s7 + $0x480] sm:$0xff]
    %v8716 = vld [vmem:[%s7 + $0x488] sm:$0xff]
    %v8717 = vld [vmem:[%s7 + $0x490] sm:$0xff]
    %v8718 = vld [vmem:[%s7 + $0x498] sm:$0xff]
    %v8719 = vld [vmem:[%s7 + $0x4a0] sm:$0xff]
    %v8720 = vld [vmem:[%s7 + $0x4a8] sm:$0xff]
    %v8721 = vld [vmem:[%s7 + $0x4b0] sm:$0xff]
    %v8722 = vld [vmem:[%s7 + $0x4b8] sm:$0xff]
    %v8723 = vld [vmem:[%s7 + $0x4c0] sm:$0xff]
    %v8724 = vld [vmem:[%s7 + $0x4c8] sm:$0xff]
    %v8725 = vld [vmem:[%s7 + $0x4d0] sm:$0xff]
    %v8726 = vld [vmem:[%s7 + $0x4d8] sm:$0xff]
    %v8727 = vld [vmem:[%s7 + $0x4e0] sm:$0xff]
    %v8728 = vld [vmem:[%s7 + $0x4e8] sm:$0xff]
    %v8729 = vld [vmem:[%s7 + $0x4f0] sm:$0xff]
    %v8730 = vld [vmem:[%s7 + $0x4f8] sm:$0xff]
    %v8731 = vld [vmem:[%s7 + $0x500] sm:$0xff]
    %v8732 = vld [vmem:[%s7 + $0x508] sm:$0xff]
    %v8733 = vld [vmem:[%s7 + $0x510] sm:$0xff]
    %v8734 = vld [vmem:[%s7 + $0x518] sm:$0xff]
    %v8735 = vld [vmem:[%s7 + $0x520] sm:$0xff]
    %v8736 = vld [vmem:[%s7 + $0x528] sm:$0xff]
    %v8737 = vld [vmem:[%s7 + $0x530] sm:$0xff]
    %v8738 = vld [vmem:[%s7 + $0x538] sm:$0xff]
    %v8739 = vld [vmem:[%s7 + $0x540] sm:$0xff]
    %v8740 = vld [vmem:[%s7 + $0x548] sm:$0xff]
    %v8741 = vld [vmem:[%s7 + $0x550] sm:$0xff]
    %v8742 = vld [vmem:[%s7 + $0x558] sm:$0xff]
    %v8743 = vld [vmem:[%s7 + $0x560] sm:$0xff]
    %v8744 = vld [vmem:[%s7 + $0x568] sm:$0xff]
    %v8745 = vld [vmem:[%s7 + $0x570] sm:$0xff]
    %v8746 = vld [vmem:[%s7 + $0x578] sm:$0xff]
    %v8747 = vld [vmem:[%s7 + $0x580] sm:$0xff]
    %v8748 = vld [vmem:[%s7 + $0x588] sm:$0xff]
    %v8749 = vld [vmem:[%s7 + $0x590] sm:$0xff]
    %v8750 = vld [vmem:[%s7 + $0x598] sm:$0xff]
    %v8751 = vld [vmem:[%s7 + $0x5a0] sm:$0xff]
    %v8752 = vld [vmem:[%s7 + $0x5a8] sm:$0xff]
    %v8753 = vld [vmem:[%s7 + $0x5b0] sm:$0xff]
    %v8754 = vld [vmem:[%s7 + $0x5b8] sm:$0xff]
    %v8755 = vld [vmem:[%s7 + $0x5c0] sm:$0xff]
    %v8756 = vld [vmem:[%s7 + $0x5c8] sm:$0xff]
    %v8757 = vld [vmem:[%s7 + $0x5d0] sm:$0xff]
    %v8758 = vld [vmem:[%s7 + $0x5d8] sm:$0xff]
    %v8759 = vld [vmem:[%s7 + $0x5e0] sm:$0xff]
    %v8760 = vld [vmem:[%s7 + $0x5e8] sm:$0xff]
    %v8761 = vld [vmem:[%s7 + $0x5f0] sm:$0xff]
    %v8762 = vld [vmem:[%s7 + $0x5f8] sm:$0xff]
    %v8763 = vld [vmem:[%s7 + $0x600] sm:$0xff]
    %v8764 = vld [vmem:[%s7 + $0x608] sm:$0xff]
    %v8765 = vld [vmem:[%s7 + $0x610] sm:$0xff]
    %v8766 = vld [vmem:[%s7 + $0x618] sm:$0xff]
    %v8767 = vld [vmem:[%s7 + $0x620] sm:$0xff]
    %v8768 = vld [vmem:[%s7 + $0x628] sm:$0xff]
    %v8769 = vld [vmem:[%s7 + $0x630] sm:$0xff]
    %v8770 = vld [vmem:[%s7 + $0x638] sm:$0xff]
    %v8771 = vld [vmem:[%s7 + $0x640] sm:$0xff]
    %v8772 = vld [vmem:[%s7 + $0x648] sm:$0xff]
    %v8773 = vld [vmem:[%s7 + $0x650] sm:$0xff]
    %v8774 = vld [vmem:[%s7 + $0x658] sm:$0xff]
    %v8775 = vld [vmem:[%s7 + $0x660] sm:$0xff]
    %v8776 = vld [vmem:[%s7 + $0x668] sm:$0xff]
    %v8777 = vld [vmem:[%s7 + $0x670] sm:$0xff]
    %v8778 = vld [vmem:[%s7 + $0x678] sm:$0xff]
    %v8779 = vld [vmem:[%s7 + $0x680] sm:$0xff]
    %v8780 = vld [vmem:[%s7 + $0x688] sm:$0xff]
    %v8781 = vld [vmem:[%s7 + $0x690] sm:$0xff]
    %v8782 = vld [vmem:[%s7 + $0x698] sm:$0xff]
    %v8783 = vld [vmem:[%s7 + $0x6a0] sm:$0xff]
    %v8784 = vld [vmem:[%s7 + $0x6a8] sm:$0xff]
    %v8785 = vld [vmem:[%s7 + $0x6b0] sm:$0xff]
    %v8786 = vld [vmem:[%s7 + $0x6b8] sm:$0xff]
    %v8787 = vld [vmem:[%s7 + $0x6c0] sm:$0xff]
    %v8788 = vld [vmem:[%s7 + $0x6c8] sm:$0xff]
    %v8789 = vld [vmem:[%s7 + $0x6d0] sm:$0xff]
    %v8790 = vld [vmem:[%s7 + $0x6d8] sm:$0xff]
    %v8791 = vld [vmem:[%s7 + $0x6e0] sm:$0xff]
    %v8792 = vld [vmem:[%s7 + $0x6e8] sm:$0xff]
    %v8793 = vld [vmem:[%s7 + $0x6f0] sm:$0xff]
    %v8794 = vld [vmem:[%s7 + $0x6f8] sm:$0xff]
    %v8795 = vld [vmem:[%s7 + $0x700] sm:$0xff]
    %v8796 = vld [vmem:[%s7 + $0x708] sm:$0xff]
    %v8797 = vld [vmem:[%s7 + $0x710] sm:$0xff]
    %v8798 = vld [vmem:[%s7 + $0x718] sm:$0xff]
    %v8799 = vld [vmem:[%s7 + $0x720] sm:$0xff]
    %v8800 = vld [vmem:[%s7 + $0x728] sm:$0xff]
    %v8801 = vld [vmem:[%s7 + $0x730] sm:$0xff]
    %v8802 = vld [vmem:[%s7 + $0x738] sm:$0xff]
    %v8803 = vld [vmem:[%s7 + $0x740] sm:$0xff]
    %v8804 = vld [vmem:[%s7 + $0x748] sm:$0xff]
    %v8805 = vld [vmem:[%s7 + $0x750] sm:$0xff]
    %v8806 = vld [vmem:[%s7 + $0x758] sm:$0xff]
    %v8807 = vld [vmem:[%s7 + $0x760] sm:$0xff]
    %v8808 = vld [vmem:[%s7 + $0x768] sm:$0xff]
    %v8809 = vld [vmem:[%s7 + $0x770] sm:$0xff]
    %v8810 = vld [vmem:[%s7 + $0x778] sm:$0xff]
    %v8811 = vld [vmem:[%s7 + $0x780] sm:$0xff]
    %v8812 = vld [vmem:[%s7 + $0x788] sm:$0xff]
    %v8813 = vld [vmem:[%s7 + $0x790] sm:$0xff]
    %v8814 = vld [vmem:[%s7 + $0x798] sm:$0xff]
    %v8815 = vld [vmem:[%s7 + $0x7a0] sm:$0xff]
    %v8816 = vld [vmem:[%s7 + $0x7a8] sm:$0xff]
    %v8817 = vld [vmem:[%s7 + $0x7b0] sm:$0xff]
    %v8818 = vld [vmem:[%s7 + $0x7b8] sm:$0xff]
    %v8819 = vld [vmem:[%s7 + $0x7c0] sm:$0xff]
    %v8820 = vld [vmem:[%s7 + $0x7c8] sm:$0xff]
    %v8821 = vld [vmem:[%s8] sm:$0xf]
    %v8823 = vperm.slane %v8821, 0
    %v8824 = vperm.slane %v8821, 1
    %v8825 = vperm.slane %v8821, 2
    %v8826 = vperm.slane %v8821, 3
    %v9081 = vunpack.c.l.b16 %v8571
    %v9082 = vunpack.c.h.b16 %v8571
    %v9083 = vunpack.c.l.b16 %v8572
    %v9084 = vunpack.c.h.b16 %v8572
    %v9085 = vunpack.c.l.b16 %v8573
    %v9086 = vunpack.c.h.b16 %v8573
    %v9087 = vunpack.c.l.b16 %v8574
    %v9088 = vunpack.c.h.b16 %v8574
    %v9089 = vunpack.c.l.b16 %v8575
    %v9090 = vunpack.c.h.b16 %v8575
    %v9091 = vunpack.c.l.b16 %v8576
    %v9092 = vunpack.c.h.b16 %v8576
    %v9093 = vunpack.c.l.b16 %v8577
    %v9094 = vunpack.c.h.b16 %v8577
    %v9095 = vunpack.c.l.b16 %v8578
    %v9096 = vunpack.c.h.b16 %v8578
    %v9097 = vunpack.c.l.b16 %v8579
    %v9098 = vunpack.c.h.b16 %v8579
    %v9099 = vunpack.c.l.b16 %v8580
    %v9100 = vunpack.c.h.b16 %v8580
    %v9101 = vunpack.c.l.b16 %v8581
    %v9102 = vunpack.c.h.b16 %v8581
    %v9103 = vunpack.c.l.b16 %v8582
    %v9104 = vunpack.c.h.b16 %v8582
    %v9105 = vunpack.c.l.b16 %v8583
    %v9106 = vunpack.c.h.b16 %v8583
    %v9107 = vunpack.c.l.b16 %v8584
    %v9108 = vunpack.c.h.b16 %v8584
    %v9109 = vunpack.c.l.b16 %v8585
    %v9110 = vunpack.c.h.b16 %v8585
    %v9111 = vunpack.c.l.b16 %v8586
    %v9112 = vunpack.c.h.b16 %v8586
    %v9113 = vunpack.c.l.b16 %v8587
    %v9114 = vunpack.c.h.b16 %v8587
    %v9115 = vunpack.c.l.b16 %v8588
    %v9116 = vunpack.c.h.b16 %v8588
    %v9117 = vunpack.c.l.b16 %v8589
    %v9118 = vunpack.c.h.b16 %v8589
    %v9119 = vunpack.c.l.b16 %v8590
    %v9120 = vunpack.c.h.b16 %v8590
    %v9121 = vunpack.c.l.b16 %v8591
    %v9122 = vunpack.c.h.b16 %v8591
    %v9123 = vunpack.c.l.b16 %v8592
    %v9124 = vunpack.c.h.b16 %v8592
    %v9125 = vunpack.c.l.b16 %v8593
    %v9126 = vunpack.c.h.b16 %v8593
    %v9127 = vunpack.c.l.b16 %v8594
    %v9128 = vunpack.c.h.b16 %v8594
    %v9129 = vunpack.c.l.b16 %v8595
    %v9130 = vunpack.c.h.b16 %v8595
    %v9131 = vunpack.c.l.b16 %v8596
    %v9132 = vunpack.c.h.b16 %v8596
    %v9133 = vunpack.c.l.b16 %v8597
    %v9134 = vunpack.c.h.b16 %v8597
    %v9135 = vunpack.c.l.b16 %v8598
    %v9136 = vunpack.c.h.b16 %v8598
    %v9137 = vunpack.c.l.b16 %v8599
    %v9138 = vunpack.c.h.b16 %v8599
    %v9139 = vunpack.c.l.b16 %v8600
    %v9140 = vunpack.c.h.b16 %v8600
    %v9141 = vunpack.c.l.b16 %v8601
    %v9142 = vunpack.c.h.b16 %v8601
    %v9143 = vunpack.c.l.b16 %v8602
    %v9144 = vunpack.c.h.b16 %v8602
    %v9145 = vunpack.c.l.b16 %v8603
    %v9146 = vunpack.c.h.b16 %v8603
    %v9147 = vunpack.c.l.b16 %v8604
    %v9148 = vunpack.c.h.b16 %v8604
    %v9149 = vunpack.c.l.b16 %v8605
    %v9150 = vunpack.c.h.b16 %v8605
    %v9151 = vunpack.c.l.b16 %v8606
    %v9152 = vunpack.c.h.b16 %v8606
    %v9153 = vunpack.c.l.b16 %v8607
    %v9154 = vunpack.c.h.b16 %v8607
    %v9155 = vunpack.c.l.b16 %v8608
    %v9156 = vunpack.c.h.b16 %v8608
    %v9157 = vunpack.c.l.b16 %v8609
    %v9158 = vunpack.c.h.b16 %v8609
    %v9159 = vunpack.c.l.b16 %v8610
    %v9160 = vunpack.c.h.b16 %v8610
    %v9161 = vunpack.c.l.b16 %v8611
    %v9162 = vunpack.c.h.b16 %v8611
    %v9163 = vunpack.c.l.b16 %v8612
    %v9164 = vunpack.c.h.b16 %v8612
    %v9165 = vunpack.c.l.b16 %v8613
    %v9166 = vunpack.c.h.b16 %v8613
    %v9167 = vunpack.c.l.b16 %v8614
    %v9168 = vunpack.c.h.b16 %v8614
    %v9169 = vunpack.c.l.b16 %v8615
    %v9170 = vunpack.c.h.b16 %v8615
    %v9171 = vunpack.c.l.b16 %v8616
    %v9172 = vunpack.c.h.b16 %v8616
    %v9173 = vunpack.c.l.b16 %v8617
    %v9174 = vunpack.c.h.b16 %v8617
    %v9175 = vunpack.c.l.b16 %v8618
    %v9176 = vunpack.c.h.b16 %v8618
    %v9177 = vunpack.c.l.b16 %v8619
    %v9178 = vunpack.c.h.b16 %v8619
    %v9179 = vunpack.c.l.b16 %v8620
    %v9180 = vunpack.c.h.b16 %v8620
    %v9181 = vunpack.c.l.b16 %v8621
    %v9182 = vunpack.c.h.b16 %v8621
    %v9183 = vunpack.c.l.b16 %v8622
    %v9184 = vunpack.c.h.b16 %v8622
    %v9185 = vunpack.c.l.b16 %v8623
    %v9186 = vunpack.c.h.b16 %v8623
    %v9187 = vunpack.c.l.b16 %v8624
    %v9188 = vunpack.c.h.b16 %v8624
    %v9189 = vunpack.c.l.b16 %v8625
    %v9190 = vunpack.c.h.b16 %v8625
    %v9191 = vunpack.c.l.b16 %v8626
    %v9192 = vunpack.c.h.b16 %v8626
    %v9193 = vunpack.c.l.b16 %v8627
    %v9194 = vunpack.c.h.b16 %v8627
    %v9195 = vunpack.c.l.b16 %v8628
    %v9196 = vunpack.c.h.b16 %v8628
    %v9197 = vunpack.c.l.b16 %v8629
    %v9198 = vunpack.c.h.b16 %v8629
    %v9199 = vunpack.c.l.b16 %v8630
    %v9200 = vunpack.c.h.b16 %v8630
    %v9201 = vunpack.c.l.b16 %v8631
    %v9202 = vunpack.c.h.b16 %v8631
    %v9203 = vunpack.c.l.b16 %v8632
    %v9204 = vunpack.c.h.b16 %v8632
    %v9205 = vunpack.c.l.b16 %v8633
    %v9206 = vunpack.c.h.b16 %v8633
    %v9207 = vunpack.c.l.b16 %v8634
    %v9208 = vunpack.c.h.b16 %v8634
    %v9209 = vunpack.c.l.b16 %v8635
    %v9210 = vunpack.c.h.b16 %v8635
    %v9211 = vunpack.c.l.b16 %v8636
    %v9212 = vunpack.c.h.b16 %v8636
    %v9213 = vunpack.c.l.b16 %v8637
    %v9214 = vunpack.c.h.b16 %v8637
    %v9215 = vunpack.c.l.b16 %v8638
    %v9216 = vunpack.c.h.b16 %v8638
    %v9217 = vunpack.c.l.b16 %v8639
    %v9218 = vunpack.c.h.b16 %v8639
    %v9219 = vunpack.c.l.b16 %v8640
    %v9220 = vunpack.c.h.b16 %v8640
    %v9221 = vunpack.c.l.b16 %v8641
    %v9222 = vunpack.c.h.b16 %v8641
    %v9223 = vunpack.c.l.b16 %v8642
    %v9224 = vunpack.c.h.b16 %v8642
    %v9225 = vunpack.c.l.b16 %v8643
    %v9226 = vunpack.c.h.b16 %v8643
    %v9227 = vunpack.c.l.b16 %v8644
    %v9228 = vunpack.c.h.b16 %v8644
    %v9229 = vunpack.c.l.b16 %v8645
    %v9230 = vunpack.c.h.b16 %v8645
    %v9231 = vunpack.c.l.b16 %v8646
    %v9232 = vunpack.c.h.b16 %v8646
    %v9233 = vunpack.c.l.b16 %v8647
    %v9234 = vunpack.c.h.b16 %v8647
    %v9235 = vunpack.c.l.b16 %v8648
    %v9236 = vunpack.c.h.b16 %v8648
    %v9237 = vunpack.c.l.b16 %v8649
    %v9238 = vunpack.c.h.b16 %v8649
    %v9239 = vunpack.c.l.b16 %v8650
    %v9240 = vunpack.c.h.b16 %v8650
    %v9241 = vunpack.c.l.b16 %v8651
    %v9242 = vunpack.c.h.b16 %v8651
    %v9243 = vunpack.c.l.b16 %v8652
    %v9244 = vunpack.c.h.b16 %v8652
    %v9245 = vunpack.c.l.b16 %v8653
    %v9246 = vunpack.c.h.b16 %v8653
    %v9247 = vunpack.c.l.b16 %v8654
    %v9248 = vunpack.c.h.b16 %v8654
    %v9249 = vunpack.c.l.b16 %v8655
    %v9250 = vunpack.c.h.b16 %v8655
    %v9251 = vunpack.c.l.b16 %v8656
    %v9252 = vunpack.c.h.b16 %v8656
    %v9253 = vunpack.c.l.b16 %v8657
    %v9254 = vunpack.c.h.b16 %v8657
    %v9255 = vunpack.c.l.b16 %v8658
    %v9256 = vunpack.c.h.b16 %v8658
    %v9257 = vunpack.c.l.b16 %v8659
    %v9258 = vunpack.c.h.b16 %v8659
    %v9259 = vunpack.c.l.b16 %v8660
    %v9260 = vunpack.c.h.b16 %v8660
    %v9261 = vunpack.c.l.b16 %v8661
    %v9262 = vunpack.c.h.b16 %v8661
    %v9263 = vunpack.c.l.b16 %v8662
    %v9264 = vunpack.c.h.b16 %v8662
    %v9265 = vunpack.c.l.b16 %v8663
    %v9266 = vunpack.c.h.b16 %v8663
    %v9267 = vunpack.c.l.b16 %v8664
    %v9268 = vunpack.c.h.b16 %v8664
    %v9269 = vunpack.c.l.b16 %v8665
    %v9270 = vunpack.c.h.b16 %v8665
    %v9271 = vunpack.c.l.b16 %v8666
    %v9272 = vunpack.c.h.b16 %v8666
    %v9273 = vunpack.c.l.b16 %v8667
    %v9274 = vunpack.c.h.b16 %v8667
    %v9275 = vunpack.c.l.b16 %v8668
    %v9276 = vunpack.c.h.b16 %v8668
    %v9277 = vunpack.c.l.b16 %v8669
    %v9278 = vunpack.c.h.b16 %v8669
    %v9279 = vunpack.c.l.b16 %v8670
    %v9280 = vunpack.c.h.b16 %v8670
    %v9281 = vunpack.c.l.b16 %v8671
    %v9282 = vunpack.c.h.b16 %v8671
    %v9283 = vunpack.c.l.b16 %v8672
    %v9284 = vunpack.c.h.b16 %v8672
    %v9285 = vunpack.c.l.b16 %v8673
    %v9286 = vunpack.c.h.b16 %v8673
    %v9287 = vunpack.c.l.b16 %v8674
    %v9288 = vunpack.c.h.b16 %v8674
    %v9289 = vunpack.c.l.b16 %v8675
    %v9290 = vunpack.c.h.b16 %v8675
    %v9291 = vunpack.c.l.b16 %v8676
    %v9292 = vunpack.c.h.b16 %v8676
    %v9293 = vunpack.c.l.b16 %v8677
    %v9294 = vunpack.c.h.b16 %v8677
    %v9295 = vunpack.c.l.b16 %v8678
    %v9296 = vunpack.c.h.b16 %v8678
    %v9297 = vunpack.c.l.b16 %v8679
    %v9298 = vunpack.c.h.b16 %v8679
    %v9299 = vunpack.c.l.b16 %v8680
    %v9300 = vunpack.c.h.b16 %v8680
    %v9301 = vunpack.c.l.b16 %v8681
    %v9302 = vunpack.c.h.b16 %v8681
    %v9303 = vunpack.c.l.b16 %v8682
    %v9304 = vunpack.c.h.b16 %v8682
    %v9305 = vunpack.c.l.b16 %v8683
    %v9306 = vunpack.c.h.b16 %v8683
    %v9307 = vunpack.c.l.b16 %v8684
    %v9308 = vunpack.c.h.b16 %v8684
    %v9309 = vunpack.c.l.b16 %v8685
    %v9310 = vunpack.c.h.b16 %v8685
    %v9311 = vunpack.c.l.b16 %v8686
    %v9312 = vunpack.c.h.b16 %v8686
    %v9313 = vunpack.c.l.b16 %v8687
    %v9314 = vunpack.c.h.b16 %v8687
    %v9315 = vunpack.c.l.b16 %v8688
    %v9316 = vunpack.c.h.b16 %v8688
    %v9317 = vunpack.c.l.b16 %v8689
    %v9318 = vunpack.c.h.b16 %v8689
    %v9319 = vunpack.c.l.b16 %v8690
    %v9320 = vunpack.c.h.b16 %v8690
    %v9321 = vunpack.c.l.b16 %v8691
    %v9322 = vunpack.c.h.b16 %v8691
    %v9323 = vunpack.c.l.b16 %v8692
    %v9324 = vunpack.c.h.b16 %v8692
    %v9325 = vunpack.c.l.b16 %v8693
    %v9326 = vunpack.c.h.b16 %v8693
    %v9327 = vunpack.c.l.b16 %v8694
    %v9328 = vunpack.c.h.b16 %v8694
    %v9329 = vunpack.c.l.b16 %v8695
    %v9330 = vunpack.c.h.b16 %v8695
    %v9331 = vunpack.c.l.b16 %v8696
    %v9332 = vunpack.c.h.b16 %v8696
    %v9333 = vunpack.c.l.b16 %v8697
    %v9334 = vunpack.c.h.b16 %v8697
    %v9335 = vunpack.c.l.b16 %v8698
    %v9336 = vunpack.c.h.b16 %v8698
    %v9337 = vunpack.c.l.b16 %v8699
    %v9338 = vunpack.c.h.b16 %v8699
    %v9339 = vunpack.c.l.b16 %v8700
    %v9340 = vunpack.c.h.b16 %v8700
    %v9341 = vunpack.c.l.b16 %v8701
    %v9342 = vunpack.c.h.b16 %v8701
    %v9343 = vunpack.c.l.b16 %v8702
    %v9344 = vunpack.c.h.b16 %v8702
    %v9345 = vunpack.c.l.b16 %v8703
    %v9346 = vunpack.c.h.b16 %v8703
    %v9347 = vunpack.c.l.b16 %v8704
    %v9348 = vunpack.c.h.b16 %v8704
    %v9349 = vunpack.c.l.b16 %v8705
    %v9350 = vunpack.c.h.b16 %v8705
    %v9351 = vunpack.c.l.b16 %v8706
    %v9352 = vunpack.c.h.b16 %v8706
    %v9353 = vunpack.c.l.b16 %v8707
    %v9354 = vunpack.c.h.b16 %v8707
    %v9355 = vunpack.c.l.b16 %v8708
    %v9356 = vunpack.c.h.b16 %v8708
    %v9357 = vunpack.c.l.b16 %v8709
    %v9358 = vunpack.c.h.b16 %v8709
    %v9359 = vunpack.c.l.b16 %v8710
    %v9360 = vunpack.c.h.b16 %v8710
    %v9361 = vunpack.c.l.b16 %v8711
    %v9362 = vunpack.c.h.b16 %v8711
    %v9363 = vunpack.c.l.b16 %v8712
    %v9364 = vunpack.c.h.b16 %v8712
    %v9365 = vunpack.c.l.b16 %v8713
    %v9366 = vunpack.c.h.b16 %v8713
    %v9367 = vunpack.c.l.b16 %v8714
    %v9368 = vunpack.c.h.b16 %v8714
    %v9369 = vunpack.c.l.b16 %v8715
    %v9370 = vunpack.c.h.b16 %v8715
    %v9371 = vunpack.c.l.b16 %v8716
    %v9372 = vunpack.c.h.b16 %v8716
    %v9373 = vunpack.c.l.b16 %v8717
    %v9374 = vunpack.c.h.b16 %v8717
    %v9375 = vunpack.c.l.b16 %v8718
    %v9376 = vunpack.c.h.b16 %v8718
    %v9377 = vunpack.c.l.b16 %v8719
    %v9378 = vunpack.c.h.b16 %v8719
    %v9379 = vunpack.c.l.b16 %v8720
    %v9380 = vunpack.c.h.b16 %v8720
    %v9381 = vunpack.c.l.b16 %v8721
    %v9382 = vunpack.c.h.b16 %v8721
    %v9383 = vunpack.c.l.b16 %v8722
    %v9384 = vunpack.c.h.b16 %v8722
    %v9385 = vunpack.c.l.b16 %v8723
    %v9386 = vunpack.c.h.b16 %v8723
    %v9387 = vunpack.c.l.b16 %v8724
    %v9388 = vunpack.c.h.b16 %v8724
    %v9389 = vunpack.c.l.b16 %v8725
    %v9390 = vunpack.c.h.b16 %v8725
    %v9391 = vunpack.c.l.b16 %v8726
    %v9392 = vunpack.c.h.b16 %v8726
    %v9393 = vunpack.c.l.b16 %v8727
    %v9394 = vunpack.c.h.b16 %v8727
    %v9395 = vunpack.c.l.b16 %v8728
    %v9396 = vunpack.c.h.b16 %v8728
    %v9397 = vunpack.c.l.b16 %v8729
    %v9398 = vunpack.c.h.b16 %v8729
    %v9399 = vunpack.c.l.b16 %v8730
    %v9400 = vunpack.c.h.b16 %v8730
    %v9401 = vunpack.c.l.b16 %v8731
    %v9402 = vunpack.c.h.b16 %v8731
    %v9403 = vunpack.c.l.b16 %v8732
    %v9404 = vunpack.c.h.b16 %v8732
    %v9405 = vunpack.c.l.b16 %v8733
    %v9406 = vunpack.c.h.b16 %v8733
    %v9407 = vunpack.c.l.b16 %v8734
    %v9408 = vunpack.c.h.b16 %v8734
    %v9409 = vunpack.c.l.b16 %v8735
    %v9410 = vunpack.c.h.b16 %v8735
    %v9411 = vunpack.c.l.b16 %v8736
    %v9412 = vunpack.c.h.b16 %v8736
    %v9413 = vunpack.c.l.b16 %v8737
    %v9414 = vunpack.c.h.b16 %v8737
    %v9415 = vunpack.c.l.b16 %v8738
    %v9416 = vunpack.c.h.b16 %v8738
    %v9417 = vunpack.c.l.b16 %v8739
    %v9418 = vunpack.c.h.b16 %v8739
    %v9419 = vunpack.c.l.b16 %v8740
    %v9420 = vunpack.c.h.b16 %v8740
    %v9421 = vunpack.c.l.b16 %v8741
    %v9422 = vunpack.c.h.b16 %v8741
    %v9423 = vunpack.c.l.b16 %v8742
    %v9424 = vunpack.c.h.b16 %v8742
    %v9425 = vunpack.c.l.b16 %v8743
    %v9426 = vunpack.c.h.b16 %v8743
    %v9427 = vunpack.c.l.b16 %v8744
    %v9428 = vunpack.c.h.b16 %v8744
    %v9429 = vunpack.c.l.b16 %v8745
    %v9430 = vunpack.c.h.b16 %v8745
    %v9431 = vunpack.c.l.b16 %v8746
    %v9432 = vunpack.c.h.b16 %v8746
    %v9433 = vunpack.c.l.b16 %v8747
    %v9434 = vunpack.c.h.b16 %v8747
    %v9435 = vunpack.c.l.b16 %v8748
    %v9436 = vunpack.c.h.b16 %v8748
    %v9437 = vunpack.c.l.b16 %v8749
    %v9438 = vunpack.c.h.b16 %v8749
    %v9439 = vunpack.c.l.b16 %v8750
    %v9440 = vunpack.c.h.b16 %v8750
    %v9441 = vunpack.c.l.b16 %v8751
    %v9442 = vunpack.c.h.b16 %v8751
    %v9443 = vunpack.c.l.b16 %v8752
    %v9444 = vunpack.c.h.b16 %v8752
    %v9445 = vunpack.c.l.b16 %v8753
    %v9446 = vunpack.c.h.b16 %v8753
    %v9447 = vunpack.c.l.b16 %v8754
    %v9448 = vunpack.c.h.b16 %v8754
    %v9449 = vunpack.c.l.b16 %v8755
    %v9450 = vunpack.c.h.b16 %v8755
    %v9451 = vunpack.c.l.b16 %v8756
    %v9452 = vunpack.c.h.b16 %v8756
    %v9453 = vunpack.c.l.b16 %v8757
    %v9454 = vunpack.c.h.b16 %v8757
    %v9455 = vunpack.c.l.b16 %v8758
    %v9456 = vunpack.c.h.b16 %v8758
    %v9457 = vunpack.c.l.b16 %v8759
    %v9458 = vunpack.c.h.b16 %v8759
    %v9459 = vunpack.c.l.b16 %v8760
    %v9460 = vunpack.c.h.b16 %v8760
    %v9461 = vunpack.c.l.b16 %v8761
    %v9462 = vunpack.c.h.b16 %v8761
    %v9463 = vunpack.c.l.b16 %v8762
    %v9464 = vunpack.c.h.b16 %v8762
    %v9465 = vunpack.c.l.b16 %v8763
    %v9466 = vunpack.c.h.b16 %v8763
    %v9467 = vunpack.c.l.b16 %v8764
    %v9468 = vunpack.c.h.b16 %v8764
    %v9469 = vunpack.c.l.b16 %v8765
    %v9470 = vunpack.c.h.b16 %v8765
    %v9471 = vunpack.c.l.b16 %v8766
    %v9472 = vunpack.c.h.b16 %v8766
    %v9473 = vunpack.c.l.b16 %v8767
    %v9474 = vunpack.c.h.b16 %v8767
    %v9475 = vunpack.c.l.b16 %v8768
    %v9476 = vunpack.c.h.b16 %v8768
    %v9477 = vunpack.c.l.b16 %v8769
    %v9478 = vunpack.c.h.b16 %v8769
    %v9479 = vunpack.c.l.b16 %v8770
    %v9480 = vunpack.c.h.b16 %v8770
    %v9481 = vunpack.c.l.b16 %v8771
    %v9482 = vunpack.c.h.b16 %v8771
    %v9483 = vunpack.c.l.b16 %v8772
    %v9484 = vunpack.c.h.b16 %v8772
    %v9485 = vunpack.c.l.b16 %v8773
    %v9486 = vunpack.c.h.b16 %v8773
    %v9487 = vunpack.c.l.b16 %v8774
    %v9488 = vunpack.c.h.b16 %v8774
    %v9489 = vunpack.c.l.b16 %v8775
    %v9490 = vunpack.c.h.b16 %v8775
    %v9491 = vunpack.c.l.b16 %v8776
    %v9492 = vunpack.c.h.b16 %v8776
    %v9493 = vunpack.c.l.b16 %v8777
    %v9494 = vunpack.c.h.b16 %v8777
    %v9495 = vunpack.c.l.b16 %v8778
    %v9496 = vunpack.c.h.b16 %v8778
    %v9497 = vunpack.c.l.b16 %v8779
    %v9498 = vunpack.c.h.b16 %v8779
    %v9499 = vunpack.c.l.b16 %v8780
    %v9500 = vunpack.c.h.b16 %v8780
    %v9501 = vunpack.c.l.b16 %v8781
    %v9502 = vunpack.c.h.b16 %v8781
    %v9503 = vunpack.c.l.b16 %v8782
    %v9504 = vunpack.c.h.b16 %v8782
    %v9505 = vunpack.c.l.b16 %v8783
    %v9506 = vunpack.c.h.b16 %v8783
    %v9507 = vunpack.c.l.b16 %v8784
    %v9508 = vunpack.c.h.b16 %v8784
    %v9509 = vunpack.c.l.b16 %v8785
    %v9510 = vunpack.c.h.b16 %v8785
    %v9511 = vunpack.c.l.b16 %v8786
    %v9512 = vunpack.c.h.b16 %v8786
    %v9513 = vunpack.c.l.b16 %v8787
    %v9514 = vunpack.c.h.b16 %v8787
    %v9515 = vunpack.c.l.b16 %v8788
    %v9516 = vunpack.c.h.b16 %v8788
    %v9517 = vunpack.c.l.b16 %v8789
    %v9518 = vunpack.c.h.b16 %v8789
    %v9519 = vunpack.c.l.b16 %v8790
    %v9520 = vunpack.c.h.b16 %v8790
    %v9521 = vunpack.c.l.b16 %v8791
    %v9522 = vunpack.c.h.b16 %v8791
    %v9523 = vunpack.c.l.b16 %v8792
    %v9524 = vunpack.c.h.b16 %v8792
    %v9525 = vunpack.c.l.b16 %v8793
    %v9526 = vunpack.c.h.b16 %v8793
    %v9527 = vunpack.c.l.b16 %v8794
    %v9528 = vunpack.c.h.b16 %v8794
    %v9529 = vunpack.c.l.b16 %v8795
    %v9530 = vunpack.c.h.b16 %v8795
    %v9531 = vunpack.c.l.b16 %v8796
    %v9532 = vunpack.c.h.b16 %v8796
    %v9533 = vunpack.c.l.b16 %v8797
    %v9534 = vunpack.c.h.b16 %v8797
    %v9535 = vunpack.c.l.b16 %v8798
    %v9536 = vunpack.c.h.b16 %v8798
    %v9537 = vunpack.c.l.b16 %v8799
    %v9538 = vunpack.c.h.b16 %v8799
    %v9539 = vunpack.c.l.b16 %v8800
    %v9540 = vunpack.c.h.b16 %v8800
    %v9541 = vunpack.c.l.b16 %v8801
    %v9542 = vunpack.c.h.b16 %v8801
    %v9543 = vunpack.c.l.b16 %v8802
    %v9544 = vunpack.c.h.b16 %v8802
    %v9545 = vunpack.c.l.b16 %v8803
    %v9546 = vunpack.c.h.b16 %v8803
    %v9547 = vunpack.c.l.b16 %v8804
    %v9548 = vunpack.c.h.b16 %v8804
    %v9549 = vunpack.c.l.b16 %v8805
    %v9550 = vunpack.c.h.b16 %v8805
    %v9551 = vunpack.c.l.b16 %v8806
    %v9552 = vunpack.c.h.b16 %v8806
    %v9553 = vunpack.c.l.b16 %v8807
    %v9554 = vunpack.c.h.b16 %v8807
    %v9555 = vunpack.c.l.b16 %v8808
    %v9556 = vunpack.c.h.b16 %v8808
    %v9557 = vunpack.c.l.b16 %v8809
    %v9558 = vunpack.c.h.b16 %v8809
    %v9559 = vunpack.c.l.b16 %v8810
    %v9560 = vunpack.c.h.b16 %v8810
    %v9561 = vunpack.c.l.b16 %v8811
    %v9562 = vunpack.c.h.b16 %v8811
    %v9563 = vunpack.c.l.b16 %v8812
    %v9564 = vunpack.c.h.b16 %v8812
    %v9565 = vunpack.c.l.b16 %v8813
    %v9566 = vunpack.c.h.b16 %v8813
    %v9567 = vunpack.c.l.b16 %v8814
    %v9568 = vunpack.c.h.b16 %v8814
    %v9569 = vunpack.c.l.b16 %v8815
    %v9570 = vunpack.c.h.b16 %v8815
    %v9571 = vunpack.c.l.b16 %v8816
    %v9572 = vunpack.c.h.b16 %v8816
    %v9573 = vunpack.c.l.b16 %v8817
    %v9574 = vunpack.c.h.b16 %v8817
    %v9575 = vunpack.c.l.b16 %v8818
    %v9576 = vunpack.c.h.b16 %v8818
    %v9577 = vunpack.c.l.b16 %v8819
    %v9578 = vunpack.c.h.b16 %v8819
    %v9579 = vunpack.c.l.b16 %v8820
    %v9580 = vunpack.c.h.b16 %v8820
    %v9581 = vpack.c.b16 %v9085, %v9081
    %v9582 = vpack.c.b16 %v9086, %v9082
    %v9583 = vpack.c.b16 %v9087, %v9083
    %v9584 = vpack.c.b16 %v9088, %v9084
    %v9585 = vpack.c.b16 %v9093, %v9089
    %v9586 = vpack.c.b16 %v9094, %v9090
    %v9587 = vpack.c.b16 %v9095, %v9091
    %v9588 = vpack.c.b16 %v9096, %v9092
    %v9589 = vpack.c.b16 %v9101, %v9097
    %v9590 = vpack.c.b16 %v9102, %v9098
    %v9591 = vpack.c.b16 %v9103, %v9099
    %v9592 = vpack.c.b16 %v9104, %v9100
    %v9593 = vpack.c.b16 %v9109, %v9105
    %v9594 = vpack.c.b16 %v9110, %v9106
    %v9595 = vpack.c.b16 %v9111, %v9107
    %v9596 = vpack.c.b16 %v9112, %v9108
    %v9597 = vpack.c.b16 %v9117, %v9113
    %v9598 = vpack.c.b16 %v9118, %v9114
    %v9599 = vpack.c.b16 %v9119, %v9115
    %v9600 = vpack.c.b16 %v9120, %v9116
    %v9601 = vpack.c.b16 %v9125, %v9121
    %v9602 = vpack.c.b16 %v9126, %v9122
    %v9603 = vpack.c.b16 %v9127, %v9123
    %v9604 = vpack.c.b16 %v9128, %v9124
    %v9605 = vpack.c.b16 %v9133, %v9129
    %v9606 = vpack.c.b16 %v9134, %v9130
    %v9607 = vpack.c.b16 %v9135, %v9131
    %v9608 = vpack.c.b16 %v9136, %v9132
    %v9609 = vpack.c.b16 %v9141, %v9137
    %v9610 = vpack.c.b16 %v9142, %v9138
    %v9611 = vpack.c.b16 %v9143, %v9139
    %v9612 = vpack.c.b16 %v9144, %v9140
    %v9613 = vpack.c.b16 %v9149, %v9145
    %v9614 = vpack.c.b16 %v9150, %v9146
    %v9615 = vpack.c.b16 %v9151, %v9147
    %v9616 = vpack.c.b16 %v9152, %v9148
    %v9617 = vpack.c.b16 %v9157, %v9153
    %v9618 = vpack.c.b16 %v9158, %v9154
    %v9619 = vpack.c.b16 %v9159, %v9155
    %v9620 = vpack.c.b16 %v9160, %v9156
    %v9621 = vpack.c.b16 %v9165, %v9161
    %v9622 = vpack.c.b16 %v9166, %v9162
    %v9623 = vpack.c.b16 %v9167, %v9163
    %v9624 = vpack.c.b16 %v9168, %v9164
    %v9625 = vpack.c.b16 %v9173, %v9169
    %v9626 = vpack.c.b16 %v9174, %v9170
    %v9627 = vpack.c.b16 %v9175, %v9171
    %v9628 = vpack.c.b16 %v9176, %v9172
    %v9629 = vpack.c.b16 %v9181, %v9177
    %v9630 = vpack.c.b16 %v9182, %v9178
    %v9631 = vpack.c.b16 %v9183, %v9179
    %v9632 = vpack.c.b16 %v9184, %v9180
    %v9633 = vpack.c.b16 %v9189, %v9185
    %v9634 = vpack.c.b16 %v9190, %v9186
    %v9635 = vpack.c.b16 %v9191, %v9187
    %v9636 = vpack.c.b16 %v9192, %v9188
    %v9637 = vpack.c.b16 %v9197, %v9193
    %v9638 = vpack.c.b16 %v9198, %v9194
    %v9639 = vpack.c.b16 %v9199, %v9195
    %v9640 = vpack.c.b16 %v9200, %v9196
    %v9641 = vpack.c.b16 %v9205, %v9201
    %v9642 = vpack.c.b16 %v9206, %v9202
    %v9643 = vpack.c.b16 %v9207, %v9203
    %v9644 = vpack.c.b16 %v9208, %v9204
    %v9645 = vpack.c.b16 %v9213, %v9209
    %v9646 = vpack.c.b16 %v9214, %v9210
    %v9647 = vpack.c.b16 %v9215, %v9211
    %v9648 = vpack.c.b16 %v9216, %v9212
    %v9649 = vpack.c.b16 %v9221, %v9217
    %v9650 = vpack.c.b16 %v9222, %v9218
    %v9651 = vpack.c.b16 %v9223, %v9219
    %v9652 = vpack.c.b16 %v9224, %v9220
    %v9653 = vpack.c.b16 %v9229, %v9225
    %v9654 = vpack.c.b16 %v9230, %v9226
    %v9655 = vpack.c.b16 %v9231, %v9227
    %v9656 = vpack.c.b16 %v9232, %v9228
    %v9657 = vpack.c.b16 %v9237, %v9233
    %v9658 = vpack.c.b16 %v9238, %v9234
    %v9659 = vpack.c.b16 %v9239, %v9235
    %v9660 = vpack.c.b16 %v9240, %v9236
    %v9661 = vpack.c.b16 %v9245, %v9241
    %v9662 = vpack.c.b16 %v9246, %v9242
    %v9663 = vpack.c.b16 %v9247, %v9243
    %v9664 = vpack.c.b16 %v9248, %v9244
    %v9665 = vpack.c.b16 %v9253, %v9249
    %v9666 = vpack.c.b16 %v9254, %v9250
    %v9667 = vpack.c.b16 %v9255, %v9251
    %v9668 = vpack.c.b16 %v9256, %v9252
    %v9669 = vpack.c.b16 %v9261, %v9257
    %v9670 = vpack.c.b16 %v9262, %v9258
    %v9671 = vpack.c.b16 %v9263, %v9259
    %v9672 = vpack.c.b16 %v9264, %v9260
    %v9673 = vpack.c.b16 %v9269, %v9265
    %v9674 = vpack.c.b16 %v9270, %v9266
    %v9675 = vpack.c.b16 %v9271, %v9267
    %v9676 = vpack.c.b16 %v9272, %v9268
    %v9677 = vpack.c.b16 %v9277, %v9273
    %v9678 = vpack.c.b16 %v9278, %v9274
    %v9679 = vpack.c.b16 %v9279, %v9275
    %v9680 = vpack.c.b16 %v9280, %v9276
    %v9681 = vpack.c.b16 %v9285, %v9281
    %v9682 = vpack.c.b16 %v9286, %v9282
    %v9683 = vpack.c.b16 %v9287, %v9283
    %v9684 = vpack.c.b16 %v9288, %v9284
    %v9685 = vpack.c.b16 %v9293, %v9289
    %v9686 = vpack.c.b16 %v9294, %v9290
    %v9687 = vpack.c.b16 %v9295, %v9291
    %v9688 = vpack.c.b16 %v9296, %v9292
    %v9689 = vpack.c.b16 %v9301, %v9297
    %v9690 = vpack.c.b16 %v9302, %v9298
    %v9691 = vpack.c.b16 %v9303, %v9299
    %v9692 = vpack.c.b16 %v9304, %v9300
    %v9693 = vpack.c.b16 %v9309, %v9305
    %v9694 = vpack.c.b16 %v9310, %v9306
    %v9695 = vpack.c.b16 %v9311, %v9307
    %v9696 = vpack.c.b16 %v9312, %v9308
    %v9697 = vpack.c.b16 %v9317, %v9313
    %v9698 = vpack.c.b16 %v9318, %v9314
    %v9699 = vpack.c.b16 %v9319, %v9315
    %v9700 = vpack.c.b16 %v9320, %v9316
    %v9701 = vpack.c.b16 %v9325, %v9321
    %v9702 = vpack.c.b16 %v9326, %v9322
    %v9703 = vpack.c.b16 %v9327, %v9323
    %v9704 = vpack.c.b16 %v9328, %v9324
    %v9705 = vpack.c.b16 %v9333, %v9329
    %v9706 = vpack.c.b16 %v9334, %v9330
    %v9707 = vpack.c.b16 %v9335, %v9331
    %v9708 = vpack.c.b16 %v9336, %v9332
    %v9709 = vpack.c.b16 %v9341, %v9337
    %v9710 = vpack.c.b16 %v9342, %v9338
    %v9711 = vpack.c.b16 %v9343, %v9339
    %v9712 = vpack.c.b16 %v9344, %v9340
    %v9713 = vpack.c.b16 %v9349, %v9345
    %v9714 = vpack.c.b16 %v9350, %v9346
    %v9715 = vpack.c.b16 %v9351, %v9347
    %v9716 = vpack.c.b16 %v9352, %v9348
    %v9717 = vpack.c.b16 %v9357, %v9353
    %v9718 = vpack.c.b16 %v9358, %v9354
    %v9719 = vpack.c.b16 %v9359, %v9355
    %v9720 = vpack.c.b16 %v9360, %v9356
    %v9721 = vpack.c.b16 %v9365, %v9361
    %v9722 = vpack.c.b16 %v9366, %v9362
    %v9723 = vpack.c.b16 %v9367, %v9363
    %v9724 = vpack.c.b16 %v9368, %v9364
    %v9725 = vpack.c.b16 %v9373, %v9369
    %v9726 = vpack.c.b16 %v9374, %v9370
    %v9727 = vpack.c.b16 %v9375, %v9371
    %v9728 = vpack.c.b16 %v9376, %v9372
    %v9729 = vpack.c.b16 %v9381, %v9377
    %v9730 = vpack.c.b16 %v9382, %v9378
    %v9731 = vpack.c.b16 %v9383, %v9379
    %v9732 = vpack.c.b16 %v9384, %v9380
    %v9733 = vpack.c.b16 %v9389, %v9385
    %v9734 = vpack.c.b16 %v9390, %v9386
    %v9735 = vpack.c.b16 %v9391, %v9387
    %v9736 = vpack.c.b16 %v9392, %v9388
    %v9737 = vpack.c.b16 %v9397, %v9393
    %v9738 = vpack.c.b16 %v9398, %v9394
    %v9739 = vpack.c.b16 %v9399, %v9395
    %v9740 = vpack.c.b16 %v9400, %v9396
    %v9741 = vpack.c.b16 %v9405, %v9401
    %v9742 = vpack.c.b16 %v9406, %v9402
    %v9743 = vpack.c.b16 %v9407, %v9403
    %v9744 = vpack.c.b16 %v9408, %v9404
    %v9745 = vpack.c.b16 %v9413, %v9409
    %v9746 = vpack.c.b16 %v9414, %v9410
    %v9747 = vpack.c.b16 %v9415, %v9411
    %v9748 = vpack.c.b16 %v9416, %v9412
    %v9749 = vpack.c.b16 %v9421, %v9417
    %v9750 = vpack.c.b16 %v9422, %v9418
    %v9751 = vpack.c.b16 %v9423, %v9419
    %v9752 = vpack.c.b16 %v9424, %v9420
    %v9753 = vpack.c.b16 %v9429, %v9425
    %v9754 = vpack.c.b16 %v9430, %v9426
    %v9755 = vpack.c.b16 %v9431, %v9427
    %v9756 = vpack.c.b16 %v9432, %v9428
    %v9757 = vpack.c.b16 %v9437, %v9433
    %v9758 = vpack.c.b16 %v9438, %v9434
    %v9759 = vpack.c.b16 %v9439, %v9435
    %v9760 = vpack.c.b16 %v9440, %v9436
    %v9761 = vpack.c.b16 %v9445, %v9441
    %v9762 = vpack.c.b16 %v9446, %v9442
    %v9763 = vpack.c.b16 %v9447, %v9443
    %v9764 = vpack.c.b16 %v9448, %v9444
    %v9765 = vpack.c.b16 %v9453, %v9449
    %v9766 = vpack.c.b16 %v9454, %v9450
    %v9767 = vpack.c.b16 %v9455, %v9451
    %v9768 = vpack.c.b16 %v9456, %v9452
    %v9769 = vpack.c.b16 %v9461, %v9457
    %v9770 = vpack.c.b16 %v9462, %v9458
    %v9771 = vpack.c.b16 %v9463, %v9459
    %v9772 = vpack.c.b16 %v9464, %v9460
    %v9773 = vpack.c.b16 %v9469, %v9465
    %v9774 = vpack.c.b16 %v9470, %v9466
    %v9775 = vpack.c.b16 %v9471, %v9467
    %v9776 = vpack.c.b16 %v9472, %v9468
    %v9777 = vpack.c.b16 %v9477, %v9473
    %v9778 = vpack.c.b16 %v9478, %v9474
    %v9779 = vpack.c.b16 %v9479, %v9475
    %v9780 = vpack.c.b16 %v9480, %v9476
    %v9781 = vpack.c.b16 %v9485, %v9481
    %v9782 = vpack.c.b16 %v9486, %v9482
    %v9783 = vpack.c.b16 %v9487, %v9483
    %v9784 = vpack.c.b16 %v9488, %v9484
    %v9785 = vpack.c.b16 %v9493, %v9489
    %v9786 = vpack.c.b16 %v9494, %v9490
    %v9787 = vpack.c.b16 %v9495, %v9491
    %v9788 = vpack.c.b16 %v9496, %v9492
    %v9789 = vpack.c.b16 %v9501, %v9497
    %v9790 = vpack.c.b16 %v9502, %v9498
    %v9791 = vpack.c.b16 %v9503, %v9499
    %v9792 = vpack.c.b16 %v9504, %v9500
    %v9793 = vpack.c.b16 %v9509, %v9505
    %v9794 = vpack.c.b16 %v9510, %v9506
    %v9795 = vpack.c.b16 %v9511, %v9507
    %v9796 = vpack.c.b16 %v9512, %v9508
    %v9797 = vpack.c.b16 %v9517, %v9513
    %v9798 = vpack.c.b16 %v9518, %v9514
    %v9799 = vpack.c.b16 %v9519, %v9515
    %v9800 = vpack.c.b16 %v9520, %v9516
    %v9801 = vpack.c.b16 %v9525, %v9521
    %v9802 = vpack.c.b16 %v9526, %v9522
    %v9803 = vpack.c.b16 %v9527, %v9523
    %v9804 = vpack.c.b16 %v9528, %v9524
    %v9805 = vpack.c.b16 %v9533, %v9529
    %v9806 = vpack.c.b16 %v9534, %v9530
    %v9807 = vpack.c.b16 %v9535, %v9531
    %v9808 = vpack.c.b16 %v9536, %v9532
    %v9809 = vpack.c.b16 %v9541, %v9537
    %v9810 = vpack.c.b16 %v9542, %v9538
    %v9811 = vpack.c.b16 %v9543, %v9539
    %v9812 = vpack.c.b16 %v9544, %v9540
    %v9813 = vpack.c.b16 %v9549, %v9545
    %v9814 = vpack.c.b16 %v9550, %v9546
    %v9815 = vpack.c.b16 %v9551, %v9547
    %v9816 = vpack.c.b16 %v9552, %v9548
    %v9817 = vpack.c.b16 %v9557, %v9553
    %v9818 = vpack.c.b16 %v9558, %v9554
    %v9819 = vpack.c.b16 %v9559, %v9555
    %v9820 = vpack.c.b16 %v9560, %v9556
    %v9821 = vpack.c.b16 %v9565, %v9561
    %v9822 = vpack.c.b16 %v9566, %v9562
    %v9823 = vpack.c.b16 %v9567, %v9563
    %v9824 = vpack.c.b16 %v9568, %v9564
    %v9825 = vpack.c.b16 %v9573, %v9569
    %v9826 = vpack.c.b16 %v9574, %v9570
    %v9827 = vpack.c.b16 %v9575, %v9571
    %v9828 = vpack.c.b16 %v9576, %v9572
    %v9829 = vpack.c.b16 %v9577, %v9577
    %v9830 = vpack.c.b16 %v9578, %v9578
    %v9831 = vpack.c.b16 %v9579, %v9579
    %v9832 = vpack.c.b16 %v9580, %v9580
    %vm10081 = vcmask 850944
    %v10083 = vsel %vm10081, %v8570, 0
    %vm10085 = vcmask 1043456
    %v10087 = vsel %vm10085, %v9829, 0
    %v10090 = vsel %vm10085, %v9830, 0
    %v10093 = vsel %vm10085, %v9831, 0
    %v10096 = vsel %vm10085, %v9832, 0
    %10098 = vmatpush.bf16.msra.mxu0 %v9609
    %10099 = vmatpush.bf16.msra.mxu0 %v9605
    %10100 = vmatpush.bf16.msra.mxu0 %v9601
    %10101 = vmatpush.bf16.msra.mxu0 %v9597
    %10102 = vmatpush.bf16.msra.mxu0 %v9593
    %10103 = vmatpush.bf16.msra.mxu0 %v9589
    %10104 = vmatpush.bf16.msra.mxu0 %v9585
    %10105 = vmatpush.bf16.msra.mxu0 %v9581
    %10106 = vmatmul.bf16.gmra.mxu0 %v8563
    %v10107 = vpop.f32.mrf.mxu0
    %v10108 = vadd.f32 %v8823, %v10107
    %v10109 = vpop.f32.mrf.mxu0
    %10110 = vdwg.mxu0
    %10111 = vmatpush.bf16.msra.mxu0 %v9641
    %10112 = vmatpush.bf16.msra.mxu0 %v9637
    %10113 = vmatpush.bf16.msra.mxu0 %v9633
    %10114 = vmatpush.bf16.msra.mxu0 %v9629
    %10115 = vmatpush.bf16.msra.mxu0 %v9625
    %10116 = vmatpush.bf16.msra.mxu0 %v9621
    %10117 = vmatpush.bf16.msra.mxu0 %v9617
    %10118 = vmatpush.bf16.msra.mxu0 %v9613
    %10119 = vmatmul.bf16.gmra.mxu0 %v8564
    %v10120 = vpop.f32.mrf.mxu0
    %v10121 = vadd.f32 %v10108, %v10120
    %v10122 = vpop.f32.mrf.mxu0
    %10123 = vdwg.mxu0
    %10124 = vmatpush.bf16.msra.mxu0 %v9673
    %10125 = vmatpush.bf16.msra.mxu0 %v9669
    %10126 = vmatpush.bf16.msra.mxu0 %v9665
    %10127 = vmatpush.bf16.msra.mxu0 %v9661
    %10128 = vmatpush.bf16.msra.mxu0 %v9657
    %10129 = vmatpush.bf16.msra.mxu0 %v9653
    %10130 = vmatpush.bf16.msra.mxu0 %v9649
    %10131 = vmatpush.bf16.msra.mxu0 %v9645
    %10132 = vmatmul.bf16.gmra.mxu0 %v8565
    %v10133 = vpop.f32.mrf.mxu0
    %v10134 = vadd.f32 %v10121, %v10133
    %v10135 = vpop.f32.mrf.mxu0
    %10136 = vdwg.mxu0
    %10137 = vmatpush.bf16.msra.mxu0 %v9705
    %10138 = vmatpush.bf16.msra.mxu0 %v9701
    %10139 = vmatpush.bf16.msra.mxu0 %v9697
    %10140 = vmatpush.bf16.msra.mxu0 %v9693
    %10141 = vmatpush.bf16.msra.mxu0 %v9689
    %10142 = vmatpush.bf16.msra.mxu0 %v9685
    %10143 = vmatpush.bf16.msra.mxu0 %v9681
    %10144 = vmatpush.bf16.msra.mxu0 %v9677
    %10145 = vmatmul.bf16.gmra.mxu0 %v8566
    %v10146 = vpop.f32.mrf.mxu0
    %v10147 = vadd.f32 %v10134, %v10146
    %v10148 = vpop.f32.mrf.mxu0
    %10149 = vdwg.mxu0
    %10150 = vmatpush.bf16.msra.mxu0 %v9737
    %10151 = vmatpush.bf16.msra.mxu0 %v9733
    %10152 = vmatpush.bf16.msra.mxu0 %v9729
    %10153 = vmatpush.bf16.msra.mxu0 %v9725
    %10154 = vmatpush.bf16.msra.mxu0 %v9721
    %10155 = vmatpush.bf16.msra.mxu0 %v9717
    %10156 = vmatpush.bf16.msra.mxu0 %v9713
    %10157 = vmatpush.bf16.msra.mxu0 %v9709
    %10158 = vmatmul.bf16.gmra.mxu0 %v8567
    %v10159 = vpop.f32.mrf.mxu0
    %v10160 = vadd.f32 %v10147, %v10159
    %v10161 = vpop.f32.mrf.mxu0
    %10162 = vdwg.mxu0
    %10163 = vmatpush.bf16.msra.mxu0 %v9769
    %10164 = vmatpush.bf16.msra.mxu0 %v9765
    %10165 = vmatpush.bf16.msra.mxu0 %v9761
    %10166 = vmatpush.bf16.msra.mxu0 %v9757
    %10167 = vmatpush.bf16.msra.mxu0 %v9753
    %10168 = vmatpush.bf16.msra.mxu0 %v9749
    %10169 = vmatpush.bf16.msra.mxu0 %v9745
    %10170 = vmatpush.bf16.msra.mxu0 %v9741
    %10171 = vmatmul.bf16.gmra.mxu0 %v8568
    %v10172 = vpop.f32.mrf.mxu0
    %v10173 = vadd.f32 %v10160, %v10172
    %v10174 = vpop.f32.mrf.mxu0
    %10175 = vdwg.mxu0
    %10176 = vmatpush.bf16.msra.mxu0 %v9801
    %10177 = vmatpush.bf16.msra.mxu0 %v9797
    %10178 = vmatpush.bf16.msra.mxu0 %v9793
    %10179 = vmatpush.bf16.msra.mxu0 %v9789
    %10180 = vmatpush.bf16.msra.mxu0 %v9785
    %10181 = vmatpush.bf16.msra.mxu0 %v9781
    %10182 = vmatpush.bf16.msra.mxu0 %v9777
    %10183 = vmatpush.bf16.msra.mxu0 %v9773
    %10184 = vmatmul.bf16.gmra.mxu0 %v8569
    %v10185 = vpop.f32.mrf.mxu0
    %v10186 = vadd.f32 %v10173, %v10185
    %v10187 = vpop.f32.mrf.mxu0
    %10188 = vdwg.mxu0
    %10189 = vmatpush.bf16.msra.mxu0 0
    %10190 = vmatpush.bf16.msra.mxu0 %v10087
    %10191 = vmatpush.bf16.msra.mxu0 %v9825
    %10192 = vmatpush.bf16.msra.mxu0 %v9821
    %10193 = vmatpush.bf16.msra.mxu0 %v9817
    %10194 = vmatpush.bf16.msra.mxu0 %v9813
    %10195 = vmatpush.bf16.msra.mxu0 %v9809
    %10196 = vmatpush.bf16.msra.mxu0 %v9805
    %10197 = vmatmul.bf16.gmra.mxu0 %v10083
    %v10198 = vpop.f32.mrf.mxu0
    %v10199 = vadd.f32 %v10186, %v10198
    %v10200 = vpop.f32.mrf.mxu0
    %10201 = vdwg.mxu0
    %10202 = vmatpush.bf16.msra.mxu0 %v9610
    %10203 = vmatpush.bf16.msra.mxu0 %v9606
    %10204 = vmatpush.bf16.msra.mxu0 %v9602
    %10205 = vmatpush.bf16.msra.mxu0 %v9598
    %10206 = vmatpush.bf16.msra.mxu0 %v9594
    %10207 = vmatpush.bf16.msra.mxu0 %v9590
    %10208 = vmatpush.bf16.msra.mxu0 %v9586
    %10209 = vmatpush.bf16.msra.mxu0 %v9582
    %10210 = vmatmul.bf16.gmra.mxu0 %v8563
    %v10211 = vpop.f32.mrf.mxu0
    %v10212 = vadd.f32 %v8824, %v10211
    %v10213 = vpop.f32.mrf.mxu0
    %10214 = vdwg.mxu0
    %10215 = vmatpush.bf16.msra.mxu0 %v9642
    %10216 = vmatpush.bf16.msra.mxu0 %v9638
    %10217 = vmatpush.bf16.msra.mxu0 %v9634
    %10218 = vmatpush.bf16.msra.mxu0 %v9630
    %10219 = vmatpush.bf16.msra.mxu0 %v9626
    %10220 = vmatpush.bf16.msra.mxu0 %v9622
    %10221 = vmatpush.bf16.msra.mxu0 %v9618
    %10222 = vmatpush.bf16.msra.mxu0 %v9614
    %10223 = vmatmul.bf16.gmra.mxu0 %v8564
    %v10224 = vpop.f32.mrf.mxu0
    %v10225 = vadd.f32 %v10212, %v10224
    %v10226 = vpop.f32.mrf.mxu0
    %10227 = vdwg.mxu0
    %10228 = vmatpush.bf16.msra.mxu0 %v9674
    %10229 = vmatpush.bf16.msra.mxu0 %v9670
    %10230 = vmatpush.bf16.msra.mxu0 %v9666
    %10231 = vmatpush.bf16.msra.mxu0 %v9662
    %10232 = vmatpush.bf16.msra.mxu0 %v9658
    %10233 = vmatpush.bf16.msra.mxu0 %v9654
    %10234 = vmatpush.bf16.msra.mxu0 %v9650
    %10235 = vmatpush.bf16.msra.mxu0 %v9646
    %10236 = vmatmul.bf16.gmra.mxu0 %v8565
    %v10237 = vpop.f32.mrf.mxu0
    %v10238 = vadd.f32 %v10225, %v10237
    %v10239 = vpop.f32.mrf.mxu0
    %10240 = vdwg.mxu0
    %10241 = vmatpush.bf16.msra.mxu0 %v9706
    %10242 = vmatpush.bf16.msra.mxu0 %v9702
    %10243 = vmatpush.bf16.msra.mxu0 %v9698
    %10244 = vmatpush.bf16.msra.mxu0 %v9694
    %10245 = vmatpush.bf16.msra.mxu0 %v9690
    %10246 = vmatpush.bf16.msra.mxu0 %v9686
    %10247 = vmatpush.bf16.msra.mxu0 %v9682
    %10248 = vmatpush.bf16.msra.mxu0 %v9678
    %10249 = vmatmul.bf16.gmra.mxu0 %v8566
    %v10250 = vpop.f32.mrf.mxu0
    %v10251 = vadd.f32 %v10238, %v10250
    %v10252 = vpop.f32.mrf.mxu0
    %10253 = vdwg.mxu0
    %10254 = vmatpush.bf16.msra.mxu0 %v9738
    %10255 = vmatpush.bf16.msra.mxu0 %v9734
    %10256 = vmatpush.bf16.msra.mxu0 %v9730
    %10257 = vmatpush.bf16.msra.mxu0 %v9726
    %10258 = vmatpush.bf16.msra.mxu0 %v9722
    %10259 = vmatpush.bf16.msra.mxu0 %v9718
    %10260 = vmatpush.bf16.msra.mxu0 %v9714
    %10261 = vmatpush.bf16.msra.mxu0 %v9710
    %10262 = vmatmul.bf16.gmra.mxu0 %v8567
    %v10263 = vpop.f32.mrf.mxu0
    %v10264 = vadd.f32 %v10251, %v10263
    %v10265 = vpop.f32.mrf.mxu0
    %10266 = vdwg.mxu0
    %10267 = vmatpush.bf16.msra.mxu0 %v9770
    %10268 = vmatpush.bf16.msra.mxu0 %v9766
    %10269 = vmatpush.bf16.msra.mxu0 %v9762
    %10270 = vmatpush.bf16.msra.mxu0 %v9758
    %10271 = vmatpush.bf16.msra.mxu0 %v9754
    %10272 = vmatpush.bf16.msra.mxu0 %v9750
    %10273 = vmatpush.bf16.msra.mxu0 %v9746
    %10274 = vmatpush.bf16.msra.mxu0 %v9742
    %10275 = vmatmul.bf16.gmra.mxu0 %v8568
    %v10276 = vpop.f32.mrf.mxu0
    %v10277 = vadd.f32 %v10264, %v10276
    %v10278 = vpop.f32.mrf.mxu0
    %10279 = vdwg.mxu0
    %10280 = vmatpush.bf16.msra.mxu0 %v9802
    %10281 = vmatpush.bf16.msra.mxu0 %v9798
    %10282 = vmatpush.bf16.msra.mxu0 %v9794
    %10283 = vmatpush.bf16.msra.mxu0 %v9790
    %10284 = vmatpush.bf16.msra.mxu0 %v9786
    %10285 = vmatpush.bf16.msra.mxu0 %v9782
    %10286 = vmatpush.bf16.msra.mxu0 %v9778
    %10287 = vmatpush.bf16.msra.mxu0 %v9774
    %10288 = vmatmul.bf16.gmra.mxu0 %v8569
    %v10289 = vpop.f32.mrf.mxu0
    %v10290 = vadd.f32 %v10277, %v10289
    %v10291 = vpop.f32.mrf.mxu0
    %10292 = vdwg.mxu0
    %10293 = vmatpush.bf16.msra.mxu0 0
    %10294 = vmatpush.bf16.msra.mxu0 %v10090
    %10295 = vmatpush.bf16.msra.mxu0 %v9826
    %10296 = vmatpush.bf16.msra.mxu0 %v9822
    %10297 = vmatpush.bf16.msra.mxu0 %v9818
    %10298 = vmatpush.bf16.msra.mxu0 %v9814
    %10299 = vmatpush.bf16.msra.mxu0 %v9810
    %10300 = vmatpush.bf16.msra.mxu0 %v9806
    %10301 = vmatmul.bf16.gmra.mxu0 %v10083
    %v10302 = vpop.f32.mrf.mxu0
    %v10303 = vadd.f32 %v10290, %v10302
    %v10304 = vpop.f32.mrf.mxu0
    %10305 = vdwg.mxu0
    %10306 = vmatpush.bf16.msra.mxu0 %v9611
    %10307 = vmatpush.bf16.msra.mxu0 %v9607
    %10308 = vmatpush.bf16.msra.mxu0 %v9603
    %10309 = vmatpush.bf16.msra.mxu0 %v9599
    %10310 = vmatpush.bf16.msra.mxu0 %v9595
    %10311 = vmatpush.bf16.msra.mxu0 %v9591
    %10312 = vmatpush.bf16.msra.mxu0 %v9587
    %10313 = vmatpush.bf16.msra.mxu0 %v9583
    %10314 = vmatmul.bf16.gmra.mxu0 %v8563
    %v10315 = vpop.f32.mrf.mxu0
    %v10316 = vadd.f32 %v8825, %v10315
    %v10317 = vpop.f32.mrf.mxu0
    %10318 = vdwg.mxu0
    %10319 = vmatpush.bf16.msra.mxu0 %v9643
    %10320 = vmatpush.bf16.msra.mxu0 %v9639
    %10321 = vmatpush.bf16.msra.mxu0 %v9635
    %10322 = vmatpush.bf16.msra.mxu0 %v9631
    %10323 = vmatpush.bf16.msra.mxu0 %v9627
    %10324 = vmatpush.bf16.msra.mxu0 %v9623
    %10325 = vmatpush.bf16.msra.mxu0 %v9619
    %10326 = vmatpush.bf16.msra.mxu0 %v9615
    %10327 = vmatmul.bf16.gmra.mxu0 %v8564
    %v10328 = vpop.f32.mrf.mxu0
    %v10329 = vadd.f32 %v10316, %v10328
    %v10330 = vpop.f32.mrf.mxu0
    %10331 = vdwg.mxu0
    %10332 = vmatpush.bf16.msra.mxu0 %v9675
    %10333 = vmatpush.bf16.msra.mxu0 %v9671
    %10334 = vmatpush.bf16.msra.mxu0 %v9667
    %10335 = vmatpush.bf16.msra.mxu0 %v9663
    %10336 = vmatpush.bf16.msra.mxu0 %v9659
    %10337 = vmatpush.bf16.msra.mxu0 %v9655
    %10338 = vmatpush.bf16.msra.mxu0 %v9651
    %10339 = vmatpush.bf16.msra.mxu0 %v9647
    %10340 = vmatmul.bf16.gmra.mxu0 %v8565
    %v10341 = vpop.f32.mrf.mxu0
    %v10342 = vadd.f32 %v10329, %v10341
    %v10343 = vpop.f32.mrf.mxu0
    %10344 = vdwg.mxu0
    %10345 = vmatpush.bf16.msra.mxu0 %v9707
    %10346 = vmatpush.bf16.msra.mxu0 %v9703
    %10347 = vmatpush.bf16.msra.mxu0 %v9699
    %10348 = vmatpush.bf16.msra.mxu0 %v9695
    %10349 = vmatpush.bf16.msra.mxu0 %v9691
    %10350 = vmatpush.bf16.msra.mxu0 %v9687
    %10351 = vmatpush.bf16.msra.mxu0 %v9683
    %10352 = vmatpush.bf16.msra.mxu0 %v9679
    %10353 = vmatmul.bf16.gmra.mxu0 %v8566
    %v10354 = vpop.f32.mrf.mxu0
    %v10355 = vadd.f32 %v10342, %v10354
    %v10356 = vpop.f32.mrf.mxu0
    %10357 = vdwg.mxu0
    %10358 = vmatpush.bf16.msra.mxu0 %v9739
    %10359 = vmatpush.bf16.msra.mxu0 %v9735
    %10360 = vmatpush.bf16.msra.mxu0 %v9731
    %10361 = vmatpush.bf16.msra.mxu0 %v9727
    %10362 = vmatpush.bf16.msra.mxu0 %v9723
    %10363 = vmatpush.bf16.msra.mxu0 %v9719
    %10364 = vmatpush.bf16.msra.mxu0 %v9715
    %10365 = vmatpush.bf16.msra.mxu0 %v9711
    %10366 = vmatmul.bf16.gmra.mxu0 %v8567
    %v10367 = vpop.f32.mrf.mxu0
    %v10368 = vadd.f32 %v10355, %v10367
    %v10369 = vpop.f32.mrf.mxu0
    %10370 = vdwg.mxu0
    %10371 = vmatpush.bf16.msra.mxu0 %v9771
    %10372 = vmatpush.bf16.msra.mxu0 %v9767
    %10373 = vmatpush.bf16.msra.mxu0 %v9763
    %10374 = vmatpush.bf16.msra.mxu0 %v9759
    %10375 = vmatpush.bf16.msra.mxu0 %v9755
    %10376 = vmatpush.bf16.msra.mxu0 %v9751
    %10377 = vmatpush.bf16.msra.mxu0 %v9747
    %10378 = vmatpush.bf16.msra.mxu0 %v9743
    %10379 = vmatmul.bf16.gmra.mxu0 %v8568
    %v10380 = vpop.f32.mrf.mxu0
    %v10381 = vadd.f32 %v10368, %v10380
    %v10382 = vpop.f32.mrf.mxu0
    %10383 = vdwg.mxu0
    %10384 = vmatpush.bf16.msra.mxu0 %v9803
    %10385 = vmatpush.bf16.msra.mxu0 %v9799
    %10386 = vmatpush.bf16.msra.mxu0 %v9795
    %10387 = vmatpush.bf16.msra.mxu0 %v9791
    %10388 = vmatpush.bf16.msra.mxu0 %v9787
    %10389 = vmatpush.bf16.msra.mxu0 %v9783
    %10390 = vmatpush.bf16.msra.mxu0 %v9779
    %10391 = vmatpush.bf16.msra.mxu0 %v9775
    %10392 = vmatmul.bf16.gmra.mxu0 %v8569
    %v10393 = vpop.f32.mrf.mxu0
    %v10394 = vadd.f32 %v10381, %v10393
    %v10395 = vpop.f32.mrf.mxu0
    %10396 = vdwg.mxu0
    %10397 = vmatpush.bf16.msra.mxu0 0
    %10398 = vmatpush.bf16.msra.mxu0 %v10093
    %10399 = vmatpush.bf16.msra.mxu0 %v9827
    %10400 = vmatpush.bf16.msra.mxu0 %v9823
    %10401 = vmatpush.bf16.msra.mxu0 %v9819
    %10402 = vmatpush.bf16.msra.mxu0 %v9815
    %10403 = vmatpush.bf16.msra.mxu0 %v9811
    %10404 = vmatpush.bf16.msra.mxu0 %v9807
    %10405 = vmatmul.bf16.gmra.mxu0 %v10083
    %v10406 = vpop.f32.mrf.mxu0
    %v10407 = vadd.f32 %v10394, %v10406
    %v10408 = vpop.f32.mrf.mxu0
    %10409 = vdwg.mxu0
    %10410 = vmatpush.bf16.msra.mxu0 %v9612
    %10411 = vmatpush.bf16.msra.mxu0 %v9608
    %10412 = vmatpush.bf16.msra.mxu0 %v9604
    %10413 = vmatpush.bf16.msra.mxu0 %v9600
    %10414 = vmatpush.bf16.msra.mxu0 %v9596
    %10415 = vmatpush.bf16.msra.mxu0 %v9592
    %10416 = vmatpush.bf16.msra.mxu0 %v9588
    %10417 = vmatpush.bf16.msra.mxu0 %v9584
    %10418 = vmatmul.bf16.gmra.mxu0 %v8563
    %v10419 = vpop.f32.mrf.mxu0
    %v10420 = vadd.f32 %v8826, %v10419
    %v10421 = vpop.f32.mrf.mxu0
    %10422 = vdwg.mxu0
    %10423 = vmatpush.bf16.msra.mxu0 %v9644
    %10424 = vmatpush.bf16.msra.mxu0 %v9640
    %10425 = vmatpush.bf16.msra.mxu0 %v9636
    %10426 = vmatpush.bf16.msra.mxu0 %v9632
    %10427 = vmatpush.bf16.msra.mxu0 %v9628
    %10428 = vmatpush.bf16.msra.mxu0 %v9624
    %10429 = vmatpush.bf16.msra.mxu0 %v9620
    %10430 = vmatpush.bf16.msra.mxu0 %v9616
    %10431 = vmatmul.bf16.gmra.mxu0 %v8564
    %v10432 = vpop.f32.mrf.mxu0
    %v10433 = vadd.f32 %v10420, %v10432
    %v10434 = vpop.f32.mrf.mxu0
    %10435 = vdwg.mxu0
    %10436 = vmatpush.bf16.msra.mxu0 %v9676
    %10437 = vmatpush.bf16.msra.mxu0 %v9672
    %10438 = vmatpush.bf16.msra.mxu0 %v9668
    %10439 = vmatpush.bf16.msra.mxu0 %v9664
    %10440 = vmatpush.bf16.msra.mxu0 %v9660
    %10441 = vmatpush.bf16.msra.mxu0 %v9656
    %10442 = vmatpush.bf16.msra.mxu0 %v9652
    %10443 = vmatpush.bf16.msra.mxu0 %v9648
    %10444 = vmatmul.bf16.gmra.mxu0 %v8565
    %v10445 = vpop.f32.mrf.mxu0
    %v10446 = vadd.f32 %v10433, %v10445
    %v10447 = vpop.f32.mrf.mxu0
    %10448 = vdwg.mxu0
    %10449 = vmatpush.bf16.msra.mxu0 %v9708
    %10450 = vmatpush.bf16.msra.mxu0 %v9704
    %10451 = vmatpush.bf16.msra.mxu0 %v9700
    %10452 = vmatpush.bf16.msra.mxu0 %v9696
    %10453 = vmatpush.bf16.msra.mxu0 %v9692
    %10454 = vmatpush.bf16.msra.mxu0 %v9688
    %10455 = vmatpush.bf16.msra.mxu0 %v9684
    %10456 = vmatpush.bf16.msra.mxu0 %v9680
    %10457 = vmatmul.bf16.gmra.mxu0 %v8566
    %v10458 = vpop.f32.mrf.mxu0
    %v10459 = vadd.f32 %v10446, %v10458
    %v10460 = vpop.f32.mrf.mxu0
    %10461 = vdwg.mxu0
    %10462 = vmatpush.bf16.msra.mxu0 %v9740
    %10463 = vmatpush.bf16.msra.mxu0 %v9736
    %10464 = vmatpush.bf16.msra.mxu0 %v9732
    %10465 = vmatpush.bf16.msra.mxu0 %v9728
    %10466 = vmatpush.bf16.msra.mxu0 %v9724
    %10467 = vmatpush.bf16.msra.mxu0 %v9720
    %10468 = vmatpush.bf16.msra.mxu0 %v9716
    %10469 = vmatpush.bf16.msra.mxu0 %v9712
    %10470 = vmatmul.bf16.gmra.mxu0 %v8567
    %v10471 = vpop.f32.mrf.mxu0
    %v10472 = vadd.f32 %v10459, %v10471
    %v10473 = vpop.f32.mrf.mxu0
    %10474 = vdwg.mxu0
    %10475 = vmatpush.bf16.msra.mxu0 %v9772
    %10476 = vmatpush.bf16.msra.mxu0 %v9768
    %10477 = vmatpush.bf16.msra.mxu0 %v9764
    %10478 = vmatpush.bf16.msra.mxu0 %v9760
    %10479 = vmatpush.bf16.msra.mxu0 %v9756
    %10480 = vmatpush.bf16.msra.mxu0 %v9752
    %10481 = vmatpush.bf16.msra.mxu0 %v9748
    %10482 = vmatpush.bf16.msra.mxu0 %v9744
    %10483 = vmatmul.bf16.gmra.mxu0 %v8568
    %v10484 = vpop.f32.mrf.mxu0
    %v10485 = vadd.f32 %v10472, %v10484
    %v10486 = vpop.f32.mrf.mxu0
    %10487 = vdwg.mxu0
    %10488 = vmatpush.bf16.msra.mxu0 %v9804
    %10489 = vmatpush.bf16.msra.mxu0 %v9800
    %10490 = vmatpush.bf16.msra.mxu0 %v9796
    %10491 = vmatpush.bf16.msra.mxu0 %v9792
    %10492 = vmatpush.bf16.msra.mxu0 %v9788
    %10493 = vmatpush.bf16.msra.mxu0 %v9784
    %10494 = vmatpush.bf16.msra.mxu0 %v9780
    %10495 = vmatpush.bf16.msra.mxu0 %v9776
    %10496 = vmatmul.bf16.gmra.mxu0 %v8569
    %v10497 = vpop.f32.mrf.mxu0
    %v10498 = vadd.f32 %v10485, %v10497
    %v10499 = vpop.f32.mrf.mxu0
    %10500 = vdwg.mxu0
    %10501 = vmatpush.bf16.msra.mxu0 0
    %10502 = vmatpush.bf16.msra.mxu0 %v10096
    %10503 = vmatpush.bf16.msra.mxu0 %v9828
    %10504 = vmatpush.bf16.msra.mxu0 %v9824
    %10505 = vmatpush.bf16.msra.mxu0 %v9820
    %10506 = vmatpush.bf16.msra.mxu0 %v9816
    %10507 = vmatpush.bf16.msra.mxu0 %v9812
    %10508 = vmatpush.bf16.msra.mxu0 %v9808
    %10509 = vmatmul.bf16.gmra.mxu0 %v10083
    %v10510 = vpop.f32.mrf.mxu0
    %v10511 = vadd.f32 %v10498, %v10510
    %v10512 = vpop.f32.mrf.mxu0
    %10513 = vdwg.mxu0
    %v10514 = vsub.f32 0.0, %v10199
    %v10515 = vsub.f32 0.0, %v10303
    %v10516 = vsub.f32 0.0, %v10407
    %v10517 = vsub.f32 0.0, %v10511
    %v10518 = vmul.f32 %v10514, 1.442695
    %v10519 = vpow.pop %v10518
    %v10520 = vmul.f32 %v10515, 1.442695
    %v10521 = vpow.pop %v10520
    %v10522 = vmul.f32 %v10516, 1.442695
    %v10523 = vpow.pop %v10522
    %v10524 = vmul.f32 %v10517, 1.442695
    %v10525 = vpow.pop %v10524
    %v10526 = vadd.f32 %v10519, 1.0
    %v10527 = vadd.f32 %v10521, 1.0
    %v10528 = vadd.f32 %v10523, 1.0
    %v10529 = vadd.f32 %v10525, 1.0
    %v10530 = vrcp.pop %v10526
    %v10531 = vmul.f32 %v10526, %v10530
    %v10532 = vsub.f32 1.0, %v10531
    %v10533 = vmul.f32 %v10530, %v10532
    %v10534 = vadd.f32 %v10530, %v10533
    %vm10535 = vweird.f32 %v10526
    %vm10536 = vweird.f32 %v10530
    %vm10537 = vmor %vm10535, %vm10536
    %v10538 = vsel %vm10537, %v10530, %v10534
    %v10539 = vand.u32 2147483647, %v10526
    %vm10540 = vcmp.eq.f32.partialorder %v10539, 8.507059e+37
    %v10541 = vand.u32 %v10526, 2147483648
    %v10542 = vor.u32 1.1754944e-38, %v10541
    %v10543 = vsel %vm10540, %v10542, %v10538
    %v10544 = vmul.f32 1.0, %v10543
    %v10545 = vrcp.pop %v10527
    %v10546 = vmul.f32 %v10527, %v10545
    %v10547 = vsub.f32 1.0, %v10546
    %v10548 = vmul.f32 %v10545, %v10547
    %v10549 = vadd.f32 %v10545, %v10548
    %vm10550 = vweird.f32 %v10527
    %vm10551 = vweird.f32 %v10545
    %vm10552 = vmor %vm10550, %vm10551
    %v10553 = vsel %vm10552, %v10545, %v10549
    %v10554 = vand.u32 2147483647, %v10527
    %vm10555 = vcmp.eq.f32.partialorder %v10554, 8.507059e+37
    %v10556 = vand.u32 %v10527, 2147483648
    %v10557 = vor.u32 1.1754944e-38, %v10556
    %v10558 = vsel %vm10555, %v10557, %v10553
    %v10559 = vmul.f32 1.0, %v10558
    %v10560 = vrcp.pop %v10528
    %v10561 = vmul.f32 %v10528, %v10560
    %v10562 = vsub.f32 1.0, %v10561
    %v10563 = vmul.f32 %v10560, %v10562
    %v10564 = vadd.f32 %v10560, %v10563
    %vm10565 = vweird.f32 %v10528
    %vm10566 = vweird.f32 %v10560
    %vm10567 = vmor %vm10565, %vm10566
    %v10568 = vsel %vm10567, %v10560, %v10564
    %v10569 = vand.u32 2147483647, %v10528
    %vm10570 = vcmp.eq.f32.partialorder %v10569, 8.507059e+37
    %v10571 = vand.u32 %v10528, 2147483648
    %v10572 = vor.u32 1.1754944e-38, %v10571
    %v10573 = vsel %vm10570, %v10572, %v10568
    %v10574 = vmul.f32 1.0, %v10573
    %v10575 = vrcp.pop %v10529
    %v10576 = vmul.f32 %v10529, %v10575
    %v10577 = vsub.f32 1.0, %v10576
    %v10578 = vmul.f32 %v10575, %v10577
    %v10579 = vadd.f32 %v10575, %v10578
    %vm10580 = vweird.f32 %v10529
    %vm10581 = vweird.f32 %v10575
    %vm10582 = vmor %vm10580, %vm10581
    %v10583 = vsel %vm10582, %v10575, %v10579
    %v10584 = vand.u32 2147483647, %v10529
    %vm10585 = vcmp.eq.f32.partialorder %v10584, 8.507059e+37
    %v10586 = vand.u32 %v10529, 2147483648
    %v10587 = vor.u32 1.1754944e-38, %v10586
    %v10588 = vsel %vm10585, %v10587, %v10583
    %v10589 = vmul.f32 1.0, %v10588
    %v10594 = vrot.slane %v10559, 6
    %v10595 = vrot.slane %v10574, 4
    %v10596 = vrot.slane %v10589, 2
    %vm10597 = vcmask 1041408
    %v10598 = vsel %vm10597, %v10544, %v10594
    %vm10599 = vcmask 1045508
    %v10600 = vsel %vm10599, %v10595, %v10596
    %v10601 = vsel %vm10085, %v10598, %v10600
    %vm10603 = vcmask 1043458
    %vm10604 = vmor %vm10603, %vm10597
    %vm10605 = vmor %vm10599, %vm10604
    %vm10606 = vcmask 130054
    %vm10607 = vmor %vm10606, %vm10605
    %10608 = vst.msk [vmem:[#allocation2] sm:$0xff] %vm10607, %v10601
    // Predicated region
    $region38: #{gmask_binary_list_forward.3} parent=1 // pred_check
      _
    $region39: #{gmask_binary_list_forward.3} parent=1 // pred_check_branch
      %10610 = sbr.rel (0) target = $region41
    $region40: #{gmask_binary_list_forward.3} parent=1 // pred_region
      %10612 = vsyncadd [#allocation3], 0
      %s10614 = sshll.u32 [#allocation2], 4
      %s10615 = int_to_ptr.vmem [resolvable:$true] %s10614
      %s10616 = sshll.u32 %s9, 4
      %s10617 = int_to_ptr.hbm [resolvable:$true] %s10616
      %10619 = dma.vmem_to_hbm [thread:$0]  %s10615, 128, %s10617, [#allocation3]
    $region41: #{gmask_binary_list_forward.3} parent=1 // pred_fallthru
      _
    // Predicated region
    $region42: #{gmask_binary_list_forward.3} parent=1 // pred_check
      _
    $region43: #{gmask_binary_list_forward.3} parent=1 // pred_check_branch
      %10621 = sbr.rel (0) target = $region45
    $region44: #{gmask_binary_list_forward.3} parent=1 // pred_region
      %10623 = dma.done [#allocation3], 128
    $region45: #{gmask_binary_list_forward.3} parent=1 // pred_fallthru
      _
    %10624 = vsyncpa [#allocation3], 1

</llo_original>
